<compile_context>
chip_gen: v5e
topology: v5e:2x2
jax: 0.10.0
libtpu: 0.0.40
codegen_flags: <defaults>
</compile_context>

<pallas_src>
import functools

import jax
import jax.numpy as jnp
from jax.experimental import pallas as pl
from jax.experimental.pallas import tpu as pltpu

TM_MAX = 512                      # max rows per grid step
CPAD = 128                        # channel / column (lane) padding
BN_EPS = 1e-5
VMEM_LIMIT = 32 * 1024 * 1024     # fits v5e scoped default head-room and v7x physical


def _round_up(x, m):
    return (x + m - 1) // m * m


# ----------------------------- Pallas kernels -----------------------------

def _matmul_stats_kernel(p_ref, w_ref, b_ref, y_ref, s_ref, q_ref, *, act):
    """One row tile of  y = act(patches @ W + bias)  plus per-tile channel sums
    and sums-of-squares computed while the tile is resident in VMEM (saves a
    separate stats pass over HBM). Stats blocks hold the tile sum broadcast
    over 8 sublanes; the JAX wrapper picks row 0 of each tile block."""
    y = jnp.dot(p_ref[...], w_ref[...],
                preferred_element_type=jnp.float32) + b_ref[...]
    if act == "sigmoid":
        y = jax.nn.sigmoid(y)
    y_ref[...] = y
    s = jnp.sum(y, axis=0, keepdims=True)
    q = jnp.sum(y * y, axis=0, keepdims=True)
    s_ref[...] = jnp.broadcast_to(s, s_ref.shape)
    q_ref[...] = jnp.broadcast_to(q, q_ref.shape)


def _affine_relu_kernel(y_ref, scale_ref, shift_ref, o_ref):
    o_ref[...] = jnp.maximum(y_ref[...] * scale_ref[...] + shift_ref[...], 0.0)


def _row_tiling(m):
    tm = min(TM_MAX, _round_up(m, 16))
    mpad = _round_up(m, tm)
    return tm, mpad, mpad // tm


def fused_matmul_stats(patches, w_mat, bias_cols, act=None):
    """(M, K) @ (K, Ccols) + bias (optionally activated), tiled over rows.

    Returns the row/column padded f32 output (Mpad, Cp) plus per-column sums
    and sums-of-squares over the real M rows (the padded zero rows contribute
    exactly `bias`, which is removed; stats are only meaningful for act=None).
    """
    M, K = patches.shape
    Ccols = w_mat.shape[1]
    Cp = _round_up(Ccols, CPAD)
    tm, Mpad, ntiles = _row_tiling(M)

    p = jnp.pad(patches, ((0, Mpad - M), (0, 0))).astype(jnp.bfloat16)
    w = jnp.pad(w_mat, ((0, 0), (0, Cp - Ccols))).astype(jnp.bfloat16)
    b = jnp.pad(bias_cols, (0, Cp - Ccols)).astype(jnp.float32).reshape(1, Cp)

    kern = functools.partial(_matmul_stats_kernel, act=act)
    y, ps, pq = pl.pallas_call(
        kern,
        out_shape=(jax.ShapeDtypeStruct((Mpad, Cp), jnp.float32),
                   jax.ShapeDtypeStruct((ntiles * 8, Cp), jnp.float32),
                   jax.ShapeDtypeStruct((ntiles * 8, Cp), jnp.float32)),
        grid_spec=pltpu.PrefetchScalarGridSpec(
            num_scalar_prefetch=0,
            grid=(ntiles,),
            in_specs=[
                pl.BlockSpec((tm, K), lambda i: (i, 0)),
                pl.BlockSpec((K, Cp), lambda i: (0, 0)),
                pl.BlockSpec((1, Cp), lambda i: (0, 0)),
            ],
            out_specs=(pl.BlockSpec((tm, Cp), lambda i: (i, 0)),
                       pl.BlockSpec((8, Cp), lambda i: (i, 0)),
                       pl.BlockSpec((8, Cp), lambda i: (i, 0))),
        ),
        compiler_params=pltpu.CompilerParams(
            dimension_semantics=("parallel",),
            vmem_limit_bytes=VMEM_LIMIT),
    )(p, w, b)

    s_cols = ps.reshape(ntiles, 8, Cp)[:, 0, :].sum(axis=0)
    q_cols = pq.reshape(ntiles, 8, Cp)[:, 0, :].sum(axis=0)
    npad = Mpad - M
    b_flat = b[0]
    s_cols = s_cols - npad * b_flat
    q_cols = q_cols - npad * b_flat * b_flat
    return y, s_cols, q_cols, M, Ccols, Cp


def affine_relu(y, scale_cols, shift_cols):
    """relu(y * scale + shift) with per-column scale/shift, tiled over rows."""
    Mpad, Cp = y.shape
    tm = min(TM_MAX, Mpad)
    return pl.pallas_call(
        _affine_relu_kernel,
        out_shape=jax.ShapeDtypeStruct((Mpad, Cp), jnp.float32),
        grid_spec=pltpu.PrefetchScalarGridSpec(
            num_scalar_prefetch=0,
            grid=(Mpad // tm,),
            in_specs=[
                pl.BlockSpec((tm, Cp), lambda i: (i, 0)),
                pl.BlockSpec((1, Cp), lambda i: (0, 0)),
                pl.BlockSpec((1, Cp), lambda i: (0, 0)),
            ],
            out_specs=pl.BlockSpec((tm, Cp), lambda i: (i, 0)),
        ),
        compiler_params=pltpu.CompilerParams(
            dimension_semantics=("parallel",),
            vmem_limit_bytes=VMEM_LIMIT),
    )(y, scale_cols.reshape(1, Cp), shift_cols.reshape(1, Cp))


# ------------------------------- JAX glue ----------------------------------

def im2col(x, kh, kw, stride):
    """x: (N, H, W, C) -> patches (N*Ho*Wo, kh*kw*C), element order (i, j, c)."""
    N, H, W, C = x.shape
    Ho = (H - kh) // stride + 1
    Wo = (W - kw) // stride + 1
    cols = []
    for i in range(kh):
        for j in range(kw):
            cols.append(x[:, i:i + stride * (Ho - 1) + 1:stride,
                            j:j + stride * (Wo - 1) + 1:stride, :])
    patches = jnp.concatenate(cols, axis=-1)
    return patches.reshape(N * Ho * Wo, kh * kw * C), (N, Ho, Wo)


def _prep_conv(x, w, stride):
    """Conv2d (padding=0): im2col patches + (K, Cout) weight matrix."""
    Cout, Cin, KH, KW = w.shape
    patches, geom = im2col(x, KH, KW, stride)
    w_mat = jnp.transpose(w, (2, 3, 1, 0)).reshape(KH * KW * Cin, Cout)
    return patches, w_mat, geom, 1, Cout


def _prep_tconv(x, w, stride):
    """ConvTranspose2d via sub-pixel decomposition.

    For each output parity (a, b) in {0..s-1}^2, the contributing kernel taps
    form a (K/s, K/s) sub-kernel applied as a valid conv over the input padded
    by K/s - 1; all parities are stacked on the output-column axis so one
    matmul produces every parity.  w is PyTorch layout (Cin, Cout, KH, KW).
    """
    Cin, Cout, KH, KW = w.shape
    assert KH % stride == 0 and KW % stride == 0
    ksh, ksw = KH // stride, KW // stride
    xp = jnp.pad(x, ((0, 0), (ksh - 1, ksh - 1), (ksw - 1, ksw - 1), (0, 0)))
    patches, geom = im2col(xp, ksh, ksw, 1)
    subs = []
    for a in range(stride):
        for b in range(stride):
            # taps of the (spatially flipped) transpose-conv kernel hitting (a, b)
            wk = w[:, :, a::stride, b::stride][:, :, ::-1, ::-1]   # (Cin,Cout,ksh,ksw)
            subs.append(jnp.transpose(wk, (2, 3, 0, 1)).reshape(ksh * ksw * Cin, Cout))
    w_mat = jnp.concatenate(subs, axis=-1)        # columns ordered (a, b, cout)
    return patches, w_mat, geom, stride, Cout


def _assemble(y_cols, M, geom, Cout, sub):
    """Drop row/column padding and interleave sub-pixel parities back into the
    spatial grid: out[n, s*u+a, s*v+b, c] = y[n, u, v, (a, b), c]."""
    N, Hs, Ws = geom
    G = sub * sub
    y = y_cols[:M, :G * Cout].reshape(N, Hs, Ws, sub, sub, Cout)
    y = jnp.transpose(y, (0, 1, 3, 2, 4, 5)).reshape(N, Hs * sub, Ws * sub, Cout)
    return y


def _conv_bn_relu_core(patches, w_mat, bias, gamma, beta, geom, sub, Cout):
    """matmul(+bias,+stats) -> BatchNorm (train-mode batch stats) -> ReLU."""
    G = sub * sub
    b_cols = jnp.tile(bias, G)
    y, s_cols, q_cols, M, Ccols, Cp = fused_matmul_stats(patches, w_mat, b_cols)
    # per-channel batch statistics; parity groups all belong to the same channel
    s_co = s_cols[:Ccols].reshape(G, Cout).sum(axis=0)
    q_co = q_cols[:Ccols].reshape(G, Cout).sum(axis=0)
    count = M * G
    mean = s_co / count
    var = jnp.maximum(q_co / count - mean * mean, 0.0)   # biased var, as PyTorch BN
    scale = gamma * jax.lax.rsqrt(var + BN_EPS)
    shift = beta - mean * scale
    scale_cols = jnp.pad(jnp.tile(scale, G), (0, Cp - Ccols), constant_values=1.0)
    shift_cols = jnp.pad(jnp.tile(shift, G), (0, Cp - Ccols))
    out = affine_relu(y, scale_cols, shift_cols)
    return _assemble(out, M, geom, Cout, sub)


def conv_bn_relu(x, w, b, gamma, beta, stride):
    patches, w_mat, geom, sub, Cout = _prep_conv(x, w, stride)
    return _conv_bn_relu_core(patches, w_mat, b, gamma, beta, geom, sub, Cout)


def tconv_bn_relu(x, w, b, gamma, beta, stride):
    patches, w_mat, geom, sub, Cout = _prep_tconv(x, w, stride)
    return _conv_bn_relu_core(patches, w_mat, b, gamma, beta, geom, sub, Cout)


def tconv_sigmoid(x, w, b, stride):
    """Final ConvTranspose2d with sigmoid fused into the matmul epilogue."""
    patches, w_mat, geom, sub, Cout = _prep_tconv(x, w, stride)
    b_cols = jnp.tile(b, sub * sub)
    y, _, _, M, _, _ = fused_matmul_stats(patches, w_mat, b_cols, act="sigmoid")
    return _assemble(y, M, geom, Cout, sub)


def generator_forward(x_nchw, params):
    """Matches Generator.forward (module fresh out of __init__, i.e. BN in train
    mode using batch statistics; running-stat updates are not materialized)."""
    x = jnp.transpose(x_nchw, (0, 2, 3, 1)).astype(jnp.float32)  # NCHW -> NHWC
    out = x
    skips = []
    for i, p in enumerate(params["enc"]):
        stride = 1 if i == 0 else 2
        out = conv_bn_relu(out, p["w"], p["b"], p["gamma"], p["beta"], stride)
        skips.append(out)
    skips = list(reversed(skips))
    for i, p in enumerate(params["dec"]):
        if 1 <= i <= 4:
            out = out + skips[i]          # skip connection (plain elementwise add)
        out = tconv_bn_relu(out, p["w"], p["b"], p["gamma"], p["beta"], 2)
    p = params["last"]
    out = tconv_sigmoid(out, p["w"], p["b"], 1)
    return jnp.transpose(out, (0, 3, 1, 2))  # NHWC -> NCHW


# --------------------------- parameter creation -----------------------------

def init_params(key, in_channels, out_channels, scaling_factor, base_n_channels):
    bc = base_n_channels * scaling_factor
    enc_cfg = [(in_channels, bc, 3)] + [(bc * i, bc * (i + 1), 4)
                                        for i in range(1, 5)]
    dec_cfg = [(bc * i, bc * (i - 1), 4) for i in range(5, 1, -1)]
    params = {"enc": [], "dec": []}
    keys = jax.random.split(key, len(enc_cfg) + len(dec_cfg) + 1)
    ki = 0
    for cin, cout, k in enc_cfg:
        kk = jax.random.split(keys[ki], 4); ki += 1
        fan_in = cin * k * k
        params["enc"].append(dict(
            w=jax.random.normal(kk[0], (cout, cin, k, k), jnp.float32)
              / jnp.sqrt(fan_in),
            b=0.1 * jax.random.normal(kk[1], (cout,), jnp.float32),
            gamma=1.0 + 0.1 * jax.random.normal(kk[2], (cout,), jnp.float32),
            beta=0.1 * jax.random.normal(kk[3], (cout,), jnp.float32)))
    for cin, cout, k in dec_cfg:
        kk = jax.random.split(keys[ki], 4); ki += 1
        fan_in = cin * k * k
        params["dec"].append(dict(
            w=jax.random.normal(kk[0], (cin, cout, k, k), jnp.float32)
              / jnp.sqrt(fan_in),
            b=0.1 * jax.random.normal(kk[1], (cout,), jnp.float32),
            gamma=1.0 + 0.1 * jax.random.normal(kk[2], (cout,), jnp.float32),
            beta=0.1 * jax.random.normal(kk[3], (cout,), jnp.float32)))
    kk = jax.random.split(keys[ki], 2)
    fan_in = bc * 3 * 3
    params["last"] = dict(
        w=jax.random.normal(kk[0], (bc, out_channels, 3, 3), jnp.float32)
          / jnp.sqrt(fan_in),
        b=0.1 * jax.random.normal(kk[1], (out_channels,), jnp.float32))
    return params


# ----------------------------------- main -----------------------------------

if __name__ == "__main__":
    key = jax.random.PRNGKey(0)
    k_params, k_x = jax.random.split(key)

    # Generator(in_channels=1, out_channels=3, scaling_factor=1, base_n_channels=4)
    in_channels, out_channels, scaling_factor, base_n_channels = 1, 3, 1, 4
    params = init_params(k_params, in_channels, out_channels,
                         scaling_factor, base_n_channels)

    # spatial size 48 so every stride-2 conv / transpose-conv lines up exactly
    x = jax.random.normal(k_x, (2, in_channels, 48, 48), jnp.float32)

    fwd = jax.jit(generator_forward)
    y = fwd(x, params)
    jax.block_until_ready(y)

    assert y.shape == (2, out_channels, 48, 48), y.shape
    assert bool(jnp.all(jnp.isfinite(y)))
    assert bool(jnp.all((y >= 0.0) & (y <= 1.0)))   # sigmoid output range
    print("KERNEL_OK")
</pallas_src>

<mosaic_0001>
module attributes {stable_mosaic.version = 11 : i64} {
  func.func @_matmul_stats_kernel(%arg0: i32, %arg1: memref<512x9xbf16, #tpu.memory_space<vmem>>, %arg2: memref<9x128xbf16, #tpu.memory_space<vmem>>, %arg3: memref<1x128xf32, #tpu.memory_space<vmem>>, %arg4: memref<512x128xf32, #tpu.memory_space<vmem>>, %arg5: memref<8x128xf32, #tpu.memory_space<vmem>>, %arg6: memref<8x128xf32, #tpu.memory_space<vmem>>) attributes {dimension_semantics = [#tpu.dimension_semantics<parallel>], iteration_bounds = array<i64: 9>, scalar_prefetch = 0 : i64, scratch_operands = 0 : i64, tpu.core_type = #tpu.core_type<tc>, window_params = [{transform_indices = @transform_0, window_bounds = array<i64: 512, 9>}, {pipeline_mode = #tpu.pipeline_mode<synchronous>, transform_indices = @transform_1, window_bounds = array<i64: 9, 128>}, {pipeline_mode = #tpu.pipeline_mode<synchronous>, transform_indices = @transform_2, window_bounds = array<i64: 1, 128>}, {transform_indices = @transform_3, window_bounds = array<i64: 512, 128>}, {transform_indices = @transform_4, window_bounds = array<i64: 8, 128>}, {transform_indices = @transform_5, window_bounds = array<i64: 8, 128>}]} {
    %c0 = arith.constant 0 : index
    %c0_0 = arith.constant 0 : index
    %0 = vector.load %arg1[%c0, %c0_0] : memref<512x9xbf16, #tpu.memory_space<vmem>>, vector<512x9xbf16>
    %c0_1 = arith.constant 0 : index
    %c0_2 = arith.constant 0 : index
    %1 = vector.load %arg2[%c0_1, %c0_2] : memref<9x128xbf16, #tpu.memory_space<vmem>>, vector<9x128xbf16>
    %cst = arith.constant dense<0.000000e+00> : vector<512x128xf32>
    %2 = tpu.matmul %0, %1, %cst {dimension_numbers = #tpu.dot_dimension_numbers<[1], [0], [0], [1], [0, 0, 1, 1], [], []>} : vector<512x9xbf16>, vector<9x128xbf16>, vector<512x128xf32> -> vector<512x128xf32>
    %c0_3 = arith.constant 0 : index
    %c0_4 = arith.constant 0 : index
    %3 = vector.load %arg3[%c0_3, %c0_4] : memref<1x128xf32, #tpu.memory_space<vmem>>, vector<1x128xf32>
    %4 = vector.broadcast %3 : vector<1x128xf32> to vector<512x128xf32>
    %5 = arith.addf %2, %4 : vector<512x128xf32>
    %c0_5 = arith.constant 0 : index
    %c0_6 = arith.constant 0 : index
    %6 = vector.load %arg4[%c0_5, %c0_6] : memref<512x128xf32, #tpu.memory_space<vmem>>, vector<512x128xf32>
    tpu.vector_store %arg4[%c0_5, %c0_6], %5 {strides = array<i32>} : memref<512x128xf32, #tpu.memory_space<vmem>>, vector<512x128xf32>,
    %cst_7 = arith.constant dense<0.000000e+00> : vector<128xf32>
    %7 = vector.multi_reduction <add>, %5, %cst_7 [0] : vector<512x128xf32> to vector<128xf32>
    %8 = vector.shape_cast %7 : vector<128xf32> to vector<1x128xf32>
    %9 = arith.mulf %5, %5 : vector<512x128xf32>
    %cst_8 = arith.constant dense<0.000000e+00> : vector<128xf32>
    %10 = vector.multi_reduction <add>, %9, %cst_8 [0] : vector<512x128xf32> to vector<128xf32>
    %11 = vector.shape_cast %10 : vector<128xf32> to vector<1x128xf32>
    %12 = vector.shape_cast %8 : vector<1x128xf32> to vector<1x128xf32>
    %13 = vector.broadcast %12 : vector<1x128xf32> to vector<8x128xf32>
    %c0_9 = arith.constant 0 : index
    %c0_10 = arith.constant 0 : index
    %14 = vector.load %arg5[%c0_9, %c0_10] : memref<8x128xf32, #tpu.memory_space<vmem>>, vector<8x128xf32>
    tpu.vector_store %arg5[%c0_9, %c0_10], %13 {strides = array<i32>} : memref<8x128xf32, #tpu.memory_space<vmem>>, vector<8x128xf32>,
    %15 = vector.shape_cast %11 : vector<1x128xf32> to vector<1x128xf32>
    %16 = vector.broadcast %15 : vector<1x128xf32> to vector<8x128xf32>
    %c0_11 = arith.constant 0 : index
    %c0_12 = arith.constant 0 : index
    %17 = vector.load %arg6[%c0_11, %c0_12] : memref<8x128xf32, #tpu.memory_space<vmem>>, vector<8x128xf32>
    tpu.vector_store %arg6[%c0_11, %c0_12], %16 {strides = array<i32>} : memref<8x128xf32, #tpu.memory_space<vmem>>, vector<8x128xf32>,
    return
  }
  func.func @transform_0(%arg0: i32) -> (i32, i32) {
    %c0_i32 = arith.constant 0 : i32
    %c0_i32_0 = arith.constant 0 : i32
    return %arg0, %c0_i32 : i32, i32
  }
  func.func @transform_1(%arg0: i32) -> (i32, i32) {
    %c0_i32 = arith.constant 0 : i32
    %c0_i32_0 = arith.constant 0 : i32
    %c0_i32_1 = arith.constant 0 : i32
    return %c0_i32, %c0_i32_0 : i32, i32
  }
  func.func @transform_2(%arg0: i32) -> (i32, i32) {
    %c0_i32 = arith.constant 0 : i32
    %c0_i32_0 = arith.constant 0 : i32
    %c0_i32_1 = arith.constant 0 : i32
    return %c0_i32, %c0_i32_0 : i32, i32
  }
  func.func @transform_3(%arg0: i32) -> (i32, i32) {
    %c0_i32 = arith.constant 0 : i32
    %c0_i32_0 = arith.constant 0 : i32
    return %arg0, %c0_i32 : i32, i32
  }
  func.func @transform_4(%arg0: i32) -> (i32, i32) {
    %c0_i32 = arith.constant 0 : i32
    %c0_i32_0 = arith.constant 0 : i32
    return %arg0, %c0_i32 : i32, i32
  }
  func.func @transform_5(%arg0: i32) -> (i32, i32) {
    %c0_i32 = arith.constant 0 : i32
    %c0_i32_0 = arith.constant 0 : i32
    return %arg0, %c0_i32 : i32, i32
  }
}

module attributes {stable_mosaic.version = 11 : i64} {
  func.func @_affine_relu_kernel(%arg0: i32, %arg1: memref<512x128xf32, #tpu.memory_space<vmem>>, %arg2: memref<1x128xf32, #tpu.memory_space<vmem>>, %arg3: memref<1x128xf32, #tpu.memory_space<vmem>>, %arg4: memref<512x128xf32, #tpu.memory_space<vmem>>) attributes {dimension_semantics = [#tpu.dimension_semantics<parallel>], iteration_bounds = array<i64: 9>, scalar_prefetch = 0 : i64, scratch_operands = 0 : i64, tpu.core_type = #tpu.core_type<tc>, window_params = [{transform_indices = @transform_0, window_bounds = array<i64: 512, 128>}, {pipeline_mode = #tpu.pipeline_mode<synchronous>, transform_indices = @transform_1, window_bounds = array<i64: 1, 128>}, {pipeline_mode = #tpu.pipeline_mode<synchronous>, transform_indices = @transform_2, window_bounds = array<i64: 1, 128>}, {transform_indices = @transform_3, window_bounds = array<i64: 512, 128>}]} {
    %c0 = arith.constant 0 : index
    %c0_0 = arith.constant 0 : index
    %0 = vector.load %arg1[%c0, %c0_0] : memref<512x128xf32, #tpu.memory_space<vmem>>, vector<512x128xf32>
    %c0_1 = arith.constant 0 : index
    %c0_2 = arith.constant 0 : index
    %1 = vector.load %arg2[%c0_1, %c0_2] : memref<1x128xf32, #tpu.memory_space<vmem>>, vector<1x128xf32>
    %2 = vector.broadcast %1 : vector<1x128xf32> to vector<512x128xf32>
    %3 = arith.mulf %0, %2 : vector<512x128xf32>
    %c0_3 = arith.constant 0 : index
    %c0_4 = arith.constant 0 : index
    %4 = vector.load %arg3[%c0_3, %c0_4] : memref<1x128xf32, #tpu.memory_space<vmem>>, vector<1x128xf32>
    %5 = vector.broadcast %4 : vector<1x128xf32> to vector<512x128xf32>
    %6 = arith.addf %3, %5 : vector<512x128xf32>
    %cst = arith.constant 0.000000e+00 : f32
    %7 = vector.broadcast %cst : f32 to vector<512x128xf32>
    %8 = arith.maximumf %6, %7 : vector<512x128xf32>
    %c0_5 = arith.constant 0 : index
    %c0_6 = arith.constant 0 : index
    %9 = vector.load %arg4[%c0_5, %c0_6] : memref<512x128xf32, #tpu.memory_space<vmem>>, vector<512x128xf32>
    tpu.vector_store %arg4[%c0_5, %c0_6], %8 {strides = array<i32>} : memref<512x128xf32, #tpu.memory_space<vmem>>, vector<512x128xf32>,
    return
  }
  func.func @transform_0(%arg0: i32) -> (i32, i32) {
    %c0_i32 = arith.constant 0 : i32
    %c0_i32_0 = arith.constant 0 : i32
    return %arg0, %c0_i32 : i32, i32
  }
  func.func @transform_1(%arg0: i32) -> (i32, i32) {
    %c0_i32 = arith.constant 0 : i32
    %c0_i32_0 = arith.constant 0 : i32
    %c0_i32_1 = arith.constant 0 : i32
    return %c0_i32, %c0_i32_0 : i32, i32
  }
  func.func @transform_2(%arg0: i32) -> (i32, i32) {
    %c0_i32 = arith.constant 0 : i32
    %c0_i32_0 = arith.constant 0 : i32
    %c0_i32_1 = arith.constant 0 : i32
    return %c0_i32, %c0_i32_0 : i32, i32
  }
  func.func @transform_3(%arg0: i32) -> (i32, i32) {
    %c0_i32 = arith.constant 0 : i32
    %c0_i32_0 = arith.constant 0 : i32
    return %arg0, %c0_i32 : i32, i32
  }
}

module attributes {stable_mosaic.version = 11 : i64} {
  func.func @_matmul_stats_kernel(%arg0: i32, %arg1: memref<512x64xbf16, #tpu.memory_space<vmem>>, %arg2: memref<64x128xbf16, #tpu.memory_space<vmem>>, %arg3: memref<1x128xf32, #tpu.memory_space<vmem>>, %arg4: memref<512x128xf32, #tpu.memory_space<vmem>>, %arg5: memref<8x128xf32, #tpu.memory_space<vmem>>, %arg6: memref<8x128xf32, #tpu.memory_space<vmem>>) attributes {dimension_semantics = [#tpu.dimension_semantics<parallel>], iteration_bounds = array<i64: 2>, scalar_prefetch = 0 : i64, scratch_operands = 0 : i64, tpu.core_type = #tpu.core_type<tc>, window_params = [{transform_indices = @transform_0, window_bounds = array<i64: 512, 64>}, {pipeline_mode = #tpu.pipeline_mode<synchronous>, transform_indices = @transform_1, window_bounds = array<i64: 64, 128>}, {pipeline_mode = #tpu.pipeline_mode<synchronous>, transform_indices = @transform_2, window_bounds = array<i64: 1, 128>}, {transform_indices = @transform_3, window_bounds = array<i64: 512, 128>}, {transform_indices = @transform_4, window_bounds = array<i64: 8, 128>}, {transform_indices = @transform_5, window_bounds = array<i64: 8, 128>}]} {
    %c0 = arith.constant 0 : index
    %c0_0 = arith.constant 0 : index
    %0 = vector.load %arg1[%c0, %c0_0] : memref<512x64xbf16, #tpu.memory_space<vmem>>, vector<512x64xbf16>
    %c0_1 = arith.constant 0 : index
    %c0_2 = arith.constant 0 : index
    %1 = vector.load %arg2[%c0_1, %c0_2] : memref<64x128xbf16, #tpu.memory_space<vmem>>, vector<64x128xbf16>
    %cst = arith.constant dense<0.000000e+00> : vector<512x128xf32>
    %2 = tpu.matmul %0, %1, %cst {dimension_numbers = #tpu.dot_dimension_numbers<[1], [0], [0], [1], [0, 0, 1, 1], [], []>} : vector<512x64xbf16>, vector<64x128xbf16>, vector<512x128xf32> -> vector<512x128xf32>
    %c0_3 = arith.constant 0 : index
    %c0_4 = arith.constant 0 : index
    %3 = vector.load %arg3[%c0_3, %c0_4] : memref<1x128xf32, #tpu.memory_space<vmem>>, vector<1x128xf32>
    %4 = vector.broadcast %3 : vector<1x128xf32> to vector<512x128xf32>
    %5 = arith.addf %2, %4 : vector<512x128xf32>
    %c0_5 = arith.constant 0 : index
    %c0_6 = arith.constant 0 : index
    %6 = vector.load %arg4[%c0_5, %c0_6] : memref<512x128xf32, #tpu.memory_space<vmem>>, vector<512x128xf32>
    tpu.vector_store %arg4[%c0_5, %c0_6], %5 {strides = array<i32>} : memref<512x128xf32, #tpu.memory_space<vmem>>, vector<512x128xf32>,
    %cst_7 = arith.constant dense<0.000000e+00> : vector<128xf32>
    %7 = vector.multi_reduction <add>, %5, %cst_7 [0] : vector<512x128xf32> to vector<128xf32>
    %8 = vector.shape_cast %7 : vector<128xf32> to vector<1x128xf32>
    %9 = arith.mulf %5, %5 : vector<512x128xf32>
    %cst_8 = arith.constant dense<0.000000e+00> : vector<128xf32>
    %10 = vector.multi_reduction <add>, %9, %cst_8 [0] : vector<512x128xf32> to vector<128xf32>
    %11 = vector.shape_cast %10 : vector<128xf32> to vector<1x128xf32>
    %12 = vector.shape_cast %8 : vector<1x128xf32> to vector<1x128xf32>
    %13 = vector.broadcast %12 : vector<1x128xf32> to vector<8x128xf32>
    %c0_9 = arith.constant 0 : index
    %c0_10 = arith.constant 0 : index
    %14 = vector.load %arg5[%c0_9, %c0_10] : memref<8x128xf32, #tpu.memory_space<vmem>>, vector<8x128xf32>
    tpu.vector_store %arg5[%c0_9, %c0_10], %13 {strides = array<i32>} : memref<8x128xf32, #tpu.memory_space<vmem>>, vector<8x128xf32>,
    %15 = vector.shape_cast %11 : vector<1x128xf32> to vector<1x128xf32>
    %16 = vector.broadcast %15 : vector<1x128xf32> to vector<8x128xf32>
    %c0_11 = arith.constant 0 : index
    %c0_12 = arith.constant 0 : index
    %17 = vector.load %arg6[%c0_11, %c0_12] : memref<8x128xf32, #tpu.memory_space<vmem>>, vector<8x128xf32>
    tpu.vector_store %arg6[%c0_11, %c0_12], %16 {strides = array<i32>} : memref<8x128xf32, #tpu.memory_space<vmem>>, vector<8x128xf32>,
    return
  }
  func.func @transform_0(%arg0: i32) -> (i32, i32) {
    %c0_i32 = arith.constant 0 : i32
    %c0_i32_0 = arith.constant 0 : i32
    return %arg0, %c0_i32 : i32, i32
  }
  func.func @transform_1(%arg0: i32) -> (i32, i32) {
    %c0_i32 = arith.constant 0 : i32
    %c0_i32_0 = arith.constant 0 : i32
    %c0_i32_1 = arith.constant 0 : i32
    return %c0_i32, %c0_i32_0 : i32, i32
  }
  func.func @transform_2(%arg0: i32) -> (i32, i32) {
    %c0_i32 = arith.constant 0 : i32
    %c0_i32_0 = arith.constant 0 : i32
    %c0_i32_1 = arith.constant 0 : i32
    return %c0_i32, %c0_i32_0 : i32, i32
  }
  func.func @transform_3(%arg0: i32) -> (i32, i32) {
    %c0_i32 = arith.constant 0 : i32
    %c0_i32_0 = arith.constant 0 : i32
    return %arg0, %c0_i32 : i32, i32
  }
  func.func @transform_4(%arg0: i32) -> (i32, i32) {
    %c0_i32 = arith.constant 0 : i32
    %c0_i32_0 = arith.constant 0 : i32
    return %arg0, %c0_i32 : i32, i32
  }
  func.func @transform_5(%arg0: i32) -> (i32, i32) {
    %c0_i32 = arith.constant 0 : i32
    %c0_i32_0 = arith.constant 0 : i32
    return %arg0, %c0_i32 : i32, i32
  }
}

module attributes {stable_mosaic.version = 11 : i64} {
  func.func @_affine_relu_kernel(%arg0: i32, %arg1: memref<512x128xf32, #tpu.memory_space<vmem>>, %arg2: memref<1x128xf32, #tpu.memory_space<vmem>>, %arg3: memref<1x128xf32, #tpu.memory_space<vmem>>, %arg4: memref<512x128xf32, #tpu.memory_space<vmem>>) attributes {dimension_semantics = [#tpu.dimension_semantics<parallel>], iteration_bounds = array<i64: 2>, scalar_prefetch = 0 : i64, scratch_operands = 0 : i64, tpu.core_type = #tpu.core_type<tc>, window_params = [{transform_indices = @transform_0, window_bounds = array<i64: 512, 128>}, {pipeline_mode = #tpu.pipeline_mode<synchronous>, transform_indices = @transform_1, window_bounds = array<i64: 1, 128>}, {pipeline_mode = #tpu.pipeline_mode<synchronous>, transform_indices = @transform_2, window_bounds = array<i64: 1, 128>}, {transform_indices = @transform_3, window_bounds = array<i64: 512, 128>}]} {
    %c0 = arith.constant 0 : index
    %c0_0 = arith.constant 0 : index
    %0 = vector.load %arg1[%c0, %c0_0] : memref<512x128xf32, #tpu.memory_space<vmem>>, vector<512x128xf32>
    %c0_1 = arith.constant 0 : index
    %c0_2 = arith.constant 0 : index
    %1 = vector.load %arg2[%c0_1, %c0_2] : memref<1x128xf32, #tpu.memory_space<vmem>>, vector<1x128xf32>
    %2 = vector.broadcast %1 : vector<1x128xf32> to vector<512x128xf32>
    %3 = arith.mulf %0, %2 : vector<512x128xf32>
    %c0_3 = arith.constant 0 : index
    %c0_4 = arith.constant 0 : index
    %4 = vector.load %arg3[%c0_3, %c0_4] : memref<1x128xf32, #tpu.memory_space<vmem>>, vector<1x128xf32>
    %5 = vector.broadcast %4 : vector<1x128xf32> to vector<512x128xf32>
    %6 = arith.addf %3, %5 : vector<512x128xf32>
    %cst = arith.constant 0.000000e+00 : f32
    %7 = vector.broadcast %cst : f32 to vector<512x128xf32>
    %8 = arith.maximumf %6, %7 : vector<512x128xf32>
    %c0_5 = arith.constant 0 : index
    %c0_6 = arith.constant 0 : index
    %9 = vector.load %arg4[%c0_5, %c0_6] : memref<512x128xf32, #tpu.memory_space<vmem>>, vector<512x128xf32>
    tpu.vector_store %arg4[%c0_5, %c0_6], %8 {strides = array<i32>} : memref<512x128xf32, #tpu.memory_space<vmem>>, vector<512x128xf32>,
    return
  }
  func.func @transform_0(%arg0: i32) -> (i32, i32) {
    %c0_i32 = arith.constant 0 : i32
    %c0_i32_0 = arith.constant 0 : i32
    return %arg0, %c0_i32 : i32, i32
  }
  func.func @transform_1(%arg0: i32) -> (i32, i32) {
    %c0_i32 = arith.constant 0 : i32
    %c0_i32_0 = arith.constant 0 : i32
    %c0_i32_1 = arith.constant 0 : i32
    return %c0_i32, %c0_i32_0 : i32, i32
  }
  func.func @transform_2(%arg0: i32) -> (i32, i32) {
    %c0_i32 = arith.constant 0 : i32
    %c0_i32_0 = arith.constant 0 : i32
    %c0_i32_1 = arith.constant 0 : i32
    return %c0_i32, %c0_i32_0 : i32, i32
  }
  func.func @transform_3(%arg0: i32) -> (i32, i32) {
    %c0_i32 = arith.constant 0 : i32
    %c0_i32_0 = arith.constant 0 : i32
    return %arg0, %c0_i32 : i32, i32
  }
}

module attributes {stable_mosaic.version = 11 : i64} {
  func.func @_matmul_stats_kernel(%arg0: i32, %arg1: memref<208x128xbf16, #tpu.memory_space<vmem>>, %arg2: memref<128x128xbf16, #tpu.memory_space<vmem>>, %arg3: memref<1x128xf32, #tpu.memory_space<vmem>>, %arg4: memref<208x128xf32, #tpu.memory_space<vmem>>, %arg5: memref<8x128xf32, #tpu.memory_space<vmem>>, %arg6: memref<8x128xf32, #tpu.memory_space<vmem>>) attributes {dimension_semantics = [#tpu.dimension_semantics<parallel>], iteration_bounds = array<i64: 1>, scalar_prefetch = 0 : i64, scratch_operands = 0 : i64, tpu.core_type = #tpu.core_type<tc>, window_params = [{transform_indices = @transform_0, window_bounds = array<i64: 208, 128>}, {pipeline_mode = #tpu.pipeline_mode<synchronous>, transform_indices = @transform_1, window_bounds = array<i64: 128, 128>}, {pipeline_mode = #tpu.pipeline_mode<synchronous>, transform_indices = @transform_2, window_bounds = array<i64: 1, 128>}, {transform_indices = @transform_3, window_bounds = array<i64: 208, 128>}, {transform_indices = @transform_4, window_bounds = array<i64: 8, 128>}, {transform_indices = @transform_5, window_bounds = array<i64: 8, 128>}]} {
    %c0 = arith.constant 0 : index
    %c0_0 = arith.constant 0 : index
    %0 = vector.load %arg1[%c0, %c0_0] : memref<208x128xbf16, #tpu.memory_space<vmem>>, vector<208x128xbf16>
    %c0_1 = arith.constant 0 : index
    %c0_2 = arith.constant 0 : index
    %1 = vector.load %arg2[%c0_1, %c0_2] : memref<128x128xbf16, #tpu.memory_space<vmem>>, vector<128x128xbf16>
    %cst = arith.constant dense<0.000000e+00> : vector<208x128xf32>
    %2 = tpu.matmul %0, %1, %cst {dimension_numbers = #tpu.dot_dimension_numbers<[1], [0], [0], [1], [0, 0, 1, 1], [], []>} : vector<208x128xbf16>, vector<128x128xbf16>, vector<208x128xf32> -> vector<208x128xf32>
    %c0_3 = arith.constant 0 : index
    %c0_4 = arith.constant 0 : index
    %3 = vector.load %arg3[%c0_3, %c0_4] : memref<1x128xf32, #tpu.memory_space<vmem>>, vector<1x128xf32>
    %4 = vector.broadcast %3 : vector<1x128xf32> to vector<208x128xf32>
    %5 = arith.addf %2, %4 : vector<208x128xf32>
    %c0_5 = arith.constant 0 : index
    %c0_6 = arith.constant 0 : index
    %6 = vector.load %arg4[%c0_5, %c0_6] : memref<208x128xf32, #tpu.memory_space<vmem>>, vector<208x128xf32>
    tpu.vector_store %arg4[%c0_5, %c0_6], %5 {strides = array<i32>} : memref<208x128xf32, #tpu.memory_space<vmem>>, vector<208x128xf32>,
    %cst_7 = arith.constant dense<0.000000e+00> : vector<128xf32>
    %7 = vector.multi_reduction <add>, %5, %cst_7 [0] : vector<208x128xf32> to vector<128xf32>
    %8 = vector.shape_cast %7 : vector<128xf32> to vector<1x128xf32>
    %9 = arith.mulf %5, %5 : vector<208x128xf32>
    %cst_8 = arith.constant dense<0.000000e+00> : vector<128xf32>
    %10 = vector.multi_reduction <add>, %9, %cst_8 [0] : vector<208x128xf32> to vector<128xf32>
    %11 = vector.shape_cast %10 : vector<128xf32> to vector<1x128xf32>
    %12 = vector.shape_cast %8 : vector<1x128xf32> to vector<1x128xf32>
    %13 = vector.broadcast %12 : vector<1x128xf32> to vector<8x128xf32>
    %c0_9 = arith.constant 0 : index
    %c0_10 = arith.constant 0 : index
    %14 = vector.load %arg5[%c0_9, %c0_10] : memref<8x128xf32, #tpu.memory_space<vmem>>, vector<8x128xf32>
    tpu.vector_store %arg5[%c0_9, %c0_10], %13 {strides = array<i32>} : memref<8x128xf32, #tpu.memory_space<vmem>>, vector<8x128xf32>,
    %15 = vector.shape_cast %11 : vector<1x128xf32> to vector<1x128xf32>
    %16 = vector.broadcast %15 : vector<1x128xf32> to vector<8x128xf32>
    %c0_11 = arith.constant 0 : index
    %c0_12 = arith.constant 0 : index
    %17 = vector.load %arg6[%c0_11, %c0_12] : memref<8x128xf32, #tpu.memory_space<vmem>>, vector<8x128xf32>
    tpu.vector_store %arg6[%c0_11, %c0_12], %16 {strides = array<i32>} : memref<8x128xf32, #tpu.memory_space<vmem>>, vector<8x128xf32>,
    return
  }
  func.func @transform_0(%arg0: i32) -> (i32, i32) {
    %c0_i32 = arith.constant 0 : i32
    %c0_i32_0 = arith.constant 0 : i32
    return %arg0, %c0_i32 : i32, i32
  }
  func.func @transform_1(%arg0: i32) -> (i32, i32) {
    %c0_i32 = arith.constant 0 : i32
    %c0_i32_0 = arith.constant 0 : i32
    %c0_i32_1 = arith.constant 0 : i32
    return %c0_i32, %c0_i32_0 : i32, i32
  }
  func.func @transform_2(%arg0: i32) -> (i32, i32) {
    %c0_i32 = arith.constant 0 : i32
    %c0_i32_0 = arith.constant 0 : i32
    %c0_i32_1 = arith.constant 0 : i32
    return %c0_i32, %c0_i32_0 : i32, i32
  }
  func.func @transform_3(%arg0: i32) -> (i32, i32) {
    %c0_i32 = arith.constant 0 : i32
    %c0_i32_0 = arith.constant 0 : i32
    return %arg0, %c0_i32 : i32, i32
  }
  func.func @transform_4(%arg0: i32) -> (i32, i32) {
    %c0_i32 = arith.constant 0 : i32
    %c0_i32_0 = arith.constant 0 : i32
    return %arg0, %c0_i32 : i32, i32
  }
  func.func @transform_5(%arg0: i32) -> (i32, i32) {
    %c0_i32 = arith.constant 0 : i32
    %c0_i32_0 = arith.constant 0 : i32
    return %arg0, %c0_i32 : i32, i32
  }
}

module attributes {stable_mosaic.version = 11 : i64} {
  func.func @_affine_relu_kernel(%arg0: i32, %arg1: memref<208x128xf32, #tpu.memory_space<vmem>>, %arg2: memref<1x128xf32, #tpu.memory_space<vmem>>, %arg3: memref<1x128xf32, #tpu.memory_space<vmem>>, %arg4: memref<208x128xf32, #tpu.memory_space<vmem>>) attributes {dimension_semantics = [#tpu.dimension_semantics<parallel>], iteration_bounds = array<i64: 1>, scalar_prefetch = 0 : i64, scratch_operands = 0 : i64, tpu.core_type = #tpu.core_type<tc>, window_params = [{transform_indices = @transform_0, window_bounds = array<i64: 208, 128>}, {pipeline_mode = #tpu.pipeline_mode<synchronous>, transform_indices = @transform_1, window_bounds = array<i64: 1, 128>}, {pipeline_mode = #tpu.pipeline_mode<synchronous>, transform_indices = @transform_2, window_bounds = array<i64: 1, 128>}, {transform_indices = @transform_3, window_bounds = array<i64: 208, 128>}]} {
    %c0 = arith.constant 0 : index
    %c0_0 = arith.constant 0 : index
    %0 = vector.load %arg1[%c0, %c0_0] : memref<208x128xf32, #tpu.memory_space<vmem>>, vector<208x128xf32>
    %c0_1 = arith.constant 0 : index
    %c0_2 = arith.constant 0 : index
    %1 = vector.load %arg2[%c0_1, %c0_2] : memref<1x128xf32, #tpu.memory_space<vmem>>, vector<1x128xf32>
    %2 = vector.broadcast %1 : vector<1x128xf32> to vector<208x128xf32>
    %3 = arith.mulf %0, %2 : vector<208x128xf32>
    %c0_3 = arith.constant 0 : index
    %c0_4 = arith.constant 0 : index
    %4 = vector.load %arg3[%c0_3, %c0_4] : memref<1x128xf32, #tpu.memory_space<vmem>>, vector<1x128xf32>
    %5 = vector.broadcast %4 : vector<1x128xf32> to vector<208x128xf32>
    %6 = arith.addf %3, %5 : vector<208x128xf32>
    %cst = arith.constant 0.000000e+00 : f32
    %7 = vector.broadcast %cst : f32 to vector<208x128xf32>
    %8 = arith.maximumf %6, %7 : vector<208x128xf32>
    %c0_5 = arith.constant 0 : index
    %c0_6 = arith.constant 0 : index
    %9 = vector.load %arg4[%c0_5, %c0_6] : memref<208x128xf32, #tpu.memory_space<vmem>>, vector<208x128xf32>
    tpu.vector_store %arg4[%c0_5, %c0_6], %8 {strides = array<i32>} : memref<208x128xf32, #tpu.memory_space<vmem>>, vector<208x128xf32>,
    return
  }
  func.func @transform_0(%arg0: i32) -> (i32, i32) {
    %c0_i32 = arith.constant 0 : i32
    %c0_i32_0 = arith.constant 0 : i32
    return %arg0, %c0_i32 : i32, i32
  }
  func.func @transform_1(%arg0: i32) -> (i32, i32) {
    %c0_i32 = arith.constant 0 : i32
    %c0_i32_0 = arith.constant 0 : i32
    %c0_i32_1 = arith.constant 0 : i32
    return %c0_i32, %c0_i32_0 : i32, i32
  }
  func.func @transform_2(%arg0: i32) -> (i32, i32) {
    %c0_i32 = arith.constant 0 : i32
    %c0_i32_0 = arith.constant 0 : i32
    %c0_i32_1 = arith.constant 0 : i32
    return %c0_i32, %c0_i32_0 : i32, i32
  }
  func.func @transform_3(%arg0: i32) -> (i32, i32) {
    %c0_i32 = arith.constant 0 : i32
    %c0_i32_0 = arith.constant 0 : i32
    return %arg0, %c0_i32 : i32, i32
  }
}

module attributes {stable_mosaic.version = 11 : i64} {
  func.func @_matmul_stats_kernel(%arg0: i32, %arg1: memref<32x192xbf16, #tpu.memory_space<vmem>>, %arg2: memref<192x128xbf16, #tpu.memory_space<vmem>>, %arg3: memref<1x128xf32, #tpu.memory_space<vmem>>, %arg4: memref<32x128xf32, #tpu.memory_space<vmem>>, %arg5: memref<8x128xf32, #tpu.memory_space<vmem>>, %arg6: memref<8x128xf32, #tpu.memory_space<vmem>>) attributes {dimension_semantics = [#tpu.dimension_semantics<parallel>], iteration_bounds = array<i64: 1>, scalar_prefetch = 0 : i64, scratch_operands = 0 : i64, tpu.core_type = #tpu.core_type<tc>, window_params = [{transform_indices = @transform_0, window_bounds = array<i64: 32, 192>}, {pipeline_mode = #tpu.pipeline_mode<synchronous>, transform_indices = @transform_1, window_bounds = array<i64: 192, 128>}, {pipeline_mode = #tpu.pipeline_mode<synchronous>, transform_indices = @transform_2, window_bounds = array<i64: 1, 128>}, {transform_indices = @transform_3, window_bounds = array<i64: 32, 128>}, {transform_indices = @transform_4, window_bounds = array<i64: 8, 128>}, {transform_indices = @transform_5, window_bounds = array<i64: 8, 128>}]} {
    %c0 = arith.constant 0 : index
    %c0_0 = arith.constant 0 : index
    %0 = vector.load %arg1[%c0, %c0_0] : memref<32x192xbf16, #tpu.memory_space<vmem>>, vector<32x192xbf16>
    %c0_1 = arith.constant 0 : index
    %c0_2 = arith.constant 0 : index
    %1 = vector.load %arg2[%c0_1, %c0_2] : memref<192x128xbf16, #tpu.memory_space<vmem>>, vector<192x128xbf16>
    %cst = arith.constant dense<0.000000e+00> : vector<32x128xf32>
    %2 = tpu.matmul %0, %1, %cst {dimension_numbers = #tpu.dot_dimension_numbers<[1], [0], [0], [1], [0, 0, 1, 1], [], []>} : vector<32x192xbf16>, vector<192x128xbf16>, vector<32x128xf32> -> vector<32x128xf32>
    %c0_3 = arith.constant 0 : index
    %c0_4 = arith.constant 0 : index
    %3 = vector.load %arg3[%c0_3, %c0_4] : memref<1x128xf32, #tpu.memory_space<vmem>>, vector<1x128xf32>
    %4 = vector.broadcast %3 : vector<1x128xf32> to vector<32x128xf32>
    %5 = arith.addf %2, %4 : vector<32x128xf32>
    %c0_5 = arith.constant 0 : index
    %c0_6 = arith.constant 0 : index
    %6 = vector.load %arg4[%c0_5, %c0_6] : memref<32x128xf32, #tpu.memory_space<vmem>>, vector<32x128xf32>
    tpu.vector_store %arg4[%c0_5, %c0_6], %5 {strides = array<i32>} : memref<32x128xf32, #tpu.memory_space<vmem>>, vector<32x128xf32>,
    %cst_7 = arith.constant dense<0.000000e+00> : vector<128xf32>
    %7 = vector.multi_reduction <add>, %5, %cst_7 [0] : vector<32x128xf32> to vector<128xf32>
    %8 = vector.shape_cast %7 : vector<128xf32> to vector<1x128xf32>
    %9 = arith.mulf %5, %5 : vector<32x128xf32>
    %cst_8 = arith.constant dense<0.000000e+00> : vector<128xf32>
    %10 = vector.multi_reduction <add>, %9, %cst_8 [0] : vector<32x128xf32> to vector<128xf32>
    %11 = vector.shape_cast %10 : vector<128xf32> to vector<1x128xf32>
    %12 = vector.shape_cast %8 : vector<1x128xf32> to vector<1x128xf32>
    %13 = vector.broadcast %12 : vector<1x128xf32> to vector<8x128xf32>
    %c0_9 = arith.constant 0 : index
    %c0_10 = arith.constant 0 : index
    %14 = vector.load %arg5[%c0_9, %c0_10] : memref<8x128xf32, #tpu.memory_space<vmem>>, vector<8x128xf32>
    tpu.vector_store %arg5[%c0_9, %c0_10], %13 {strides = array<i32>} : memref<8x128xf32, #tpu.memory_space<vmem>>, vector<8x128xf32>,
    %15 = vector.shape_cast %11 : vector<1x128xf32> to vector<1x128xf32>
    %16 = vector.broadcast %15 : vector<1x128xf32> to vector<8x128xf32>
    %c0_11 = arith.constant 0 : index
    %c0_12 = arith.constant 0 : index
    %17 = vector.load %arg6[%c0_11, %c0_12] : memref<8x128xf32, #tpu.memory_space<vmem>>, vector<8x128xf32>
    tpu.vector_store %arg6[%c0_11, %c0_12], %16 {strides = array<i32>} : memref<8x128xf32, #tpu.memory_space<vmem>>, vector<8x128xf32>,
    return
  }
  func.func @transform_0(%arg0: i32) -> (i32, i32) {
    %c0_i32 = arith.constant 0 : i32
    %c0_i32_0 = arith.constant 0 : i32
    return %arg0, %c0_i32 : i32, i32
  }
  func.func @transform_1(%arg0: i32) -> (i32, i32) {
    %c0_i32 = arith.constant 0 : i32
    %c0_i32_0 = arith.constant 0 : i32
    %c0_i32_1 = arith.constant 0 : i32
    return %c0_i32, %c0_i32_0 : i32, i32
  }
  func.func @transform_2(%arg0: i32) -> (i32, i32) {
    %c0_i32 = arith.constant 0 : i32
    %c0_i32_0 = arith.constant 0 : i32
    %c0_i32_1 = arith.constant 0 : i32
    return %c0_i32, %c0_i32_0 : i32, i32
  }
  func.func @transform_3(%arg0: i32) -> (i32, i32) {
    %c0_i32 = arith.constant 0 : i32
    %c0_i32_0 = arith.constant 0 : i32
    return %arg0, %c0_i32 : i32, i32
  }
  func.func @transform_4(%arg0: i32) -> (i32, i32) {
    %c0_i32 = arith.constant 0 : i32
    %c0_i32_0 = arith.constant 0 : i32
    return %arg0, %c0_i32 : i32, i32
  }
  func.func @transform_5(%arg0: i32) -> (i32, i32) {
    %c0_i32 = arith.constant 0 : i32
    %c0_i32_0 = arith.constant 0 : i32
    return %arg0, %c0_i32 : i32, i32
  }
}

module attributes {stable_mosaic.version = 11 : i64} {
  func.func @_affine_relu_kernel(%arg0: i32, %arg1: memref<32x128xf32, #tpu.memory_space<vmem>>, %arg2: memref<1x128xf32, #tpu.memory_space<vmem>>, %arg3: memref<1x128xf32, #tpu.memory_space<vmem>>, %arg4: memref<32x128xf32, #tpu.memory_space<vmem>>) attributes {dimension_semantics = [#tpu.dimension_semantics<parallel>], iteration_bounds = array<i64: 1>, scalar_prefetch = 0 : i64, scratch_operands = 0 : i64, tpu.core_type = #tpu.core_type<tc>, window_params = [{transform_indices = @transform_0, window_bounds = array<i64: 32, 128>}, {pipeline_mode = #tpu.pipeline_mode<synchronous>, transform_indices = @transform_1, window_bounds = array<i64: 1, 128>}, {pipeline_mode = #tpu.pipeline_mode<synchronous>, transform_indices = @transform_2, window_bounds = array<i64: 1, 128>}, {transform_indices = @transform_3, window_bounds = array<i64: 32, 128>}]} {
    %c0 = arith.constant 0 : index
    %c0_0 = arith.constant 0 : index
    %0 = vector.load %arg1[%c0, %c0_0] : memref<32x128xf32, #tpu.memory_space<vmem>>, vector<32x128xf32>
    %c0_1 = arith.constant 0 : index
    %c0_2 = arith.constant 0 : index
    %1 = vector.load %arg2[%c0_1, %c0_2] : memref<1x128xf32, #tpu.memory_space<vmem>>, vector<1x128xf32>
    %2 = vector.broadcast %1 : vector<1x128xf32> to vector<32x128xf32>
    %3 = arith.mulf %0, %2 : vector<32x128xf32>
    %c0_3 = arith.constant 0 : index
    %c0_4 = arith.constant 0 : index
    %4 = vector.load %arg3[%c0_3, %c0_4] : memref<1x128xf32, #tpu.memory_space<vmem>>, vector<1x128xf32>
    %5 = vector.broadcast %4 : vector<1x128xf32> to vector<32x128xf32>
    %6 = arith.addf %3, %5 : vector<32x128xf32>
    %cst = arith.constant 0.000000e+00 : f32
    %7 = vector.broadcast %cst : f32 to vector<32x128xf32>
    %8 = arith.maximumf %6, %7 : vector<32x128xf32>
    %c0_5 = arith.constant 0 : index
    %c0_6 = arith.constant 0 : index
    %9 = vector.load %arg4[%c0_5, %c0_6] : memref<32x128xf32, #tpu.memory_space<vmem>>, vector<32x128xf32>
    tpu.vector_store %arg4[%c0_5, %c0_6], %8 {strides = array<i32>} : memref<32x128xf32, #tpu.memory_space<vmem>>, vector<32x128xf32>,
    return
  }
  func.func @transform_0(%arg0: i32) -> (i32, i32) {
    %c0_i32 = arith.constant 0 : i32
    %c0_i32_0 = arith.constant 0 : i32
    return %arg0, %c0_i32 : i32, i32
  }
  func.func @transform_1(%arg0: i32) -> (i32, i32) {
    %c0_i32 = arith.constant 0 : i32
    %c0_i32_0 = arith.constant 0 : i32
    %c0_i32_1 = arith.constant 0 : i32
    return %c0_i32, %c0_i32_0 : i32, i32
  }
  func.func @transform_2(%arg0: i32) -> (i32, i32) {
    %c0_i32 = arith.constant 0 : i32
    %c0_i32_0 = arith.constant 0 : i32
    %c0_i32_1 = arith.constant 0 : i32
    return %c0_i32, %c0_i32_0 : i32, i32
  }
  func.func @transform_3(%arg0: i32) -> (i32, i32) {
    %c0_i32 = arith.constant 0 : i32
    %c0_i32_0 = arith.constant 0 : i32
    return %arg0, %c0_i32 : i32, i32
  }
}

module attributes {stable_mosaic.version = 11 : i64} {
  func.func @_matmul_stats_kernel(%arg0: i32, %arg1: memref<16x256xbf16, #tpu.memory_space<vmem>>, %arg2: memref<256x128xbf16, #tpu.memory_space<vmem>>, %arg3: memref<1x128xf32, #tpu.memory_space<vmem>>, %arg4: memref<16x128xf32, #tpu.memory_space<vmem>>, %arg5: memref<8x128xf32, #tpu.memory_space<vmem>>, %arg6: memref<8x128xf32, #tpu.memory_space<vmem>>) attributes {dimension_semantics = [#tpu.dimension_semantics<parallel>], iteration_bounds = array<i64: 1>, scalar_prefetch = 0 : i64, scratch_operands = 0 : i64, tpu.core_type = #tpu.core_type<tc>, window_params = [{transform_indices = @transform_0, window_bounds = array<i64: 16, 256>}, {pipeline_mode = #tpu.pipeline_mode<synchronous>, transform_indices = @transform_1, window_bounds = array<i64: 256, 128>}, {pipeline_mode = #tpu.pipeline_mode<synchronous>, transform_indices = @transform_2, window_bounds = array<i64: 1, 128>}, {transform_indices = @transform_3, window_bounds = array<i64: 16, 128>}, {transform_indices = @transform_4, window_bounds = array<i64: 8, 128>}, {transform_indices = @transform_5, window_bounds = array<i64: 8, 128>}]} {
    %c0 = arith.constant 0 : index
    %c0_0 = arith.constant 0 : index
    %0 = vector.load %arg1[%c0, %c0_0] : memref<16x256xbf16, #tpu.memory_space<vmem>>, vector<16x256xbf16>
    %c0_1 = arith.constant 0 : index
    %c0_2 = arith.constant 0 : index
    %1 = vector.load %arg2[%c0_1, %c0_2] : memref<256x128xbf16, #tpu.memory_space<vmem>>, vector<256x128xbf16>
    %cst = arith.constant dense<0.000000e+00> : vector<16x128xf32>
    %2 = tpu.matmul %0, %1, %cst {dimension_numbers = #tpu.dot_dimension_numbers<[1], [0], [0], [1], [0, 0, 1, 1], [], []>} : vector<16x256xbf16>, vector<256x128xbf16>, vector<16x128xf32> -> vector<16x128xf32>
    %c0_3 = arith.constant 0 : index
    %c0_4 = arith.constant 0 : index
    %3 = vector.load %arg3[%c0_3, %c0_4] : memref<1x128xf32, #tpu.memory_space<vmem>>, vector<1x128xf32>
    %4 = vector.broadcast %3 : vector<1x128xf32> to vector<16x128xf32>
    %5 = arith.addf %2, %4 : vector<16x128xf32>
    %c0_5 = arith.constant 0 : index
    %c0_6 = arith.constant 0 : index
    %6 = vector.load %arg4[%c0_5, %c0_6] : memref<16x128xf32, #tpu.memory_space<vmem>>, vector<16x128xf32>
    tpu.vector_store %arg4[%c0_5, %c0_6], %5 {strides = array<i32>} : memref<16x128xf32, #tpu.memory_space<vmem>>, vector<16x128xf32>,
    %cst_7 = arith.constant dense<0.000000e+00> : vector<128xf32>
    %7 = vector.multi_reduction <add>, %5, %cst_7 [0] : vector<16x128xf32> to vector<128xf32>
    %8 = vector.shape_cast %7 : vector<128xf32> to vector<1x128xf32>
    %9 = arith.mulf %5, %5 : vector<16x128xf32>
    %cst_8 = arith.constant dense<0.000000e+00> : vector<128xf32>
    %10 = vector.multi_reduction <add>, %9, %cst_8 [0] : vector<16x128xf32> to vector<128xf32>
    %11 = vector.shape_cast %10 : vector<128xf32> to vector<1x128xf32>
    %12 = vector.shape_cast %8 : vector<1x128xf32> to vector<1x128xf32>
    %13 = vector.broadcast %12 : vector<1x128xf32> to vector<8x128xf32>
    %c0_9 = arith.constant 0 : index
    %c0_10 = arith.constant 0 : index
    %14 = vector.load %arg5[%c0_9, %c0_10] : memref<8x128xf32, #tpu.memory_space<vmem>>, vector<8x128xf32>
    tpu.vector_store %arg5[%c0_9, %c0_10], %13 {strides = array<i32>} : memref<8x128xf32, #tpu.memory_space<vmem>>, vector<8x128xf32>,
    %15 = vector.shape_cast %11 : vector<1x128xf32> to vector<1x128xf32>
    %16 = vector.broadcast %15 : vector<1x128xf32> to vector<8x128xf32>
    %c0_11 = arith.constant 0 : index
    %c0_12 = arith.constant 0 : index
    %17 = vector.load %arg6[%c0_11, %c0_12] : memref<8x128xf32, #tpu.memory_space<vmem>>, vector<8x128xf32>
    tpu.vector_store %arg6[%c0_11, %c0_12], %16 {strides = array<i32>} : memref<8x128xf32, #tpu.memory_space<vmem>>, vector<8x128xf32>,
    return
  }
  func.func @transform_0(%arg0: i32) -> (i32, i32) {
    %c0_i32 = arith.constant 0 : i32
    %c0_i32_0 = arith.constant 0 : i32
    return %arg0, %c0_i32 : i32, i32
  }
  func.func @transform_1(%arg0: i32) -> (i32, i32) {
    %c0_i32 = arith.constant 0 : i32
    %c0_i32_0 = arith.constant 0 : i32
    %c0_i32_1 = arith.constant 0 : i32
    return %c0_i32, %c0_i32_0 : i32, i32
  }
  func.func @transform_2(%arg0: i32) -> (i32, i32) {
    %c0_i32 = arith.constant 0 : i32
    %c0_i32_0 = arith.constant 0 : i32
    %c0_i32_1 = arith.constant 0 : i32
    return %c0_i32, %c0_i32_0 : i32, i32
  }
  func.func @transform_3(%arg0: i32) -> (i32, i32) {
    %c0_i32 = arith.constant 0 : i32
    %c0_i32_0 = arith.constant 0 : i32
    return %arg0, %c0_i32 : i32, i32
  }
  func.func @transform_4(%arg0: i32) -> (i32, i32) {
    %c0_i32 = arith.constant 0 : i32
    %c0_i32_0 = arith.constant 0 : i32
    return %arg0, %c0_i32 : i32, i32
  }
  func.func @transform_5(%arg0: i32) -> (i32, i32) {
    %c0_i32 = arith.constant 0 : i32
    %c0_i32_0 = arith.constant 0 : i32
    return %arg0, %c0_i32 : i32, i32
  }
}

module attributes {stable_mosaic.version = 11 : i64} {
  func.func @_affine_relu_kernel(%arg0: i32, %arg1: memref<16x128xf32, #tpu.memory_space<vmem>>, %arg2: memref<1x128xf32, #tpu.memory_space<vmem>>, %arg3: memref<1x128xf32, #tpu.memory_space<vmem>>, %arg4: memref<16x128xf32, #tpu.memory_space<vmem>>) attributes {dimension_semantics = [#tpu.dimension_semantics<parallel>], iteration_bounds = array<i64: 1>, scalar_prefetch = 0 : i64, scratch_operands = 0 : i64, tpu.core_type = #tpu.core_type<tc>, window_params = [{transform_indices = @transform_0, window_bounds = array<i64: 16, 128>}, {pipeline_mode = #tpu.pipeline_mode<synchronous>, transform_indices = @transform_1, window_bounds = array<i64: 1, 128>}, {pipeline_mode = #tpu.pipeline_mode<synchronous>, transform_indices = @transform_2, window_bounds = array<i64: 1, 128>}, {transform_indices = @transform_3, window_bounds = array<i64: 16, 128>}]} {
    %c0 = arith.constant 0 : index
    %c0_0 = arith.constant 0 : index
    %0 = vector.load %arg1[%c0, %c0_0] : memref<16x128xf32, #tpu.memory_space<vmem>>, vector<16x128xf32>
    %c0_1 = arith.constant 0 : index
    %c0_2 = arith.constant 0 : index
    %1 = vector.load %arg2[%c0_1, %c0_2] : memref<1x128xf32, #tpu.memory_space<vmem>>, vector<1x128xf32>
    %2 = vector.broadcast %1 : vector<1x128xf32> to vector<16x128xf32>
    %3 = arith.mulf %0, %2 : vector<16x128xf32>
    %c0_3 = arith.constant 0 : index
    %c0_4 = arith.constant 0 : index
    %4 = vector.load %arg3[%c0_3, %c0_4] : memref<1x128xf32, #tpu.memory_space<vmem>>, vector<1x128xf32>
    %5 = vector.broadcast %4 : vector<1x128xf32> to vector<16x128xf32>
    %6 = arith.addf %3, %5 : vector<16x128xf32>
    %cst = arith.constant 0.000000e+00 : f32
    %7 = vector.broadcast %cst : f32 to vector<16x128xf32>
    %8 = arith.maximumf %6, %7 : vector<16x128xf32>
    %c0_5 = arith.constant 0 : index
    %c0_6 = arith.constant 0 : index
    %9 = vector.load %arg4[%c0_5, %c0_6] : memref<16x128xf32, #tpu.memory_space<vmem>>, vector<16x128xf32>
    tpu.vector_store %arg4[%c0_5, %c0_6], %8 {strides = array<i32>} : memref<16x128xf32, #tpu.memory_space<vmem>>, vector<16x128xf32>,
    return
  }
  func.func @transform_0(%arg0: i32) -> (i32, i32) {
    %c0_i32 = arith.constant 0 : i32
    %c0_i32_0 = arith.constant 0 : i32
    return %arg0, %c0_i32 : i32, i32
  }
  func.func @transform_1(%arg0: i32) -> (i32, i32) {
    %c0_i32 = arith.constant 0 : i32
    %c0_i32_0 = arith.constant 0 : i32
    %c0_i32_1 = arith.constant 0 : i32
    return %c0_i32, %c0_i32_0 : i32, i32
  }
  func.func @transform_2(%arg0: i32) -> (i32, i32) {
    %c0_i32 = arith.constant 0 : i32
    %c0_i32_0 = arith.constant 0 : i32
    %c0_i32_1 = arith.constant 0 : i32
    return %c0_i32, %c0_i32_0 : i32, i32
  }
  func.func @transform_3(%arg0: i32) -> (i32, i32) {
    %c0_i32 = arith.constant 0 : i32
    %c0_i32_0 = arith.constant 0 : i32
    return %arg0, %c0_i32 : i32, i32
  }
}

module attributes {stable_mosaic.version = 11 : i64} {
  func.func @_matmul_stats_kernel(%arg0: i32, %arg1: memref<16x80xbf16, #tpu.memory_space<vmem>>, %arg2: memref<80x128xbf16, #tpu.memory_space<vmem>>, %arg3: memref<1x128xf32, #tpu.memory_space<vmem>>, %arg4: memref<16x128xf32, #tpu.memory_space<vmem>>, %arg5: memref<8x128xf32, #tpu.memory_space<vmem>>, %arg6: memref<8x128xf32, #tpu.memory_space<vmem>>) attributes {dimension_semantics = [#tpu.dimension_semantics<parallel>], iteration_bounds = array<i64: 1>, scalar_prefetch = 0 : i64, scratch_operands = 0 : i64, tpu.core_type = #tpu.core_type<tc>, window_params = [{transform_indices = @transform_0, window_bounds = array<i64: 16, 80>}, {pipeline_mode = #tpu.pipeline_mode<synchronous>, transform_indices = @transform_1, window_bounds = array<i64: 80, 128>}, {pipeline_mode = #tpu.pipeline_mode<synchronous>, transform_indices = @transform_2, window_bounds = array<i64: 1, 128>}, {transform_indices = @transform_3, window_bounds = array<i64: 16, 128>}, {transform_indices = @transform_4, window_bounds = array<i64: 8, 128>}, {transform_indices = @transform_5, window_bounds = array<i64: 8, 128>}]} {
    %c0 = arith.constant 0 : index
    %c0_0 = arith.constant 0 : index
    %0 = vector.load %arg1[%c0, %c0_0] : memref<16x80xbf16, #tpu.memory_space<vmem>>, vector<16x80xbf16>
    %c0_1 = arith.constant 0 : index
    %c0_2 = arith.constant 0 : index
    %1 = vector.load %arg2[%c0_1, %c0_2] : memref<80x128xbf16, #tpu.memory_space<vmem>>, vector<80x128xbf16>
    %cst = arith.constant dense<0.000000e+00> : vector<16x128xf32>
    %2 = tpu.matmul %0, %1, %cst {dimension_numbers = #tpu.dot_dimension_numbers<[1], [0], [0], [1], [0, 0, 1, 1], [], []>} : vector<16x80xbf16>, vector<80x128xbf16>, vector<16x128xf32> -> vector<16x128xf32>
    %c0_3 = arith.constant 0 : index
    %c0_4 = arith.constant 0 : index
    %3 = vector.load %arg3[%c0_3, %c0_4] : memref<1x128xf32, #tpu.memory_space<vmem>>, vector<1x128xf32>
    %4 = vector.broadcast %3 : vector<1x128xf32> to vector<16x128xf32>
    %5 = arith.addf %2, %4 : vector<16x128xf32>
    %c0_5 = arith.constant 0 : index
    %c0_6 = arith.constant 0 : index
    %6 = vector.load %arg4[%c0_5, %c0_6] : memref<16x128xf32, #tpu.memory_space<vmem>>, vector<16x128xf32>
    tpu.vector_store %arg4[%c0_5, %c0_6], %5 {strides = array<i32>} : memref<16x128xf32, #tpu.memory_space<vmem>>, vector<16x128xf32>,
    %cst_7 = arith.constant dense<0.000000e+00> : vector<128xf32>
    %7 = vector.multi_reduction <add>, %5, %cst_7 [0] : vector<16x128xf32> to vector<128xf32>
    %8 = vector.shape_cast %7 : vector<128xf32> to vector<1x128xf32>
    %9 = arith.mulf %5, %5 : vector<16x128xf32>
    %cst_8 = arith.constant dense<0.000000e+00> : vector<128xf32>
    %10 = vector.multi_reduction <add>, %9, %cst_8 [0] : vector<16x128xf32> to vector<128xf32>
    %11 = vector.shape_cast %10 : vector<128xf32> to vector<1x128xf32>
    %12 = vector.shape_cast %8 : vector<1x128xf32> to vector<1x128xf32>
    %13 = vector.broadcast %12 : vector<1x128xf32> to vector<8x128xf32>
    %c0_9 = arith.constant 0 : index
    %c0_10 = arith.constant 0 : index
    %14 = vector.load %arg5[%c0_9, %c0_10] : memref<8x128xf32, #tpu.memory_space<vmem>>, vector<8x128xf32>
    tpu.vector_store %arg5[%c0_9, %c0_10], %13 {strides = array<i32>} : memref<8x128xf32, #tpu.memory_space<vmem>>, vector<8x128xf32>,
    %15 = vector.shape_cast %11 : vector<1x128xf32> to vector<1x128xf32>
    %16 = vector.broadcast %15 : vector<1x128xf32> to vector<8x128xf32>
    %c0_11 = arith.constant 0 : index
    %c0_12 = arith.constant 0 : index
    %17 = vector.load %arg6[%c0_11, %c0_12] : memref<8x128xf32, #tpu.memory_space<vmem>>, vector<8x128xf32>
    tpu.vector_store %arg6[%c0_11, %c0_12], %16 {strides = array<i32>} : memref<8x128xf32, #tpu.memory_space<vmem>>, vector<8x128xf32>,
    return
  }
  func.func @transform_0(%arg0: i32) -> (i32, i32) {
    %c0_i32 = arith.constant 0 : i32
    %c0_i32_0 = arith.constant 0 : i32
    return %arg0, %c0_i32 : i32, i32
  }
  func.func @transform_1(%arg0: i32) -> (i32, i32) {
    %c0_i32 = arith.constant 0 : i32
    %c0_i32_0 = arith.constant 0 : i32
    %c0_i32_1 = arith.constant 0 : i32
    return %c0_i32, %c0_i32_0 : i32, i32
  }
  func.func @transform_2(%arg0: i32) -> (i32, i32) {
    %c0_i32 = arith.constant 0 : i32
    %c0_i32_0 = arith.constant 0 : i32
    %c0_i32_1 = arith.constant 0 : i32
    return %c0_i32, %c0_i32_0 : i32, i32
  }
  func.func @transform_3(%arg0: i32) -> (i32, i32) {
    %c0_i32 = arith.constant 0 : i32
    %c0_i32_0 = arith.constant 0 : i32
    return %arg0, %c0_i32 : i32, i32
  }
  func.func @transform_4(%arg0: i32) -> (i32, i32) {
    %c0_i32 = arith.constant 0 : i32
    %c0_i32_0 = arith.constant 0 : i32
    return %arg0, %c0_i32 : i32, i32
  }
  func.func @transform_5(%arg0: i32) -> (i32, i32) {
    %c0_i32 = arith.constant 0 : i32
    %c0_i32_0 = arith.constant 0 : i32
    return %arg0, %c0_i32 : i32, i32
  }
}

module attributes {stable_mosaic.version = 11 : i64} {
  func.func @_affine_relu_kernel(%arg0: i32, %arg1: memref<64x128xf32, #tpu.memory_space<vmem>>, %arg2: memref<1x128xf32, #tpu.memory_space<vmem>>, %arg3: memref<1x128xf32, #tpu.memory_space<vmem>>, %arg4: memref<64x128xf32, #tpu.memory_space<vmem>>) attributes {dimension_semantics = [#tpu.dimension_semantics<parallel>], iteration_bounds = array<i64: 1>, scalar_prefetch = 0 : i64, scratch_operands = 0 : i64, tpu.core_type = #tpu.core_type<tc>, window_params = [{transform_indices = @transform_0, window_bounds = array<i64: 64, 128>}, {pipeline_mode = #tpu.pipeline_mode<synchronous>, transform_indices = @transform_1, window_bounds = array<i64: 1, 128>}, {pipeline_mode = #tpu.pipeline_mode<synchronous>, transform_indices = @transform_2, window_bounds = array<i64: 1, 128>}, {transform_indices = @transform_3, window_bounds = array<i64: 64, 128>}]} {
    %c0 = arith.constant 0 : index
    %c0_0 = arith.constant 0 : index
    %0 = vector.load %arg1[%c0, %c0_0] : memref<64x128xf32, #tpu.memory_space<vmem>>, vector<64x128xf32>
    %c0_1 = arith.constant 0 : index
    %c0_2 = arith.constant 0 : index
    %1 = vector.load %arg2[%c0_1, %c0_2] : memref<1x128xf32, #tpu.memory_space<vmem>>, vector<1x128xf32>
    %2 = vector.broadcast %1 : vector<1x128xf32> to vector<64x128xf32>
    %3 = arith.mulf %0, %2 : vector<64x128xf32>
    %c0_3 = arith.constant 0 : index
    %c0_4 = arith.constant 0 : index
    %4 = vector.load %arg3[%c0_3, %c0_4] : memref<1x128xf32, #tpu.memory_space<vmem>>, vector<1x128xf32>
    %5 = vector.broadcast %4 : vector<1x128xf32> to vector<64x128xf32>
    %6 = arith.addf %3, %5 : vector<64x128xf32>
    %cst = arith.constant 0.000000e+00 : f32
    %7 = vector.broadcast %cst : f32 to vector<64x128xf32>
    %8 = arith.maximumf %6, %7 : vector<64x128xf32>
    %c0_5 = arith.constant 0 : index
    %c0_6 = arith.constant 0 : index
    %9 = vector.load %arg4[%c0_5, %c0_6] : memref<64x128xf32, #tpu.memory_space<vmem>>, vector<64x128xf32>
    tpu.vector_store %arg4[%c0_5, %c0_6], %8 {strides = array<i32>} : memref<64x128xf32, #tpu.memory_space<vmem>>, vector<64x128xf32>,
    return
  }
  func.func @transform_0(%arg0: i32) -> (i32, i32) {
    %c0_i32 = arith.constant 0 : i32
    %c0_i32_0 = arith.constant 0 : i32
    return %arg0, %c0_i32 : i32, i32
  }
  func.func @transform_1(%arg0: i32) -> (i32, i32) {
    %c0_i32 = arith.constant 0 : i32
    %c0_i32_0 = arith.constant 0 : i32
    %c0_i32_1 = arith.constant 0 : i32
    return %c0_i32, %c0_i32_0 : i32, i32
  }
  func.func @transform_2(%arg0: i32) -> (i32, i32) {
    %c0_i32 = arith.constant 0 : i32
    %c0_i32_0 = arith.constant 0 : i32
    %c0_i32_1 = arith.constant 0 : i32
    return %c0_i32, %c0_i32_0 : i32, i32
  }
  func.func @transform_3(%arg0: i32) -> (i32, i32) {
    %c0_i32 = arith.constant 0 : i32
    %c0_i32_0 = arith.constant 0 : i32
    return %arg0, %c0_i32 : i32, i32
  }
}

module attributes {stable_mosaic.version = 11 : i64} {
  func.func @_matmul_stats_kernel(%arg0: i32, %arg1: memref<64x64xbf16, #tpu.memory_space<vmem>>, %arg2: memref<64x128xbf16, #tpu.memory_space<vmem>>, %arg3: memref<1x128xf32, #tpu.memory_space<vmem>>, %arg4: memref<64x128xf32, #tpu.memory_space<vmem>>, %arg5: memref<8x128xf32, #tpu.memory_space<vmem>>, %arg6: memref<8x128xf32, #tpu.memory_space<vmem>>) attributes {dimension_semantics = [#tpu.dimension_semantics<parallel>], iteration_bounds = array<i64: 1>, scalar_prefetch = 0 : i64, scratch_operands = 0 : i64, tpu.core_type = #tpu.core_type<tc>, window_params = [{transform_indices = @transform_0, window_bounds = array<i64: 64, 64>}, {pipeline_mode = #tpu.pipeline_mode<synchronous>, transform_indices = @transform_1, window_bounds = array<i64: 64, 128>}, {pipeline_mode = #tpu.pipeline_mode<synchronous>, transform_indices = @transform_2, window_bounds = array<i64: 1, 128>}, {transform_indices = @transform_3, window_bounds = array<i64: 64, 128>}, {transform_indices = @transform_4, window_bounds = array<i64: 8, 128>}, {transform_indices = @transform_5, window_bounds = array<i64: 8, 128>}]} {
    %c0 = arith.constant 0 : index
    %c0_0 = arith.constant 0 : index
    %0 = vector.load %arg1[%c0, %c0_0] : memref<64x64xbf16, #tpu.memory_space<vmem>>, vector<64x64xbf16>
    %c0_1 = arith.constant 0 : index
    %c0_2 = arith.constant 0 : index
    %1 = vector.load %arg2[%c0_1, %c0_2] : memref<64x128xbf16, #tpu.memory_space<vmem>>, vector<64x128xbf16>
    %cst = arith.constant dense<0.000000e+00> : vector<64x128xf32>
    %2 = tpu.matmul %0, %1, %cst {dimension_numbers = #tpu.dot_dimension_numbers<[1], [0], [0], [1], [0, 0, 1, 1], [], []>} : vector<64x64xbf16>, vector<64x128xbf16>, vector<64x128xf32> -> vector<64x128xf32>
    %c0_3 = arith.constant 0 : index
    %c0_4 = arith.constant 0 : index
    %3 = vector.load %arg3[%c0_3, %c0_4] : memref<1x128xf32, #tpu.memory_space<vmem>>, vector<1x128xf32>
    %4 = vector.broadcast %3 : vector<1x128xf32> to vector<64x128xf32>
    %5 = arith.addf %2, %4 : vector<64x128xf32>
    %c0_5 = arith.constant 0 : index
    %c0_6 = arith.constant 0 : index
    %6 = vector.load %arg4[%c0_5, %c0_6] : memref<64x128xf32, #tpu.memory_space<vmem>>, vector<64x128xf32>
    tpu.vector_store %arg4[%c0_5, %c0_6], %5 {strides = array<i32>} : memref<64x128xf32, #tpu.memory_space<vmem>>, vector<64x128xf32>,
    %cst_7 = arith.constant dense<0.000000e+00> : vector<128xf32>
    %7 = vector.multi_reduction <add>, %5, %cst_7 [0] : vector<64x128xf32> to vector<128xf32>
    %8 = vector.shape_cast %7 : vector<128xf32> to vector<1x128xf32>
    %9 = arith.mulf %5, %5 : vector<64x128xf32>
    %cst_8 = arith.constant dense<0.000000e+00> : vector<128xf32>
    %10 = vector.multi_reduction <add>, %9, %cst_8 [0] : vector<64x128xf32> to vector<128xf32>
    %11 = vector.shape_cast %10 : vector<128xf32> to vector<1x128xf32>
    %12 = vector.shape_cast %8 : vector<1x128xf32> to vector<1x128xf32>
    %13 = vector.broadcast %12 : vector<1x128xf32> to vector<8x128xf32>
    %c0_9 = arith.constant 0 : index
    %c0_10 = arith.constant 0 : index
    %14 = vector.load %arg5[%c0_9, %c0_10] : memref<8x128xf32, #tpu.memory_space<vmem>>, vector<8x128xf32>
    tpu.vector_store %arg5[%c0_9, %c0_10], %13 {strides = array<i32>} : memref<8x128xf32, #tpu.memory_space<vmem>>, vector<8x128xf32>,
    %15 = vector.shape_cast %11 : vector<1x128xf32> to vector<1x128xf32>
    %16 = vector.broadcast %15 : vector<1x128xf32> to vector<8x128xf32>
    %c0_11 = arith.constant 0 : index
    %c0_12 = arith.constant 0 : index
    %17 = vector.load %arg6[%c0_11, %c0_12] : memref<8x128xf32, #tpu.memory_space<vmem>>, vector<8x128xf32>
    tpu.vector_store %arg6[%c0_11, %c0_12], %16 {strides = array<i32>} : memref<8x128xf32, #tpu.memory_space<vmem>>, vector<8x128xf32>,
    return
  }
  func.func @transform_0(%arg0: i32) -> (i32, i32) {
    %c0_i32 = arith.constant 0 : i32
    %c0_i32_0 = arith.constant 0 : i32
    return %arg0, %c0_i32 : i32, i32
  }
  func.func @transform_1(%arg0: i32) -> (i32, i32) {
    %c0_i32 = arith.constant 0 : i32
    %c0_i32_0 = arith.constant 0 : i32
    %c0_i32_1 = arith.constant 0 : i32
    return %c0_i32, %c0_i32_0 : i32, i32
  }
  func.func @transform_2(%arg0: i32) -> (i32, i32) {
    %c0_i32 = arith.constant 0 : i32
    %c0_i32_0 = arith.constant 0 : i32
    %c0_i32_1 = arith.constant 0 : i32
    return %c0_i32, %c0_i32_0 : i32, i32
  }
  func.func @transform_3(%arg0: i32) -> (i32, i32) {
    %c0_i32 = arith.constant 0 : i32
    %c0_i32_0 = arith.constant 0 : i32
    return %arg0, %c0_i32 : i32, i32
  }
  func.func @transform_4(%arg0: i32) -> (i32, i32) {
    %c0_i32 = arith.constant 0 : i32
    %c0_i32_0 = arith.constant 0 : i32
    return %arg0, %c0_i32 : i32, i32
  }
  func.func @transform_5(%arg0: i32) -> (i32, i32) {
    %c0_i32 = arith.constant 0 : i32
    %c0_i32_0 = arith.constant 0 : i32
    return %arg0, %c0_i32 : i32, i32
  }
}

module attributes {stable_mosaic.version = 11 : i64} {
  func.func @_matmul_stats_kernel(%arg0: i32, %arg1: memref<256x48xbf16, #tpu.memory_space<vmem>>, %arg2: memref<48x128xbf16, #tpu.memory_space<vmem>>, %arg3: memref<1x128xf32, #tpu.memory_space<vmem>>, %arg4: memref<256x128xf32, #tpu.memory_space<vmem>>, %arg5: memref<8x128xf32, #tpu.memory_space<vmem>>, %arg6: memref<8x128xf32, #tpu.memory_space<vmem>>) attributes {dimension_semantics = [#tpu.dimension_semantics<parallel>], iteration_bounds = array<i64: 1>, scalar_prefetch = 0 : i64, scratch_operands = 0 : i64, tpu.core_type = #tpu.core_type<tc>, window_params = [{transform_indices = @transform_0, window_bounds = array<i64: 256, 48>}, {pipeline_mode = #tpu.pipeline_mode<synchronous>, transform_indices = @transform_1, window_bounds = array<i64: 48, 128>}, {pipeline_mode = #tpu.pipeline_mode<synchronous>, transform_indices = @transform_2, window_bounds = array<i64: 1, 128>}, {transform_indices = @transform_3, window_bounds = array<i64: 256, 128>}, {transform_indices = @transform_4, window_bounds = array<i64: 8, 128>}, {transform_indices = @transform_5, window_bounds = array<i64: 8, 128>}]} {
    %c0 = arith.constant 0 : index
    %c0_0 = arith.constant 0 : index
    %0 = vector.load %arg1[%c0, %c0_0] : memref<256x48xbf16, #tpu.memory_space<vmem>>, vector<256x48xbf16>
    %c0_1 = arith.constant 0 : index
    %c0_2 = arith.constant 0 : index
    %1 = vector.load %arg2[%c0_1, %c0_2] : memref<48x128xbf16, #tpu.memory_space<vmem>>, vector<48x128xbf16>
    %cst = arith.constant dense<0.000000e+00> : vector<256x128xf32>
    %2 = tpu.matmul %0, %1, %cst {dimension_numbers = #tpu.dot_dimension_numbers<[1], [0], [0], [1], [0, 0, 1, 1], [], []>} : vector<256x48xbf16>, vector<48x128xbf16>, vector<256x128xf32> -> vector<256x128xf32>
    %c0_3 = arith.constant 0 : index
    %c0_4 = arith.constant 0 : index
    %3 = vector.load %arg3[%c0_3, %c0_4] : memref<1x128xf32, #tpu.memory_space<vmem>>, vector<1x128xf32>
    %4 = vector.broadcast %3 : vector<1x128xf32> to vector<256x128xf32>
    %5 = arith.addf %2, %4 : vector<256x128xf32>
    %c0_5 = arith.constant 0 : index
    %c0_6 = arith.constant 0 : index
    %6 = vector.load %arg4[%c0_5, %c0_6] : memref<256x128xf32, #tpu.memory_space<vmem>>, vector<256x128xf32>
    tpu.vector_store %arg4[%c0_5, %c0_6], %5 {strides = array<i32>} : memref<256x128xf32, #tpu.memory_space<vmem>>, vector<256x128xf32>,
    %cst_7 = arith.constant dense<0.000000e+00> : vector<128xf32>
    %7 = vector.multi_reduction <add>, %5, %cst_7 [0] : vector<256x128xf32> to vector<128xf32>
    %8 = vector.shape_cast %7 : vector<128xf32> to vector<1x128xf32>
    %9 = arith.mulf %5, %5 : vector<256x128xf32>
    %cst_8 = arith.constant dense<0.000000e+00> : vector<128xf32>
    %10 = vector.multi_reduction <add>, %9, %cst_8 [0] : vector<256x128xf32> to vector<128xf32>
    %11 = vector.shape_cast %10 : vector<128xf32> to vector<1x128xf32>
    %12 = vector.shape_cast %8 : vector<1x128xf32> to vector<1x128xf32>
    %13 = vector.broadcast %12 : vector<1x128xf32> to vector<8x128xf32>
    %c0_9 = arith.constant 0 : index
    %c0_10 = arith.constant 0 : index
    %14 = vector.load %arg5[%c0_9, %c0_10] : memref<8x128xf32, #tpu.memory_space<vmem>>, vector<8x128xf32>
    tpu.vector_store %arg5[%c0_9, %c0_10], %13 {strides = array<i32>} : memref<8x128xf32, #tpu.memory_space<vmem>>, vector<8x128xf32>,
    %15 = vector.shape_cast %11 : vector<1x128xf32> to vector<1x128xf32>
    %16 = vector.broadcast %15 : vector<1x128xf32> to vector<8x128xf32>
    %c0_11 = arith.constant 0 : index
    %c0_12 = arith.constant 0 : index
    %17 = vector.load %arg6[%c0_11, %c0_12] : memref<8x128xf32, #tpu.memory_space<vmem>>, vector<8x128xf32>
    tpu.vector_store %arg6[%c0_11, %c0_12], %16 {strides = array<i32>} : memref<8x128xf32, #tpu.memory_space<vmem>>, vector<8x128xf32>,
    return
  }
  func.func @transform_0(%arg0: i32) -> (i32, i32) {
    %c0_i32 = arith.constant 0 : i32
    %c0_i32_0 = arith.constant 0 : i32
    return %arg0, %c0_i32 : i32, i32
  }
  func.func @transform_1(%arg0: i32) -> (i32, i32) {
    %c0_i32 = arith.constant 0 : i32
    %c0_i32_0 = arith.constant 0 : i32
    %c0_i32_1 = arith.constant 0 : i32
    return %c0_i32, %c0_i32_0 : i32, i32
  }
  func.func @transform_2(%arg0: i32) -> (i32, i32) {
    %c0_i32 = arith.constant 0 : i32
    %c0_i32_0 = arith.constant 0 : i32
    %c0_i32_1 = arith.constant 0 : i32
    return %c0_i32, %c0_i32_0 : i32, i32
  }
  func.func @transform_3(%arg0: i32) -> (i32, i32) {
    %c0_i32 = arith.constant 0 : i32
    %c0_i32_0 = arith.constant 0 : i32
    return %arg0, %c0_i32 : i32, i32
  }
  func.func @transform_4(%arg0: i32) -> (i32, i32) {
    %c0_i32 = arith.constant 0 : i32
    %c0_i32_0 = arith.constant 0 : i32
    return %arg0, %c0_i32 : i32, i32
  }
  func.func @transform_5(%arg0: i32) -> (i32, i32) {
    %c0_i32 = arith.constant 0 : i32
    %c0_i32_0 = arith.constant 0 : i32
    return %arg0, %c0_i32 : i32, i32
  }
}

module attributes {stable_mosaic.version = 11 : i64} {
  func.func @_affine_relu_kernel(%arg0: i32, %arg1: memref<256x128xf32, #tpu.memory_space<vmem>>, %arg2: memref<1x128xf32, #tpu.memory_space<vmem>>, %arg3: memref<1x128xf32, #tpu.memory_space<vmem>>, %arg4: memref<256x128xf32, #tpu.memory_space<vmem>>) attributes {dimension_semantics = [#tpu.dimension_semantics<parallel>], iteration_bounds = array<i64: 1>, scalar_prefetch = 0 : i64, scratch_operands = 0 : i64, tpu.core_type = #tpu.core_type<tc>, window_params = [{transform_indices = @transform_0, window_bounds = array<i64: 256, 128>}, {pipeline_mode = #tpu.pipeline_mode<synchronous>, transform_indices = @transform_1, window_bounds = array<i64: 1, 128>}, {pipeline_mode = #tpu.pipeline_mode<synchronous>, transform_indices = @transform_2, window_bounds = array<i64: 1, 128>}, {transform_indices = @transform_3, window_bounds = array<i64: 256, 128>}]} {
    %c0 = arith.constant 0 : index
    %c0_0 = arith.constant 0 : index
    %0 = vector.load %arg1[%c0, %c0_0] : memref<256x128xf32, #tpu.memory_space<vmem>>, vector<256x128xf32>
    %c0_1 = arith.constant 0 : index
    %c0_2 = arith.constant 0 : index
    %1 = vector.load %arg2[%c0_1, %c0_2] : memref<1x128xf32, #tpu.memory_space<vmem>>, vector<1x128xf32>
    %2 = vector.broadcast %1 : vector<1x128xf32> to vector<256x128xf32>
    %3 = arith.mulf %0, %2 : vector<256x128xf32>
    %c0_3 = arith.constant 0 : index
    %c0_4 = arith.constant 0 : index
    %4 = vector.load %arg3[%c0_3, %c0_4] : memref<1x128xf32, #tpu.memory_space<vmem>>, vector<1x128xf32>
    %5 = vector.broadcast %4 : vector<1x128xf32> to vector<256x128xf32>
    %6 = arith.addf %3, %5 : vector<256x128xf32>
    %cst = arith.constant 0.000000e+00 : f32
    %7 = vector.broadcast %cst : f32 to vector<256x128xf32>
    %8 = arith.maximumf %6, %7 : vector<256x128xf32>
    %c0_5 = arith.constant 0 : index
    %c0_6 = arith.constant 0 : index
    %9 = vector.load %arg4[%c0_5, %c0_6] : memref<256x128xf32, #tpu.memory_space<vmem>>, vector<256x128xf32>
    tpu.vector_store %arg4[%c0_5, %c0_6], %8 {strides = array<i32>} : memref<256x128xf32, #tpu.memory_space<vmem>>, vector<256x128xf32>,
    return
  }
  func.func @transform_0(%arg0: i32) -> (i32, i32) {
    %c0_i32 = arith.constant 0 : i32
    %c0_i32_0 = arith.constant 0 : i32
    return %arg0, %c0_i32 : i32, i32
  }
  func.func @transform_1(%arg0: i32) -> (i32, i32) {
    %c0_i32 = arith.constant 0 : i32
    %c0_i32_0 = arith.constant 0 : i32
    %c0_i32_1 = arith.constant 0 : i32
    return %c0_i32, %c0_i32_0 : i32, i32
  }
  func.func @transform_2(%arg0: i32) -> (i32, i32) {
    %c0_i32 = arith.constant 0 : i32
    %c0_i32_0 = arith.constant 0 : i32
    %c0_i32_1 = arith.constant 0 : i32
    return %c0_i32, %c0_i32_0 : i32, i32
  }
  func.func @transform_3(%arg0: i32) -> (i32, i32) {
    %c0_i32 = arith.constant 0 : i32
    %c0_i32_0 = arith.constant 0 : i32
    return %arg0, %c0_i32 : i32, i32
  }
}

module attributes {stable_mosaic.version = 11 : i64} {
  func.func @_matmul_stats_kernel(%arg0: i32, %arg1: memref<512x32xbf16, #tpu.memory_space<vmem>>, %arg2: memref<32x128xbf16, #tpu.memory_space<vmem>>, %arg3: memref<1x128xf32, #tpu.memory_space<vmem>>, %arg4: memref<512x128xf32, #tpu.memory_space<vmem>>, %arg5: memref<8x128xf32, #tpu.memory_space<vmem>>, %arg6: memref<8x128xf32, #tpu.memory_space<vmem>>) attributes {dimension_semantics = [#tpu.dimension_semantics<parallel>], iteration_bounds = array<i64: 3>, scalar_prefetch = 0 : i64, scratch_operands = 0 : i64, tpu.core_type = #tpu.core_type<tc>, window_params = [{transform_indices = @transform_0, window_bounds = array<i64: 512, 32>}, {pipeline_mode = #tpu.pipeline_mode<synchronous>, transform_indices = @transform_1, window_bounds = array<i64: 32, 128>}, {pipeline_mode = #tpu.pipeline_mode<synchronous>, transform_indices = @transform_2, window_bounds = array<i64: 1, 128>}, {transform_indices = @transform_3, window_bounds = array<i64: 512, 128>}, {transform_indices = @transform_4, window_bounds = array<i64: 8, 128>}, {transform_indices = @transform_5, window_bounds = array<i64: 8, 128>}]} {
    %c0 = arith.constant 0 : index
    %c0_0 = arith.constant 0 : index
    %0 = vector.load %arg1[%c0, %c0_0] : memref<512x32xbf16, #tpu.memory_space<vmem>>, vector<512x32xbf16>
    %c0_1 = arith.constant 0 : index
    %c0_2 = arith.constant 0 : index
    %1 = vector.load %arg2[%c0_1, %c0_2] : memref<32x128xbf16, #tpu.memory_space<vmem>>, vector<32x128xbf16>
    %cst = arith.constant dense<0.000000e+00> : vector<512x128xf32>
    %2 = tpu.matmul %0, %1, %cst {dimension_numbers = #tpu.dot_dimension_numbers<[1], [0], [0], [1], [0, 0, 1, 1], [], []>} : vector<512x32xbf16>, vector<32x128xbf16>, vector<512x128xf32> -> vector<512x128xf32>
    %c0_3 = arith.constant 0 : index
    %c0_4 = arith.constant 0 : index
    %3 = vector.load %arg3[%c0_3, %c0_4] : memref<1x128xf32, #tpu.memory_space<vmem>>, vector<1x128xf32>
    %4 = vector.broadcast %3 : vector<1x128xf32> to vector<512x128xf32>
    %5 = arith.addf %2, %4 : vector<512x128xf32>
    %c0_5 = arith.constant 0 : index
    %c0_6 = arith.constant 0 : index
    %6 = vector.load %arg4[%c0_5, %c0_6] : memref<512x128xf32, #tpu.memory_space<vmem>>, vector<512x128xf32>
    tpu.vector_store %arg4[%c0_5, %c0_6], %5 {strides = array<i32>} : memref<512x128xf32, #tpu.memory_space<vmem>>, vector<512x128xf32>,
    %cst_7 = arith.constant dense<0.000000e+00> : vector<128xf32>
    %7 = vector.multi_reduction <add>, %5, %cst_7 [0] : vector<512x128xf32> to vector<128xf32>
    %8 = vector.shape_cast %7 : vector<128xf32> to vector<1x128xf32>
    %9 = arith.mulf %5, %5 : vector<512x128xf32>
    %cst_8 = arith.constant dense<0.000000e+00> : vector<128xf32>
    %10 = vector.multi_reduction <add>, %9, %cst_8 [0] : vector<512x128xf32> to vector<128xf32>
    %11 = vector.shape_cast %10 : vector<128xf32> to vector<1x128xf32>
    %12 = vector.shape_cast %8 : vector<1x128xf32> to vector<1x128xf32>
    %13 = vector.broadcast %12 : vector<1x128xf32> to vector<8x128xf32>
    %c0_9 = arith.constant 0 : index
    %c0_10 = arith.constant 0 : index
    %14 = vector.load %arg5[%c0_9, %c0_10] : memref<8x128xf32, #tpu.memory_space<vmem>>, vector<8x128xf32>
    tpu.vector_store %arg5[%c0_9, %c0_10], %13 {strides = array<i32>} : memref<8x128xf32, #tpu.memory_space<vmem>>, vector<8x128xf32>,
    %15 = vector.shape_cast %11 : vector<1x128xf32> to vector<1x128xf32>
    %16 = vector.broadcast %15 : vector<1x128xf32> to vector<8x128xf32>
    %c0_11 = arith.constant 0 : index
    %c0_12 = arith.constant 0 : index
    %17 = vector.load %arg6[%c0_11, %c0_12] : memref<8x128xf32, #tpu.memory_space<vmem>>, vector<8x128xf32>
    tpu.vector_store %arg6[%c0_11, %c0_12], %16 {strides = array<i32>} : memref<8x128xf32, #tpu.memory_space<vmem>>, vector<8x128xf32>,
    return
  }
  func.func @transform_0(%arg0: i32) -> (i32, i32) {
    %c0_i32 = arith.constant 0 : i32
    %c0_i32_0 = arith.constant 0 : i32
    return %arg0, %c0_i32 : i32, i32
  }
  func.func @transform_1(%arg0: i32) -> (i32, i32) {
    %c0_i32 = arith.constant 0 : i32
    %c0_i32_0 = arith.constant 0 : i32
    %c0_i32_1 = arith.constant 0 : i32
    return %c0_i32, %c0_i32_0 : i32, i32
  }
  func.func @transform_2(%arg0: i32) -> (i32, i32) {
    %c0_i32 = arith.constant 0 : i32
    %c0_i32_0 = arith.constant 0 : i32
    %c0_i32_1 = arith.constant 0 : i32
    return %c0_i32, %c0_i32_0 : i32, i32
  }
  func.func @transform_3(%arg0: i32) -> (i32, i32) {
    %c0_i32 = arith.constant 0 : i32
    %c0_i32_0 = arith.constant 0 : i32
    return %arg0, %c0_i32 : i32, i32
  }
  func.func @transform_4(%arg0: i32) -> (i32, i32) {
    %c0_i32 = arith.constant 0 : i32
    %c0_i32_0 = arith.constant 0 : i32
    return %arg0, %c0_i32 : i32, i32
  }
  func.func @transform_5(%arg0: i32) -> (i32, i32) {
    %c0_i32 = arith.constant 0 : i32
    %c0_i32_0 = arith.constant 0 : i32
    return %arg0, %c0_i32 : i32, i32
  }
}

module attributes {stable_mosaic.version = 11 : i64} {
  func.func @_affine_relu_kernel(%arg0: i32, %arg1: memref<512x128xf32, #tpu.memory_space<vmem>>, %arg2: memref<1x128xf32, #tpu.memory_space<vmem>>, %arg3: memref<1x128xf32, #tpu.memory_space<vmem>>, %arg4: memref<512x128xf32, #tpu.memory_space<vmem>>) attributes {dimension_semantics = [#tpu.dimension_semantics<parallel>], iteration_bounds = array<i64: 3>, scalar_prefetch = 0 : i64, scratch_operands = 0 : i64, tpu.core_type = #tpu.core_type<tc>, window_params = [{transform_indices = @transform_0, window_bounds = array<i64: 512, 128>}, {pipeline_mode = #tpu.pipeline_mode<synchronous>, transform_indices = @transform_1, window_bounds = array<i64: 1, 128>}, {pipeline_mode = #tpu.pipeline_mode<synchronous>, transform_indices = @transform_2, window_bounds = array<i64: 1, 128>}, {transform_indices = @transform_3, window_bounds = array<i64: 512, 128>}]} {
    %c0 = arith.constant 0 : index
    %c0_0 = arith.constant 0 : index
    %0 = vector.load %arg1[%c0, %c0_0] : memref<512x128xf32, #tpu.memory_space<vmem>>, vector<512x128xf32>
    %c0_1 = arith.constant 0 : index
    %c0_2 = arith.constant 0 : index
    %1 = vector.load %arg2[%c0_1, %c0_2] : memref<1x128xf32, #tpu.memory_space<vmem>>, vector<1x128xf32>
    %2 = vector.broadcast %1 : vector<1x128xf32> to vector<512x128xf32>
    %3 = arith.mulf %0, %2 : vector<512x128xf32>
    %c0_3 = arith.constant 0 : index
    %c0_4 = arith.constant 0 : index
    %4 = vector.load %arg3[%c0_3, %c0_4] : memref<1x128xf32, #tpu.memory_space<vmem>>, vector<1x128xf32>
    %5 = vector.broadcast %4 : vector<1x128xf32> to vector<512x128xf32>
    %6 = arith.addf %3, %5 : vector<512x128xf32>
    %cst = arith.constant 0.000000e+00 : f32
    %7 = vector.broadcast %cst : f32 to vector<512x128xf32>
    %8 = arith.maximumf %6, %7 : vector<512x128xf32>
    %c0_5 = arith.constant 0 : index
    %c0_6 = arith.constant 0 : index
    %9 = vector.load %arg4[%c0_5, %c0_6] : memref<512x128xf32, #tpu.memory_space<vmem>>, vector<512x128xf32>
    tpu.vector_store %arg4[%c0_5, %c0_6], %8 {strides = array<i32>} : memref<512x128xf32, #tpu.memory_space<vmem>>, vector<512x128xf32>,
    return
  }
  func.func @transform_0(%arg0: i32) -> (i32, i32) {
    %c0_i32 = arith.constant 0 : i32
    %c0_i32_0 = arith.constant 0 : i32
    return %arg0, %c0_i32 : i32, i32
  }
  func.func @transform_1(%arg0: i32) -> (i32, i32) {
    %c0_i32 = arith.constant 0 : i32
    %c0_i32_0 = arith.constant 0 : i32
    %c0_i32_1 = arith.constant 0 : i32
    return %c0_i32, %c0_i32_0 : i32, i32
  }
  func.func @transform_2(%arg0: i32) -> (i32, i32) {
    %c0_i32 = arith.constant 0 : i32
    %c0_i32_0 = arith.constant 0 : i32
    %c0_i32_1 = arith.constant 0 : i32
    return %c0_i32, %c0_i32_0 : i32, i32
  }
  func.func @transform_3(%arg0: i32) -> (i32, i32) {
    %c0_i32 = arith.constant 0 : i32
    %c0_i32_0 = arith.constant 0 : i32
    return %arg0, %c0_i32 : i32, i32
  }
}

module attributes {stable_mosaic.version = 11 : i64} {
  func.func @_matmul_stats_kernel(%arg0: i32, %arg1: memref<512x36xbf16, #tpu.memory_space<vmem>>, %arg2: memref<36x128xbf16, #tpu.memory_space<vmem>>, %arg3: memref<1x128xf32, #tpu.memory_space<vmem>>, %arg4: memref<512x128xf32, #tpu.memory_space<vmem>>, %arg5: memref<8x128xf32, #tpu.memory_space<vmem>>, %arg6: memref<8x128xf32, #tpu.memory_space<vmem>>) attributes {dimension_semantics = [#tpu.dimension_semantics<parallel>], iteration_bounds = array<i64: 9>, scalar_prefetch = 0 : i64, scratch_operands = 0 : i64, tpu.core_type = #tpu.core_type<tc>, window_params = [{transform_indices = @transform_0, window_bounds = array<i64: 512, 36>}, {pipeline_mode = #tpu.pipeline_mode<synchronous>, transform_indices = @transform_1, window_bounds = array<i64: 36, 128>}, {pipeline_mode = #tpu.pipeline_mode<synchronous>, transform_indices = @transform_2, window_bounds = array<i64: 1, 128>}, {transform_indices = @transform_3, window_bounds = array<i64: 512, 128>}, {transform_indices = @transform_4, window_bounds = array<i64: 8, 128>}, {transform_indices = @transform_5, window_bounds = array<i64: 8, 128>}]} {
    %c0 = arith.constant 0 : index
    %c0_0 = arith.constant 0 : index
    %0 = vector.load %arg1[%c0, %c0_0] : memref<512x36xbf16, #tpu.memory_space<vmem>>, vector<512x36xbf16>
    %c0_1 = arith.constant 0 : index
    %c0_2 = arith.constant 0 : index
    %1 = vector.load %arg2[%c0_1, %c0_2] : memref<36x128xbf16, #tpu.memory_space<vmem>>, vector<36x128xbf16>
    %cst = arith.constant dense<0.000000e+00> : vector<512x128xf32>
    %2 = tpu.matmul %0, %1, %cst {dimension_numbers = #tpu.dot_dimension_numbers<[1], [0], [0], [1], [0, 0, 1, 1], [], []>} : vector<512x36xbf16>, vector<36x128xbf16>, vector<512x128xf32> -> vector<512x128xf32>
    %c0_3 = arith.constant 0 : index
    %c0_4 = arith.constant 0 : index
    %3 = vector.load %arg3[%c0_3, %c0_4] : memref<1x128xf32, #tpu.memory_space<vmem>>, vector<1x128xf32>
    %4 = vector.broadcast %3 : vector<1x128xf32> to vector<512x128xf32>
    %5 = arith.addf %2, %4 : vector<512x128xf32>
    %6 = arith.negf %5 : vector<512x128xf32>
    %7 = math.exp %6 : vector<512x128xf32>
    %cst_5 = arith.constant 1.000000e+00 : f32
    %8 = vector.broadcast %cst_5 : f32 to vector<512x128xf32>
    %9 = arith.addf %8, %7 : vector<512x128xf32>
    %10 = arith.divf %8, %9 : vector<512x128xf32>
    %c0_6 = arith.constant 0 : index
    %c0_7 = arith.constant 0 : index
    %11 = vector.load %arg4[%c0_6, %c0_7] : memref<512x128xf32, #tpu.memory_space<vmem>>, vector<512x128xf32>
    tpu.vector_store %arg4[%c0_6, %c0_7], %10 {strides = array<i32>} : memref<512x128xf32, #tpu.memory_space<vmem>>, vector<512x128xf32>,
    %cst_8 = arith.constant dense<0.000000e+00> : vector<128xf32>
    %12 = vector.multi_reduction <add>, %10, %cst_8 [0] : vector<512x128xf32> to vector<128xf32>
    %13 = vector.shape_cast %12 : vector<128xf32> to vector<1x128xf32>
    %14 = arith.mulf %10, %10 : vector<512x128xf32>
    %cst_9 = arith.constant dense<0.000000e+00> : vector<128xf32>
    %15 = vector.multi_reduction <add>, %14, %cst_9 [0] : vector<512x128xf32> to vector<128xf32>
    %16 = vector.shape_cast %15 : vector<128xf32> to vector<1x128xf32>
    %17 = vector.shape_cast %13 : vector<1x128xf32> to vector<1x128xf32>
    %18 = vector.broadcast %17 : vector<1x128xf32> to vector<8x128xf32>
    %c0_10 = arith.constant 0 : index
    %c0_11 = arith.constant 0 : index
    %19 = vector.load %arg5[%c0_10, %c0_11] : memref<8x128xf32, #tpu.memory_space<vmem>>, vector<8x128xf32>
    tpu.vector_store %arg5[%c0_10, %c0_11], %18 {strides = array<i32>} : memref<8x128xf32, #tpu.memory_space<vmem>>, vector<8x128xf32>,
    %20 = vector.shape_cast %16 : vector<1x128xf32> to vector<1x128xf32>
    %21 = vector.broadcast %20 : vector<1x128xf32> to vector<8x128xf32>
    %c0_12 = arith.constant 0 : index
    %c0_13 = arith.constant 0 : index
    %22 = vector.load %arg6[%c0_12, %c0_13] : memref<8x128xf32, #tpu.memory_space<vmem>>, vector<8x128xf32>
    tpu.vector_store %arg6[%c0_12, %c0_13], %21 {strides = array<i32>} : memref<8x128xf32, #tpu.memory_space<vmem>>, vector<8x128xf32>,
    return
  }
  func.func @transform_0(%arg0: i32) -> (i32, i32) {
    %c0_i32 = arith.constant 0 : i32
    %c0_i32_0 = arith.constant 0 : i32
    return %arg0, %c0_i32 : i32, i32
  }
  func.func @transform_1(%arg0: i32) -> (i32, i32) {
    %c0_i32 = arith.constant 0 : i32
    %c0_i32_0 = arith.constant 0 : i32
    %c0_i32_1 = arith.constant 0 : i32
    return %c0_i32, %c0_i32_0 : i32, i32
  }
  func.func @transform_2(%arg0: i32) -> (i32, i32) {
    %c0_i32 = arith.constant 0 : i32
    %c0_i32_0 = arith.constant 0 : i32
    %c0_i32_1 = arith.constant 0 : i32
    return %c0_i32, %c0_i32_0 : i32, i32
  }
  func.func @transform_3(%arg0: i32) -> (i32, i32) {
    %c0_i32 = arith.constant 0 : i32
    %c0_i32_0 = arith.constant 0 : i32
    return %arg0, %c0_i32 : i32, i32
  }
  func.func @transform_4(%arg0: i32) -> (i32, i32) {
    %c0_i32 = arith.constant 0 : i32
    %c0_i32_0 = arith.constant 0 : i32
    return %arg0, %c0_i32 : i32, i32
  }
  func.func @transform_5(%arg0: i32) -> (i32, i32) {
    %c0_i32 = arith.constant 0 : i32
    %c0_i32_0 = arith.constant 0 : i32
    return %arg0, %c0_i32 : i32, i32
  }
}

</mosaic_0001>

<llo_original>
// kernel: generator_forward.19
$region0: #{generator_forward.19}
  #allocation0 [shape = 'u32[]', space=smem, size = 0x4, offset = 0x4, fixed_abs, tag = 'smem constant byte address 0x4 - core index']
  #allocation1 [shape = 'u32[72,128]{1,0:T(1,128)}', space=vmem, size = 0x9000, scoped, tag = 'internal scratch']
  %s0 = inlined_call_operand.vmem [shape: bf16[4608,9], index: 0, kind: input, shape index: {}]
  %s1 = inlined_call_operand.vmem [shape: bf16[9,128], index: 1, kind: input, shape index: {}]
  %s2 = inlined_call_operand.vmem [shape: f32[1,128], index: 2, kind: input, shape index: {}]
  %s3 = inlined_call_operand.vmem [shape: f32[4608,128], index: 3, kind: output, shape index: {0}]
  %s4 = inlined_call_operand.vmem [shape: f32[72,128], index: 4, kind: output, shape index: {1}]
  %s5 = inlined_call_operand.vmem [shape: f32[72,128], index: 5, kind: output, shape index: {2}]
  %6 = xla_tuple %s3, %s4, %s5
  %s7 = sld [smem:[#allocation0]]
  $region61: #{generator_forward.19} parent=0
    _
  %s9 = ssub.s32 1, %s7
  %s10 = scalar_select 0, %s9, %s7
  loop: start=0, step=1, limit=11
  $region2: #{generator_forward.19} parent=0 // loop_pre_header
    _
  $region3: #{generator_forward.19} parent=0 // loop_header
    %s12 = sphi 0, %s16
    %p13 = scmp.ge.s32.totalorder %s12, 11
    %s22 = sphi 0, %s24
    %s25 = sphi 0, %s22
    %s26 = sphi 0, %s25
    %s42 = sphi 0, %s26
    %s46 = sphi 0, %s46
    %s48 = sphi 0, %s46
    %s49 = sphi 0, %s48
    %s63 = sphi 0, %s49
    %s67 = sphi 0, %s67
    %s69 = sphi 0, %s67
    %s70 = sphi 0, %s69
    %s84 = sphi 0, %s70
    %s90 = sphi 0, %s92
    %s93 = sphi 0, %s90
    %s94 = sphi 0, %s93
    %s110 = sphi 0, %s94
    %s116 = sphi 0, %s118
    %s119 = sphi 0, %s116
    %s120 = sphi 0, %s119
    %s136 = sphi 0, %s120
    %s142 = sphi 0, %s144
    %s145 = sphi 0, %s142
    %s146 = sphi 0, %s145
    %s162 = sphi 0, %s146
  $region4: #{generator_forward.19} parent=0 // loop_header_branch
    %15 = sbr.rel (%p13) target = $region8
  $region5: #{generator_forward.19} parent=0 // loop_body
    %s17 = ssub.s32 %s12, 1
    %s18 = ssub.s32 %s12, 2
    %s19 = sadd.s32 %s12, 1
    %s20 = ssub.s32 %s12, %s19
    %p21 = scmp.eq.s32.totalorder %s20, 0
    %s23 = sadd.s32 %s22, 1
    %s24 = scalar_select %p21, %s22, %s23
    %p27 = pneg %p21
    %p28 = scmp.eq.s32.totalorder %s12, 8
    %p29 = por %p27, %p28
    %p30 = scmp.ne.s32.totalorder %s22, %s25
    %p31 = scmp.eq.s32.totalorder %s12, 0
    %p32 = por %p30, %p31
    %p33 = scmp.ne.s32.totalorder %s22, %s25
    %p34 = scmp.eq.s32.totalorder %s17, 8
    %p35 = por %p33, %p34
    %p36 = scmp.ne.s32.totalorder %s25, %s26
    %p37 = scmp.eq.s32.totalorder %s17, 0
    %p38 = por %p36, %p37
    %p39 = scmp.ne.s32.totalorder %s25, %s26
    %p40 = scmp.eq.s32.totalorder %s18, 8
    %p41 = por %p39, %p40
    %p43 = scmp.ne.s32.totalorder %s26, %s42
    %p44 = scmp.eq.s32.totalorder %s18, 0
    %p45 = por %p43, %p44
    %s47 = sadd.s32 %s46, 1
    %p50 = scmp.eq.s32.totalorder %s12, 8
    %p51 = scmp.ne.s32.totalorder %s46, %s48
    %p52 = scmp.eq.s32.totalorder %s12, 0
    %p53 = por %p51, %p52
    %p54 = scmp.ne.s32.totalorder %s46, %s48
    %p55 = scmp.eq.s32.totalorder %s17, 8
    %p56 = por %p54, %p55
    %p57 = scmp.ne.s32.totalorder %s48, %s49
    %p58 = scmp.eq.s32.totalorder %s17, 0
    %p59 = por %p57, %p58
    %p60 = scmp.ne.s32.totalorder %s48, %s49
    %p61 = scmp.eq.s32.totalorder %s18, 8
    %p62 = por %p60, %p61
    %p64 = scmp.ne.s32.totalorder %s49, %s63
    %p65 = scmp.eq.s32.totalorder %s18, 0
    %p66 = por %p64, %p65
    %s68 = sadd.s32 %s67, 1
    %p71 = scmp.eq.s32.totalorder %s12, 8
    %p72 = scmp.ne.s32.totalorder %s67, %s69
    %p73 = scmp.eq.s32.totalorder %s12, 0
    %p74 = por %p72, %p73
    %p75 = scmp.ne.s32.totalorder %s67, %s69
    %p76 = scmp.eq.s32.totalorder %s17, 8
    %p77 = por %p75, %p76
    %p78 = scmp.ne.s32.totalorder %s69, %s70
    %p79 = scmp.eq.s32.totalorder %s17, 0
    %p80 = por %p78, %p79
    %p81 = scmp.ne.s32.totalorder %s69, %s70
    %p82 = scmp.eq.s32.totalorder %s18, 8
    %p83 = por %p81, %p82
    %p85 = scmp.ne.s32.totalorder %s70, %s84
    %p86 = scmp.eq.s32.totalorder %s18, 0
    %p87 = por %p85, %p86
    %s88 = ssub.s32 %s12, %s19
    %p89 = scmp.eq.s32.totalorder %s88, 0
    %s91 = sadd.s32 %s90, 1
    %s92 = scalar_select %p89, %s90, %s91
    %p95 = pneg %p89
    %p96 = scmp.eq.s32.totalorder %s12, 8
    %p97 = por %p95, %p96
    %p98 = scmp.ne.s32.totalorder %s90, %s93
    %p99 = scmp.eq.s32.totalorder %s12, 0
    %p100 = por %p98, %p99
    %p101 = scmp.ne.s32.totalorder %s90, %s93
    %p102 = scmp.eq.s32.totalorder %s17, 8
    %p103 = por %p101, %p102
    %p104 = scmp.ne.s32.totalorder %s93, %s94
    %p105 = scmp.eq.s32.totalorder %s17, 0
    %p106 = por %p104, %p105
    %p107 = scmp.ne.s32.totalorder %s93, %s94
    %p108 = scmp.eq.s32.totalorder %s18, 8
    %p109 = por %p107, %p108
    %p111 = scmp.ne.s32.totalorder %s94, %s110
    %p112 = scmp.eq.s32.totalorder %s18, 0
    %p113 = por %p111, %p112
    %s114 = ssub.s32 %s12, %s19
    %p115 = scmp.eq.s32.totalorder %s114, 0
    %s117 = sadd.s32 %s116, 1
    %s118 = scalar_select %p115, %s116, %s117
    %p121 = pneg %p115
    %p122 = scmp.eq.s32.totalorder %s12, 8
    %p123 = por %p121, %p122
    %p124 = scmp.ne.s32.totalorder %s116, %s119
    %p125 = scmp.eq.s32.totalorder %s12, 0
    %p126 = por %p124, %p125
    %p127 = scmp.ne.s32.totalorder %s116, %s119
    %p128 = scmp.eq.s32.totalorder %s17, 8
    %p129 = por %p127, %p128
    %p130 = scmp.ne.s32.totalorder %s119, %s120
    %p131 = scmp.eq.s32.totalorder %s17, 0
    %p132 = por %p130, %p131
    %p133 = scmp.ne.s32.totalorder %s119, %s120
    %p134 = scmp.eq.s32.totalorder %s18, 8
    %p135 = por %p133, %p134
    %p137 = scmp.ne.s32.totalorder %s120, %s136
    %p138 = scmp.eq.s32.totalorder %s18, 0
    %p139 = por %p137, %p138
    %s140 = ssub.s32 %s12, %s19
    %p141 = scmp.eq.s32.totalorder %s140, 0
    %s143 = sadd.s32 %s142, 1
    %s144 = scalar_select %p141, %s142, %s143
    %p147 = pneg %p141
    %p148 = scmp.eq.s32.totalorder %s12, 8
    %p149 = por %p147, %p148
    %p150 = scmp.ne.s32.totalorder %s142, %s145
    %p151 = scmp.eq.s32.totalorder %s12, 0
    %p152 = por %p150, %p151
    %p153 = scmp.ne.s32.totalorder %s142, %s145
    %p154 = scmp.eq.s32.totalorder %s17, 8
    %p155 = por %p153, %p154
    %p156 = scmp.ne.s32.totalorder %s145, %s146
    %p157 = scmp.eq.s32.totalorder %s17, 0
    %p158 = por %p156, %p157
    %p159 = scmp.ne.s32.totalorder %s145, %s146
    %p160 = scmp.eq.s32.totalorder %s18, 8
    %p161 = por %p159, %p160
    %p163 = scmp.ne.s32.totalorder %s146, %s162
    %p164 = scmp.eq.s32.totalorder %s18, 0
    %p165 = por %p163, %p164
    %p166 = scmp.le.s32.totalorder 1, %s12
    %p167 = scmp.lt.s32.totalorder %s12, 10
    %p168 = pnand %p166, %p167
    %p169 = pneg %p168
    // Predicated region
    $region9: #{generator_forward.19} parent=5 // pred_check
      _
    $region10: #{generator_forward.19} parent=5 // pred_check_branch
      %171 = sbr.rel (%p168) target = $region12
    $region11: #{generator_forward.19} parent=5 // pred_region
      %s172 = ssub.s32 %s12, 1
      // Predicated region
      $region13: #{generator_forward.19} parent=11 // pred_check
        %p173 = pneg %p59
      $region14: #{generator_forward.19} parent=11 // pred_check_branch
        %175 = sbr.rel (%p173) target = $region16
      $region15: #{generator_forward.19} parent=11 // pred_region
        _
      $region16: #{generator_forward.19} parent=11 // pred_fallthru
        _
      // Predicated region
      $region17: #{generator_forward.19} parent=11 // pred_check
        %p176 = pneg %p80
      $region18: #{generator_forward.19} parent=11 // pred_check_branch
        %178 = sbr.rel (%p176) target = $region20
      $region19: #{generator_forward.19} parent=11 // pred_region
        _
      $region20: #{generator_forward.19} parent=11 // pred_fallthru
        _
    $region12: #{generator_forward.19} parent=5 // pred_fallthru
      _
    %p179 = scmp.lt.s32.totalorder %s12, 9
    // Predicated region
    $region21: #{generator_forward.19} parent=5 // pred_check
      %p180 = pneg %p179
    $region22: #{generator_forward.19} parent=5 // pred_check_branch
      %182 = sbr.rel (%p180) target = $region24
    $region23: #{generator_forward.19} parent=5 // pred_region
      // Predicated region
      $region25: #{generator_forward.19} parent=23 // pred_check
        %p183 = pneg %p32
      $region26: #{generator_forward.19} parent=23 // pred_check_branch
        %185 = sbr.rel (%p183) target = $region28
      $region27: #{generator_forward.19} parent=23 // pred_region
        %s186 = smul.u32 64, %s12
        %p187 = scmp.lt.s32.totalorder %s186, 575
        %s188 = scalar_select %p187, %s186, 575
        %s189 = smul.addr %s188, 4
        %s190 = scalar_lea.vmem %s0, %s189
        %s191 = smul.u32 64, %s12
      $region28: #{generator_forward.19} parent=23 // pred_fallthru
        _
    $region24: #{generator_forward.19} parent=5 // pred_fallthru
      _
    %p192 = scmp.le.s32.totalorder 1, %s12
    %p193 = scmp.lt.s32.totalorder %s12, 10
    %p194 = pnand %p192, %p193
    %p195 = pneg %p194
    // Predicated region
    $region29: #{generator_forward.19} parent=5 // pred_check
      _
    $region30: #{generator_forward.19} parent=5 // pred_check_branch
      %197 = sbr.rel (%p194) target = $region32
    $region31: #{generator_forward.19} parent=5 // pred_region
      %s198 = ssub.s32 %s12, 1
      %s199 = smul.u32 64, %s17
      %p200 = scmp.lt.s32.totalorder %s199, 575
      %s201 = scalar_select %p200, %s199, 575
      %s202 = smul.addr %s201, 4
      %s203 = scalar_lea.vmem %s0, %s202
      %p204 = pneg %p38
      %p205 = pneg %p35
      %p206 = pneg %p59
      %p207 = pneg %p56
      %p208 = pneg %p80
      %p209 = pneg %p77
      %p210 = pneg %p106
      %p211 = pneg %p103
      %s212 = smul.u32 64, %s17
      %p213 = scmp.lt.s32.totalorder %s212, 575
      %s214 = scalar_select %p213, %s212, 575
      %s215 = smul.addr %s214, 8
      %s216 = scalar_lea.vmem %s3, %s215
      %p217 = pneg %p132
      %p218 = pneg %p129
      %p219 = scmp.lt.s32.totalorder %s17, 8
      %s220 = scalar_select %p219, %s17, 8
      %s221 = smul.addr %s220, 8
      %s222 = scalar_lea.vmem %s4, %s221
      %p223 = pneg %p158
      %p224 = pneg %p155
      %p225 = scmp.lt.s32.totalorder %s17, 8
      %s226 = scalar_select %p225, %s17, 8
      %s227 = smul.addr %s226, 8
      %s228 = scalar_lea.vmem %s5, %s227
      %s229 = smul.u32 64, %s17
      %p230 = scmp.lt.s32.totalorder %s229, 575
      %s231 = scalar_select %p230, %s229, 575
      %s232 = smul.addr %s231, 4
      %s233 = scalar_lea.vmem %s0, %s232
      %s234 = smul.u32 64, %s17
      %s235 = smul.u32 64, %s17
      %p236 = scmp.lt.s32.totalorder %s235, 575
      %s237 = scalar_select %p236, %s235, 575
      %s238 = smul.addr %s237, 8
      %s239 = scalar_lea.vmem %s3, %s238
      %s240 = smul.u32 64, %s17
      %p241 = scmp.lt.s32.totalorder %s17, 8
      %s242 = scalar_select %p241, %s17, 8
      %s243 = smul.addr %s242, 8
      %s244 = scalar_lea.vmem %s4, %s243
      %p245 = scmp.lt.s32.totalorder %s17, 8
      %s246 = scalar_select %p245, %s17, 8
      %s247 = smul.addr %s246, 8
      %s248 = scalar_lea.vmem %s5, %s247
      %v250 = vld [vmem:[%s233] sm:$0xf]
      %v251 = vld [vmem:[%s233 + $0x4] sm:$0xf]
      %v252 = vld [vmem:[%s233 + $0x8] sm:$0xf]
      %v253 = vld [vmem:[%s233 + $0xc] sm:$0xf]
      %v254 = vld [vmem:[%s233 + $0x10] sm:$0xf]
      %v255 = vld [vmem:[%s233 + $0x14] sm:$0xf]
      %v256 = vld [vmem:[%s233 + $0x18] sm:$0xf]
      %v257 = vld [vmem:[%s233 + $0x1c] sm:$0xf]
      %v258 = vld [vmem:[%s233 + $0x20] sm:$0xf]
      %v259 = vld [vmem:[%s233 + $0x24] sm:$0xf]
      %v260 = vld [vmem:[%s233 + $0x28] sm:$0xf]
      %v261 = vld [vmem:[%s233 + $0x2c] sm:$0xf]
      %v262 = vld [vmem:[%s233 + $0x30] sm:$0xf]
      %v263 = vld [vmem:[%s233 + $0x34] sm:$0xf]
      %v264 = vld [vmem:[%s233 + $0x38] sm:$0xf]
      %v265 = vld [vmem:[%s233 + $0x3c] sm:$0xf]
      %v266 = vld [vmem:[%s233 + $0x40] sm:$0xf]
      %v267 = vld [vmem:[%s233 + $0x44] sm:$0xf]
      %v268 = vld [vmem:[%s233 + $0x48] sm:$0xf]
      %v269 = vld [vmem:[%s233 + $0x4c] sm:$0xf]
      %v270 = vld [vmem:[%s233 + $0x50] sm:$0xf]
      %v271 = vld [vmem:[%s233 + $0x54] sm:$0xf]
      %v272 = vld [vmem:[%s233 + $0x58] sm:$0xf]
      %v273 = vld [vmem:[%s233 + $0x5c] sm:$0xf]
      %v274 = vld [vmem:[%s233 + $0x60] sm:$0xf]
      %v275 = vld [vmem:[%s233 + $0x64] sm:$0xf]
      %v276 = vld [vmem:[%s233 + $0x68] sm:$0xf]
      %v277 = vld [vmem:[%s233 + $0x6c] sm:$0xf]
      %v278 = vld [vmem:[%s233 + $0x70] sm:$0xf]
      %v279 = vld [vmem:[%s233 + $0x74] sm:$0xf]
      %v280 = vld [vmem:[%s233 + $0x78] sm:$0xf]
      %v281 = vld [vmem:[%s233 + $0x7c] sm:$0xf]
      %v282 = vld [vmem:[%s233 + $0x80] sm:$0xf]
      %v283 = vld [vmem:[%s233 + $0x84] sm:$0xf]
      %v284 = vld [vmem:[%s233 + $0x88] sm:$0xf]
      %v285 = vld [vmem:[%s233 + $0x8c] sm:$0xf]
      %v286 = vld [vmem:[%s233 + $0x90] sm:$0xf]
      %v287 = vld [vmem:[%s233 + $0x94] sm:$0xf]
      %v288 = vld [vmem:[%s233 + $0x98] sm:$0xf]
      %v289 = vld [vmem:[%s233 + $0x9c] sm:$0xf]
      %v290 = vld [vmem:[%s233 + $0xa0] sm:$0xf]
      %v291 = vld [vmem:[%s233 + $0xa4] sm:$0xf]
      %v292 = vld [vmem:[%s233 + $0xa8] sm:$0xf]
      %v293 = vld [vmem:[%s233 + $0xac] sm:$0xf]
      %v294 = vld [vmem:[%s233 + $0xb0] sm:$0xf]
      %v295 = vld [vmem:[%s233 + $0xb4] sm:$0xf]
      %v296 = vld [vmem:[%s233 + $0xb8] sm:$0xf]
      %v297 = vld [vmem:[%s233 + $0xbc] sm:$0xf]
      %v298 = vld [vmem:[%s233 + $0xc0] sm:$0xf]
      %v299 = vld [vmem:[%s233 + $0xc4] sm:$0xf]
      %v300 = vld [vmem:[%s233 + $0xc8] sm:$0xf]
      %v301 = vld [vmem:[%s233 + $0xcc] sm:$0xf]
      %v302 = vld [vmem:[%s233 + $0xd0] sm:$0xf]
      %v303 = vld [vmem:[%s233 + $0xd4] sm:$0xf]
      %v304 = vld [vmem:[%s233 + $0xd8] sm:$0xf]
      %v305 = vld [vmem:[%s233 + $0xdc] sm:$0xf]
      %v306 = vld [vmem:[%s233 + $0xe0] sm:$0xf]
      %v307 = vld [vmem:[%s233 + $0xe4] sm:$0xf]
      %v308 = vld [vmem:[%s233 + $0xe8] sm:$0xf]
      %v309 = vld [vmem:[%s233 + $0xec] sm:$0xf]
      %v310 = vld [vmem:[%s233 + $0xf0] sm:$0xf]
      %v311 = vld [vmem:[%s233 + $0xf4] sm:$0xf]
      %v312 = vld [vmem:[%s233 + $0xf8] sm:$0xf]
      %v313 = vld [vmem:[%s233 + $0xfc] sm:$0xf]
      %v314 = vld [vmem:[%s1] sm:$0xf]
      %v315 = vld [vmem:[%s1 + $0x4] sm:$0x1]
      %v316 = vld [vmem:[%s2] sm:$0x1]
      %v318 = vperm.slane %v316, 0
      %v384 = vunpack.c.l.b16 %v250
      %v385 = vunpack.c.l.b16 %v251
      %v386 = vunpack.c.l.b16 %v252
      %v387 = vunpack.c.l.b16 %v253
      %v388 = vunpack.c.l.b16 %v254
      %v389 = vunpack.c.l.b16 %v255
      %v390 = vunpack.c.l.b16 %v256
      %v391 = vunpack.c.l.b16 %v257
      %v392 = vunpack.c.l.b16 %v258
      %v393 = vunpack.c.l.b16 %v259
      %v394 = vunpack.c.l.b16 %v260
      %v395 = vunpack.c.l.b16 %v261
      %v396 = vunpack.c.l.b16 %v262
      %v397 = vunpack.c.l.b16 %v263
      %v398 = vunpack.c.l.b16 %v264
      %v399 = vunpack.c.l.b16 %v265
      %v400 = vunpack.c.l.b16 %v266
      %v401 = vunpack.c.l.b16 %v267
      %v402 = vunpack.c.l.b16 %v268
      %v403 = vunpack.c.l.b16 %v269
      %v404 = vunpack.c.l.b16 %v270
      %v405 = vunpack.c.l.b16 %v271
      %v406 = vunpack.c.l.b16 %v272
      %v407 = vunpack.c.l.b16 %v273
      %v408 = vunpack.c.l.b16 %v274
      %v409 = vunpack.c.l.b16 %v275
      %v410 = vunpack.c.l.b16 %v276
      %v411 = vunpack.c.l.b16 %v277
      %v412 = vunpack.c.l.b16 %v278
      %v413 = vunpack.c.l.b16 %v279
      %v414 = vunpack.c.l.b16 %v280
      %v415 = vunpack.c.l.b16 %v281
      %v416 = vunpack.c.l.b16 %v282
      %v417 = vunpack.c.l.b16 %v283
      %v418 = vunpack.c.l.b16 %v284
      %v419 = vunpack.c.l.b16 %v285
      %v420 = vunpack.c.l.b16 %v286
      %v421 = vunpack.c.l.b16 %v287
      %v422 = vunpack.c.l.b16 %v288
      %v423 = vunpack.c.l.b16 %v289
      %v424 = vunpack.c.l.b16 %v290
      %v425 = vunpack.c.l.b16 %v291
      %v426 = vunpack.c.l.b16 %v292
      %v427 = vunpack.c.l.b16 %v293
      %v428 = vunpack.c.l.b16 %v294
      %v429 = vunpack.c.l.b16 %v295
      %v430 = vunpack.c.l.b16 %v296
      %v431 = vunpack.c.l.b16 %v297
      %v432 = vunpack.c.l.b16 %v298
      %v433 = vunpack.c.l.b16 %v299
      %v434 = vunpack.c.l.b16 %v300
      %v435 = vunpack.c.l.b16 %v301
      %v436 = vunpack.c.l.b16 %v302
      %v437 = vunpack.c.l.b16 %v303
      %v438 = vunpack.c.l.b16 %v304
      %v439 = vunpack.c.l.b16 %v305
      %v440 = vunpack.c.l.b16 %v306
      %v441 = vunpack.c.l.b16 %v307
      %v442 = vunpack.c.l.b16 %v308
      %v443 = vunpack.c.l.b16 %v309
      %v444 = vunpack.c.l.b16 %v310
      %v445 = vunpack.c.l.b16 %v311
      %v446 = vunpack.c.l.b16 %v312
      %v447 = vunpack.c.l.b16 %v313
      %v448 = vpack.c.b16 %v385, %v384
      %v449 = vpack.c.b16 %v387, %v386
      %v450 = vpack.c.b16 %v389, %v388
      %v451 = vpack.c.b16 %v391, %v390
      %v452 = vpack.c.b16 %v393, %v392
      %v453 = vpack.c.b16 %v395, %v394
      %v454 = vpack.c.b16 %v397, %v396
      %v455 = vpack.c.b16 %v399, %v398
      %v456 = vpack.c.b16 %v401, %v400
      %v457 = vpack.c.b16 %v403, %v402
      %v458 = vpack.c.b16 %v405, %v404
      %v459 = vpack.c.b16 %v407, %v406
      %v460 = vpack.c.b16 %v409, %v408
      %v461 = vpack.c.b16 %v411, %v410
      %v462 = vpack.c.b16 %v413, %v412
      %v463 = vpack.c.b16 %v415, %v414
      %v464 = vpack.c.b16 %v417, %v416
      %v465 = vpack.c.b16 %v419, %v418
      %v466 = vpack.c.b16 %v421, %v420
      %v467 = vpack.c.b16 %v423, %v422
      %v468 = vpack.c.b16 %v425, %v424
      %v469 = vpack.c.b16 %v427, %v426
      %v470 = vpack.c.b16 %v429, %v428
      %v471 = vpack.c.b16 %v431, %v430
      %v472 = vpack.c.b16 %v433, %v432
      %v473 = vpack.c.b16 %v435, %v434
      %v474 = vpack.c.b16 %v437, %v436
      %v475 = vpack.c.b16 %v439, %v438
      %v476 = vpack.c.b16 %v441, %v440
      %v477 = vpack.c.b16 %v443, %v442
      %v478 = vpack.c.b16 %v445, %v444
      %v479 = vpack.c.b16 %v447, %v446
      %v482 = vunpack.c.l.b16 %v314
      %v483 = vunpack.c.l.b16 %v315
      %v484 = vpack.c.b16 %v483, %v482
      %vm485 = vcmask 72704
      %v487 = vsel %vm485, %v448, 0
      %v490 = vsel %vm485, %v449, 0
      %v493 = vsel %vm485, %v450, 0
      %v496 = vsel %vm485, %v451, 0
      %v499 = vsel %vm485, %v452, 0
      %v502 = vsel %vm485, %v453, 0
      %v505 = vsel %vm485, %v454, 0
      %v508 = vsel %vm485, %v455, 0
      %v511 = vsel %vm485, %v456, 0
      %v514 = vsel %vm485, %v457, 0
      %v517 = vsel %vm485, %v458, 0
      %v520 = vsel %vm485, %v459, 0
      %v523 = vsel %vm485, %v460, 0
      %v526 = vsel %vm485, %v461, 0
      %v529 = vsel %vm485, %v462, 0
      %v532 = vsel %vm485, %v463, 0
      %v535 = vsel %vm485, %v464, 0
      %v538 = vsel %vm485, %v465, 0
      %v541 = vsel %vm485, %v466, 0
      %v544 = vsel %vm485, %v467, 0
      %v547 = vsel %vm485, %v468, 0
      %v550 = vsel %vm485, %v469, 0
      %v553 = vsel %vm485, %v470, 0
      %v556 = vsel %vm485, %v471, 0
      %v559 = vsel %vm485, %v472, 0
      %v562 = vsel %vm485, %v473, 0
      %v565 = vsel %vm485, %v474, 0
      %v568 = vsel %vm485, %v475, 0
      %v571 = vsel %vm485, %v476, 0
      %v574 = vsel %vm485, %v477, 0
      %v577 = vsel %vm485, %v478, 0
      %v580 = vsel %vm485, %v479, 0
      %vm582 = vcmask 1043456
      %vm583 = vcmask 1044480
      %v584 = vsel %vm582, 4294967295, 65535
      %v585 = vsel %vm583, %v584, 0
      %v587 = vand.u32 %v484, %v585
      %589 = vmatpush.bf16.msra.mxu0 0
      %590 = vmatpush.bf16.msra.mxu0 0
      %591 = vmatpush.bf16.msra.mxu0 0
      %592 = vmatpush.bf16.msra.mxu0 0
      %593 = vmatpush.bf16.msra.mxu0 0
      %594 = vmatpush.bf16.msra.mxu0 0
      %595 = vmatpush.bf16.msra.mxu0 0
      %596 = vmatpush.bf16.msra.mxu0 %v587
      %597 = vmatmul.bf16.gmra.mxu0 %v487
      %v598 = vpop.f32.mrf.mxu0
      %v599 = vadd.f32 %v318, %v598
      %v600 = vpop.f32.mrf.mxu0
      %v601 = vadd.f32 %v318, %v600
      %602 = vmatmul.bf16.gmra.mxu0 %v490
      %v603 = vpop.f32.mrf.mxu0
      %v604 = vadd.f32 %v318, %v603
      %v605 = vpop.f32.mrf.mxu0
      %v606 = vadd.f32 %v318, %v605
      %607 = vmatmul.bf16.gmra.mxu0 %v493
      %v608 = vpop.f32.mrf.mxu0
      %v609 = vadd.f32 %v318, %v608
      %v610 = vpop.f32.mrf.mxu0
      %v611 = vadd.f32 %v318, %v610
      %612 = vmatmul.bf16.gmra.mxu0 %v496
      %v613 = vpop.f32.mrf.mxu0
      %v614 = vadd.f32 %v318, %v613
      %v615 = vpop.f32.mrf.mxu0
      %v616 = vadd.f32 %v318, %v615
      %617 = vmatmul.bf16.gmra.mxu0 %v499
      %v618 = vpop.f32.mrf.mxu0
      %v619 = vadd.f32 %v318, %v618
      %v620 = vpop.f32.mrf.mxu0
      %v621 = vadd.f32 %v318, %v620
      %622 = vmatmul.bf16.gmra.mxu0 %v502
      %v623 = vpop.f32.mrf.mxu0
      %v624 = vadd.f32 %v318, %v623
      %v625 = vpop.f32.mrf.mxu0
      %v626 = vadd.f32 %v318, %v625
      %627 = vmatmul.bf16.gmra.mxu0 %v505
      %v628 = vpop.f32.mrf.mxu0
      %v629 = vadd.f32 %v318, %v628
      %v630 = vpop.f32.mrf.mxu0
      %v631 = vadd.f32 %v318, %v630
      %632 = vmatmul.bf16.gmra.mxu0 %v508
      %v633 = vpop.f32.mrf.mxu0
      %v634 = vadd.f32 %v318, %v633
      %v635 = vpop.f32.mrf.mxu0
      %v636 = vadd.f32 %v318, %v635
      %637 = vmatmul.bf16.gmra.mxu0 %v511
      %v638 = vpop.f32.mrf.mxu0
      %v639 = vadd.f32 %v318, %v638
      %v640 = vpop.f32.mrf.mxu0
      %v641 = vadd.f32 %v318, %v640
      %642 = vmatmul.bf16.gmra.mxu0 %v514
      %v643 = vpop.f32.mrf.mxu0
      %v644 = vadd.f32 %v318, %v643
      %v645 = vpop.f32.mrf.mxu0
      %v646 = vadd.f32 %v318, %v645
      %647 = vmatmul.bf16.gmra.mxu0 %v517
      %v648 = vpop.f32.mrf.mxu0
      %v649 = vadd.f32 %v318, %v648
      %v650 = vpop.f32.mrf.mxu0
      %v651 = vadd.f32 %v318, %v650
      %652 = vmatmul.bf16.gmra.mxu0 %v520
      %v653 = vpop.f32.mrf.mxu0
      %v654 = vadd.f32 %v318, %v653
      %v655 = vpop.f32.mrf.mxu0
      %v656 = vadd.f32 %v318, %v655
      %657 = vmatmul.bf16.gmra.mxu0 %v523
      %v658 = vpop.f32.mrf.mxu0
      %v659 = vadd.f32 %v318, %v658
      %v660 = vpop.f32.mrf.mxu0
      %v661 = vadd.f32 %v318, %v660
      %662 = vmatmul.bf16.gmra.mxu0 %v526
      %v663 = vpop.f32.mrf.mxu0
      %v664 = vadd.f32 %v318, %v663
      %v665 = vpop.f32.mrf.mxu0
      %v666 = vadd.f32 %v318, %v665
      %667 = vmatmul.bf16.gmra.mxu0 %v529
      %v668 = vpop.f32.mrf.mxu0
      %v669 = vadd.f32 %v318, %v668
      %v670 = vpop.f32.mrf.mxu0
      %v671 = vadd.f32 %v318, %v670
      %672 = vmatmul.bf16.gmra.mxu0 %v532
      %v673 = vpop.f32.mrf.mxu0
      %v674 = vadd.f32 %v318, %v673
      %v675 = vpop.f32.mrf.mxu0
      %v676 = vadd.f32 %v318, %v675
      %677 = vmatmul.bf16.gmra.mxu0 %v535
      %v678 = vpop.f32.mrf.mxu0
      %v679 = vadd.f32 %v318, %v678
      %v680 = vpop.f32.mrf.mxu0
      %v681 = vadd.f32 %v318, %v680
      %682 = vmatmul.bf16.gmra.mxu0 %v538
      %v683 = vpop.f32.mrf.mxu0
      %v684 = vadd.f32 %v318, %v683
      %v685 = vpop.f32.mrf.mxu0
      %v686 = vadd.f32 %v318, %v685
      %687 = vmatmul.bf16.gmra.mxu0 %v541
      %v688 = vpop.f32.mrf.mxu0
      %v689 = vadd.f32 %v318, %v688
      %v690 = vpop.f32.mrf.mxu0
      %v691 = vadd.f32 %v318, %v690
      %692 = vmatmul.bf16.gmra.mxu0 %v544
      %v693 = vpop.f32.mrf.mxu0
      %v694 = vadd.f32 %v318, %v693
      %v695 = vpop.f32.mrf.mxu0
      %v696 = vadd.f32 %v318, %v695
      %697 = vmatmul.bf16.gmra.mxu0 %v547
      %v698 = vpop.f32.mrf.mxu0
      %v699 = vadd.f32 %v318, %v698
      %v700 = vpop.f32.mrf.mxu0
      %v701 = vadd.f32 %v318, %v700
      %702 = vmatmul.bf16.gmra.mxu0 %v550
      %v703 = vpop.f32.mrf.mxu0
      %v704 = vadd.f32 %v318, %v703
      %v705 = vpop.f32.mrf.mxu0
      %v706 = vadd.f32 %v318, %v705
      %707 = vmatmul.bf16.gmra.mxu0 %v553
      %v708 = vpop.f32.mrf.mxu0
      %v709 = vadd.f32 %v318, %v708
      %v710 = vpop.f32.mrf.mxu0
      %v711 = vadd.f32 %v318, %v710
      %712 = vmatmul.bf16.gmra.mxu0 %v556
      %v713 = vpop.f32.mrf.mxu0
      %v714 = vadd.f32 %v318, %v713
      %v715 = vpop.f32.mrf.mxu0
      %v716 = vadd.f32 %v318, %v715
      %717 = vmatmul.bf16.gmra.mxu0 %v559
      %v718 = vpop.f32.mrf.mxu0
      %v719 = vadd.f32 %v318, %v718
      %v720 = vpop.f32.mrf.mxu0
      %v721 = vadd.f32 %v318, %v720
      %722 = vmatmul.bf16.gmra.mxu0 %v562
      %v723 = vpop.f32.mrf.mxu0
      %v724 = vadd.f32 %v318, %v723
      %v725 = vpop.f32.mrf.mxu0
      %v726 = vadd.f32 %v318, %v725
      %727 = vmatmul.bf16.gmra.mxu0 %v565
      %v728 = vpop.f32.mrf.mxu0
      %v729 = vadd.f32 %v318, %v728
      %v730 = vpop.f32.mrf.mxu0
      %v731 = vadd.f32 %v318, %v730
      %732 = vmatmul.bf16.gmra.mxu0 %v568
      %v733 = vpop.f32.mrf.mxu0
      %v734 = vadd.f32 %v318, %v733
      %v735 = vpop.f32.mrf.mxu0
      %v736 = vadd.f32 %v318, %v735
      %737 = vmatmul.bf16.gmra.mxu0 %v571
      %v738 = vpop.f32.mrf.mxu0
      %v739 = vadd.f32 %v318, %v738
      %v740 = vpop.f32.mrf.mxu0
      %v741 = vadd.f32 %v318, %v740
      %742 = vmatmul.bf16.gmra.mxu0 %v574
      %v743 = vpop.f32.mrf.mxu0
      %v744 = vadd.f32 %v318, %v743
      %v745 = vpop.f32.mrf.mxu0
      %v746 = vadd.f32 %v318, %v745
      %747 = vmatmul.bf16.gmra.mxu0 %v577
      %v748 = vpop.f32.mrf.mxu0
      %v749 = vadd.f32 %v318, %v748
      %v750 = vpop.f32.mrf.mxu0
      %v751 = vadd.f32 %v318, %v750
      %752 = vmatmul.bf16.gmra.mxu0 %v580
      %v753 = vpop.f32.mrf.mxu0
      %v754 = vadd.f32 %v318, %v753
      %v755 = vpop.f32.mrf.mxu0
      %v756 = vadd.f32 %v318, %v755
      %757 = vdwg.mxu0
      %758 = vst [vmem:[%s239] sm:$0xff] %v599
      %759 = vst [vmem:[%s239 + $0x8] sm:$0xff] %v601
      %760 = vst [vmem:[%s239 + $0x10] sm:$0xff] %v604
      %761 = vst [vmem:[%s239 + $0x18] sm:$0xff] %v606
      %762 = vst [vmem:[%s239 + $0x20] sm:$0xff] %v609
      %763 = vst [vmem:[%s239 + $0x28] sm:$0xff] %v611
      %764 = vst [vmem:[%s239 + $0x30] sm:$0xff] %v614
      %765 = vst [vmem:[%s239 + $0x38] sm:$0xff] %v616
      %766 = vst [vmem:[%s239 + $0x40] sm:$0xff] %v619
      %767 = vst [vmem:[%s239 + $0x48] sm:$0xff] %v621
      %768 = vst [vmem:[%s239 + $0x50] sm:$0xff] %v624
      %769 = vst [vmem:[%s239 + $0x58] sm:$0xff] %v626
      %770 = vst [vmem:[%s239 + $0x60] sm:$0xff] %v629
      %771 = vst [vmem:[%s239 + $0x68] sm:$0xff] %v631
      %772 = vst [vmem:[%s239 + $0x70] sm:$0xff] %v634
      %773 = vst [vmem:[%s239 + $0x78] sm:$0xff] %v636
      %774 = vst [vmem:[%s239 + $0x80] sm:$0xff] %v639
      %775 = vst [vmem:[%s239 + $0x88] sm:$0xff] %v641
      %776 = vst [vmem:[%s239 + $0x90] sm:$0xff] %v644
      %777 = vst [vmem:[%s239 + $0x98] sm:$0xff] %v646
      %778 = vst [vmem:[%s239 + $0xa0] sm:$0xff] %v649
      %779 = vst [vmem:[%s239 + $0xa8] sm:$0xff] %v651
      %780 = vst [vmem:[%s239 + $0xb0] sm:$0xff] %v654
      %781 = vst [vmem:[%s239 + $0xb8] sm:$0xff] %v656
      %782 = vst [vmem:[%s239 + $0xc0] sm:$0xff] %v659
      %783 = vst [vmem:[%s239 + $0xc8] sm:$0xff] %v661
      %784 = vst [vmem:[%s239 + $0xd0] sm:$0xff] %v664
      %785 = vst [vmem:[%s239 + $0xd8] sm:$0xff] %v666
      %786 = vst [vmem:[%s239 + $0xe0] sm:$0xff] %v669
      %787 = vst [vmem:[%s239 + $0xe8] sm:$0xff] %v671
      %788 = vst [vmem:[%s239 + $0xf0] sm:$0xff] %v674
      %789 = vst [vmem:[%s239 + $0xf8] sm:$0xff] %v676
      %790 = vst [vmem:[%s239 + $0x100] sm:$0xff] %v679
      %791 = vst [vmem:[%s239 + $0x108] sm:$0xff] %v681
      %792 = vst [vmem:[%s239 + $0x110] sm:$0xff] %v684
      %793 = vst [vmem:[%s239 + $0x118] sm:$0xff] %v686
      %794 = vst [vmem:[%s239 + $0x120] sm:$0xff] %v689
      %795 = vst [vmem:[%s239 + $0x128] sm:$0xff] %v691
      %796 = vst [vmem:[%s239 + $0x130] sm:$0xff] %v694
      %797 = vst [vmem:[%s239 + $0x138] sm:$0xff] %v696
      %798 = vst [vmem:[%s239 + $0x140] sm:$0xff] %v699
      %799 = vst [vmem:[%s239 + $0x148] sm:$0xff] %v701
      %800 = vst [vmem:[%s239 + $0x150] sm:$0xff] %v704
      %801 = vst [vmem:[%s239 + $0x158] sm:$0xff] %v706
      %802 = vst [vmem:[%s239 + $0x160] sm:$0xff] %v709
      %803 = vst [vmem:[%s239 + $0x168] sm:$0xff] %v711
      %804 = vst [vmem:[%s239 + $0x170] sm:$0xff] %v714
      %805 = vst [vmem:[%s239 + $0x178] sm:$0xff] %v716
      %806 = vst [vmem:[%s239 + $0x180] sm:$0xff] %v719
      %807 = vst [vmem:[%s239 + $0x188] sm:$0xff] %v721
      %808 = vst [vmem:[%s239 + $0x190] sm:$0xff] %v724
      %809 = vst [vmem:[%s239 + $0x198] sm:$0xff] %v726
      %810 = vst [vmem:[%s239 + $0x1a0] sm:$0xff] %v729
      %811 = vst [vmem:[%s239 + $0x1a8] sm:$0xff] %v731
      %812 = vst [vmem:[%s239 + $0x1b0] sm:$0xff] %v734
      %813 = vst [vmem:[%s239 + $0x1b8] sm:$0xff] %v736
      %814 = vst [vmem:[%s239 + $0x1c0] sm:$0xff] %v739
      %815 = vst [vmem:[%s239 + $0x1c8] sm:$0xff] %v741
      %816 = vst [vmem:[%s239 + $0x1d0] sm:$0xff] %v744
      %817 = vst [vmem:[%s239 + $0x1d8] sm:$0xff] %v746
      %818 = vst [vmem:[%s239 + $0x1e0] sm:$0xff] %v749
      %819 = vst [vmem:[%s239 + $0x1e8] sm:$0xff] %v751
      %820 = vst [vmem:[%s239 + $0x1f0] sm:$0xff] %v754
      %821 = vst [vmem:[%s239 + $0x1f8] sm:$0xff] %v756
      %v822 = vadd.f32 %v599, %v601
      %v823 = vadd.f32 %v822, %v604
      %v824 = vadd.f32 %v823, %v606
      %v825 = vadd.f32 %v824, %v609
      %v826 = vadd.f32 %v825, %v611
      %v827 = vadd.f32 %v826, %v614
      %v828 = vadd.f32 %v827, %v616
      %v829 = vadd.f32 %v828, %v619
      %v830 = vadd.f32 %v829, %v621
      %v831 = vadd.f32 %v830, %v624
      %v832 = vadd.f32 %v831, %v626
      %v833 = vadd.f32 %v832, %v629
      %v834 = vadd.f32 %v833, %v631
      %v835 = vadd.f32 %v834, %v634
      %v836 = vadd.f32 %v835, %v636
      %v837 = vadd.f32 %v836, %v639
      %v838 = vadd.f32 %v837, %v641
      %v839 = vadd.f32 %v838, %v644
      %v840 = vadd.f32 %v839, %v646
      %v841 = vadd.f32 %v840, %v649
      %v842 = vadd.f32 %v841, %v651
      %v843 = vadd.f32 %v842, %v654
      %v844 = vadd.f32 %v843, %v656
      %v845 = vadd.f32 %v844, %v659
      %v846 = vadd.f32 %v845, %v661
      %v847 = vadd.f32 %v846, %v664
      %v848 = vadd.f32 %v847, %v666
      %v849 = vadd.f32 %v848, %v669
      %v850 = vadd.f32 %v849, %v671
      %v851 = vadd.f32 %v850, %v674
      %v852 = vadd.f32 %v851, %v676
      %v853 = vadd.f32 %v852, %v679
      %v854 = vadd.f32 %v853, %v681
      %v855 = vadd.f32 %v854, %v684
      %v856 = vadd.f32 %v855, %v686
      %v857 = vadd.f32 %v856, %v689
      %v858 = vadd.f32 %v857, %v691
      %v859 = vadd.f32 %v858, %v694
      %v860 = vadd.f32 %v859, %v696
      %v861 = vadd.f32 %v860, %v699
      %v862 = vadd.f32 %v861, %v701
      %v863 = vadd.f32 %v862, %v704
      %v864 = vadd.f32 %v863, %v706
      %v865 = vadd.f32 %v864, %v709
      %v866 = vadd.f32 %v865, %v711
      %v867 = vadd.f32 %v866, %v714
      %v868 = vadd.f32 %v867, %v716
      %v869 = vadd.f32 %v868, %v719
      %v870 = vadd.f32 %v869, %v721
      %v871 = vadd.f32 %v870, %v724
      %v872 = vadd.f32 %v871, %v726
      %v873 = vadd.f32 %v872, %v729
      %v874 = vadd.f32 %v873, %v731
      %v875 = vadd.f32 %v874, %v734
      %v876 = vadd.f32 %v875, %v736
      %v877 = vadd.f32 %v876, %v739
      %v878 = vadd.f32 %v877, %v741
      %v879 = vadd.f32 %v878, %v744
      %v880 = vadd.f32 %v879, %v746
      %v881 = vadd.f32 %v880, %v749
      %v882 = vadd.f32 %v881, %v751
      %v883 = vadd.f32 %v882, %v754
      %v884 = vadd.f32 %v883, %v756
      %v885 = vrot.slane %v884, 4
      %v886 = vadd.f32 %v884, %v885
      %v887 = vrot.slane %v886, 2
      %v888 = vadd.f32 %v886, %v887
      %v889 = vrot.slane %v888, 1
      %v890 = vadd.f32 %v888, %v889
      %v891 = vmul.f32 %v599, %v599
      %v892 = vmul.f32 %v601, %v601
      %v893 = vmul.f32 %v604, %v604
      %v894 = vmul.f32 %v606, %v606
      %v895 = vmul.f32 %v609, %v609
      %v896 = vmul.f32 %v611, %v611
      %v897 = vmul.f32 %v614, %v614
      %v898 = vmul.f32 %v616, %v616
      %v899 = vmul.f32 %v619, %v619
      %v900 = vmul.f32 %v621, %v621
      %v901 = vmul.f32 %v624, %v624
      %v902 = vmul.f32 %v626, %v626
      %v903 = vmul.f32 %v629, %v629
      %v904 = vmul.f32 %v631, %v631
      %v905 = vmul.f32 %v634, %v634
      %v906 = vmul.f32 %v636, %v636
      %v907 = vmul.f32 %v639, %v639
      %v908 = vmul.f32 %v641, %v641
      %v909 = vmul.f32 %v644, %v644
      %v910 = vmul.f32 %v646, %v646
      %v911 = vmul.f32 %v649, %v649
      %v912 = vmul.f32 %v651, %v651
      %v913 = vmul.f32 %v654, %v654
      %v914 = vmul.f32 %v656, %v656
      %v915 = vmul.f32 %v659, %v659
      %v916 = vmul.f32 %v661, %v661
      %v917 = vmul.f32 %v664, %v664
      %v918 = vmul.f32 %v666, %v666
      %v919 = vmul.f32 %v669, %v669
      %v920 = vmul.f32 %v671, %v671
      %v921 = vmul.f32 %v674, %v674
      %v922 = vmul.f32 %v676, %v676
      %v923 = vmul.f32 %v679, %v679
      %v924 = vmul.f32 %v681, %v681
      %v925 = vmul.f32 %v684, %v684
      %v926 = vmul.f32 %v686, %v686
      %v927 = vmul.f32 %v689, %v689
      %v928 = vmul.f32 %v691, %v691
      %v929 = vmul.f32 %v694, %v694
      %v930 = vmul.f32 %v696, %v696
      %v931 = vmul.f32 %v699, %v699
      %v932 = vmul.f32 %v701, %v701
      %v933 = vmul.f32 %v704, %v704
      %v934 = vmul.f32 %v706, %v706
      %v935 = vmul.f32 %v709, %v709
      %v936 = vmul.f32 %v711, %v711
      %v937 = vmul.f32 %v714, %v714
      %v938 = vmul.f32 %v716, %v716
      %v939 = vmul.f32 %v719, %v719
      %v940 = vmul.f32 %v721, %v721
      %v941 = vmul.f32 %v724, %v724
      %v942 = vmul.f32 %v726, %v726
      %v943 = vmul.f32 %v729, %v729
      %v944 = vmul.f32 %v731, %v731
      %v945 = vmul.f32 %v734, %v734
      %v946 = vmul.f32 %v736, %v736
      %v947 = vmul.f32 %v739, %v739
      %v948 = vmul.f32 %v741, %v741
      %v949 = vmul.f32 %v744, %v744
      %v950 = vmul.f32 %v746, %v746
      %v951 = vmul.f32 %v749, %v749
      %v952 = vmul.f32 %v751, %v751
      %v953 = vmul.f32 %v754, %v754
      %v954 = vmul.f32 %v756, %v756
      %v955 = vadd.f32 %v891, %v892
      %v956 = vadd.f32 %v955, %v893
      %v957 = vadd.f32 %v956, %v894
      %v958 = vadd.f32 %v957, %v895
      %v959 = vadd.f32 %v958, %v896
      %v960 = vadd.f32 %v959, %v897
      %v961 = vadd.f32 %v960, %v898
      %v962 = vadd.f32 %v961, %v899
      %v963 = vadd.f32 %v962, %v900
      %v964 = vadd.f32 %v963, %v901
      %v965 = vadd.f32 %v964, %v902
      %v966 = vadd.f32 %v965, %v903
      %v967 = vadd.f32 %v966, %v904
      %v968 = vadd.f32 %v967, %v905
      %v969 = vadd.f32 %v968, %v906
      %v970 = vadd.f32 %v969, %v907
      %v971 = vadd.f32 %v970, %v908
      %v972 = vadd.f32 %v971, %v909
      %v973 = vadd.f32 %v972, %v910
      %v974 = vadd.f32 %v973, %v911
      %v975 = vadd.f32 %v974, %v912
      %v976 = vadd.f32 %v975, %v913
      %v977 = vadd.f32 %v976, %v914
      %v978 = vadd.f32 %v977, %v915
      %v979 = vadd.f32 %v978, %v916
      %v980 = vadd.f32 %v979, %v917
      %v981 = vadd.f32 %v980, %v918
      %v982 = vadd.f32 %v981, %v919
      %v983 = vadd.f32 %v982, %v920
      %v984 = vadd.f32 %v983, %v921
      %v985 = vadd.f32 %v984, %v922
      %v986 = vadd.f32 %v985, %v923
      %v987 = vadd.f32 %v986, %v924
      %v988 = vadd.f32 %v987, %v925
      %v989 = vadd.f32 %v988, %v926
      %v990 = vadd.f32 %v989, %v927
      %v991 = vadd.f32 %v990, %v928
      %v992 = vadd.f32 %v991, %v929
      %v993 = vadd.f32 %v992, %v930
      %v994 = vadd.f32 %v993, %v931
      %v995 = vadd.f32 %v994, %v932
      %v996 = vadd.f32 %v995, %v933
      %v997 = vadd.f32 %v996, %v934
      %v998 = vadd.f32 %v997, %v935
      %v999 = vadd.f32 %v998, %v936
      %v1000 = vadd.f32 %v999, %v937
      %v1001 = vadd.f32 %v1000, %v938
      %v1002 = vadd.f32 %v1001, %v939
      %v1003 = vadd.f32 %v1002, %v940
      %v1004 = vadd.f32 %v1003, %v941
      %v1005 = vadd.f32 %v1004, %v942
      %v1006 = vadd.f32 %v1005, %v943
      %v1007 = vadd.f32 %v1006, %v944
      %v1008 = vadd.f32 %v1007, %v945
      %v1009 = vadd.f32 %v1008, %v946
      %v1010 = vadd.f32 %v1009, %v947
      %v1011 = vadd.f32 %v1010, %v948
      %v1012 = vadd.f32 %v1011, %v949
      %v1013 = vadd.f32 %v1012, %v950
      %v1014 = vadd.f32 %v1013, %v951
      %v1015 = vadd.f32 %v1014, %v952
      %v1016 = vadd.f32 %v1015, %v953
      %v1017 = vadd.f32 %v1016, %v954
      %v1018 = vrot.slane %v1017, 4
      %v1019 = vadd.f32 %v1017, %v1018
      %v1020 = vrot.slane %v1019, 2
      %v1021 = vadd.f32 %v1019, %v1020
      %v1022 = vrot.slane %v1021, 1
      %v1023 = vadd.f32 %v1021, %v1022
      %1024 = vst [vmem:[%s244] sm:$0xff] %v890
      %1025 = vst [vmem:[%s248] sm:$0xff] %v1023
      %s1026 = smul.u32 64, %s17
      %p1027 = scmp.lt.s32.totalorder %s1026, 575
      %s1028 = scalar_select %p1027, %s1026, 575
      %s1029 = smul.addr %s1028, 8
      %s1030 = scalar_lea.vmem %s3, %s1029
      %p1031 = scmp.lt.s32.totalorder %s17, 8
      %s1032 = scalar_select %p1031, %s17, 8
      %s1033 = smul.addr %s1032, 8
      %s1034 = scalar_lea.vmem %s4, %s1033
      %p1035 = scmp.lt.s32.totalorder %s17, 8
      %s1036 = scalar_select %p1035, %s17, 8
      %s1037 = smul.addr %s1036, 8
      %s1038 = scalar_lea.vmem %s5, %s1037
      // Predicated region
      $region33: #{generator_forward.19} parent=31 // pred_check
        %p1039 = pneg %p103
      $region34: #{generator_forward.19} parent=31 // pred_check_branch
        %1041 = sbr.rel (%p1039) target = $region36
      $region35: #{generator_forward.19} parent=31 // pred_region
        %s1042 = smul.u32 64, %s17
      $region36: #{generator_forward.19} parent=31 // pred_fallthru
        _
      // Predicated region
      $region37: #{generator_forward.19} parent=31 // pred_check
        %p1043 = pneg %p129
      $region38: #{generator_forward.19} parent=31 // pred_check_branch
        %1045 = sbr.rel (%p1043) target = $region40
      $region39: #{generator_forward.19} parent=31 // pred_region
        _
      $region40: #{generator_forward.19} parent=31 // pred_fallthru
        _
      // Predicated region
      $region41: #{generator_forward.19} parent=31 // pred_check
        %p1046 = pneg %p155
      $region42: #{generator_forward.19} parent=31 // pred_check_branch
        %1048 = sbr.rel (%p1046) target = $region44
      $region43: #{generator_forward.19} parent=31 // pred_region
        _
      $region44: #{generator_forward.19} parent=31 // pred_fallthru
        _
    $region32: #{generator_forward.19} parent=5 // pred_fallthru
      _
    %p1049 = scmp.le.s32.totalorder 2, %s12
    // Predicated region
    $region45: #{generator_forward.19} parent=5 // pred_check
      %p1050 = pneg %p1049
    $region46: #{generator_forward.19} parent=5 // pred_check_branch
      %1052 = sbr.rel (%p1050) target = $region48
    $region47: #{generator_forward.19} parent=5 // pred_region
      %s1053 = ssub.s32 %s12, 2
      // Predicated region
      $region49: #{generator_forward.19} parent=47 // pred_check
        %p1054 = pneg %p109
      $region50: #{generator_forward.19} parent=47 // pred_check_branch
        %1056 = sbr.rel (%p1054) target = $region52
      $region51: #{generator_forward.19} parent=47 // pred_region
        %s1057 = smul.u32 64, %s18
        %p1058 = scmp.lt.s32.totalorder %s1057, 575
        %s1059 = scalar_select %p1058, %s1057, 575
        %s1060 = smul.addr %s1059, 8
        %s1061 = scalar_lea.vmem %s3, %s1060
      $region52: #{generator_forward.19} parent=47 // pred_fallthru
        _
      // Predicated region
      $region53: #{generator_forward.19} parent=47 // pred_check
        %p1062 = pneg %p135
      $region54: #{generator_forward.19} parent=47 // pred_check_branch
        %1064 = sbr.rel (%p1062) target = $region56
      $region55: #{generator_forward.19} parent=47 // pred_region
        %p1065 = scmp.lt.s32.totalorder %s18, 8
        %s1066 = scalar_select %p1065, %s18, 8
        %s1067 = smul.addr %s1066, 8
        %s1068 = scalar_lea.vmem %s4, %s1067
      $region56: #{generator_forward.19} parent=47 // pred_fallthru
        _
      // Predicated region
      $region57: #{generator_forward.19} parent=47 // pred_check
        %p1069 = pneg %p161
      $region58: #{generator_forward.19} parent=47 // pred_check_branch
        %1071 = sbr.rel (%p1069) target = $region60
      $region59: #{generator_forward.19} parent=47 // pred_region
        %p1072 = scmp.lt.s32.totalorder %s18, 8
        %s1073 = scalar_select %p1072, %s18, 8
        %s1074 = smul.addr %s1073, 8
        %s1075 = scalar_lea.vmem %s5, %s1074
      $region60: #{generator_forward.19} parent=47 // pred_fallthru
        _
    $region48: #{generator_forward.19} parent=5 // pred_fallthru
      _
  $region6: #{generator_forward.19} parent=0 // loop_footer
    %s16 = sadd.s32 1, %s12
  $region7: #{generator_forward.19} parent=0 // loop_footer_branch
    %11 = sbr.rel target = $region3
  $region8: #{generator_forward.19} parent=0 // loop_exit
    _

// kernel: generator_forward.20
$region0: #{generator_forward.20}
  #allocation0 [shape = 'u32[]', space=smem, size = 0x4, offset = 0x4, fixed_abs, tag = 'smem constant byte address 0x4 - core index']
  #allocation1 [shape = 'u32[72,128]{1,0:T(1,128)}', space=vmem, size = 0x9000, scoped, tag = 'internal scratch']
  %s0 = inlined_call_operand.vmem [shape: f32[4608,128], index: 0, kind: input, shape index: {}]
  %s1 = inlined_call_operand.vmem [shape: f32[1,128], index: 1, kind: input, shape index: {}]
  %s2 = inlined_call_operand.vmem [shape: f32[1,128], index: 2, kind: input, shape index: {}]
  %s3 = inlined_call_operand.vmem [shape: f32[4608,128], index: 3, kind: output, shape index: {}]
  %s4 = sld [smem:[#allocation0]]
  $region45: #{generator_forward.20} parent=0
    _
  %s6 = ssub.s32 1, %s4
  %s7 = scalar_select 0, %s6, %s4
  loop: start=0, step=1, limit=11
  $region2: #{generator_forward.20} parent=0 // loop_pre_header
    _
  $region3: #{generator_forward.20} parent=0 // loop_header
    %s9 = sphi 0, %s13
    %p10 = scmp.ge.s32.totalorder %s9, 11
    %s19 = sphi 0, %s21
    %s22 = sphi 0, %s19
    %s23 = sphi 0, %s22
    %s39 = sphi 0, %s23
    %s43 = sphi 0, %s43
    %s45 = sphi 0, %s43
    %s46 = sphi 0, %s45
    %s60 = sphi 0, %s46
    %s64 = sphi 0, %s64
    %s66 = sphi 0, %s64
    %s67 = sphi 0, %s66
    %s81 = sphi 0, %s67
    %s87 = sphi 0, %s89
    %s90 = sphi 0, %s87
    %s91 = sphi 0, %s90
    %s107 = sphi 0, %s91
  $region4: #{generator_forward.20} parent=0 // loop_header_branch
    %12 = sbr.rel (%p10) target = $region8
  $region5: #{generator_forward.20} parent=0 // loop_body
    %s14 = ssub.s32 %s9, 1
    %s15 = ssub.s32 %s9, 2
    %s16 = sadd.s32 %s9, 1
    %s17 = ssub.s32 %s9, %s16
    %p18 = scmp.eq.s32.totalorder %s17, 0
    %s20 = sadd.s32 %s19, 1
    %s21 = scalar_select %p18, %s19, %s20
    %p24 = pneg %p18
    %p25 = scmp.eq.s32.totalorder %s9, 8
    %p26 = por %p24, %p25
    %p27 = scmp.ne.s32.totalorder %s19, %s22
    %p28 = scmp.eq.s32.totalorder %s9, 0
    %p29 = por %p27, %p28
    %p30 = scmp.ne.s32.totalorder %s19, %s22
    %p31 = scmp.eq.s32.totalorder %s14, 8
    %p32 = por %p30, %p31
    %p33 = scmp.ne.s32.totalorder %s22, %s23
    %p34 = scmp.eq.s32.totalorder %s14, 0
    %p35 = por %p33, %p34
    %p36 = scmp.ne.s32.totalorder %s22, %s23
    %p37 = scmp.eq.s32.totalorder %s15, 8
    %p38 = por %p36, %p37
    %p40 = scmp.ne.s32.totalorder %s23, %s39
    %p41 = scmp.eq.s32.totalorder %s15, 0
    %p42 = por %p40, %p41
    %s44 = sadd.s32 %s43, 1
    %p47 = scmp.eq.s32.totalorder %s9, 8
    %p48 = scmp.ne.s32.totalorder %s43, %s45
    %p49 = scmp.eq.s32.totalorder %s9, 0
    %p50 = por %p48, %p49
    %p51 = scmp.ne.s32.totalorder %s43, %s45
    %p52 = scmp.eq.s32.totalorder %s14, 8
    %p53 = por %p51, %p52
    %p54 = scmp.ne.s32.totalorder %s45, %s46
    %p55 = scmp.eq.s32.totalorder %s14, 0
    %p56 = por %p54, %p55
    %p57 = scmp.ne.s32.totalorder %s45, %s46
    %p58 = scmp.eq.s32.totalorder %s15, 8
    %p59 = por %p57, %p58
    %p61 = scmp.ne.s32.totalorder %s46, %s60
    %p62 = scmp.eq.s32.totalorder %s15, 0
    %p63 = por %p61, %p62
    %s65 = sadd.s32 %s64, 1
    %p68 = scmp.eq.s32.totalorder %s9, 8
    %p69 = scmp.ne.s32.totalorder %s64, %s66
    %p70 = scmp.eq.s32.totalorder %s9, 0
    %p71 = por %p69, %p70
    %p72 = scmp.ne.s32.totalorder %s64, %s66
    %p73 = scmp.eq.s32.totalorder %s14, 8
    %p74 = por %p72, %p73
    %p75 = scmp.ne.s32.totalorder %s66, %s67
    %p76 = scmp.eq.s32.totalorder %s14, 0
    %p77 = por %p75, %p76
    %p78 = scmp.ne.s32.totalorder %s66, %s67
    %p79 = scmp.eq.s32.totalorder %s15, 8
    %p80 = por %p78, %p79
    %p82 = scmp.ne.s32.totalorder %s67, %s81
    %p83 = scmp.eq.s32.totalorder %s15, 0
    %p84 = por %p82, %p83
    %s85 = ssub.s32 %s9, %s16
    %p86 = scmp.eq.s32.totalorder %s85, 0
    %s88 = sadd.s32 %s87, 1
    %s89 = scalar_select %p86, %s87, %s88
    %p92 = pneg %p86
    %p93 = scmp.eq.s32.totalorder %s9, 8
    %p94 = por %p92, %p93
    %p95 = scmp.ne.s32.totalorder %s87, %s90
    %p96 = scmp.eq.s32.totalorder %s9, 0
    %p97 = por %p95, %p96
    %p98 = scmp.ne.s32.totalorder %s87, %s90
    %p99 = scmp.eq.s32.totalorder %s14, 8
    %p100 = por %p98, %p99
    %p101 = scmp.ne.s32.totalorder %s90, %s91
    %p102 = scmp.eq.s32.totalorder %s14, 0
    %p103 = por %p101, %p102
    %p104 = scmp.ne.s32.totalorder %s90, %s91
    %p105 = scmp.eq.s32.totalorder %s15, 8
    %p106 = por %p104, %p105
    %p108 = scmp.ne.s32.totalorder %s91, %s107
    %p109 = scmp.eq.s32.totalorder %s15, 0
    %p110 = por %p108, %p109
    %p111 = scmp.le.s32.totalorder 1, %s9
    %p112 = scmp.lt.s32.totalorder %s9, 10
    %p113 = pnand %p111, %p112
    %p114 = pneg %p113
    // Predicated region
    $region9: #{generator_forward.20} parent=5 // pred_check
      _
    $region10: #{generator_forward.20} parent=5 // pred_check_branch
      %116 = sbr.rel (%p113) target = $region12
    $region11: #{generator_forward.20} parent=5 // pred_region
      %s117 = ssub.s32 %s9, 1
      // Predicated region
      $region13: #{generator_forward.20} parent=11 // pred_check
        %p118 = pneg %p56
      $region14: #{generator_forward.20} parent=11 // pred_check_branch
        %120 = sbr.rel (%p118) target = $region16
      $region15: #{generator_forward.20} parent=11 // pred_region
        _
      $region16: #{generator_forward.20} parent=11 // pred_fallthru
        _
      // Predicated region
      $region17: #{generator_forward.20} parent=11 // pred_check
        %p121 = pneg %p77
      $region18: #{generator_forward.20} parent=11 // pred_check_branch
        %123 = sbr.rel (%p121) target = $region20
      $region19: #{generator_forward.20} parent=11 // pred_region
        _
      $region20: #{generator_forward.20} parent=11 // pred_fallthru
        _
    $region12: #{generator_forward.20} parent=5 // pred_fallthru
      _
    %p124 = scmp.lt.s32.totalorder %s9, 9
    // Predicated region
    $region21: #{generator_forward.20} parent=5 // pred_check
      %p125 = pneg %p124
    $region22: #{generator_forward.20} parent=5 // pred_check_branch
      %127 = sbr.rel (%p125) target = $region24
    $region23: #{generator_forward.20} parent=5 // pred_region
      // Predicated region
      $region25: #{generator_forward.20} parent=23 // pred_check
        %p128 = pneg %p29
      $region26: #{generator_forward.20} parent=23 // pred_check_branch
        %130 = sbr.rel (%p128) target = $region28
      $region27: #{generator_forward.20} parent=23 // pred_region
        %s131 = smul.u32 64, %s9
        %p132 = scmp.lt.s32.totalorder %s131, 575
        %s133 = scalar_select %p132, %s131, 575
        %s134 = smul.addr %s133, 8
        %s135 = scalar_lea.vmem %s0, %s134
        %s136 = smul.u32 64, %s9
      $region28: #{generator_forward.20} parent=23 // pred_fallthru
        _
    $region24: #{generator_forward.20} parent=5 // pred_fallthru
      _
    %p137 = scmp.le.s32.totalorder 1, %s9
    %p138 = scmp.lt.s32.totalorder %s9, 10
    %p139 = pnand %p137, %p138
    %p140 = pneg %p139
    // Predicated region
    $region29: #{generator_forward.20} parent=5 // pred_check
      _
    $region30: #{generator_forward.20} parent=5 // pred_check_branch
      %142 = sbr.rel (%p139) target = $region32
    $region31: #{generator_forward.20} parent=5 // pred_region
      %s143 = ssub.s32 %s9, 1
      %s144 = smul.u32 64, %s14
      %p145 = scmp.lt.s32.totalorder %s144, 575
      %s146 = scalar_select %p145, %s144, 575
      %s147 = smul.addr %s146, 8
      %s148 = scalar_lea.vmem %s0, %s147
      %p149 = pneg %p35
      %p150 = pneg %p32
      %p151 = pneg %p56
      %p152 = pneg %p53
      %p153 = pneg %p77
      %p154 = pneg %p74
      %p155 = pneg %p103
      %p156 = pneg %p100
      %s157 = smul.u32 64, %s14
      %p158 = scmp.lt.s32.totalorder %s157, 575
      %s159 = scalar_select %p158, %s157, 575
      %s160 = smul.addr %s159, 8
      %s161 = scalar_lea.vmem %s3, %s160
      %s162 = smul.u32 64, %s14
      %p163 = scmp.lt.s32.totalorder %s162, 575
      %s164 = scalar_select %p163, %s162, 575
      %s165 = smul.addr %s164, 8
      %s166 = scalar_lea.vmem %s0, %s165
      %s167 = smul.u32 64, %s14
      %s168 = smul.u32 64, %s14
      %p169 = scmp.lt.s32.totalorder %s168, 575
      %s170 = scalar_select %p169, %s168, 575
      %s171 = smul.addr %s170, 8
      %s172 = scalar_lea.vmem %s3, %s171
      %s173 = smul.u32 64, %s14
      %v174 = vld [vmem:[%s166] sm:$0xff]
      %v175 = vld [vmem:[%s166 + $0x8] sm:$0xff]
      %v176 = vld [vmem:[%s166 + $0x10] sm:$0xff]
      %v177 = vld [vmem:[%s166 + $0x18] sm:$0xff]
      %v178 = vld [vmem:[%s166 + $0x20] sm:$0xff]
      %v179 = vld [vmem:[%s166 + $0x28] sm:$0xff]
      %v180 = vld [vmem:[%s166 + $0x30] sm:$0xff]
      %v181 = vld [vmem:[%s166 + $0x38] sm:$0xff]
      %v182 = vld [vmem:[%s166 + $0x40] sm:$0xff]
      %v183 = vld [vmem:[%s166 + $0x48] sm:$0xff]
      %v184 = vld [vmem:[%s166 + $0x50] sm:$0xff]
      %v185 = vld [vmem:[%s166 + $0x58] sm:$0xff]
      %v186 = vld [vmem:[%s166 + $0x60] sm:$0xff]
      %v187 = vld [vmem:[%s166 + $0x68] sm:$0xff]
      %v188 = vld [vmem:[%s166 + $0x70] sm:$0xff]
      %v189 = vld [vmem:[%s166 + $0x78] sm:$0xff]
      %v190 = vld [vmem:[%s166 + $0x80] sm:$0xff]
      %v191 = vld [vmem:[%s166 + $0x88] sm:$0xff]
      %v192 = vld [vmem:[%s166 + $0x90] sm:$0xff]
      %v193 = vld [vmem:[%s166 + $0x98] sm:$0xff]
      %v194 = vld [vmem:[%s166 + $0xa0] sm:$0xff]
      %v195 = vld [vmem:[%s166 + $0xa8] sm:$0xff]
      %v196 = vld [vmem:[%s166 + $0xb0] sm:$0xff]
      %v197 = vld [vmem:[%s166 + $0xb8] sm:$0xff]
      %v198 = vld [vmem:[%s166 + $0xc0] sm:$0xff]
      %v199 = vld [vmem:[%s166 + $0xc8] sm:$0xff]
      %v200 = vld [vmem:[%s166 + $0xd0] sm:$0xff]
      %v201 = vld [vmem:[%s166 + $0xd8] sm:$0xff]
      %v202 = vld [vmem:[%s166 + $0xe0] sm:$0xff]
      %v203 = vld [vmem:[%s166 + $0xe8] sm:$0xff]
      %v204 = vld [vmem:[%s166 + $0xf0] sm:$0xff]
      %v205 = vld [vmem:[%s166 + $0xf8] sm:$0xff]
      %v206 = vld [vmem:[%s166 + $0x100] sm:$0xff]
      %v207 = vld [vmem:[%s166 + $0x108] sm:$0xff]
      %v208 = vld [vmem:[%s166 + $0x110] sm:$0xff]
      %v209 = vld [vmem:[%s166 + $0x118] sm:$0xff]
      %v210 = vld [vmem:[%s166 + $0x120] sm:$0xff]
      %v211 = vld [vmem:[%s166 + $0x128] sm:$0xff]
      %v212 = vld [vmem:[%s166 + $0x130] sm:$0xff]
      %v213 = vld [vmem:[%s166 + $0x138] sm:$0xff]
      %v214 = vld [vmem:[%s166 + $0x140] sm:$0xff]
      %v215 = vld [vmem:[%s166 + $0x148] sm:$0xff]
      %v216 = vld [vmem:[%s166 + $0x150] sm:$0xff]
      %v217 = vld [vmem:[%s166 + $0x158] sm:$0xff]
      %v218 = vld [vmem:[%s166 + $0x160] sm:$0xff]
      %v219 = vld [vmem:[%s166 + $0x168] sm:$0xff]
      %v220 = vld [vmem:[%s166 + $0x170] sm:$0xff]
      %v221 = vld [vmem:[%s166 + $0x178] sm:$0xff]
      %v222 = vld [vmem:[%s166 + $0x180] sm:$0xff]
      %v223 = vld [vmem:[%s166 + $0x188] sm:$0xff]
      %v224 = vld [vmem:[%s166 + $0x190] sm:$0xff]
      %v225 = vld [vmem:[%s166 + $0x198] sm:$0xff]
      %v226 = vld [vmem:[%s166 + $0x1a0] sm:$0xff]
      %v227 = vld [vmem:[%s166 + $0x1a8] sm:$0xff]
      %v228 = vld [vmem:[%s166 + $0x1b0] sm:$0xff]
      %v229 = vld [vmem:[%s166 + $0x1b8] sm:$0xff]
      %v230 = vld [vmem:[%s166 + $0x1c0] sm:$0xff]
      %v231 = vld [vmem:[%s166 + $0x1c8] sm:$0xff]
      %v232 = vld [vmem:[%s166 + $0x1d0] sm:$0xff]
      %v233 = vld [vmem:[%s166 + $0x1d8] sm:$0xff]
      %v234 = vld [vmem:[%s166 + $0x1e0] sm:$0xff]
      %v235 = vld [vmem:[%s166 + $0x1e8] sm:$0xff]
      %v236 = vld [vmem:[%s166 + $0x1f0] sm:$0xff]
      %v237 = vld [vmem:[%s166 + $0x1f8] sm:$0xff]
      %v238 = vld [vmem:[%s1] sm:$0x1]
      %v240 = vperm.slane %v238, 0
      %v242 = vmul.f32 %v174, %v240
      %v243 = vmul.f32 %v175, %v240
      %v244 = vmul.f32 %v176, %v240
      %v245 = vmul.f32 %v177, %v240
      %v246 = vmul.f32 %v178, %v240
      %v247 = vmul.f32 %v179, %v240
      %v248 = vmul.f32 %v180, %v240
      %v249 = vmul.f32 %v181, %v240
      %v250 = vmul.f32 %v182, %v240
      %v251 = vmul.f32 %v183, %v240
      %v252 = vmul.f32 %v184, %v240
      %v253 = vmul.f32 %v185, %v240
      %v254 = vmul.f32 %v186, %v240
      %v255 = vmul.f32 %v187, %v240
      %v256 = vmul.f32 %v188, %v240
      %v257 = vmul.f32 %v189, %v240
      %v258 = vmul.f32 %v190, %v240
      %v259 = vmul.f32 %v191, %v240
      %v260 = vmul.f32 %v192, %v240
      %v261 = vmul.f32 %v193, %v240
      %v262 = vmul.f32 %v194, %v240
      %v263 = vmul.f32 %v195, %v240
      %v264 = vmul.f32 %v196, %v240
      %v265 = vmul.f32 %v197, %v240
      %v266 = vmul.f32 %v198, %v240
      %v267 = vmul.f32 %v199, %v240
      %v268 = vmul.f32 %v200, %v240
      %v269 = vmul.f32 %v201, %v240
      %v270 = vmul.f32 %v202, %v240
      %v271 = vmul.f32 %v203, %v240
      %v272 = vmul.f32 %v204, %v240
      %v273 = vmul.f32 %v205, %v240
      %v274 = vmul.f32 %v206, %v240
      %v275 = vmul.f32 %v207, %v240
      %v276 = vmul.f32 %v208, %v240
      %v277 = vmul.f32 %v209, %v240
      %v278 = vmul.f32 %v210, %v240
      %v279 = vmul.f32 %v211, %v240
      %v280 = vmul.f32 %v212, %v240
      %v281 = vmul.f32 %v213, %v240
      %v282 = vmul.f32 %v214, %v240
      %v283 = vmul.f32 %v215, %v240
      %v284 = vmul.f32 %v216, %v240
      %v285 = vmul.f32 %v217, %v240
      %v286 = vmul.f32 %v218, %v240
      %v287 = vmul.f32 %v219, %v240
      %v288 = vmul.f32 %v220, %v240
      %v289 = vmul.f32 %v221, %v240
      %v290 = vmul.f32 %v222, %v240
      %v291 = vmul.f32 %v223, %v240
      %v292 = vmul.f32 %v224, %v240
      %v293 = vmul.f32 %v225, %v240
      %v294 = vmul.f32 %v226, %v240
      %v295 = vmul.f32 %v227, %v240
      %v296 = vmul.f32 %v228, %v240
      %v297 = vmul.f32 %v229, %v240
      %v298 = vmul.f32 %v230, %v240
      %v299 = vmul.f32 %v231, %v240
      %v300 = vmul.f32 %v232, %v240
      %v301 = vmul.f32 %v233, %v240
      %v302 = vmul.f32 %v234, %v240
      %v303 = vmul.f32 %v235, %v240
      %v304 = vmul.f32 %v236, %v240
      %v305 = vmul.f32 %v237, %v240
      %v306 = vld [vmem:[%s2] sm:$0x1]
      %v308 = vperm.slane %v306, 0
      %v310 = vadd.f32 %v242, %v308
      %v311 = vadd.f32 %v243, %v308
      %v312 = vadd.f32 %v244, %v308
      %v313 = vadd.f32 %v245, %v308
      %v314 = vadd.f32 %v246, %v308
      %v315 = vadd.f32 %v247, %v308
      %v316 = vadd.f32 %v248, %v308
      %v317 = vadd.f32 %v249, %v308
      %v318 = vadd.f32 %v250, %v308
      %v319 = vadd.f32 %v251, %v308
      %v320 = vadd.f32 %v252, %v308
      %v321 = vadd.f32 %v253, %v308
      %v322 = vadd.f32 %v254, %v308
      %v323 = vadd.f32 %v255, %v308
      %v324 = vadd.f32 %v256, %v308
      %v325 = vadd.f32 %v257, %v308
      %v326 = vadd.f32 %v258, %v308
      %v327 = vadd.f32 %v259, %v308
      %v328 = vadd.f32 %v260, %v308
      %v329 = vadd.f32 %v261, %v308
      %v330 = vadd.f32 %v262, %v308
      %v331 = vadd.f32 %v263, %v308
      %v332 = vadd.f32 %v264, %v308
      %v333 = vadd.f32 %v265, %v308
      %v334 = vadd.f32 %v266, %v308
      %v335 = vadd.f32 %v267, %v308
      %v336 = vadd.f32 %v268, %v308
      %v337 = vadd.f32 %v269, %v308
      %v338 = vadd.f32 %v270, %v308
      %v339 = vadd.f32 %v271, %v308
      %v340 = vadd.f32 %v272, %v308
      %v341 = vadd.f32 %v273, %v308
      %v342 = vadd.f32 %v274, %v308
      %v343 = vadd.f32 %v275, %v308
      %v344 = vadd.f32 %v276, %v308
      %v345 = vadd.f32 %v277, %v308
      %v346 = vadd.f32 %v278, %v308
      %v347 = vadd.f32 %v279, %v308
      %v348 = vadd.f32 %v280, %v308
      %v349 = vadd.f32 %v281, %v308
      %v350 = vadd.f32 %v282, %v308
      %v351 = vadd.f32 %v283, %v308
      %v352 = vadd.f32 %v284, %v308
      %v353 = vadd.f32 %v285, %v308
      %v354 = vadd.f32 %v286, %v308
      %v355 = vadd.f32 %v287, %v308
      %v356 = vadd.f32 %v288, %v308
      %v357 = vadd.f32 %v289, %v308
      %v358 = vadd.f32 %v290, %v308
      %v359 = vadd.f32 %v291, %v308
      %v360 = vadd.f32 %v292, %v308
      %v361 = vadd.f32 %v293, %v308
      %v362 = vadd.f32 %v294, %v308
      %v363 = vadd.f32 %v295, %v308
      %v364 = vadd.f32 %v296, %v308
      %v365 = vadd.f32 %v297, %v308
      %v366 = vadd.f32 %v298, %v308
      %v367 = vadd.f32 %v299, %v308
      %v368 = vadd.f32 %v300, %v308
      %v369 = vadd.f32 %v301, %v308
      %v370 = vadd.f32 %v302, %v308
      %v371 = vadd.f32 %v303, %v308
      %v372 = vadd.f32 %v304, %v308
      %v373 = vadd.f32 %v305, %v308
      %v374 = vmax.f32 %v310, 0.0
      %v375 = vmax.f32 %v311, 0.0
      %v376 = vmax.f32 %v312, 0.0
      %v377 = vmax.f32 %v313, 0.0
      %v378 = vmax.f32 %v314, 0.0
      %v379 = vmax.f32 %v315, 0.0
      %v380 = vmax.f32 %v316, 0.0
      %v381 = vmax.f32 %v317, 0.0
      %v382 = vmax.f32 %v318, 0.0
      %v383 = vmax.f32 %v319, 0.0
      %v384 = vmax.f32 %v320, 0.0
      %v385 = vmax.f32 %v321, 0.0
      %v386 = vmax.f32 %v322, 0.0
      %v387 = vmax.f32 %v323, 0.0
      %v388 = vmax.f32 %v324, 0.0
      %v389 = vmax.f32 %v325, 0.0
      %v390 = vmax.f32 %v326, 0.0
      %v391 = vmax.f32 %v327, 0.0
      %v392 = vmax.f32 %v328, 0.0
      %v393 = vmax.f32 %v329, 0.0
      %v394 = vmax.f32 %v330, 0.0
      %v395 = vmax.f32 %v331, 0.0
      %v396 = vmax.f32 %v332, 0.0
      %v397 = vmax.f32 %v333, 0.0
      %v398 = vmax.f32 %v334, 0.0
      %v399 = vmax.f32 %v335, 0.0
      %v400 = vmax.f32 %v336, 0.0
      %v401 = vmax.f32 %v337, 0.0
      %v402 = vmax.f32 %v338, 0.0
      %v403 = vmax.f32 %v339, 0.0
      %v404 = vmax.f32 %v340, 0.0
      %v405 = vmax.f32 %v341, 0.0
      %v406 = vmax.f32 %v342, 0.0
      %v407 = vmax.f32 %v343, 0.0
      %v408 = vmax.f32 %v344, 0.0
      %v409 = vmax.f32 %v345, 0.0
      %v410 = vmax.f32 %v346, 0.0
      %v411 = vmax.f32 %v347, 0.0
      %v412 = vmax.f32 %v348, 0.0
      %v413 = vmax.f32 %v349, 0.0
      %v414 = vmax.f32 %v350, 0.0
      %v415 = vmax.f32 %v351, 0.0
      %v416 = vmax.f32 %v352, 0.0
      %v417 = vmax.f32 %v353, 0.0
      %v418 = vmax.f32 %v354, 0.0
      %v419 = vmax.f32 %v355, 0.0
      %v420 = vmax.f32 %v356, 0.0
      %v421 = vmax.f32 %v357, 0.0
      %v422 = vmax.f32 %v358, 0.0
      %v423 = vmax.f32 %v359, 0.0
      %v424 = vmax.f32 %v360, 0.0
      %v425 = vmax.f32 %v361, 0.0
      %v426 = vmax.f32 %v362, 0.0
      %v427 = vmax.f32 %v363, 0.0
      %v428 = vmax.f32 %v364, 0.0
      %v429 = vmax.f32 %v365, 0.0
      %v430 = vmax.f32 %v366, 0.0
      %v431 = vmax.f32 %v367, 0.0
      %v432 = vmax.f32 %v368, 0.0
      %v433 = vmax.f32 %v369, 0.0
      %v434 = vmax.f32 %v370, 0.0
      %v435 = vmax.f32 %v371, 0.0
      %v436 = vmax.f32 %v372, 0.0
      %v437 = vmax.f32 %v373, 0.0
      %438 = vst [vmem:[%s172] sm:$0xff] %v374
      %439 = vst [vmem:[%s172 + $0x8] sm:$0xff] %v375
      %440 = vst [vmem:[%s172 + $0x10] sm:$0xff] %v376
      %441 = vst [vmem:[%s172 + $0x18] sm:$0xff] %v377
      %442 = vst [vmem:[%s172 + $0x20] sm:$0xff] %v378
      %443 = vst [vmem:[%s172 + $0x28] sm:$0xff] %v379
      %444 = vst [vmem:[%s172 + $0x30] sm:$0xff] %v380
      %445 = vst [vmem:[%s172 + $0x38] sm:$0xff] %v381
      %446 = vst [vmem:[%s172 + $0x40] sm:$0xff] %v382
      %447 = vst [vmem:[%s172 + $0x48] sm:$0xff] %v383
      %448 = vst [vmem:[%s172 + $0x50] sm:$0xff] %v384
      %449 = vst [vmem:[%s172 + $0x58] sm:$0xff] %v385
      %450 = vst [vmem:[%s172 + $0x60] sm:$0xff] %v386
      %451 = vst [vmem:[%s172 + $0x68] sm:$0xff] %v387
      %452 = vst [vmem:[%s172 + $0x70] sm:$0xff] %v388
      %453 = vst [vmem:[%s172 + $0x78] sm:$0xff] %v389
      %454 = vst [vmem:[%s172 + $0x80] sm:$0xff] %v390
      %455 = vst [vmem:[%s172 + $0x88] sm:$0xff] %v391
      %456 = vst [vmem:[%s172 + $0x90] sm:$0xff] %v392
      %457 = vst [vmem:[%s172 + $0x98] sm:$0xff] %v393
      %458 = vst [vmem:[%s172 + $0xa0] sm:$0xff] %v394
      %459 = vst [vmem:[%s172 + $0xa8] sm:$0xff] %v395
      %460 = vst [vmem:[%s172 + $0xb0] sm:$0xff] %v396
      %461 = vst [vmem:[%s172 + $0xb8] sm:$0xff] %v397
      %462 = vst [vmem:[%s172 + $0xc0] sm:$0xff] %v398
      %463 = vst [vmem:[%s172 + $0xc8] sm:$0xff] %v399
      %464 = vst [vmem:[%s172 + $0xd0] sm:$0xff] %v400
      %465 = vst [vmem:[%s172 + $0xd8] sm:$0xff] %v401
      %466 = vst [vmem:[%s172 + $0xe0] sm:$0xff] %v402
      %467 = vst [vmem:[%s172 + $0xe8] sm:$0xff] %v403
      %468 = vst [vmem:[%s172 + $0xf0] sm:$0xff] %v404
      %469 = vst [vmem:[%s172 + $0xf8] sm:$0xff] %v405
      %470 = vst [vmem:[%s172 + $0x100] sm:$0xff] %v406
      %471 = vst [vmem:[%s172 + $0x108] sm:$0xff] %v407
      %472 = vst [vmem:[%s172 + $0x110] sm:$0xff] %v408
      %473 = vst [vmem:[%s172 + $0x118] sm:$0xff] %v409
      %474 = vst [vmem:[%s172 + $0x120] sm:$0xff] %v410
      %475 = vst [vmem:[%s172 + $0x128] sm:$0xff] %v411
      %476 = vst [vmem:[%s172 + $0x130] sm:$0xff] %v412
      %477 = vst [vmem:[%s172 + $0x138] sm:$0xff] %v413
      %478 = vst [vmem:[%s172 + $0x140] sm:$0xff] %v414
      %479 = vst [vmem:[%s172 + $0x148] sm:$0xff] %v415
      %480 = vst [vmem:[%s172 + $0x150] sm:$0xff] %v416
      %481 = vst [vmem:[%s172 + $0x158] sm:$0xff] %v417
      %482 = vst [vmem:[%s172 + $0x160] sm:$0xff] %v418
      %483 = vst [vmem:[%s172 + $0x168] sm:$0xff] %v419
      %484 = vst [vmem:[%s172 + $0x170] sm:$0xff] %v420
      %485 = vst [vmem:[%s172 + $0x178] sm:$0xff] %v421
      %486 = vst [vmem:[%s172 + $0x180] sm:$0xff] %v422
      %487 = vst [vmem:[%s172 + $0x188] sm:$0xff] %v423
      %488 = vst [vmem:[%s172 + $0x190] sm:$0xff] %v424
      %489 = vst [vmem:[%s172 + $0x198] sm:$0xff] %v425
      %490 = vst [vmem:[%s172 + $0x1a0] sm:$0xff] %v426
      %491 = vst [vmem:[%s172 + $0x1a8] sm:$0xff] %v427
      %492 = vst [vmem:[%s172 + $0x1b0] sm:$0xff] %v428
      %493 = vst [vmem:[%s172 + $0x1b8] sm:$0xff] %v429
      %494 = vst [vmem:[%s172 + $0x1c0] sm:$0xff] %v430
      %495 = vst [vmem:[%s172 + $0x1c8] sm:$0xff] %v431
      %496 = vst [vmem:[%s172 + $0x1d0] sm:$0xff] %v432
      %497 = vst [vmem:[%s172 + $0x1d8] sm:$0xff] %v433
      %498 = vst [vmem:[%s172 + $0x1e0] sm:$0xff] %v434
      %499 = vst [vmem:[%s172 + $0x1e8] sm:$0xff] %v435
      %500 = vst [vmem:[%s172 + $0x1f0] sm:$0xff] %v436
      %501 = vst [vmem:[%s172 + $0x1f8] sm:$0xff] %v437
      %s502 = smul.u32 64, %s14
      %p503 = scmp.lt.s32.totalorder %s502, 575
      %s504 = scalar_select %p503, %s502, 575
      %s505 = smul.addr %s504, 8
      %s506 = scalar_lea.vmem %s3, %s505
      // Predicated region
      $region33: #{generator_forward.20} parent=31 // pred_check
        %p507 = pneg %p100
      $region34: #{generator_forward.20} parent=31 // pred_check_branch
        %509 = sbr.rel (%p507) target = $region36
      $region35: #{generator_forward.20} parent=31 // pred_region
        %s510 = smul.u32 64, %s14
      $region36: #{generator_forward.20} parent=31 // pred_fallthru
        _
    $region32: #{generator_forward.20} parent=5 // pred_fallthru
      _
    %p511 = scmp.le.s32.totalorder 2, %s9
    // Predicated region
    $region37: #{generator_forward.20} parent=5 // pred_check
      %p512 = pneg %p511
    $region38: #{generator_forward.20} parent=5 // pred_check_branch
      %514 = sbr.rel (%p512) target = $region40
    $region39: #{generator_forward.20} parent=5 // pred_region
      %s515 = ssub.s32 %s9, 2
      // Predicated region
      $region41: #{generator_forward.20} parent=39 // pred_check
        %p516 = pneg %p106
      $region42: #{generator_forward.20} parent=39 // pred_check_branch
        %518 = sbr.rel (%p516) target = $region44
      $region43: #{generator_forward.20} parent=39 // pred_region
        %s519 = smul.u32 64, %s15
        %p520 = scmp.lt.s32.totalorder %s519, 575
        %s521 = scalar_select %p520, %s519, 575
        %s522 = smul.addr %s521, 8
        %s523 = scalar_lea.vmem %s3, %s522
      $region44: #{generator_forward.20} parent=39 // pred_fallthru
        _
    $region40: #{generator_forward.20} parent=5 // pred_fallthru
      _
  $region6: #{generator_forward.20} parent=0 // loop_footer
    %s13 = sadd.s32 1, %s9
  $region7: #{generator_forward.20} parent=0 // loop_footer_branch
    %8 = sbr.rel target = $region3
  $region8: #{generator_forward.20} parent=0 // loop_exit
    _

// kernel: generator_forward.22
$region0: #{generator_forward.22}
  #allocation0 [shape = 'u32[]', space=smem, size = 0x4, offset = 0x4, fixed_abs, tag = 'smem constant byte address 0x4 - core index']
  #allocation1 [shape = 'u32[72,128]{1,0:T(1,128)}', space=vmem, size = 0x9000, scoped, tag = 'internal scratch']
  %s0 = inlined_call_operand.vmem [shape: f32[1024,128], index: 0, kind: input, shape index: {}]
  %s1 = inlined_call_operand.vmem [shape: f32[1,128], index: 1, kind: input, shape index: {}]
  %s2 = inlined_call_operand.vmem [shape: f32[1,128], index: 2, kind: input, shape index: {}]
  %s3 = inlined_call_operand.vmem [shape: f32[1024,128], index: 3, kind: output, shape index: {}]
  %s4 = sld [smem:[#allocation0]]
  $region45: #{generator_forward.22} parent=0
    _
  %s6 = ssub.s32 1, %s4
  %s7 = scalar_select 0, %s6, %s4
  loop: start=0, step=1, limit=4
  $region2: #{generator_forward.22} parent=0 // loop_pre_header
    _
  $region3: #{generator_forward.22} parent=0 // loop_header
    %s9 = sphi 0, %s13
    %p10 = scmp.ge.s32.totalorder %s9, 4
    %s19 = sphi 0, %s21
    %s22 = sphi 0, %s19
    %s23 = sphi 0, %s22
    %s39 = sphi 0, %s23
    %s43 = sphi 0, %s43
    %s45 = sphi 0, %s43
    %s46 = sphi 0, %s45
    %s60 = sphi 0, %s46
    %s64 = sphi 0, %s64
    %s66 = sphi 0, %s64
    %s67 = sphi 0, %s66
    %s81 = sphi 0, %s67
    %s87 = sphi 0, %s89
    %s90 = sphi 0, %s87
    %s91 = sphi 0, %s90
    %s107 = sphi 0, %s91
  $region4: #{generator_forward.22} parent=0 // loop_header_branch
    %12 = sbr.rel (%p10) target = $region8
  $region5: #{generator_forward.22} parent=0 // loop_body
    %s14 = ssub.s32 %s9, 1
    %s15 = ssub.s32 %s9, 2
    %s16 = sadd.s32 %s9, 1
    %s17 = ssub.s32 %s9, %s16
    %p18 = scmp.eq.s32.totalorder %s17, 0
    %s20 = sadd.s32 %s19, 1
    %s21 = scalar_select %p18, %s19, %s20
    %p24 = pneg %p18
    %p25 = scmp.eq.s32.totalorder %s9, 1
    %p26 = por %p24, %p25
    %p27 = scmp.ne.s32.totalorder %s19, %s22
    %p28 = scmp.eq.s32.totalorder %s9, 0
    %p29 = por %p27, %p28
    %p30 = scmp.ne.s32.totalorder %s19, %s22
    %p31 = scmp.eq.s32.totalorder %s14, 1
    %p32 = por %p30, %p31
    %p33 = scmp.ne.s32.totalorder %s22, %s23
    %p34 = scmp.eq.s32.totalorder %s14, 0
    %p35 = por %p33, %p34
    %p36 = scmp.ne.s32.totalorder %s22, %s23
    %p37 = scmp.eq.s32.totalorder %s15, 1
    %p38 = por %p36, %p37
    %p40 = scmp.ne.s32.totalorder %s23, %s39
    %p41 = scmp.eq.s32.totalorder %s15, 0
    %p42 = por %p40, %p41
    %s44 = sadd.s32 %s43, 1
    %p47 = scmp.eq.s32.totalorder %s9, 1
    %p48 = scmp.ne.s32.totalorder %s43, %s45
    %p49 = scmp.eq.s32.totalorder %s9, 0
    %p50 = por %p48, %p49
    %p51 = scmp.ne.s32.totalorder %s43, %s45
    %p52 = scmp.eq.s32.totalorder %s14, 1
    %p53 = por %p51, %p52
    %p54 = scmp.ne.s32.totalorder %s45, %s46
    %p55 = scmp.eq.s32.totalorder %s14, 0
    %p56 = por %p54, %p55
    %p57 = scmp.ne.s32.totalorder %s45, %s46
    %p58 = scmp.eq.s32.totalorder %s15, 1
    %p59 = por %p57, %p58
    %p61 = scmp.ne.s32.totalorder %s46, %s60
    %p62 = scmp.eq.s32.totalorder %s15, 0
    %p63 = por %p61, %p62
    %s65 = sadd.s32 %s64, 1
    %p68 = scmp.eq.s32.totalorder %s9, 1
    %p69 = scmp.ne.s32.totalorder %s64, %s66
    %p70 = scmp.eq.s32.totalorder %s9, 0
    %p71 = por %p69, %p70
    %p72 = scmp.ne.s32.totalorder %s64, %s66
    %p73 = scmp.eq.s32.totalorder %s14, 1
    %p74 = por %p72, %p73
    %p75 = scmp.ne.s32.totalorder %s66, %s67
    %p76 = scmp.eq.s32.totalorder %s14, 0
    %p77 = por %p75, %p76
    %p78 = scmp.ne.s32.totalorder %s66, %s67
    %p79 = scmp.eq.s32.totalorder %s15, 1
    %p80 = por %p78, %p79
    %p82 = scmp.ne.s32.totalorder %s67, %s81
    %p83 = scmp.eq.s32.totalorder %s15, 0
    %p84 = por %p82, %p83
    %s85 = ssub.s32 %s9, %s16
    %p86 = scmp.eq.s32.totalorder %s85, 0
    %s88 = sadd.s32 %s87, 1
    %s89 = scalar_select %p86, %s87, %s88
    %p92 = pneg %p86
    %p93 = scmp.eq.s32.totalorder %s9, 1
    %p94 = por %p92, %p93
    %p95 = scmp.ne.s32.totalorder %s87, %s90
    %p96 = scmp.eq.s32.totalorder %s9, 0
    %p97 = por %p95, %p96
    %p98 = scmp.ne.s32.totalorder %s87, %s90
    %p99 = scmp.eq.s32.totalorder %s14, 1
    %p100 = por %p98, %p99
    %p101 = scmp.ne.s32.totalorder %s90, %s91
    %p102 = scmp.eq.s32.totalorder %s14, 0
    %p103 = por %p101, %p102
    %p104 = scmp.ne.s32.totalorder %s90, %s91
    %p105 = scmp.eq.s32.totalorder %s15, 1
    %p106 = por %p104, %p105
    %p108 = scmp.ne.s32.totalorder %s91, %s107
    %p109 = scmp.eq.s32.totalorder %s15, 0
    %p110 = por %p108, %p109
    %p111 = scmp.le.s32.totalorder 1, %s9
    %p112 = scmp.lt.s32.totalorder %s9, 3
    %p113 = pnand %p111, %p112
    %p114 = pneg %p113
    // Predicated region
    $region9: #{generator_forward.22} parent=5 // pred_check
      _
    $region10: #{generator_forward.22} parent=5 // pred_check_branch
      %116 = sbr.rel (%p113) target = $region12
    $region11: #{generator_forward.22} parent=5 // pred_region
      %s117 = ssub.s32 %s9, 1
      // Predicated region
      $region13: #{generator_forward.22} parent=11 // pred_check
        %p118 = pneg %p56
      $region14: #{generator_forward.22} parent=11 // pred_check_branch
        %120 = sbr.rel (%p118) target = $region16
      $region15: #{generator_forward.22} parent=11 // pred_region
        _
      $region16: #{generator_forward.22} parent=11 // pred_fallthru
        _
      // Predicated region
      $region17: #{generator_forward.22} parent=11 // pred_check
        %p121 = pneg %p77
      $region18: #{generator_forward.22} parent=11 // pred_check_branch
        %123 = sbr.rel (%p121) target = $region20
      $region19: #{generator_forward.22} parent=11 // pred_region
        _
      $region20: #{generator_forward.22} parent=11 // pred_fallthru
        _
    $region12: #{generator_forward.22} parent=5 // pred_fallthru
      _
    %p124 = scmp.lt.s32.totalorder %s9, 2
    // Predicated region
    $region21: #{generator_forward.22} parent=5 // pred_check
      %p125 = pneg %p124
    $region22: #{generator_forward.22} parent=5 // pred_check_branch
      %127 = sbr.rel (%p125) target = $region24
    $region23: #{generator_forward.22} parent=5 // pred_region
      // Predicated region
      $region25: #{generator_forward.22} parent=23 // pred_check
        %p128 = pneg %p29
      $region26: #{generator_forward.22} parent=23 // pred_check_branch
        %130 = sbr.rel (%p128) target = $region28
      $region27: #{generator_forward.22} parent=23 // pred_region
        %s131 = smul.u32 64, %s9
        %p132 = scmp.lt.s32.totalorder %s131, 127
        %s133 = scalar_select %p132, %s131, 127
        %s134 = smul.addr %s133, 8
        %s135 = scalar_lea.vmem %s0, %s134
        %s136 = smul.u32 64, %s9
      $region28: #{generator_forward.22} parent=23 // pred_fallthru
        _
    $region24: #{generator_forward.22} parent=5 // pred_fallthru
      _
    %p137 = scmp.le.s32.totalorder 1, %s9
    %p138 = scmp.lt.s32.totalorder %s9, 3
    %p139 = pnand %p137, %p138
    %p140 = pneg %p139
    // Predicated region
    $region29: #{generator_forward.22} parent=5 // pred_check
      _
    $region30: #{generator_forward.22} parent=5 // pred_check_branch
      %142 = sbr.rel (%p139) target = $region32
    $region31: #{generator_forward.22} parent=5 // pred_region
      %s143 = ssub.s32 %s9, 1
      %s144 = smul.u32 64, %s14
      %p145 = scmp.lt.s32.totalorder %s144, 127
      %s146 = scalar_select %p145, %s144, 127
      %s147 = smul.addr %s146, 8
      %s148 = scalar_lea.vmem %s0, %s147
      %p149 = pneg %p35
      %p150 = pneg %p32
      %p151 = pneg %p56
      %p152 = pneg %p53
      %p153 = pneg %p77
      %p154 = pneg %p74
      %p155 = pneg %p103
      %p156 = pneg %p100
      %s157 = smul.u32 64, %s14
      %p158 = scmp.lt.s32.totalorder %s157, 127
      %s159 = scalar_select %p158, %s157, 127
      %s160 = smul.addr %s159, 8
      %s161 = scalar_lea.vmem %s3, %s160
      %s162 = smul.u32 64, %s14
      %p163 = scmp.lt.s32.totalorder %s162, 127
      %s164 = scalar_select %p163, %s162, 127
      %s165 = smul.addr %s164, 8
      %s166 = scalar_lea.vmem %s0, %s165
      %s167 = smul.u32 64, %s14
      %s168 = smul.u32 64, %s14
      %p169 = scmp.lt.s32.totalorder %s168, 127
      %s170 = scalar_select %p169, %s168, 127
      %s171 = smul.addr %s170, 8
      %s172 = scalar_lea.vmem %s3, %s171
      %s173 = smul.u32 64, %s14
      %v174 = vld [vmem:[%s166] sm:$0xff]
      %v175 = vld [vmem:[%s166 + $0x8] sm:$0xff]
      %v176 = vld [vmem:[%s166 + $0x10] sm:$0xff]
      %v177 = vld [vmem:[%s166 + $0x18] sm:$0xff]
      %v178 = vld [vmem:[%s166 + $0x20] sm:$0xff]
      %v179 = vld [vmem:[%s166 + $0x28] sm:$0xff]
      %v180 = vld [vmem:[%s166 + $0x30] sm:$0xff]
      %v181 = vld [vmem:[%s166 + $0x38] sm:$0xff]
      %v182 = vld [vmem:[%s166 + $0x40] sm:$0xff]
      %v183 = vld [vmem:[%s166 + $0x48] sm:$0xff]
      %v184 = vld [vmem:[%s166 + $0x50] sm:$0xff]
      %v185 = vld [vmem:[%s166 + $0x58] sm:$0xff]
      %v186 = vld [vmem:[%s166 + $0x60] sm:$0xff]
      %v187 = vld [vmem:[%s166 + $0x68] sm:$0xff]
      %v188 = vld [vmem:[%s166 + $0x70] sm:$0xff]
      %v189 = vld [vmem:[%s166 + $0x78] sm:$0xff]
      %v190 = vld [vmem:[%s166 + $0x80] sm:$0xff]
      %v191 = vld [vmem:[%s166 + $0x88] sm:$0xff]
      %v192 = vld [vmem:[%s166 + $0x90] sm:$0xff]
      %v193 = vld [vmem:[%s166 + $0x98] sm:$0xff]
      %v194 = vld [vmem:[%s166 + $0xa0] sm:$0xff]
      %v195 = vld [vmem:[%s166 + $0xa8] sm:$0xff]
      %v196 = vld [vmem:[%s166 + $0xb0] sm:$0xff]
      %v197 = vld [vmem:[%s166 + $0xb8] sm:$0xff]
      %v198 = vld [vmem:[%s166 + $0xc0] sm:$0xff]
      %v199 = vld [vmem:[%s166 + $0xc8] sm:$0xff]
      %v200 = vld [vmem:[%s166 + $0xd0] sm:$0xff]
      %v201 = vld [vmem:[%s166 + $0xd8] sm:$0xff]
      %v202 = vld [vmem:[%s166 + $0xe0] sm:$0xff]
      %v203 = vld [vmem:[%s166 + $0xe8] sm:$0xff]
      %v204 = vld [vmem:[%s166 + $0xf0] sm:$0xff]
      %v205 = vld [vmem:[%s166 + $0xf8] sm:$0xff]
      %v206 = vld [vmem:[%s166 + $0x100] sm:$0xff]
      %v207 = vld [vmem:[%s166 + $0x108] sm:$0xff]
      %v208 = vld [vmem:[%s166 + $0x110] sm:$0xff]
      %v209 = vld [vmem:[%s166 + $0x118] sm:$0xff]
      %v210 = vld [vmem:[%s166 + $0x120] sm:$0xff]
      %v211 = vld [vmem:[%s166 + $0x128] sm:$0xff]
      %v212 = vld [vmem:[%s166 + $0x130] sm:$0xff]
      %v213 = vld [vmem:[%s166 + $0x138] sm:$0xff]
      %v214 = vld [vmem:[%s166 + $0x140] sm:$0xff]
      %v215 = vld [vmem:[%s166 + $0x148] sm:$0xff]
      %v216 = vld [vmem:[%s166 + $0x150] sm:$0xff]
      %v217 = vld [vmem:[%s166 + $0x158] sm:$0xff]
      %v218 = vld [vmem:[%s166 + $0x160] sm:$0xff]
      %v219 = vld [vmem:[%s166 + $0x168] sm:$0xff]
      %v220 = vld [vmem:[%s166 + $0x170] sm:$0xff]
      %v221 = vld [vmem:[%s166 + $0x178] sm:$0xff]
      %v222 = vld [vmem:[%s166 + $0x180] sm:$0xff]
      %v223 = vld [vmem:[%s166 + $0x188] sm:$0xff]
      %v224 = vld [vmem:[%s166 + $0x190] sm:$0xff]
      %v225 = vld [vmem:[%s166 + $0x198] sm:$0xff]
      %v226 = vld [vmem:[%s166 + $0x1a0] sm:$0xff]
      %v227 = vld [vmem:[%s166 + $0x1a8] sm:$0xff]
      %v228 = vld [vmem:[%s166 + $0x1b0] sm:$0xff]
      %v229 = vld [vmem:[%s166 + $0x1b8] sm:$0xff]
      %v230 = vld [vmem:[%s166 + $0x1c0] sm:$0xff]
      %v231 = vld [vmem:[%s166 + $0x1c8] sm:$0xff]
      %v232 = vld [vmem:[%s166 + $0x1d0] sm:$0xff]
      %v233 = vld [vmem:[%s166 + $0x1d8] sm:$0xff]
      %v234 = vld [vmem:[%s166 + $0x1e0] sm:$0xff]
      %v235 = vld [vmem:[%s166 + $0x1e8] sm:$0xff]
      %v236 = vld [vmem:[%s166 + $0x1f0] sm:$0xff]
      %v237 = vld [vmem:[%s166 + $0x1f8] sm:$0xff]
      %v238 = vld [vmem:[%s1] sm:$0x1]
      %v240 = vperm.slane %v238, 0
      %v242 = vmul.f32 %v174, %v240
      %v243 = vmul.f32 %v175, %v240
      %v244 = vmul.f32 %v176, %v240
      %v245 = vmul.f32 %v177, %v240
      %v246 = vmul.f32 %v178, %v240
      %v247 = vmul.f32 %v179, %v240
      %v248 = vmul.f32 %v180, %v240
      %v249 = vmul.f32 %v181, %v240
      %v250 = vmul.f32 %v182, %v240
      %v251 = vmul.f32 %v183, %v240
      %v252 = vmul.f32 %v184, %v240
      %v253 = vmul.f32 %v185, %v240
      %v254 = vmul.f32 %v186, %v240
      %v255 = vmul.f32 %v187, %v240
      %v256 = vmul.f32 %v188, %v240
      %v257 = vmul.f32 %v189, %v240
      %v258 = vmul.f32 %v190, %v240
      %v259 = vmul.f32 %v191, %v240
      %v260 = vmul.f32 %v192, %v240
      %v261 = vmul.f32 %v193, %v240
      %v262 = vmul.f32 %v194, %v240
      %v263 = vmul.f32 %v195, %v240
      %v264 = vmul.f32 %v196, %v240
      %v265 = vmul.f32 %v197, %v240
      %v266 = vmul.f32 %v198, %v240
      %v267 = vmul.f32 %v199, %v240
      %v268 = vmul.f32 %v200, %v240
      %v269 = vmul.f32 %v201, %v240
      %v270 = vmul.f32 %v202, %v240
      %v271 = vmul.f32 %v203, %v240
      %v272 = vmul.f32 %v204, %v240
      %v273 = vmul.f32 %v205, %v240
      %v274 = vmul.f32 %v206, %v240
      %v275 = vmul.f32 %v207, %v240
      %v276 = vmul.f32 %v208, %v240
      %v277 = vmul.f32 %v209, %v240
      %v278 = vmul.f32 %v210, %v240
      %v279 = vmul.f32 %v211, %v240
      %v280 = vmul.f32 %v212, %v240
      %v281 = vmul.f32 %v213, %v240
      %v282 = vmul.f32 %v214, %v240
      %v283 = vmul.f32 %v215, %v240
      %v284 = vmul.f32 %v216, %v240
      %v285 = vmul.f32 %v217, %v240
      %v286 = vmul.f32 %v218, %v240
      %v287 = vmul.f32 %v219, %v240
      %v288 = vmul.f32 %v220, %v240
      %v289 = vmul.f32 %v221, %v240
      %v290 = vmul.f32 %v222, %v240
      %v291 = vmul.f32 %v223, %v240
      %v292 = vmul.f32 %v224, %v240
      %v293 = vmul.f32 %v225, %v240
      %v294 = vmul.f32 %v226, %v240
      %v295 = vmul.f32 %v227, %v240
      %v296 = vmul.f32 %v228, %v240
      %v297 = vmul.f32 %v229, %v240
      %v298 = vmul.f32 %v230, %v240
      %v299 = vmul.f32 %v231, %v240
      %v300 = vmul.f32 %v232, %v240
      %v301 = vmul.f32 %v233, %v240
      %v302 = vmul.f32 %v234, %v240
      %v303 = vmul.f32 %v235, %v240
      %v304 = vmul.f32 %v236, %v240
      %v305 = vmul.f32 %v237, %v240
      %v306 = vld [vmem:[%s2] sm:$0x1]
      %v308 = vperm.slane %v306, 0
      %v310 = vadd.f32 %v242, %v308
      %v311 = vadd.f32 %v243, %v308
      %v312 = vadd.f32 %v244, %v308
      %v313 = vadd.f32 %v245, %v308
      %v314 = vadd.f32 %v246, %v308
      %v315 = vadd.f32 %v247, %v308
      %v316 = vadd.f32 %v248, %v308
      %v317 = vadd.f32 %v249, %v308
      %v318 = vadd.f32 %v250, %v308
      %v319 = vadd.f32 %v251, %v308
      %v320 = vadd.f32 %v252, %v308
      %v321 = vadd.f32 %v253, %v308
      %v322 = vadd.f32 %v254, %v308
      %v323 = vadd.f32 %v255, %v308
      %v324 = vadd.f32 %v256, %v308
      %v325 = vadd.f32 %v257, %v308
      %v326 = vadd.f32 %v258, %v308
      %v327 = vadd.f32 %v259, %v308
      %v328 = vadd.f32 %v260, %v308
      %v329 = vadd.f32 %v261, %v308
      %v330 = vadd.f32 %v262, %v308
      %v331 = vadd.f32 %v263, %v308
      %v332 = vadd.f32 %v264, %v308
      %v333 = vadd.f32 %v265, %v308
      %v334 = vadd.f32 %v266, %v308
      %v335 = vadd.f32 %v267, %v308
      %v336 = vadd.f32 %v268, %v308
      %v337 = vadd.f32 %v269, %v308
      %v338 = vadd.f32 %v270, %v308
      %v339 = vadd.f32 %v271, %v308
      %v340 = vadd.f32 %v272, %v308
      %v341 = vadd.f32 %v273, %v308
      %v342 = vadd.f32 %v274, %v308
      %v343 = vadd.f32 %v275, %v308
      %v344 = vadd.f32 %v276, %v308
      %v345 = vadd.f32 %v277, %v308
      %v346 = vadd.f32 %v278, %v308
      %v347 = vadd.f32 %v279, %v308
      %v348 = vadd.f32 %v280, %v308
      %v349 = vadd.f32 %v281, %v308
      %v350 = vadd.f32 %v282, %v308
      %v351 = vadd.f32 %v283, %v308
      %v352 = vadd.f32 %v284, %v308
      %v353 = vadd.f32 %v285, %v308
      %v354 = vadd.f32 %v286, %v308
      %v355 = vadd.f32 %v287, %v308
      %v356 = vadd.f32 %v288, %v308
      %v357 = vadd.f32 %v289, %v308
      %v358 = vadd.f32 %v290, %v308
      %v359 = vadd.f32 %v291, %v308
      %v360 = vadd.f32 %v292, %v308
      %v361 = vadd.f32 %v293, %v308
      %v362 = vadd.f32 %v294, %v308
      %v363 = vadd.f32 %v295, %v308
      %v364 = vadd.f32 %v296, %v308
      %v365 = vadd.f32 %v297, %v308
      %v366 = vadd.f32 %v298, %v308
      %v367 = vadd.f32 %v299, %v308
      %v368 = vadd.f32 %v300, %v308
      %v369 = vadd.f32 %v301, %v308
      %v370 = vadd.f32 %v302, %v308
      %v371 = vadd.f32 %v303, %v308
      %v372 = vadd.f32 %v304, %v308
      %v373 = vadd.f32 %v305, %v308
      %v374 = vmax.f32 %v310, 0.0
      %v375 = vmax.f32 %v311, 0.0
      %v376 = vmax.f32 %v312, 0.0
      %v377 = vmax.f32 %v313, 0.0
      %v378 = vmax.f32 %v314, 0.0
      %v379 = vmax.f32 %v315, 0.0
      %v380 = vmax.f32 %v316, 0.0
      %v381 = vmax.f32 %v317, 0.0
      %v382 = vmax.f32 %v318, 0.0
      %v383 = vmax.f32 %v319, 0.0
      %v384 = vmax.f32 %v320, 0.0
      %v385 = vmax.f32 %v321, 0.0
      %v386 = vmax.f32 %v322, 0.0
      %v387 = vmax.f32 %v323, 0.0
      %v388 = vmax.f32 %v324, 0.0
      %v389 = vmax.f32 %v325, 0.0
      %v390 = vmax.f32 %v326, 0.0
      %v391 = vmax.f32 %v327, 0.0
      %v392 = vmax.f32 %v328, 0.0
      %v393 = vmax.f32 %v329, 0.0
      %v394 = vmax.f32 %v330, 0.0
      %v395 = vmax.f32 %v331, 0.0
      %v396 = vmax.f32 %v332, 0.0
      %v397 = vmax.f32 %v333, 0.0
      %v398 = vmax.f32 %v334, 0.0
      %v399 = vmax.f32 %v335, 0.0
      %v400 = vmax.f32 %v336, 0.0
      %v401 = vmax.f32 %v337, 0.0
      %v402 = vmax.f32 %v338, 0.0
      %v403 = vmax.f32 %v339, 0.0
      %v404 = vmax.f32 %v340, 0.0
      %v405 = vmax.f32 %v341, 0.0
      %v406 = vmax.f32 %v342, 0.0
      %v407 = vmax.f32 %v343, 0.0
      %v408 = vmax.f32 %v344, 0.0
      %v409 = vmax.f32 %v345, 0.0
      %v410 = vmax.f32 %v346, 0.0
      %v411 = vmax.f32 %v347, 0.0
      %v412 = vmax.f32 %v348, 0.0
      %v413 = vmax.f32 %v349, 0.0
      %v414 = vmax.f32 %v350, 0.0
      %v415 = vmax.f32 %v351, 0.0
      %v416 = vmax.f32 %v352, 0.0
      %v417 = vmax.f32 %v353, 0.0
      %v418 = vmax.f32 %v354, 0.0
      %v419 = vmax.f32 %v355, 0.0
      %v420 = vmax.f32 %v356, 0.0
      %v421 = vmax.f32 %v357, 0.0
      %v422 = vmax.f32 %v358, 0.0
      %v423 = vmax.f32 %v359, 0.0
      %v424 = vmax.f32 %v360, 0.0
      %v425 = vmax.f32 %v361, 0.0
      %v426 = vmax.f32 %v362, 0.0
      %v427 = vmax.f32 %v363, 0.0
      %v428 = vmax.f32 %v364, 0.0
      %v429 = vmax.f32 %v365, 0.0
      %v430 = vmax.f32 %v366, 0.0
      %v431 = vmax.f32 %v367, 0.0
      %v432 = vmax.f32 %v368, 0.0
      %v433 = vmax.f32 %v369, 0.0
      %v434 = vmax.f32 %v370, 0.0
      %v435 = vmax.f32 %v371, 0.0
      %v436 = vmax.f32 %v372, 0.0
      %v437 = vmax.f32 %v373, 0.0
      %438 = vst [vmem:[%s172] sm:$0xff] %v374
      %439 = vst [vmem:[%s172 + $0x8] sm:$0xff] %v375
      %440 = vst [vmem:[%s172 + $0x10] sm:$0xff] %v376
      %441 = vst [vmem:[%s172 + $0x18] sm:$0xff] %v377
      %442 = vst [vmem:[%s172 + $0x20] sm:$0xff] %v378
      %443 = vst [vmem:[%s172 + $0x28] sm:$0xff] %v379
      %444 = vst [vmem:[%s172 + $0x30] sm:$0xff] %v380
      %445 = vst [vmem:[%s172 + $0x38] sm:$0xff] %v381
      %446 = vst [vmem:[%s172 + $0x40] sm:$0xff] %v382
      %447 = vst [vmem:[%s172 + $0x48] sm:$0xff] %v383
      %448 = vst [vmem:[%s172 + $0x50] sm:$0xff] %v384
      %449 = vst [vmem:[%s172 + $0x58] sm:$0xff] %v385
      %450 = vst [vmem:[%s172 + $0x60] sm:$0xff] %v386
      %451 = vst [vmem:[%s172 + $0x68] sm:$0xff] %v387
      %452 = vst [vmem:[%s172 + $0x70] sm:$0xff] %v388
      %453 = vst [vmem:[%s172 + $0x78] sm:$0xff] %v389
      %454 = vst [vmem:[%s172 + $0x80] sm:$0xff] %v390
      %455 = vst [vmem:[%s172 + $0x88] sm:$0xff] %v391
      %456 = vst [vmem:[%s172 + $0x90] sm:$0xff] %v392
      %457 = vst [vmem:[%s172 + $0x98] sm:$0xff] %v393
      %458 = vst [vmem:[%s172 + $0xa0] sm:$0xff] %v394
      %459 = vst [vmem:[%s172 + $0xa8] sm:$0xff] %v395
      %460 = vst [vmem:[%s172 + $0xb0] sm:$0xff] %v396
      %461 = vst [vmem:[%s172 + $0xb8] sm:$0xff] %v397
      %462 = vst [vmem:[%s172 + $0xc0] sm:$0xff] %v398
      %463 = vst [vmem:[%s172 + $0xc8] sm:$0xff] %v399
      %464 = vst [vmem:[%s172 + $0xd0] sm:$0xff] %v400
      %465 = vst [vmem:[%s172 + $0xd8] sm:$0xff] %v401
      %466 = vst [vmem:[%s172 + $0xe0] sm:$0xff] %v402
      %467 = vst [vmem:[%s172 + $0xe8] sm:$0xff] %v403
      %468 = vst [vmem:[%s172 + $0xf0] sm:$0xff] %v404
      %469 = vst [vmem:[%s172 + $0xf8] sm:$0xff] %v405
      %470 = vst [vmem:[%s172 + $0x100] sm:$0xff] %v406
      %471 = vst [vmem:[%s172 + $0x108] sm:$0xff] %v407
      %472 = vst [vmem:[%s172 + $0x110] sm:$0xff] %v408
      %473 = vst [vmem:[%s172 + $0x118] sm:$0xff] %v409
      %474 = vst [vmem:[%s172 + $0x120] sm:$0xff] %v410
      %475 = vst [vmem:[%s172 + $0x128] sm:$0xff] %v411
      %476 = vst [vmem:[%s172 + $0x130] sm:$0xff] %v412
      %477 = vst [vmem:[%s172 + $0x138] sm:$0xff] %v413
      %478 = vst [vmem:[%s172 + $0x140] sm:$0xff] %v414
      %479 = vst [vmem:[%s172 + $0x148] sm:$0xff] %v415
      %480 = vst [vmem:[%s172 + $0x150] sm:$0xff] %v416
      %481 = vst [vmem:[%s172 + $0x158] sm:$0xff] %v417
      %482 = vst [vmem:[%s172 + $0x160] sm:$0xff] %v418
      %483 = vst [vmem:[%s172 + $0x168] sm:$0xff] %v419
      %484 = vst [vmem:[%s172 + $0x170] sm:$0xff] %v420
      %485 = vst [vmem:[%s172 + $0x178] sm:$0xff] %v421
      %486 = vst [vmem:[%s172 + $0x180] sm:$0xff] %v422
      %487 = vst [vmem:[%s172 + $0x188] sm:$0xff] %v423
      %488 = vst [vmem:[%s172 + $0x190] sm:$0xff] %v424
      %489 = vst [vmem:[%s172 + $0x198] sm:$0xff] %v425
      %490 = vst [vmem:[%s172 + $0x1a0] sm:$0xff] %v426
      %491 = vst [vmem:[%s172 + $0x1a8] sm:$0xff] %v427
      %492 = vst [vmem:[%s172 + $0x1b0] sm:$0xff] %v428
      %493 = vst [vmem:[%s172 + $0x1b8] sm:$0xff] %v429
      %494 = vst [vmem:[%s172 + $0x1c0] sm:$0xff] %v430
      %495 = vst [vmem:[%s172 + $0x1c8] sm:$0xff] %v431
      %496 = vst [vmem:[%s172 + $0x1d0] sm:$0xff] %v432
      %497 = vst [vmem:[%s172 + $0x1d8] sm:$0xff] %v433
      %498 = vst [vmem:[%s172 + $0x1e0] sm:$0xff] %v434
      %499 = vst [vmem:[%s172 + $0x1e8] sm:$0xff] %v435
      %500 = vst [vmem:[%s172 + $0x1f0] sm:$0xff] %v436
      %501 = vst [vmem:[%s172 + $0x1f8] sm:$0xff] %v437
      %s502 = smul.u32 64, %s14
      %p503 = scmp.lt.s32.totalorder %s502, 127
      %s504 = scalar_select %p503, %s502, 127
      %s505 = smul.addr %s504, 8
      %s506 = scalar_lea.vmem %s3, %s505
      // Predicated region
      $region33: #{generator_forward.22} parent=31 // pred_check
        %p507 = pneg %p100
      $region34: #{generator_forward.22} parent=31 // pred_check_branch
        %509 = sbr.rel (%p507) target = $region36
      $region35: #{generator_forward.22} parent=31 // pred_region
        %s510 = smul.u32 64, %s14
      $region36: #{generator_forward.22} parent=31 // pred_fallthru
        _
    $region32: #{generator_forward.22} parent=5 // pred_fallthru
      _
    %p511 = scmp.le.s32.totalorder 2, %s9
    // Predicated region
    $region37: #{generator_forward.22} parent=5 // pred_check
      %p512 = pneg %p511
    $region38: #{generator_forward.22} parent=5 // pred_check_branch
      %514 = sbr.rel (%p512) target = $region40
    $region39: #{generator_forward.22} parent=5 // pred_region
      %s515 = ssub.s32 %s9, 2
      // Predicated region
      $region41: #{generator_forward.22} parent=39 // pred_check
        %p516 = pneg %p106
      $region42: #{generator_forward.22} parent=39 // pred_check_branch
        %518 = sbr.rel (%p516) target = $region44
      $region43: #{generator_forward.22} parent=39 // pred_region
        %s519 = smul.u32 64, %s15
        %p520 = scmp.lt.s32.totalorder %s519, 127
        %s521 = scalar_select %p520, %s519, 127
        %s522 = smul.addr %s521, 8
        %s523 = scalar_lea.vmem %s3, %s522
      $region44: #{generator_forward.22} parent=39 // pred_fallthru
        _
    $region40: #{generator_forward.22} parent=5 // pred_fallthru
      _
  $region6: #{generator_forward.22} parent=0 // loop_footer
    %s13 = sadd.s32 1, %s9
  $region7: #{generator_forward.22} parent=0 // loop_footer_branch
    %8 = sbr.rel target = $region3
  $region8: #{generator_forward.22} parent=0 // loop_exit
    _

// kernel: generator_forward.21
$region0: #{generator_forward.21}
  #allocation0 [shape = 'u32[]', space=smem, size = 0x4, offset = 0x4, fixed_abs, tag = 'smem constant byte address 0x4 - core index']
  #allocation1 [shape = 'u32[72,128]{1,0:T(1,128)}', space=vmem, size = 0x9000, scoped, tag = 'internal scratch']
  %s0 = inlined_call_operand.vmem [shape: bf16[1024,64], index: 0, kind: input, shape index: {}]
  %s1 = inlined_call_operand.vmem [shape: bf16[64,128], index: 1, kind: input, shape index: {}]
  %s2 = inlined_call_operand.vmem [shape: f32[1,128], index: 2, kind: input, shape index: {}]
  %s3 = inlined_call_operand.vmem [shape: f32[1024,128], index: 3, kind: output, shape index: {0}]
  %s4 = inlined_call_operand.vmem [shape: f32[16,128], index: 4, kind: output, shape index: {1}]
  %s5 = inlined_call_operand.vmem [shape: f32[16,128], index: 5, kind: output, shape index: {2}]
  %6 = xla_tuple %s3, %s4, %s5
  %s7 = sld [smem:[#allocation0]]
  $region61: #{generator_forward.21} parent=0
    _
  %s9 = ssub.s32 1, %s7
  %s10 = scalar_select 0, %s9, %s7
  loop: start=0, step=1, limit=4
  $region2: #{generator_forward.21} parent=0 // loop_pre_header
    _
  $region3: #{generator_forward.21} parent=0 // loop_header
    %s12 = sphi 0, %s16
    %p13 = scmp.ge.s32.totalorder %s12, 4
    %s22 = sphi 0, %s24
    %s25 = sphi 0, %s22
    %s26 = sphi 0, %s25
    %s42 = sphi 0, %s26
    %s46 = sphi 0, %s46
    %s48 = sphi 0, %s46
    %s49 = sphi 0, %s48
    %s63 = sphi 0, %s49
    %s67 = sphi 0, %s67
    %s69 = sphi 0, %s67
    %s70 = sphi 0, %s69
    %s84 = sphi 0, %s70
    %s90 = sphi 0, %s92
    %s93 = sphi 0, %s90
    %s94 = sphi 0, %s93
    %s110 = sphi 0, %s94
    %s116 = sphi 0, %s118
    %s119 = sphi 0, %s116
    %s120 = sphi 0, %s119
    %s136 = sphi 0, %s120
    %s142 = sphi 0, %s144
    %s145 = sphi 0, %s142
    %s146 = sphi 0, %s145
    %s162 = sphi 0, %s146
  $region4: #{generator_forward.21} parent=0 // loop_header_branch
    %15 = sbr.rel (%p13) target = $region8
  $region5: #{generator_forward.21} parent=0 // loop_body
    %s17 = ssub.s32 %s12, 1
    %s18 = ssub.s32 %s12, 2
    %s19 = sadd.s32 %s12, 1
    %s20 = ssub.s32 %s12, %s19
    %p21 = scmp.eq.s32.totalorder %s20, 0
    %s23 = sadd.s32 %s22, 1
    %s24 = scalar_select %p21, %s22, %s23
    %p27 = pneg %p21
    %p28 = scmp.eq.s32.totalorder %s12, 1
    %p29 = por %p27, %p28
    %p30 = scmp.ne.s32.totalorder %s22, %s25
    %p31 = scmp.eq.s32.totalorder %s12, 0
    %p32 = por %p30, %p31
    %p33 = scmp.ne.s32.totalorder %s22, %s25
    %p34 = scmp.eq.s32.totalorder %s17, 1
    %p35 = por %p33, %p34
    %p36 = scmp.ne.s32.totalorder %s25, %s26
    %p37 = scmp.eq.s32.totalorder %s17, 0
    %p38 = por %p36, %p37
    %p39 = scmp.ne.s32.totalorder %s25, %s26
    %p40 = scmp.eq.s32.totalorder %s18, 1
    %p41 = por %p39, %p40
    %p43 = scmp.ne.s32.totalorder %s26, %s42
    %p44 = scmp.eq.s32.totalorder %s18, 0
    %p45 = por %p43, %p44
    %s47 = sadd.s32 %s46, 1
    %p50 = scmp.eq.s32.totalorder %s12, 1
    %p51 = scmp.ne.s32.totalorder %s46, %s48
    %p52 = scmp.eq.s32.totalorder %s12, 0
    %p53 = por %p51, %p52
    %p54 = scmp.ne.s32.totalorder %s46, %s48
    %p55 = scmp.eq.s32.totalorder %s17, 1
    %p56 = por %p54, %p55
    %p57 = scmp.ne.s32.totalorder %s48, %s49
    %p58 = scmp.eq.s32.totalorder %s17, 0
    %p59 = por %p57, %p58
    %p60 = scmp.ne.s32.totalorder %s48, %s49
    %p61 = scmp.eq.s32.totalorder %s18, 1
    %p62 = por %p60, %p61
    %p64 = scmp.ne.s32.totalorder %s49, %s63
    %p65 = scmp.eq.s32.totalorder %s18, 0
    %p66 = por %p64, %p65
    %s68 = sadd.s32 %s67, 1
    %p71 = scmp.eq.s32.totalorder %s12, 1
    %p72 = scmp.ne.s32.totalorder %s67, %s69
    %p73 = scmp.eq.s32.totalorder %s12, 0
    %p74 = por %p72, %p73
    %p75 = scmp.ne.s32.totalorder %s67, %s69
    %p76 = scmp.eq.s32.totalorder %s17, 1
    %p77 = por %p75, %p76
    %p78 = scmp.ne.s32.totalorder %s69, %s70
    %p79 = scmp.eq.s32.totalorder %s17, 0
    %p80 = por %p78, %p79
    %p81 = scmp.ne.s32.totalorder %s69, %s70
    %p82 = scmp.eq.s32.totalorder %s18, 1
    %p83 = por %p81, %p82
    %p85 = scmp.ne.s32.totalorder %s70, %s84
    %p86 = scmp.eq.s32.totalorder %s18, 0
    %p87 = por %p85, %p86
    %s88 = ssub.s32 %s12, %s19
    %p89 = scmp.eq.s32.totalorder %s88, 0
    %s91 = sadd.s32 %s90, 1
    %s92 = scalar_select %p89, %s90, %s91
    %p95 = pneg %p89
    %p96 = scmp.eq.s32.totalorder %s12, 1
    %p97 = por %p95, %p96
    %p98 = scmp.ne.s32.totalorder %s90, %s93
    %p99 = scmp.eq.s32.totalorder %s12, 0
    %p100 = por %p98, %p99
    %p101 = scmp.ne.s32.totalorder %s90, %s93
    %p102 = scmp.eq.s32.totalorder %s17, 1
    %p103 = por %p101, %p102
    %p104 = scmp.ne.s32.totalorder %s93, %s94
    %p105 = scmp.eq.s32.totalorder %s17, 0
    %p106 = por %p104, %p105
    %p107 = scmp.ne.s32.totalorder %s93, %s94
    %p108 = scmp.eq.s32.totalorder %s18, 1
    %p109 = por %p107, %p108
    %p111 = scmp.ne.s32.totalorder %s94, %s110
    %p112 = scmp.eq.s32.totalorder %s18, 0
    %p113 = por %p111, %p112
    %s114 = ssub.s32 %s12, %s19
    %p115 = scmp.eq.s32.totalorder %s114, 0
    %s117 = sadd.s32 %s116, 1
    %s118 = scalar_select %p115, %s116, %s117
    %p121 = pneg %p115
    %p122 = scmp.eq.s32.totalorder %s12, 1
    %p123 = por %p121, %p122
    %p124 = scmp.ne.s32.totalorder %s116, %s119
    %p125 = scmp.eq.s32.totalorder %s12, 0
    %p126 = por %p124, %p125
    %p127 = scmp.ne.s32.totalorder %s116, %s119
    %p128 = scmp.eq.s32.totalorder %s17, 1
    %p129 = por %p127, %p128
    %p130 = scmp.ne.s32.totalorder %s119, %s120
    %p131 = scmp.eq.s32.totalorder %s17, 0
    %p132 = por %p130, %p131
    %p133 = scmp.ne.s32.totalorder %s119, %s120
    %p134 = scmp.eq.s32.totalorder %s18, 1
    %p135 = por %p133, %p134
    %p137 = scmp.ne.s32.totalorder %s120, %s136
    %p138 = scmp.eq.s32.totalorder %s18, 0
    %p139 = por %p137, %p138
    %s140 = ssub.s32 %s12, %s19
    %p141 = scmp.eq.s32.totalorder %s140, 0
    %s143 = sadd.s32 %s142, 1
    %s144 = scalar_select %p141, %s142, %s143
    %p147 = pneg %p141
    %p148 = scmp.eq.s32.totalorder %s12, 1
    %p149 = por %p147, %p148
    %p150 = scmp.ne.s32.totalorder %s142, %s145
    %p151 = scmp.eq.s32.totalorder %s12, 0
    %p152 = por %p150, %p151
    %p153 = scmp.ne.s32.totalorder %s142, %s145
    %p154 = scmp.eq.s32.totalorder %s17, 1
    %p155 = por %p153, %p154
    %p156 = scmp.ne.s32.totalorder %s145, %s146
    %p157 = scmp.eq.s32.totalorder %s17, 0
    %p158 = por %p156, %p157
    %p159 = scmp.ne.s32.totalorder %s145, %s146
    %p160 = scmp.eq.s32.totalorder %s18, 1
    %p161 = por %p159, %p160
    %p163 = scmp.ne.s32.totalorder %s146, %s162
    %p164 = scmp.eq.s32.totalorder %s18, 0
    %p165 = por %p163, %p164
    %p166 = scmp.le.s32.totalorder 1, %s12
    %p167 = scmp.lt.s32.totalorder %s12, 3
    %p168 = pnand %p166, %p167
    %p169 = pneg %p168
    // Predicated region
    $region9: #{generator_forward.21} parent=5 // pred_check
      _
    $region10: #{generator_forward.21} parent=5 // pred_check_branch
      %171 = sbr.rel (%p168) target = $region12
    $region11: #{generator_forward.21} parent=5 // pred_region
      %s172 = ssub.s32 %s12, 1
      // Predicated region
      $region13: #{generator_forward.21} parent=11 // pred_check
        %p173 = pneg %p59
      $region14: #{generator_forward.21} parent=11 // pred_check_branch
        %175 = sbr.rel (%p173) target = $region16
      $region15: #{generator_forward.21} parent=11 // pred_region
        _
      $region16: #{generator_forward.21} parent=11 // pred_fallthru
        _
      // Predicated region
      $region17: #{generator_forward.21} parent=11 // pred_check
        %p176 = pneg %p80
      $region18: #{generator_forward.21} parent=11 // pred_check_branch
        %178 = sbr.rel (%p176) target = $region20
      $region19: #{generator_forward.21} parent=11 // pred_region
        _
      $region20: #{generator_forward.21} parent=11 // pred_fallthru
        _
    $region12: #{generator_forward.21} parent=5 // pred_fallthru
      _
    %p179 = scmp.lt.s32.totalorder %s12, 2
    // Predicated region
    $region21: #{generator_forward.21} parent=5 // pred_check
      %p180 = pneg %p179
    $region22: #{generator_forward.21} parent=5 // pred_check_branch
      %182 = sbr.rel (%p180) target = $region24
    $region23: #{generator_forward.21} parent=5 // pred_region
      // Predicated region
      $region25: #{generator_forward.21} parent=23 // pred_check
        %p183 = pneg %p32
      $region26: #{generator_forward.21} parent=23 // pred_check_branch
        %185 = sbr.rel (%p183) target = $region28
      $region27: #{generator_forward.21} parent=23 // pred_region
        %s186 = smul.u32 64, %s12
        %p187 = scmp.lt.s32.totalorder %s186, 127
        %s188 = scalar_select %p187, %s186, 127
        %s189 = smul.addr %s188, 4
        %s190 = scalar_lea.vmem %s0, %s189
        %s191 = smul.u32 64, %s12
      $region28: #{generator_forward.21} parent=23 // pred_fallthru
        _
    $region24: #{generator_forward.21} parent=5 // pred_fallthru
      _
    %p192 = scmp.le.s32.totalorder 1, %s12
    %p193 = scmp.lt.s32.totalorder %s12, 3
    %p194 = pnand %p192, %p193
    %p195 = pneg %p194
    // Predicated region
    $region29: #{generator_forward.21} parent=5 // pred_check
      _
    $region30: #{generator_forward.21} parent=5 // pred_check_branch
      %197 = sbr.rel (%p194) target = $region32
    $region31: #{generator_forward.21} parent=5 // pred_region
      %s198 = ssub.s32 %s12, 1
      %s199 = smul.u32 64, %s17
      %p200 = scmp.lt.s32.totalorder %s199, 127
      %s201 = scalar_select %p200, %s199, 127
      %s202 = smul.addr %s201, 4
      %s203 = scalar_lea.vmem %s0, %s202
      %p204 = pneg %p38
      %p205 = pneg %p35
      %p206 = pneg %p59
      %p207 = pneg %p56
      %p208 = pneg %p80
      %p209 = pneg %p77
      %p210 = pneg %p106
      %p211 = pneg %p103
      %s212 = smul.u32 64, %s17
      %p213 = scmp.lt.s32.totalorder %s212, 127
      %s214 = scalar_select %p213, %s212, 127
      %s215 = smul.addr %s214, 8
      %s216 = scalar_lea.vmem %s3, %s215
      %p217 = pneg %p132
      %p218 = pneg %p129
      %p219 = scmp.lt.s32.totalorder %s17, 1
      %s220 = scalar_select %p219, %s17, 1
      %s221 = smul.addr %s220, 8
      %s222 = scalar_lea.vmem %s4, %s221
      %p223 = pneg %p158
      %p224 = pneg %p155
      %p225 = scmp.lt.s32.totalorder %s17, 1
      %s226 = scalar_select %p225, %s17, 1
      %s227 = smul.addr %s226, 8
      %s228 = scalar_lea.vmem %s5, %s227
      %s229 = smul.u32 64, %s17
      %p230 = scmp.lt.s32.totalorder %s229, 127
      %s231 = scalar_select %p230, %s229, 127
      %s232 = smul.addr %s231, 4
      %s233 = scalar_lea.vmem %s0, %s232
      %s234 = smul.u32 64, %s17
      %s235 = smul.u32 64, %s17
      %p236 = scmp.lt.s32.totalorder %s235, 127
      %s237 = scalar_select %p236, %s235, 127
      %s238 = smul.addr %s237, 8
      %s239 = scalar_lea.vmem %s3, %s238
      %s240 = smul.u32 64, %s17
      %p241 = scmp.lt.s32.totalorder %s17, 1
      %s242 = scalar_select %p241, %s17, 1
      %s243 = smul.addr %s242, 8
      %s244 = scalar_lea.vmem %s4, %s243
      %p245 = scmp.lt.s32.totalorder %s17, 1
      %s246 = scalar_select %p245, %s17, 1
      %s247 = smul.addr %s246, 8
      %s248 = scalar_lea.vmem %s5, %s247
      %v250 = vld [vmem:[%s233] sm:$0xf]
      %v251 = vld [vmem:[%s233 + $0x4] sm:$0xf]
      %v252 = vld [vmem:[%s233 + $0x8] sm:$0xf]
      %v253 = vld [vmem:[%s233 + $0xc] sm:$0xf]
      %v254 = vld [vmem:[%s233 + $0x10] sm:$0xf]
      %v255 = vld [vmem:[%s233 + $0x14] sm:$0xf]
      %v256 = vld [vmem:[%s233 + $0x18] sm:$0xf]
      %v257 = vld [vmem:[%s233 + $0x1c] sm:$0xf]
      %v258 = vld [vmem:[%s233 + $0x20] sm:$0xf]
      %v259 = vld [vmem:[%s233 + $0x24] sm:$0xf]
      %v260 = vld [vmem:[%s233 + $0x28] sm:$0xf]
      %v261 = vld [vmem:[%s233 + $0x2c] sm:$0xf]
      %v262 = vld [vmem:[%s233 + $0x30] sm:$0xf]
      %v263 = vld [vmem:[%s233 + $0x34] sm:$0xf]
      %v264 = vld [vmem:[%s233 + $0x38] sm:$0xf]
      %v265 = vld [vmem:[%s233 + $0x3c] sm:$0xf]
      %v266 = vld [vmem:[%s233 + $0x40] sm:$0xf]
      %v267 = vld [vmem:[%s233 + $0x44] sm:$0xf]
      %v268 = vld [vmem:[%s233 + $0x48] sm:$0xf]
      %v269 = vld [vmem:[%s233 + $0x4c] sm:$0xf]
      %v270 = vld [vmem:[%s233 + $0x50] sm:$0xf]
      %v271 = vld [vmem:[%s233 + $0x54] sm:$0xf]
      %v272 = vld [vmem:[%s233 + $0x58] sm:$0xf]
      %v273 = vld [vmem:[%s233 + $0x5c] sm:$0xf]
      %v274 = vld [vmem:[%s233 + $0x60] sm:$0xf]
      %v275 = vld [vmem:[%s233 + $0x64] sm:$0xf]
      %v276 = vld [vmem:[%s233 + $0x68] sm:$0xf]
      %v277 = vld [vmem:[%s233 + $0x6c] sm:$0xf]
      %v278 = vld [vmem:[%s233 + $0x70] sm:$0xf]
      %v279 = vld [vmem:[%s233 + $0x74] sm:$0xf]
      %v280 = vld [vmem:[%s233 + $0x78] sm:$0xf]
      %v281 = vld [vmem:[%s233 + $0x7c] sm:$0xf]
      %v282 = vld [vmem:[%s233 + $0x80] sm:$0xf]
      %v283 = vld [vmem:[%s233 + $0x84] sm:$0xf]
      %v284 = vld [vmem:[%s233 + $0x88] sm:$0xf]
      %v285 = vld [vmem:[%s233 + $0x8c] sm:$0xf]
      %v286 = vld [vmem:[%s233 + $0x90] sm:$0xf]
      %v287 = vld [vmem:[%s233 + $0x94] sm:$0xf]
      %v288 = vld [vmem:[%s233 + $0x98] sm:$0xf]
      %v289 = vld [vmem:[%s233 + $0x9c] sm:$0xf]
      %v290 = vld [vmem:[%s233 + $0xa0] sm:$0xf]
      %v291 = vld [vmem:[%s233 + $0xa4] sm:$0xf]
      %v292 = vld [vmem:[%s233 + $0xa8] sm:$0xf]
      %v293 = vld [vmem:[%s233 + $0xac] sm:$0xf]
      %v294 = vld [vmem:[%s233 + $0xb0] sm:$0xf]
      %v295 = vld [vmem:[%s233 + $0xb4] sm:$0xf]
      %v296 = vld [vmem:[%s233 + $0xb8] sm:$0xf]
      %v297 = vld [vmem:[%s233 + $0xbc] sm:$0xf]
      %v298 = vld [vmem:[%s233 + $0xc0] sm:$0xf]
      %v299 = vld [vmem:[%s233 + $0xc4] sm:$0xf]
      %v300 = vld [vmem:[%s233 + $0xc8] sm:$0xf]
      %v301 = vld [vmem:[%s233 + $0xcc] sm:$0xf]
      %v302 = vld [vmem:[%s233 + $0xd0] sm:$0xf]
      %v303 = vld [vmem:[%s233 + $0xd4] sm:$0xf]
      %v304 = vld [vmem:[%s233 + $0xd8] sm:$0xf]
      %v305 = vld [vmem:[%s233 + $0xdc] sm:$0xf]
      %v306 = vld [vmem:[%s233 + $0xe0] sm:$0xf]
      %v307 = vld [vmem:[%s233 + $0xe4] sm:$0xf]
      %v308 = vld [vmem:[%s233 + $0xe8] sm:$0xf]
      %v309 = vld [vmem:[%s233 + $0xec] sm:$0xf]
      %v310 = vld [vmem:[%s233 + $0xf0] sm:$0xf]
      %v311 = vld [vmem:[%s233 + $0xf4] sm:$0xf]
      %v312 = vld [vmem:[%s233 + $0xf8] sm:$0xf]
      %v313 = vld [vmem:[%s233 + $0xfc] sm:$0xf]
      %v314 = vld [vmem:[%s1] sm:$0xf]
      %v315 = vld [vmem:[%s1 + $0x4] sm:$0xf]
      %v316 = vld [vmem:[%s1 + $0x8] sm:$0xf]
      %v317 = vld [vmem:[%s1 + $0xc] sm:$0xf]
      %v318 = vld [vmem:[%s1 + $0x10] sm:$0xf]
      %v319 = vld [vmem:[%s1 + $0x14] sm:$0xf]
      %v320 = vld [vmem:[%s1 + $0x18] sm:$0xf]
      %v321 = vld [vmem:[%s1 + $0x1c] sm:$0xf]
      %v322 = vld [vmem:[%s2] sm:$0x1]
      %v324 = vperm.slane %v322, 0
      %v390 = vunpack.c.l.b16 %v250
      %v391 = vunpack.c.l.b16 %v251
      %v392 = vunpack.c.l.b16 %v252
      %v393 = vunpack.c.l.b16 %v253
      %v394 = vunpack.c.l.b16 %v254
      %v395 = vunpack.c.l.b16 %v255
      %v396 = vunpack.c.l.b16 %v256
      %v397 = vunpack.c.l.b16 %v257
      %v398 = vunpack.c.l.b16 %v258
      %v399 = vunpack.c.l.b16 %v259
      %v400 = vunpack.c.l.b16 %v260
      %v401 = vunpack.c.l.b16 %v261
      %v402 = vunpack.c.l.b16 %v262
      %v403 = vunpack.c.l.b16 %v263
      %v404 = vunpack.c.l.b16 %v264
      %v405 = vunpack.c.l.b16 %v265
      %v406 = vunpack.c.l.b16 %v266
      %v407 = vunpack.c.l.b16 %v267
      %v408 = vunpack.c.l.b16 %v268
      %v409 = vunpack.c.l.b16 %v269
      %v410 = vunpack.c.l.b16 %v270
      %v411 = vunpack.c.l.b16 %v271
      %v412 = vunpack.c.l.b16 %v272
      %v413 = vunpack.c.l.b16 %v273
      %v414 = vunpack.c.l.b16 %v274
      %v415 = vunpack.c.l.b16 %v275
      %v416 = vunpack.c.l.b16 %v276
      %v417 = vunpack.c.l.b16 %v277
      %v418 = vunpack.c.l.b16 %v278
      %v419 = vunpack.c.l.b16 %v279
      %v420 = vunpack.c.l.b16 %v280
      %v421 = vunpack.c.l.b16 %v281
      %v422 = vunpack.c.l.b16 %v282
      %v423 = vunpack.c.l.b16 %v283
      %v424 = vunpack.c.l.b16 %v284
      %v425 = vunpack.c.l.b16 %v285
      %v426 = vunpack.c.l.b16 %v286
      %v427 = vunpack.c.l.b16 %v287
      %v428 = vunpack.c.l.b16 %v288
      %v429 = vunpack.c.l.b16 %v289
      %v430 = vunpack.c.l.b16 %v290
      %v431 = vunpack.c.l.b16 %v291
      %v432 = vunpack.c.l.b16 %v292
      %v433 = vunpack.c.l.b16 %v293
      %v434 = vunpack.c.l.b16 %v294
      %v435 = vunpack.c.l.b16 %v295
      %v436 = vunpack.c.l.b16 %v296
      %v437 = vunpack.c.l.b16 %v297
      %v438 = vunpack.c.l.b16 %v298
      %v439 = vunpack.c.l.b16 %v299
      %v440 = vunpack.c.l.b16 %v300
      %v441 = vunpack.c.l.b16 %v301
      %v442 = vunpack.c.l.b16 %v302
      %v443 = vunpack.c.l.b16 %v303
      %v444 = vunpack.c.l.b16 %v304
      %v445 = vunpack.c.l.b16 %v305
      %v446 = vunpack.c.l.b16 %v306
      %v447 = vunpack.c.l.b16 %v307
      %v448 = vunpack.c.l.b16 %v308
      %v449 = vunpack.c.l.b16 %v309
      %v450 = vunpack.c.l.b16 %v310
      %v451 = vunpack.c.l.b16 %v311
      %v452 = vunpack.c.l.b16 %v312
      %v453 = vunpack.c.l.b16 %v313
      %v454 = vpack.c.b16 %v391, %v390
      %v455 = vpack.c.b16 %v393, %v392
      %v456 = vpack.c.b16 %v395, %v394
      %v457 = vpack.c.b16 %v397, %v396
      %v458 = vpack.c.b16 %v399, %v398
      %v459 = vpack.c.b16 %v401, %v400
      %v460 = vpack.c.b16 %v403, %v402
      %v461 = vpack.c.b16 %v405, %v404
      %v462 = vpack.c.b16 %v407, %v406
      %v463 = vpack.c.b16 %v409, %v408
      %v464 = vpack.c.b16 %v411, %v410
      %v465 = vpack.c.b16 %v413, %v412
      %v466 = vpack.c.b16 %v415, %v414
      %v467 = vpack.c.b16 %v417, %v416
      %v468 = vpack.c.b16 %v419, %v418
      %v469 = vpack.c.b16 %v421, %v420
      %v470 = vpack.c.b16 %v423, %v422
      %v471 = vpack.c.b16 %v425, %v424
      %v472 = vpack.c.b16 %v427, %v426
      %v473 = vpack.c.b16 %v429, %v428
      %v474 = vpack.c.b16 %v431, %v430
      %v475 = vpack.c.b16 %v433, %v432
      %v476 = vpack.c.b16 %v435, %v434
      %v477 = vpack.c.b16 %v437, %v436
      %v478 = vpack.c.b16 %v439, %v438
      %v479 = vpack.c.b16 %v441, %v440
      %v480 = vpack.c.b16 %v443, %v442
      %v481 = vpack.c.b16 %v445, %v444
      %v482 = vpack.c.b16 %v447, %v446
      %v483 = vpack.c.b16 %v449, %v448
      %v484 = vpack.c.b16 %v451, %v450
      %v485 = vpack.c.b16 %v453, %v452
      %v494 = vunpack.c.l.b16 %v314
      %v495 = vunpack.c.l.b16 %v315
      %v496 = vunpack.c.l.b16 %v316
      %v497 = vunpack.c.l.b16 %v317
      %v498 = vunpack.c.l.b16 %v318
      %v499 = vunpack.c.l.b16 %v319
      %v500 = vunpack.c.l.b16 %v320
      %v501 = vunpack.c.l.b16 %v321
      %v502 = vpack.c.b16 %v495, %v494
      %v503 = vpack.c.b16 %v497, %v496
      %v504 = vpack.c.b16 %v499, %v498
      %v505 = vpack.c.b16 %v501, %v500
      %vm510 = vcmask 523264
      %v512 = vsel %vm510, %v454, 0
      %v515 = vsel %vm510, %v455, 0
      %v518 = vsel %vm510, %v456, 0
      %v521 = vsel %vm510, %v457, 0
      %v524 = vsel %vm510, %v458, 0
      %v527 = vsel %vm510, %v459, 0
      %v530 = vsel %vm510, %v460, 0
      %v533 = vsel %vm510, %v461, 0
      %v536 = vsel %vm510, %v462, 0
      %v539 = vsel %vm510, %v463, 0
      %v542 = vsel %vm510, %v464, 0
      %v545 = vsel %vm510, %v465, 0
      %v548 = vsel %vm510, %v466, 0
      %v551 = vsel %vm510, %v467, 0
      %v554 = vsel %vm510, %v468, 0
      %v557 = vsel %vm510, %v469, 0
      %v560 = vsel %vm510, %v470, 0
      %v563 = vsel %vm510, %v471, 0
      %v566 = vsel %vm510, %v472, 0
      %v569 = vsel %vm510, %v473, 0
      %v572 = vsel %vm510, %v474, 0
      %v575 = vsel %vm510, %v475, 0
      %v578 = vsel %vm510, %v476, 0
      %v581 = vsel %vm510, %v477, 0
      %v584 = vsel %vm510, %v478, 0
      %v587 = vsel %vm510, %v479, 0
      %v590 = vsel %vm510, %v480, 0
      %v593 = vsel %vm510, %v481, 0
      %v596 = vsel %vm510, %v482, 0
      %v599 = vsel %vm510, %v483, 0
      %v602 = vsel %vm510, %v484, 0
      %v605 = vsel %vm510, %v485, 0
      %607 = vmatpush.bf16.msra.mxu0 0
      %608 = vmatpush.bf16.msra.mxu0 0
      %609 = vmatpush.bf16.msra.mxu0 0
      %610 = vmatpush.bf16.msra.mxu0 0
      %611 = vmatpush.bf16.msra.mxu0 %v505
      %612 = vmatpush.bf16.msra.mxu0 %v504
      %613 = vmatpush.bf16.msra.mxu0 %v503
      %614 = vmatpush.bf16.msra.mxu0 %v502
      %615 = vmatmul.bf16.gmra.mxu0 %v512
      %v616 = vpop.f32.mrf.mxu0
      %v617 = vadd.f32 %v324, %v616
      %v618 = vpop.f32.mrf.mxu0
      %v619 = vadd.f32 %v324, %v618
      %620 = vmatmul.bf16.gmra.mxu0 %v515
      %v621 = vpop.f32.mrf.mxu0
      %v622 = vadd.f32 %v324, %v621
      %v623 = vpop.f32.mrf.mxu0
      %v624 = vadd.f32 %v324, %v623
      %625 = vmatmul.bf16.gmra.mxu0 %v518
      %v626 = vpop.f32.mrf.mxu0
      %v627 = vadd.f32 %v324, %v626
      %v628 = vpop.f32.mrf.mxu0
      %v629 = vadd.f32 %v324, %v628
      %630 = vmatmul.bf16.gmra.mxu0 %v521
      %v631 = vpop.f32.mrf.mxu0
      %v632 = vadd.f32 %v324, %v631
      %v633 = vpop.f32.mrf.mxu0
      %v634 = vadd.f32 %v324, %v633
      %635 = vmatmul.bf16.gmra.mxu0 %v524
      %v636 = vpop.f32.mrf.mxu0
      %v637 = vadd.f32 %v324, %v636
      %v638 = vpop.f32.mrf.mxu0
      %v639 = vadd.f32 %v324, %v638
      %640 = vmatmul.bf16.gmra.mxu0 %v527
      %v641 = vpop.f32.mrf.mxu0
      %v642 = vadd.f32 %v324, %v641
      %v643 = vpop.f32.mrf.mxu0
      %v644 = vadd.f32 %v324, %v643
      %645 = vmatmul.bf16.gmra.mxu0 %v530
      %v646 = vpop.f32.mrf.mxu0
      %v647 = vadd.f32 %v324, %v646
      %v648 = vpop.f32.mrf.mxu0
      %v649 = vadd.f32 %v324, %v648
      %650 = vmatmul.bf16.gmra.mxu0 %v533
      %v651 = vpop.f32.mrf.mxu0
      %v652 = vadd.f32 %v324, %v651
      %v653 = vpop.f32.mrf.mxu0
      %v654 = vadd.f32 %v324, %v653
      %655 = vmatmul.bf16.gmra.mxu0 %v536
      %v656 = vpop.f32.mrf.mxu0
      %v657 = vadd.f32 %v324, %v656
      %v658 = vpop.f32.mrf.mxu0
      %v659 = vadd.f32 %v324, %v658
      %660 = vmatmul.bf16.gmra.mxu0 %v539
      %v661 = vpop.f32.mrf.mxu0
      %v662 = vadd.f32 %v324, %v661
      %v663 = vpop.f32.mrf.mxu0
      %v664 = vadd.f32 %v324, %v663
      %665 = vmatmul.bf16.gmra.mxu0 %v542
      %v666 = vpop.f32.mrf.mxu0
      %v667 = vadd.f32 %v324, %v666
      %v668 = vpop.f32.mrf.mxu0
      %v669 = vadd.f32 %v324, %v668
      %670 = vmatmul.bf16.gmra.mxu0 %v545
      %v671 = vpop.f32.mrf.mxu0
      %v672 = vadd.f32 %v324, %v671
      %v673 = vpop.f32.mrf.mxu0
      %v674 = vadd.f32 %v324, %v673
      %675 = vmatmul.bf16.gmra.mxu0 %v548
      %v676 = vpop.f32.mrf.mxu0
      %v677 = vadd.f32 %v324, %v676
      %v678 = vpop.f32.mrf.mxu0
      %v679 = vadd.f32 %v324, %v678
      %680 = vmatmul.bf16.gmra.mxu0 %v551
      %v681 = vpop.f32.mrf.mxu0
      %v682 = vadd.f32 %v324, %v681
      %v683 = vpop.f32.mrf.mxu0
      %v684 = vadd.f32 %v324, %v683
      %685 = vmatmul.bf16.gmra.mxu0 %v554
      %v686 = vpop.f32.mrf.mxu0
      %v687 = vadd.f32 %v324, %v686
      %v688 = vpop.f32.mrf.mxu0
      %v689 = vadd.f32 %v324, %v688
      %690 = vmatmul.bf16.gmra.mxu0 %v557
      %v691 = vpop.f32.mrf.mxu0
      %v692 = vadd.f32 %v324, %v691
      %v693 = vpop.f32.mrf.mxu0
      %v694 = vadd.f32 %v324, %v693
      %695 = vmatmul.bf16.gmra.mxu0 %v560
      %v696 = vpop.f32.mrf.mxu0
      %v697 = vadd.f32 %v324, %v696
      %v698 = vpop.f32.mrf.mxu0
      %v699 = vadd.f32 %v324, %v698
      %700 = vmatmul.bf16.gmra.mxu0 %v563
      %v701 = vpop.f32.mrf.mxu0
      %v702 = vadd.f32 %v324, %v701
      %v703 = vpop.f32.mrf.mxu0
      %v704 = vadd.f32 %v324, %v703
      %705 = vmatmul.bf16.gmra.mxu0 %v566
      %v706 = vpop.f32.mrf.mxu0
      %v707 = vadd.f32 %v324, %v706
      %v708 = vpop.f32.mrf.mxu0
      %v709 = vadd.f32 %v324, %v708
      %710 = vmatmul.bf16.gmra.mxu0 %v569
      %v711 = vpop.f32.mrf.mxu0
      %v712 = vadd.f32 %v324, %v711
      %v713 = vpop.f32.mrf.mxu0
      %v714 = vadd.f32 %v324, %v713
      %715 = vmatmul.bf16.gmra.mxu0 %v572
      %v716 = vpop.f32.mrf.mxu0
      %v717 = vadd.f32 %v324, %v716
      %v718 = vpop.f32.mrf.mxu0
      %v719 = vadd.f32 %v324, %v718
      %720 = vmatmul.bf16.gmra.mxu0 %v575
      %v721 = vpop.f32.mrf.mxu0
      %v722 = vadd.f32 %v324, %v721
      %v723 = vpop.f32.mrf.mxu0
      %v724 = vadd.f32 %v324, %v723
      %725 = vmatmul.bf16.gmra.mxu0 %v578
      %v726 = vpop.f32.mrf.mxu0
      %v727 = vadd.f32 %v324, %v726
      %v728 = vpop.f32.mrf.mxu0
      %v729 = vadd.f32 %v324, %v728
      %730 = vmatmul.bf16.gmra.mxu0 %v581
      %v731 = vpop.f32.mrf.mxu0
      %v732 = vadd.f32 %v324, %v731
      %v733 = vpop.f32.mrf.mxu0
      %v734 = vadd.f32 %v324, %v733
      %735 = vmatmul.bf16.gmra.mxu0 %v584
      %v736 = vpop.f32.mrf.mxu0
      %v737 = vadd.f32 %v324, %v736
      %v738 = vpop.f32.mrf.mxu0
      %v739 = vadd.f32 %v324, %v738
      %740 = vmatmul.bf16.gmra.mxu0 %v587
      %v741 = vpop.f32.mrf.mxu0
      %v742 = vadd.f32 %v324, %v741
      %v743 = vpop.f32.mrf.mxu0
      %v744 = vadd.f32 %v324, %v743
      %745 = vmatmul.bf16.gmra.mxu0 %v590
      %v746 = vpop.f32.mrf.mxu0
      %v747 = vadd.f32 %v324, %v746
      %v748 = vpop.f32.mrf.mxu0
      %v749 = vadd.f32 %v324, %v748
      %750 = vmatmul.bf16.gmra.mxu0 %v593
      %v751 = vpop.f32.mrf.mxu0
      %v752 = vadd.f32 %v324, %v751
      %v753 = vpop.f32.mrf.mxu0
      %v754 = vadd.f32 %v324, %v753
      %755 = vmatmul.bf16.gmra.mxu0 %v596
      %v756 = vpop.f32.mrf.mxu0
      %v757 = vadd.f32 %v324, %v756
      %v758 = vpop.f32.mrf.mxu0
      %v759 = vadd.f32 %v324, %v758
      %760 = vmatmul.bf16.gmra.mxu0 %v599
      %v761 = vpop.f32.mrf.mxu0
      %v762 = vadd.f32 %v324, %v761
      %v763 = vpop.f32.mrf.mxu0
      %v764 = vadd.f32 %v324, %v763
      %765 = vmatmul.bf16.gmra.mxu0 %v602
      %v766 = vpop.f32.mrf.mxu0
      %v767 = vadd.f32 %v324, %v766
      %v768 = vpop.f32.mrf.mxu0
      %v769 = vadd.f32 %v324, %v768
      %770 = vmatmul.bf16.gmra.mxu0 %v605
      %v771 = vpop.f32.mrf.mxu0
      %v772 = vadd.f32 %v324, %v771
      %v773 = vpop.f32.mrf.mxu0
      %v774 = vadd.f32 %v324, %v773
      %775 = vdwg.mxu0
      %776 = vst [vmem:[%s239] sm:$0xff] %v617
      %777 = vst [vmem:[%s239 + $0x8] sm:$0xff] %v619
      %778 = vst [vmem:[%s239 + $0x10] sm:$0xff] %v622
      %779 = vst [vmem:[%s239 + $0x18] sm:$0xff] %v624
      %780 = vst [vmem:[%s239 + $0x20] sm:$0xff] %v627
      %781 = vst [vmem:[%s239 + $0x28] sm:$0xff] %v629
      %782 = vst [vmem:[%s239 + $0x30] sm:$0xff] %v632
      %783 = vst [vmem:[%s239 + $0x38] sm:$0xff] %v634
      %784 = vst [vmem:[%s239 + $0x40] sm:$0xff] %v637
      %785 = vst [vmem:[%s239 + $0x48] sm:$0xff] %v639
      %786 = vst [vmem:[%s239 + $0x50] sm:$0xff] %v642
      %787 = vst [vmem:[%s239 + $0x58] sm:$0xff] %v644
      %788 = vst [vmem:[%s239 + $0x60] sm:$0xff] %v647
      %789 = vst [vmem:[%s239 + $0x68] sm:$0xff] %v649
      %790 = vst [vmem:[%s239 + $0x70] sm:$0xff] %v652
      %791 = vst [vmem:[%s239 + $0x78] sm:$0xff] %v654
      %792 = vst [vmem:[%s239 + $0x80] sm:$0xff] %v657
      %793 = vst [vmem:[%s239 + $0x88] sm:$0xff] %v659
      %794 = vst [vmem:[%s239 + $0x90] sm:$0xff] %v662
      %795 = vst [vmem:[%s239 + $0x98] sm:$0xff] %v664
      %796 = vst [vmem:[%s239 + $0xa0] sm:$0xff] %v667
      %797 = vst [vmem:[%s239 + $0xa8] sm:$0xff] %v669
      %798 = vst [vmem:[%s239 + $0xb0] sm:$0xff] %v672
      %799 = vst [vmem:[%s239 + $0xb8] sm:$0xff] %v674
      %800 = vst [vmem:[%s239 + $0xc0] sm:$0xff] %v677
      %801 = vst [vmem:[%s239 + $0xc8] sm:$0xff] %v679
      %802 = vst [vmem:[%s239 + $0xd0] sm:$0xff] %v682
      %803 = vst [vmem:[%s239 + $0xd8] sm:$0xff] %v684
      %804 = vst [vmem:[%s239 + $0xe0] sm:$0xff] %v687
      %805 = vst [vmem:[%s239 + $0xe8] sm:$0xff] %v689
      %806 = vst [vmem:[%s239 + $0xf0] sm:$0xff] %v692
      %807 = vst [vmem:[%s239 + $0xf8] sm:$0xff] %v694
      %808 = vst [vmem:[%s239 + $0x100] sm:$0xff] %v697
      %809 = vst [vmem:[%s239 + $0x108] sm:$0xff] %v699
      %810 = vst [vmem:[%s239 + $0x110] sm:$0xff] %v702
      %811 = vst [vmem:[%s239 + $0x118] sm:$0xff] %v704
      %812 = vst [vmem:[%s239 + $0x120] sm:$0xff] %v707
      %813 = vst [vmem:[%s239 + $0x128] sm:$0xff] %v709
      %814 = vst [vmem:[%s239 + $0x130] sm:$0xff] %v712
      %815 = vst [vmem:[%s239 + $0x138] sm:$0xff] %v714
      %816 = vst [vmem:[%s239 + $0x140] sm:$0xff] %v717
      %817 = vst [vmem:[%s239 + $0x148] sm:$0xff] %v719
      %818 = vst [vmem:[%s239 + $0x150] sm:$0xff] %v722
      %819 = vst [vmem:[%s239 + $0x158] sm:$0xff] %v724
      %820 = vst [vmem:[%s239 + $0x160] sm:$0xff] %v727
      %821 = vst [vmem:[%s239 + $0x168] sm:$0xff] %v729
      %822 = vst [vmem:[%s239 + $0x170] sm:$0xff] %v732
      %823 = vst [vmem:[%s239 + $0x178] sm:$0xff] %v734
      %824 = vst [vmem:[%s239 + $0x180] sm:$0xff] %v737
      %825 = vst [vmem:[%s239 + $0x188] sm:$0xff] %v739
      %826 = vst [vmem:[%s239 + $0x190] sm:$0xff] %v742
      %827 = vst [vmem:[%s239 + $0x198] sm:$0xff] %v744
      %828 = vst [vmem:[%s239 + $0x1a0] sm:$0xff] %v747
      %829 = vst [vmem:[%s239 + $0x1a8] sm:$0xff] %v749
      %830 = vst [vmem:[%s239 + $0x1b0] sm:$0xff] %v752
      %831 = vst [vmem:[%s239 + $0x1b8] sm:$0xff] %v754
      %832 = vst [vmem:[%s239 + $0x1c0] sm:$0xff] %v757
      %833 = vst [vmem:[%s239 + $0x1c8] sm:$0xff] %v759
      %834 = vst [vmem:[%s239 + $0x1d0] sm:$0xff] %v762
      %835 = vst [vmem:[%s239 + $0x1d8] sm:$0xff] %v764
      %836 = vst [vmem:[%s239 + $0x1e0] sm:$0xff] %v767
      %837 = vst [vmem:[%s239 + $0x1e8] sm:$0xff] %v769
      %838 = vst [vmem:[%s239 + $0x1f0] sm:$0xff] %v772
      %839 = vst [vmem:[%s239 + $0x1f8] sm:$0xff] %v774
      %v840 = vadd.f32 %v617, %v619
      %v841 = vadd.f32 %v840, %v622
      %v842 = vadd.f32 %v841, %v624
      %v843 = vadd.f32 %v842, %v627
      %v844 = vadd.f32 %v843, %v629
      %v845 = vadd.f32 %v844, %v632
      %v846 = vadd.f32 %v845, %v634
      %v847 = vadd.f32 %v846, %v637
      %v848 = vadd.f32 %v847, %v639
      %v849 = vadd.f32 %v848, %v642
      %v850 = vadd.f32 %v849, %v644
      %v851 = vadd.f32 %v850, %v647
      %v852 = vadd.f32 %v851, %v649
      %v853 = vadd.f32 %v852, %v652
      %v854 = vadd.f32 %v853, %v654
      %v855 = vadd.f32 %v854, %v657
      %v856 = vadd.f32 %v855, %v659
      %v857 = vadd.f32 %v856, %v662
      %v858 = vadd.f32 %v857, %v664
      %v859 = vadd.f32 %v858, %v667
      %v860 = vadd.f32 %v859, %v669
      %v861 = vadd.f32 %v860, %v672
      %v862 = vadd.f32 %v861, %v674
      %v863 = vadd.f32 %v862, %v677
      %v864 = vadd.f32 %v863, %v679
      %v865 = vadd.f32 %v864, %v682
      %v866 = vadd.f32 %v865, %v684
      %v867 = vadd.f32 %v866, %v687
      %v868 = vadd.f32 %v867, %v689
      %v869 = vadd.f32 %v868, %v692
      %v870 = vadd.f32 %v869, %v694
      %v871 = vadd.f32 %v870, %v697
      %v872 = vadd.f32 %v871, %v699
      %v873 = vadd.f32 %v872, %v702
      %v874 = vadd.f32 %v873, %v704
      %v875 = vadd.f32 %v874, %v707
      %v876 = vadd.f32 %v875, %v709
      %v877 = vadd.f32 %v876, %v712
      %v878 = vadd.f32 %v877, %v714
      %v879 = vadd.f32 %v878, %v717
      %v880 = vadd.f32 %v879, %v719
      %v881 = vadd.f32 %v880, %v722
      %v882 = vadd.f32 %v881, %v724
      %v883 = vadd.f32 %v882, %v727
      %v884 = vadd.f32 %v883, %v729
      %v885 = vadd.f32 %v884, %v732
      %v886 = vadd.f32 %v885, %v734
      %v887 = vadd.f32 %v886, %v737
      %v888 = vadd.f32 %v887, %v739
      %v889 = vadd.f32 %v888, %v742
      %v890 = vadd.f32 %v889, %v744
      %v891 = vadd.f32 %v890, %v747
      %v892 = vadd.f32 %v891, %v749
      %v893 = vadd.f32 %v892, %v752
      %v894 = vadd.f32 %v893, %v754
      %v895 = vadd.f32 %v894, %v757
      %v896 = vadd.f32 %v895, %v759
      %v897 = vadd.f32 %v896, %v762
      %v898 = vadd.f32 %v897, %v764
      %v899 = vadd.f32 %v898, %v767
      %v900 = vadd.f32 %v899, %v769
      %v901 = vadd.f32 %v900, %v772
      %v902 = vadd.f32 %v901, %v774
      %v903 = vrot.slane %v902, 4
      %v904 = vadd.f32 %v902, %v903
      %v905 = vrot.slane %v904, 2
      %v906 = vadd.f32 %v904, %v905
      %v907 = vrot.slane %v906, 1
      %v908 = vadd.f32 %v906, %v907
      %v909 = vmul.f32 %v617, %v617
      %v910 = vmul.f32 %v619, %v619
      %v911 = vmul.f32 %v622, %v622
      %v912 = vmul.f32 %v624, %v624
      %v913 = vmul.f32 %v627, %v627
      %v914 = vmul.f32 %v629, %v629
      %v915 = vmul.f32 %v632, %v632
      %v916 = vmul.f32 %v634, %v634
      %v917 = vmul.f32 %v637, %v637
      %v918 = vmul.f32 %v639, %v639
      %v919 = vmul.f32 %v642, %v642
      %v920 = vmul.f32 %v644, %v644
      %v921 = vmul.f32 %v647, %v647
      %v922 = vmul.f32 %v649, %v649
      %v923 = vmul.f32 %v652, %v652
      %v924 = vmul.f32 %v654, %v654
      %v925 = vmul.f32 %v657, %v657
      %v926 = vmul.f32 %v659, %v659
      %v927 = vmul.f32 %v662, %v662
      %v928 = vmul.f32 %v664, %v664
      %v929 = vmul.f32 %v667, %v667
      %v930 = vmul.f32 %v669, %v669
      %v931 = vmul.f32 %v672, %v672
      %v932 = vmul.f32 %v674, %v674
      %v933 = vmul.f32 %v677, %v677
      %v934 = vmul.f32 %v679, %v679
      %v935 = vmul.f32 %v682, %v682
      %v936 = vmul.f32 %v684, %v684
      %v937 = vmul.f32 %v687, %v687
      %v938 = vmul.f32 %v689, %v689
      %v939 = vmul.f32 %v692, %v692
      %v940 = vmul.f32 %v694, %v694
      %v941 = vmul.f32 %v697, %v697
      %v942 = vmul.f32 %v699, %v699
      %v943 = vmul.f32 %v702, %v702
      %v944 = vmul.f32 %v704, %v704
      %v945 = vmul.f32 %v707, %v707
      %v946 = vmul.f32 %v709, %v709
      %v947 = vmul.f32 %v712, %v712
      %v948 = vmul.f32 %v714, %v714
      %v949 = vmul.f32 %v717, %v717
      %v950 = vmul.f32 %v719, %v719
      %v951 = vmul.f32 %v722, %v722
      %v952 = vmul.f32 %v724, %v724
      %v953 = vmul.f32 %v727, %v727
      %v954 = vmul.f32 %v729, %v729
      %v955 = vmul.f32 %v732, %v732
      %v956 = vmul.f32 %v734, %v734
      %v957 = vmul.f32 %v737, %v737
      %v958 = vmul.f32 %v739, %v739
      %v959 = vmul.f32 %v742, %v742
      %v960 = vmul.f32 %v744, %v744
      %v961 = vmul.f32 %v747, %v747
      %v962 = vmul.f32 %v749, %v749
      %v963 = vmul.f32 %v752, %v752
      %v964 = vmul.f32 %v754, %v754
      %v965 = vmul.f32 %v757, %v757
      %v966 = vmul.f32 %v759, %v759
      %v967 = vmul.f32 %v762, %v762
      %v968 = vmul.f32 %v764, %v764
      %v969 = vmul.f32 %v767, %v767
      %v970 = vmul.f32 %v769, %v769
      %v971 = vmul.f32 %v772, %v772
      %v972 = vmul.f32 %v774, %v774
      %v973 = vadd.f32 %v909, %v910
      %v974 = vadd.f32 %v973, %v911
      %v975 = vadd.f32 %v974, %v912
      %v976 = vadd.f32 %v975, %v913
      %v977 = vadd.f32 %v976, %v914
      %v978 = vadd.f32 %v977, %v915
      %v979 = vadd.f32 %v978, %v916
      %v980 = vadd.f32 %v979, %v917
      %v981 = vadd.f32 %v980, %v918
      %v982 = vadd.f32 %v981, %v919
      %v983 = vadd.f32 %v982, %v920
      %v984 = vadd.f32 %v983, %v921
      %v985 = vadd.f32 %v984, %v922
      %v986 = vadd.f32 %v985, %v923
      %v987 = vadd.f32 %v986, %v924
      %v988 = vadd.f32 %v987, %v925
      %v989 = vadd.f32 %v988, %v926
      %v990 = vadd.f32 %v989, %v927
      %v991 = vadd.f32 %v990, %v928
      %v992 = vadd.f32 %v991, %v929
      %v993 = vadd.f32 %v992, %v930
      %v994 = vadd.f32 %v993, %v931
      %v995 = vadd.f32 %v994, %v932
      %v996 = vadd.f32 %v995, %v933
      %v997 = vadd.f32 %v996, %v934
      %v998 = vadd.f32 %v997, %v935
      %v999 = vadd.f32 %v998, %v936
      %v1000 = vadd.f32 %v999, %v937
      %v1001 = vadd.f32 %v1000, %v938
      %v1002 = vadd.f32 %v1001, %v939
      %v1003 = vadd.f32 %v1002, %v940
      %v1004 = vadd.f32 %v1003, %v941
      %v1005 = vadd.f32 %v1004, %v942
      %v1006 = vadd.f32 %v1005, %v943
      %v1007 = vadd.f32 %v1006, %v944
      %v1008 = vadd.f32 %v1007, %v945
      %v1009 = vadd.f32 %v1008, %v946
      %v1010 = vadd.f32 %v1009, %v947
      %v1011 = vadd.f32 %v1010, %v948
      %v1012 = vadd.f32 %v1011, %v949
      %v1013 = vadd.f32 %v1012, %v950
      %v1014 = vadd.f32 %v1013, %v951
      %v1015 = vadd.f32 %v1014, %v952
      %v1016 = vadd.f32 %v1015, %v953
      %v1017 = vadd.f32 %v1016, %v954
      %v1018 = vadd.f32 %v1017, %v955
      %v1019 = vadd.f32 %v1018, %v956
      %v1020 = vadd.f32 %v1019, %v957
      %v1021 = vadd.f32 %v1020, %v958
      %v1022 = vadd.f32 %v1021, %v959
      %v1023 = vadd.f32 %v1022, %v960
      %v1024 = vadd.f32 %v1023, %v961
      %v1025 = vadd.f32 %v1024, %v962
      %v1026 = vadd.f32 %v1025, %v963
      %v1027 = vadd.f32 %v1026, %v964
      %v1028 = vadd.f32 %v1027, %v965
      %v1029 = vadd.f32 %v1028, %v966
      %v1030 = vadd.f32 %v1029, %v967
      %v1031 = vadd.f32 %v1030, %v968
      %v1032 = vadd.f32 %v1031, %v969
      %v1033 = vadd.f32 %v1032, %v970
      %v1034 = vadd.f32 %v1033, %v971
      %v1035 = vadd.f32 %v1034, %v972
      %v1036 = vrot.slane %v1035, 4
      %v1037 = vadd.f32 %v1035, %v1036
      %v1038 = vrot.slane %v1037, 2
      %v1039 = vadd.f32 %v1037, %v1038
      %v1040 = vrot.slane %v1039, 1
      %v1041 = vadd.f32 %v1039, %v1040
      %1042 = vst [vmem:[%s244] sm:$0xff] %v908
      %1043 = vst [vmem:[%s248] sm:$0xff] %v1041
      %s1044 = smul.u32 64, %s17
      %p1045 = scmp.lt.s32.totalorder %s1044, 127
      %s1046 = scalar_select %p1045, %s1044, 127
      %s1047 = smul.addr %s1046, 8
      %s1048 = scalar_lea.vmem %s3, %s1047
      %p1049 = scmp.lt.s32.totalorder %s17, 1
      %s1050 = scalar_select %p1049, %s17, 1
      %s1051 = smul.addr %s1050, 8
      %s1052 = scalar_lea.vmem %s4, %s1051
      %p1053 = scmp.lt.s32.totalorder %s17, 1
      %s1054 = scalar_select %p1053, %s17, 1
      %s1055 = smul.addr %s1054, 8
      %s1056 = scalar_lea.vmem %s5, %s1055
      // Predicated region
      $region33: #{generator_forward.21} parent=31 // pred_check
        %p1057 = pneg %p103
      $region34: #{generator_forward.21} parent=31 // pred_check_branch
        %1059 = sbr.rel (%p1057) target = $region36
      $region35: #{generator_forward.21} parent=31 // pred_region
        %s1060 = smul.u32 64, %s17
      $region36: #{generator_forward.21} parent=31 // pred_fallthru
        _
      // Predicated region
      $region37: #{generator_forward.21} parent=31 // pred_check
        %p1061 = pneg %p129
      $region38: #{generator_forward.21} parent=31 // pred_check_branch
        %1063 = sbr.rel (%p1061) target = $region40
      $region39: #{generator_forward.21} parent=31 // pred_region
        _
      $region40: #{generator_forward.21} parent=31 // pred_fallthru
        _
      // Predicated region
      $region41: #{generator_forward.21} parent=31 // pred_check
        %p1064 = pneg %p155
      $region42: #{generator_forward.21} parent=31 // pred_check_branch
        %1066 = sbr.rel (%p1064) target = $region44
      $region43: #{generator_forward.21} parent=31 // pred_region
        _
      $region44: #{generator_forward.21} parent=31 // pred_fallthru
        _
    $region32: #{generator_forward.21} parent=5 // pred_fallthru
      _
    %p1067 = scmp.le.s32.totalorder 2, %s12
    // Predicated region
    $region45: #{generator_forward.21} parent=5 // pred_check
      %p1068 = pneg %p1067
    $region46: #{generator_forward.21} parent=5 // pred_check_branch
      %1070 = sbr.rel (%p1068) target = $region48
    $region47: #{generator_forward.21} parent=5 // pred_region
      %s1071 = ssub.s32 %s12, 2
      // Predicated region
      $region49: #{generator_forward.21} parent=47 // pred_check
        %p1072 = pneg %p109
      $region50: #{generator_forward.21} parent=47 // pred_check_branch
        %1074 = sbr.rel (%p1072) target = $region52
      $region51: #{generator_forward.21} parent=47 // pred_region
        %s1075 = smul.u32 64, %s18
        %p1076 = scmp.lt.s32.totalorder %s1075, 127
        %s1077 = scalar_select %p1076, %s1075, 127
        %s1078 = smul.addr %s1077, 8
        %s1079 = scalar_lea.vmem %s3, %s1078
      $region52: #{generator_forward.21} parent=47 // pred_fallthru
        _
      // Predicated region
      $region53: #{generator_forward.21} parent=47 // pred_check
        %p1080 = pneg %p135
      $region54: #{generator_forward.21} parent=47 // pred_check_branch
        %1082 = sbr.rel (%p1080) target = $region56
      $region55: #{generator_forward.21} parent=47 // pred_region
        %p1083 = scmp.lt.s32.totalorder %s18, 1
        %s1084 = scalar_select %p1083, %s18, 1
        %s1085 = smul.addr %s1084, 8
        %s1086 = scalar_lea.vmem %s4, %s1085
      $region56: #{generator_forward.21} parent=47 // pred_fallthru
        _
      // Predicated region
      $region57: #{generator_forward.21} parent=47 // pred_check
        %p1087 = pneg %p161
      $region58: #{generator_forward.21} parent=47 // pred_check_branch
        %1089 = sbr.rel (%p1087) target = $region60
      $region59: #{generator_forward.21} parent=47 // pred_region
        %p1090 = scmp.lt.s32.totalorder %s18, 1
        %s1091 = scalar_select %p1090, %s18, 1
        %s1092 = smul.addr %s1091, 8
        %s1093 = scalar_lea.vmem %s5, %s1092
      $region60: #{generator_forward.21} parent=47 // pred_fallthru
        _
    $region48: #{generator_forward.21} parent=5 // pred_fallthru
      _
  $region6: #{generator_forward.21} parent=0 // loop_footer
    %s16 = sadd.s32 1, %s12
  $region7: #{generator_forward.21} parent=0 // loop_footer_branch
    %11 = sbr.rel target = $region3
  $region8: #{generator_forward.21} parent=0 // loop_exit
    _

// kernel: generator_forward.24
$region0: #{generator_forward.24}
  #allocation0 [shape = 'u32[]', space=smem, size = 0x4, offset = 0x4, fixed_abs, tag = 'smem constant byte address 0x4 - core index']
  #allocation1 [shape = 'u32[72,128]{1,0:T(1,128)}', space=vmem, size = 0x9000, scoped, tag = 'internal scratch']
  %s0 = inlined_call_operand.vmem [shape: f32[208,128], index: 0, kind: input, shape index: {}]
  %s1 = inlined_call_operand.vmem [shape: f32[1,128], index: 1, kind: input, shape index: {}]
  %s2 = inlined_call_operand.vmem [shape: f32[1,128], index: 2, kind: input, shape index: {}]
  %s3 = inlined_call_operand.vmem [shape: f32[208,128], index: 3, kind: output, shape index: {}]
  %s4 = sld [smem:[#allocation0]]
  $region22: #{generator_forward.24} parent=0
    _
  %s6 = ssub.s32 1, %s4
  %s7 = scalar_select 0, %s6, %s4
  // Predicated region
  $region2: #{generator_forward.24} parent=0 // pred_check
    _
  $region3: #{generator_forward.24} parent=0 // pred_check_branch
    %9 = sbr.rel (0) target = $region5
  $region4: #{generator_forward.24} parent=0 // pred_region
    _
  $region5: #{generator_forward.24} parent=0 // pred_fallthru
    _
  // Predicated region
  $region6: #{generator_forward.24} parent=0 // pred_check
    _
  $region7: #{generator_forward.24} parent=0 // pred_check_branch
    %11 = sbr.rel (0) target = $region9
  $region8: #{generator_forward.24} parent=0 // pred_region
    _
  $region9: #{generator_forward.24} parent=0 // pred_fallthru
    _
  // Predicated region
  $region10: #{generator_forward.24} parent=0 // pred_check
    _
  $region11: #{generator_forward.24} parent=0 // pred_check_branch
    %13 = sbr.rel (0) target = $region13
  $region12: #{generator_forward.24} parent=0 // pred_region
    _
  $region13: #{generator_forward.24} parent=0 // pred_fallthru
    _
  %v14 = vld [vmem:[%s0] sm:$0xff]
  %v15 = vld [vmem:[%s0 + $0x8] sm:$0xff]
  %v16 = vld [vmem:[%s0 + $0x10] sm:$0xff]
  %v17 = vld [vmem:[%s0 + $0x18] sm:$0xff]
  %v18 = vld [vmem:[%s0 + $0x20] sm:$0xff]
  %v19 = vld [vmem:[%s0 + $0x28] sm:$0xff]
  %v20 = vld [vmem:[%s0 + $0x30] sm:$0xff]
  %v21 = vld [vmem:[%s0 + $0x38] sm:$0xff]
  %v22 = vld [vmem:[%s0 + $0x40] sm:$0xff]
  %v23 = vld [vmem:[%s0 + $0x48] sm:$0xff]
  %v24 = vld [vmem:[%s0 + $0x50] sm:$0xff]
  %v25 = vld [vmem:[%s0 + $0x58] sm:$0xff]
  %v26 = vld [vmem:[%s0 + $0x60] sm:$0xff]
  %v27 = vld [vmem:[%s0 + $0x68] sm:$0xff]
  %v28 = vld [vmem:[%s0 + $0x70] sm:$0xff]
  %v29 = vld [vmem:[%s0 + $0x78] sm:$0xff]
  %v30 = vld [vmem:[%s0 + $0x80] sm:$0xff]
  %v31 = vld [vmem:[%s0 + $0x88] sm:$0xff]
  %v32 = vld [vmem:[%s0 + $0x90] sm:$0xff]
  %v33 = vld [vmem:[%s0 + $0x98] sm:$0xff]
  %v34 = vld [vmem:[%s0 + $0xa0] sm:$0xff]
  %v35 = vld [vmem:[%s0 + $0xa8] sm:$0xff]
  %v36 = vld [vmem:[%s0 + $0xb0] sm:$0xff]
  %v37 = vld [vmem:[%s0 + $0xb8] sm:$0xff]
  %v38 = vld [vmem:[%s0 + $0xc0] sm:$0xff]
  %v39 = vld [vmem:[%s0 + $0xc8] sm:$0xff]
  %v40 = vld [vmem:[%s1] sm:$0x1]
  %v42 = vperm.slane %v40, 0
  %v44 = vmul.f32 %v14, %v42
  %v45 = vmul.f32 %v15, %v42
  %v46 = vmul.f32 %v16, %v42
  %v47 = vmul.f32 %v17, %v42
  %v48 = vmul.f32 %v18, %v42
  %v49 = vmul.f32 %v19, %v42
  %v50 = vmul.f32 %v20, %v42
  %v51 = vmul.f32 %v21, %v42
  %v52 = vmul.f32 %v22, %v42
  %v53 = vmul.f32 %v23, %v42
  %v54 = vmul.f32 %v24, %v42
  %v55 = vmul.f32 %v25, %v42
  %v56 = vmul.f32 %v26, %v42
  %v57 = vmul.f32 %v27, %v42
  %v58 = vmul.f32 %v28, %v42
  %v59 = vmul.f32 %v29, %v42
  %v60 = vmul.f32 %v30, %v42
  %v61 = vmul.f32 %v31, %v42
  %v62 = vmul.f32 %v32, %v42
  %v63 = vmul.f32 %v33, %v42
  %v64 = vmul.f32 %v34, %v42
  %v65 = vmul.f32 %v35, %v42
  %v66 = vmul.f32 %v36, %v42
  %v67 = vmul.f32 %v37, %v42
  %v68 = vmul.f32 %v38, %v42
  %v69 = vmul.f32 %v39, %v42
  %v70 = vld [vmem:[%s2] sm:$0x1]
  %v72 = vperm.slane %v70, 0
  %v74 = vadd.f32 %v44, %v72
  %v75 = vadd.f32 %v45, %v72
  %v76 = vadd.f32 %v46, %v72
  %v77 = vadd.f32 %v47, %v72
  %v78 = vadd.f32 %v48, %v72
  %v79 = vadd.f32 %v49, %v72
  %v80 = vadd.f32 %v50, %v72
  %v81 = vadd.f32 %v51, %v72
  %v82 = vadd.f32 %v52, %v72
  %v83 = vadd.f32 %v53, %v72
  %v84 = vadd.f32 %v54, %v72
  %v85 = vadd.f32 %v55, %v72
  %v86 = vadd.f32 %v56, %v72
  %v87 = vadd.f32 %v57, %v72
  %v88 = vadd.f32 %v58, %v72
  %v89 = vadd.f32 %v59, %v72
  %v90 = vadd.f32 %v60, %v72
  %v91 = vadd.f32 %v61, %v72
  %v92 = vadd.f32 %v62, %v72
  %v93 = vadd.f32 %v63, %v72
  %v94 = vadd.f32 %v64, %v72
  %v95 = vadd.f32 %v65, %v72
  %v96 = vadd.f32 %v66, %v72
  %v97 = vadd.f32 %v67, %v72
  %v98 = vadd.f32 %v68, %v72
  %v99 = vadd.f32 %v69, %v72
  %v100 = vmax.f32 %v74, 0.0
  %v101 = vmax.f32 %v75, 0.0
  %v102 = vmax.f32 %v76, 0.0
  %v103 = vmax.f32 %v77, 0.0
  %v104 = vmax.f32 %v78, 0.0
  %v105 = vmax.f32 %v79, 0.0
  %v106 = vmax.f32 %v80, 0.0
  %v107 = vmax.f32 %v81, 0.0
  %v108 = vmax.f32 %v82, 0.0
  %v109 = vmax.f32 %v83, 0.0
  %v110 = vmax.f32 %v84, 0.0
  %v111 = vmax.f32 %v85, 0.0
  %v112 = vmax.f32 %v86, 0.0
  %v113 = vmax.f32 %v87, 0.0
  %v114 = vmax.f32 %v88, 0.0
  %v115 = vmax.f32 %v89, 0.0
  %v116 = vmax.f32 %v90, 0.0
  %v117 = vmax.f32 %v91, 0.0
  %v118 = vmax.f32 %v92, 0.0
  %v119 = vmax.f32 %v93, 0.0
  %v120 = vmax.f32 %v94, 0.0
  %v121 = vmax.f32 %v95, 0.0
  %v122 = vmax.f32 %v96, 0.0
  %v123 = vmax.f32 %v97, 0.0
  %v124 = vmax.f32 %v98, 0.0
  %v125 = vmax.f32 %v99, 0.0
  %126 = vst [vmem:[%s3] sm:$0xff] %v100
  %127 = vst [vmem:[%s3 + $0x8] sm:$0xff] %v101
  %128 = vst [vmem:[%s3 + $0x10] sm:$0xff] %v102
  %129 = vst [vmem:[%s3 + $0x18] sm:$0xff] %v103
  %130 = vst [vmem:[%s3 + $0x20] sm:$0xff] %v104
  %131 = vst [vmem:[%s3 + $0x28] sm:$0xff] %v105
  %132 = vst [vmem:[%s3 + $0x30] sm:$0xff] %v106
  %133 = vst [vmem:[%s3 + $0x38] sm:$0xff] %v107
  %134 = vst [vmem:[%s3 + $0x40] sm:$0xff] %v108
  %135 = vst [vmem:[%s3 + $0x48] sm:$0xff] %v109
  %136 = vst [vmem:[%s3 + $0x50] sm:$0xff] %v110
  %137 = vst [vmem:[%s3 + $0x58] sm:$0xff] %v111
  %138 = vst [vmem:[%s3 + $0x60] sm:$0xff] %v112
  %139 = vst [vmem:[%s3 + $0x68] sm:$0xff] %v113
  %140 = vst [vmem:[%s3 + $0x70] sm:$0xff] %v114
  %141 = vst [vmem:[%s3 + $0x78] sm:$0xff] %v115
  %142 = vst [vmem:[%s3 + $0x80] sm:$0xff] %v116
  %143 = vst [vmem:[%s3 + $0x88] sm:$0xff] %v117
  %144 = vst [vmem:[%s3 + $0x90] sm:$0xff] %v118
  %145 = vst [vmem:[%s3 + $0x98] sm:$0xff] %v119
  %146 = vst [vmem:[%s3 + $0xa0] sm:$0xff] %v120
  %147 = vst [vmem:[%s3 + $0xa8] sm:$0xff] %v121
  %148 = vst [vmem:[%s3 + $0xb0] sm:$0xff] %v122
  %149 = vst [vmem:[%s3 + $0xb8] sm:$0xff] %v123
  %150 = vst [vmem:[%s3 + $0xc0] sm:$0xff] %v124
  %151 = vst [vmem:[%s3 + $0xc8] sm:$0xff] %v125
  // Predicated region
  $region14: #{generator_forward.24} parent=0 // pred_check
    _
  $region15: #{generator_forward.24} parent=0 // pred_check_branch
    %153 = sbr.rel (0) target = $region17
  $region16: #{generator_forward.24} parent=0 // pred_region
    _
  $region17: #{generator_forward.24} parent=0 // pred_fallthru
    _
  // Predicated region
  $region18: #{generator_forward.24} parent=0 // pred_check
    _
  $region19: #{generator_forward.24} parent=0 // pred_check_branch
    %155 = sbr.rel (0) target = $region21
  $region20: #{generator_forward.24} parent=0 // pred_region
    _
  $region21: #{generator_forward.24} parent=0 // pred_fallthru
    _

// kernel: generator_forward.23
$region0: #{generator_forward.23}
  #allocation0 [shape = 'u32[]', space=smem, size = 0x4, offset = 0x4, fixed_abs, tag = 'smem constant byte address 0x4 - core index']
  #allocation1 [shape = 'u32[72,128]{1,0:T(1,128)}', space=vmem, size = 0x9000, scoped, tag = 'internal scratch']
  %s0 = inlined_call_operand.vmem [shape: bf16[208,128], index: 0, kind: input, shape index: {}]
  %s1 = inlined_call_operand.vmem [shape: bf16[128,128], index: 1, kind: input, shape index: {}]
  %s2 = inlined_call_operand.vmem [shape: f32[1,128], index: 2, kind: input, shape index: {}]
  %s3 = inlined_call_operand.vmem [shape: f32[208,128], index: 3, kind: output, shape index: {0}]
  %s4 = inlined_call_operand.vmem [shape: f32[8,128], index: 4, kind: output, shape index: {1}]
  %s5 = inlined_call_operand.vmem [shape: f32[8,128], index: 5, kind: output, shape index: {2}]
  %6 = xla_tuple %s3, %s4, %s5
  %s7 = sld [smem:[#allocation0]]
  $region38: #{generator_forward.23} parent=0
    _
  %s9 = ssub.s32 1, %s7
  %s10 = scalar_select 0, %s9, %s7
  // Predicated region
  $region2: #{generator_forward.23} parent=0 // pred_check
    _
  $region3: #{generator_forward.23} parent=0 // pred_check_branch
    %12 = sbr.rel (0) target = $region5
  $region4: #{generator_forward.23} parent=0 // pred_region
    _
  $region5: #{generator_forward.23} parent=0 // pred_fallthru
    _
  // Predicated region
  $region6: #{generator_forward.23} parent=0 // pred_check
    _
  $region7: #{generator_forward.23} parent=0 // pred_check_branch
    %14 = sbr.rel (0) target = $region9
  $region8: #{generator_forward.23} parent=0 // pred_region
    _
  $region9: #{generator_forward.23} parent=0 // pred_fallthru
    _
  // Predicated region
  $region10: #{generator_forward.23} parent=0 // pred_check
    _
  $region11: #{generator_forward.23} parent=0 // pred_check_branch
    %16 = sbr.rel (0) target = $region13
  $region12: #{generator_forward.23} parent=0 // pred_region
    _
  $region13: #{generator_forward.23} parent=0 // pred_fallthru
    _
  %v17 = vld [vmem:[%s0] sm:$0xf]
  %v18 = vld [vmem:[%s0 + $0x4] sm:$0xf]
  %v19 = vld [vmem:[%s0 + $0x8] sm:$0xf]
  %v20 = vld [vmem:[%s0 + $0xc] sm:$0xf]
  %v21 = vld [vmem:[%s0 + $0x10] sm:$0xf]
  %v22 = vld [vmem:[%s0 + $0x14] sm:$0xf]
  %v23 = vld [vmem:[%s0 + $0x18] sm:$0xf]
  %v24 = vld [vmem:[%s0 + $0x1c] sm:$0xf]
  %v25 = vld [vmem:[%s0 + $0x20] sm:$0xf]
  %v26 = vld [vmem:[%s0 + $0x24] sm:$0xf]
  %v27 = vld [vmem:[%s0 + $0x28] sm:$0xf]
  %v28 = vld [vmem:[%s0 + $0x2c] sm:$0xf]
  %v29 = vld [vmem:[%s0 + $0x30] sm:$0xf]
  %v30 = vld [vmem:[%s0 + $0x34] sm:$0xf]
  %v31 = vld [vmem:[%s0 + $0x38] sm:$0xf]
  %v32 = vld [vmem:[%s0 + $0x3c] sm:$0xf]
  %v33 = vld [vmem:[%s0 + $0x40] sm:$0xf]
  %v34 = vld [vmem:[%s0 + $0x44] sm:$0xf]
  %v35 = vld [vmem:[%s0 + $0x48] sm:$0xf]
  %v36 = vld [vmem:[%s0 + $0x4c] sm:$0xf]
  %v37 = vld [vmem:[%s0 + $0x50] sm:$0xf]
  %v38 = vld [vmem:[%s0 + $0x54] sm:$0xf]
  %v39 = vld [vmem:[%s0 + $0x58] sm:$0xf]
  %v40 = vld [vmem:[%s0 + $0x5c] sm:$0xf]
  %v41 = vld [vmem:[%s0 + $0x60] sm:$0xf]
  %v42 = vld [vmem:[%s0 + $0x64] sm:$0xf]
  %v43 = vld [vmem:[%s1] sm:$0xf]
  %v44 = vld [vmem:[%s1 + $0x4] sm:$0xf]
  %v45 = vld [vmem:[%s1 + $0x8] sm:$0xf]
  %v46 = vld [vmem:[%s1 + $0xc] sm:$0xf]
  %v47 = vld [vmem:[%s1 + $0x10] sm:$0xf]
  %v48 = vld [vmem:[%s1 + $0x14] sm:$0xf]
  %v49 = vld [vmem:[%s1 + $0x18] sm:$0xf]
  %v50 = vld [vmem:[%s1 + $0x1c] sm:$0xf]
  %v51 = vld [vmem:[%s1 + $0x20] sm:$0xf]
  %v52 = vld [vmem:[%s1 + $0x24] sm:$0xf]
  %v53 = vld [vmem:[%s1 + $0x28] sm:$0xf]
  %v54 = vld [vmem:[%s1 + $0x2c] sm:$0xf]
  %v55 = vld [vmem:[%s1 + $0x30] sm:$0xf]
  %v56 = vld [vmem:[%s1 + $0x34] sm:$0xf]
  %v57 = vld [vmem:[%s1 + $0x38] sm:$0xf]
  %v58 = vld [vmem:[%s1 + $0x3c] sm:$0xf]
  %v59 = vld [vmem:[%s2] sm:$0x1]
  %v61 = vperm.slane %v59, 0
  %v89 = vunpack.c.l.b16 %v17
  %v90 = vunpack.c.l.b16 %v18
  %v91 = vunpack.c.l.b16 %v19
  %v92 = vunpack.c.l.b16 %v20
  %v93 = vunpack.c.l.b16 %v21
  %v94 = vunpack.c.l.b16 %v22
  %v95 = vunpack.c.l.b16 %v23
  %v96 = vunpack.c.l.b16 %v24
  %v97 = vunpack.c.l.b16 %v25
  %v98 = vunpack.c.l.b16 %v26
  %v99 = vunpack.c.l.b16 %v27
  %v100 = vunpack.c.l.b16 %v28
  %v101 = vunpack.c.l.b16 %v29
  %v102 = vunpack.c.l.b16 %v30
  %v103 = vunpack.c.l.b16 %v31
  %v104 = vunpack.c.l.b16 %v32
  %v105 = vunpack.c.l.b16 %v33
  %v106 = vunpack.c.l.b16 %v34
  %v107 = vunpack.c.l.b16 %v35
  %v108 = vunpack.c.l.b16 %v36
  %v109 = vunpack.c.l.b16 %v37
  %v110 = vunpack.c.l.b16 %v38
  %v111 = vunpack.c.l.b16 %v39
  %v112 = vunpack.c.l.b16 %v40
  %v113 = vunpack.c.l.b16 %v41
  %v114 = vunpack.c.l.b16 %v42
  %v115 = vpack.c.b16 %v90, %v89
  %v116 = vpack.c.b16 %v92, %v91
  %v117 = vpack.c.b16 %v94, %v93
  %v118 = vpack.c.b16 %v96, %v95
  %v119 = vpack.c.b16 %v98, %v97
  %v120 = vpack.c.b16 %v100, %v99
  %v121 = vpack.c.b16 %v102, %v101
  %v122 = vpack.c.b16 %v104, %v103
  %v123 = vpack.c.b16 %v106, %v105
  %v124 = vpack.c.b16 %v108, %v107
  %v125 = vpack.c.b16 %v110, %v109
  %v126 = vpack.c.b16 %v112, %v111
  %v127 = vpack.c.b16 %v114, %v113
  %v157 = vunpack.c.l.b16 %v43
  %v158 = vunpack.c.l.b16 %v44
  %v159 = vunpack.c.l.b16 %v45
  %v160 = vunpack.c.l.b16 %v46
  %v161 = vunpack.c.l.b16 %v47
  %v162 = vunpack.c.l.b16 %v48
  %v163 = vunpack.c.l.b16 %v49
  %v164 = vunpack.c.l.b16 %v50
  %v165 = vunpack.c.l.b16 %v51
  %v166 = vunpack.c.l.b16 %v52
  %v167 = vunpack.c.l.b16 %v53
  %v168 = vunpack.c.l.b16 %v54
  %v169 = vunpack.c.l.b16 %v55
  %v170 = vunpack.c.l.b16 %v56
  %v171 = vunpack.c.l.b16 %v57
  %v172 = vunpack.c.l.b16 %v58
  %v173 = vpack.c.b16 %v158, %v157
  %v174 = vpack.c.b16 %v160, %v159
  %v175 = vpack.c.b16 %v162, %v161
  %v176 = vpack.c.b16 %v164, %v163
  %v177 = vpack.c.b16 %v166, %v165
  %v178 = vpack.c.b16 %v168, %v167
  %v179 = vpack.c.b16 %v170, %v169
  %v180 = vpack.c.b16 %v172, %v171
  %189 = vmatpush.bf16.msra.mxu0 %v180
  %190 = vmatpush.bf16.msra.mxu0 %v179
  %191 = vmatpush.bf16.msra.mxu0 %v178
  %192 = vmatpush.bf16.msra.mxu0 %v177
  %193 = vmatpush.bf16.msra.mxu0 %v176
  %194 = vmatpush.bf16.msra.mxu0 %v175
  %195 = vmatpush.bf16.msra.mxu0 %v174
  %196 = vmatpush.bf16.msra.mxu0 %v173
  %197 = vmatmul.bf16.gmra.mxu0 %v115
  %v198 = vpop.f32.mrf.mxu0
  %v199 = vadd.f32 %v61, %v198
  %v200 = vpop.f32.mrf.mxu0
  %v201 = vadd.f32 %v61, %v200
  %202 = vmatmul.bf16.gmra.mxu0 %v116
  %v203 = vpop.f32.mrf.mxu0
  %v204 = vadd.f32 %v61, %v203
  %v205 = vpop.f32.mrf.mxu0
  %v206 = vadd.f32 %v61, %v205
  %207 = vmatmul.bf16.gmra.mxu0 %v117
  %v208 = vpop.f32.mrf.mxu0
  %v209 = vadd.f32 %v61, %v208
  %v210 = vpop.f32.mrf.mxu0
  %v211 = vadd.f32 %v61, %v210
  %212 = vmatmul.bf16.gmra.mxu0 %v118
  %v213 = vpop.f32.mrf.mxu0
  %v214 = vadd.f32 %v61, %v213
  %v215 = vpop.f32.mrf.mxu0
  %v216 = vadd.f32 %v61, %v215
  %217 = vmatmul.bf16.gmra.mxu0 %v119
  %v218 = vpop.f32.mrf.mxu0
  %v219 = vadd.f32 %v61, %v218
  %v220 = vpop.f32.mrf.mxu0
  %v221 = vadd.f32 %v61, %v220
  %222 = vmatmul.bf16.gmra.mxu0 %v120
  %v223 = vpop.f32.mrf.mxu0
  %v224 = vadd.f32 %v61, %v223
  %v225 = vpop.f32.mrf.mxu0
  %v226 = vadd.f32 %v61, %v225
  %227 = vmatmul.bf16.gmra.mxu0 %v121
  %v228 = vpop.f32.mrf.mxu0
  %v229 = vadd.f32 %v61, %v228
  %v230 = vpop.f32.mrf.mxu0
  %v231 = vadd.f32 %v61, %v230
  %232 = vmatmul.bf16.gmra.mxu0 %v122
  %v233 = vpop.f32.mrf.mxu0
  %v234 = vadd.f32 %v61, %v233
  %v235 = vpop.f32.mrf.mxu0
  %v236 = vadd.f32 %v61, %v235
  %237 = vmatmul.bf16.gmra.mxu0 %v123
  %v238 = vpop.f32.mrf.mxu0
  %v239 = vadd.f32 %v61, %v238
  %v240 = vpop.f32.mrf.mxu0
  %v241 = vadd.f32 %v61, %v240
  %242 = vmatmul.bf16.gmra.mxu0 %v124
  %v243 = vpop.f32.mrf.mxu0
  %v244 = vadd.f32 %v61, %v243
  %v245 = vpop.f32.mrf.mxu0
  %v246 = vadd.f32 %v61, %v245
  %247 = vmatmul.bf16.gmra.mxu0 %v125
  %v248 = vpop.f32.mrf.mxu0
  %v249 = vadd.f32 %v61, %v248
  %v250 = vpop.f32.mrf.mxu0
  %v251 = vadd.f32 %v61, %v250
  %252 = vmatmul.bf16.gmra.mxu0 %v126
  %v253 = vpop.f32.mrf.mxu0
  %v254 = vadd.f32 %v61, %v253
  %v255 = vpop.f32.mrf.mxu0
  %v256 = vadd.f32 %v61, %v255
  %257 = vmatmul.bf16.gmra.mxu0 %v127
  %v258 = vpop.f32.mrf.mxu0
  %v259 = vadd.f32 %v61, %v258
  %v260 = vpop.f32.mrf.mxu0
  %v261 = vadd.f32 %v61, %v260
  %262 = vdwg.mxu0
  %263 = vst [vmem:[%s3] sm:$0xff] %v199
  %264 = vst [vmem:[%s3 + $0x8] sm:$0xff] %v201
  %265 = vst [vmem:[%s3 + $0x10] sm:$0xff] %v204
  %266 = vst [vmem:[%s3 + $0x18] sm:$0xff] %v206
  %267 = vst [vmem:[%s3 + $0x20] sm:$0xff] %v209
  %268 = vst [vmem:[%s3 + $0x28] sm:$0xff] %v211
  %269 = vst [vmem:[%s3 + $0x30] sm:$0xff] %v214
  %270 = vst [vmem:[%s3 + $0x38] sm:$0xff] %v216
  %271 = vst [vmem:[%s3 + $0x40] sm:$0xff] %v219
  %272 = vst [vmem:[%s3 + $0x48] sm:$0xff] %v221
  %273 = vst [vmem:[%s3 + $0x50] sm:$0xff] %v224
  %274 = vst [vmem:[%s3 + $0x58] sm:$0xff] %v226
  %275 = vst [vmem:[%s3 + $0x60] sm:$0xff] %v229
  %276 = vst [vmem:[%s3 + $0x68] sm:$0xff] %v231
  %277 = vst [vmem:[%s3 + $0x70] sm:$0xff] %v234
  %278 = vst [vmem:[%s3 + $0x78] sm:$0xff] %v236
  %279 = vst [vmem:[%s3 + $0x80] sm:$0xff] %v239
  %280 = vst [vmem:[%s3 + $0x88] sm:$0xff] %v241
  %281 = vst [vmem:[%s3 + $0x90] sm:$0xff] %v244
  %282 = vst [vmem:[%s3 + $0x98] sm:$0xff] %v246
  %283 = vst [vmem:[%s3 + $0xa0] sm:$0xff] %v249
  %284 = vst [vmem:[%s3 + $0xa8] sm:$0xff] %v251
  %285 = vst [vmem:[%s3 + $0xb0] sm:$0xff] %v254
  %286 = vst [vmem:[%s3 + $0xb8] sm:$0xff] %v256
  %287 = vst [vmem:[%s3 + $0xc0] sm:$0xff] %v259
  %288 = vst [vmem:[%s3 + $0xc8] sm:$0xff] %v261
  %v289 = vadd.f32 %v199, %v201
  %v290 = vadd.f32 %v289, %v204
  %v291 = vadd.f32 %v290, %v206
  %v292 = vadd.f32 %v291, %v209
  %v293 = vadd.f32 %v292, %v211
  %v294 = vadd.f32 %v293, %v214
  %v295 = vadd.f32 %v294, %v216
  %v296 = vadd.f32 %v295, %v219
  %v297 = vadd.f32 %v296, %v221
  %v298 = vadd.f32 %v297, %v224
  %v299 = vadd.f32 %v298, %v226
  %v300 = vadd.f32 %v299, %v229
  %v301 = vadd.f32 %v300, %v231
  %v302 = vadd.f32 %v301, %v234
  %v303 = vadd.f32 %v302, %v236
  %v304 = vadd.f32 %v303, %v239
  %v305 = vadd.f32 %v304, %v241
  %v306 = vadd.f32 %v305, %v244
  %v307 = vadd.f32 %v306, %v246
  %v308 = vadd.f32 %v307, %v249
  %v309 = vadd.f32 %v308, %v251
  %v310 = vadd.f32 %v309, %v254
  %v311 = vadd.f32 %v310, %v256
  %v312 = vadd.f32 %v311, %v259
  %v313 = vadd.f32 %v312, %v261
  %v314 = vrot.slane %v313, 4
  %v315 = vadd.f32 %v313, %v314
  %v316 = vrot.slane %v315, 2
  %v317 = vadd.f32 %v315, %v316
  %v318 = vrot.slane %v317, 1
  %v319 = vadd.f32 %v317, %v318
  %v320 = vmul.f32 %v199, %v199
  %v321 = vmul.f32 %v201, %v201
  %v322 = vmul.f32 %v204, %v204
  %v323 = vmul.f32 %v206, %v206
  %v324 = vmul.f32 %v209, %v209
  %v325 = vmul.f32 %v211, %v211
  %v326 = vmul.f32 %v214, %v214
  %v327 = vmul.f32 %v216, %v216
  %v328 = vmul.f32 %v219, %v219
  %v329 = vmul.f32 %v221, %v221
  %v330 = vmul.f32 %v224, %v224
  %v331 = vmul.f32 %v226, %v226
  %v332 = vmul.f32 %v229, %v229
  %v333 = vmul.f32 %v231, %v231
  %v334 = vmul.f32 %v234, %v234
  %v335 = vmul.f32 %v236, %v236
  %v336 = vmul.f32 %v239, %v239
  %v337 = vmul.f32 %v241, %v241
  %v338 = vmul.f32 %v244, %v244
  %v339 = vmul.f32 %v246, %v246
  %v340 = vmul.f32 %v249, %v249
  %v341 = vmul.f32 %v251, %v251
  %v342 = vmul.f32 %v254, %v254
  %v343 = vmul.f32 %v256, %v256
  %v344 = vmul.f32 %v259, %v259
  %v345 = vmul.f32 %v261, %v261
  %v346 = vadd.f32 %v320, %v321
  %v347 = vadd.f32 %v346, %v322
  %v348 = vadd.f32 %v347, %v323
  %v349 = vadd.f32 %v348, %v324
  %v350 = vadd.f32 %v349, %v325
  %v351 = vadd.f32 %v350, %v326
  %v352 = vadd.f32 %v351, %v327
  %v353 = vadd.f32 %v352, %v328
  %v354 = vadd.f32 %v353, %v329
  %v355 = vadd.f32 %v354, %v330
  %v356 = vadd.f32 %v355, %v331
  %v357 = vadd.f32 %v356, %v332
  %v358 = vadd.f32 %v357, %v333
  %v359 = vadd.f32 %v358, %v334
  %v360 = vadd.f32 %v359, %v335
  %v361 = vadd.f32 %v360, %v336
  %v362 = vadd.f32 %v361, %v337
  %v363 = vadd.f32 %v362, %v338
  %v364 = vadd.f32 %v363, %v339
  %v365 = vadd.f32 %v364, %v340
  %v366 = vadd.f32 %v365, %v341
  %v367 = vadd.f32 %v366, %v342
  %v368 = vadd.f32 %v367, %v343
  %v369 = vadd.f32 %v368, %v344
  %v370 = vadd.f32 %v369, %v345
  %v371 = vrot.slane %v370, 4
  %v372 = vadd.f32 %v370, %v371
  %v373 = vrot.slane %v372, 2
  %v374 = vadd.f32 %v372, %v373
  %v375 = vrot.slane %v374, 1
  %v376 = vadd.f32 %v374, %v375
  %377 = vst [vmem:[%s4] sm:$0xff] %v319
  %378 = vst [vmem:[%s5] sm:$0xff] %v376
  // Predicated region
  $region14: #{generator_forward.23} parent=0 // pred_check
    _
  $region15: #{generator_forward.23} parent=0 // pred_check_branch
    %380 = sbr.rel (0) target = $region17
  $region16: #{generator_forward.23} parent=0 // pred_region
    _
  $region17: #{generator_forward.23} parent=0 // pred_fallthru
    _
  // Predicated region
  $region18: #{generator_forward.23} parent=0 // pred_check
    _
  $region19: #{generator_forward.23} parent=0 // pred_check_branch
    %382 = sbr.rel (0) target = $region21
  $region20: #{generator_forward.23} parent=0 // pred_region
    _
  $region21: #{generator_forward.23} parent=0 // pred_fallthru
    _
  // Predicated region
  $region22: #{generator_forward.23} parent=0 // pred_check
    _
  $region23: #{generator_forward.23} parent=0 // pred_check_branch
    %384 = sbr.rel (0) target = $region25
  $region24: #{generator_forward.23} parent=0 // pred_region
    _
  $region25: #{generator_forward.23} parent=0 // pred_fallthru
    _
  // Predicated region
  $region26: #{generator_forward.23} parent=0 // pred_check
    _
  $region27: #{generator_forward.23} parent=0 // pred_check_branch
    %386 = sbr.rel (0) target = $region29
  $region28: #{generator_forward.23} parent=0 // pred_region
    _
  $region29: #{generator_forward.23} parent=0 // pred_fallthru
    _
  // Predicated region
  $region30: #{generator_forward.23} parent=0 // pred_check
    _
  $region31: #{generator_forward.23} parent=0 // pred_check_branch
    %388 = sbr.rel (0) target = $region33
  $region32: #{generator_forward.23} parent=0 // pred_region
    _
  $region33: #{generator_forward.23} parent=0 // pred_fallthru
    _
  // Predicated region
  $region34: #{generator_forward.23} parent=0 // pred_check
    _
  $region35: #{generator_forward.23} parent=0 // pred_check_branch
    %390 = sbr.rel (0) target = $region37
  $region36: #{generator_forward.23} parent=0 // pred_region
    _
  $region37: #{generator_forward.23} parent=0 // pred_fallthru
    _

// kernel: generator_forward.26
$region0: #{generator_forward.26}
  #allocation0 [shape = 'u32[]', space=smem, size = 0x4, offset = 0x4, fixed_abs, tag = 'smem constant byte address 0x4 - core index']
  #allocation1 [shape = 'u32[72,128]{1,0:T(1,128)}', space=vmem, size = 0x9000, scoped, tag = 'internal scratch']
  %s0 = inlined_call_operand.vmem [shape: f32[32,128], index: 0, kind: input, shape index: {}]
  %s1 = inlined_call_operand.vmem [shape: f32[1,128], index: 1, kind: input, shape index: {}]
  %s2 = inlined_call_operand.vmem [shape: f32[1,128], index: 2, kind: input, shape index: {}]
  %s3 = inlined_call_operand.vmem [shape: f32[32,128], index: 3, kind: output, shape index: {}]
  %s4 = sld [smem:[#allocation0]]
  $region22: #{generator_forward.26} parent=0
    _
  %s6 = ssub.s32 1, %s4
  %s7 = scalar_select 0, %s6, %s4
  // Predicated region
  $region2: #{generator_forward.26} parent=0 // pred_check
    _
  $region3: #{generator_forward.26} parent=0 // pred_check_branch
    %9 = sbr.rel (0) target = $region5
  $region4: #{generator_forward.26} parent=0 // pred_region
    _
  $region5: #{generator_forward.26} parent=0 // pred_fallthru
    _
  // Predicated region
  $region6: #{generator_forward.26} parent=0 // pred_check
    _
  $region7: #{generator_forward.26} parent=0 // pred_check_branch
    %11 = sbr.rel (0) target = $region9
  $region8: #{generator_forward.26} parent=0 // pred_region
    _
  $region9: #{generator_forward.26} parent=0 // pred_fallthru
    _
  // Predicated region
  $region10: #{generator_forward.26} parent=0 // pred_check
    _
  $region11: #{generator_forward.26} parent=0 // pred_check_branch
    %13 = sbr.rel (0) target = $region13
  $region12: #{generator_forward.26} parent=0 // pred_region
    _
  $region13: #{generator_forward.26} parent=0 // pred_fallthru
    _
  %v14 = vld [vmem:[%s0] sm:$0xff]
  %v15 = vld [vmem:[%s0 + $0x8] sm:$0xff]
  %v16 = vld [vmem:[%s0 + $0x10] sm:$0xff]
  %v17 = vld [vmem:[%s0 + $0x18] sm:$0xff]
  %v18 = vld [vmem:[%s1] sm:$0x1]
  %v20 = vperm.slane %v18, 0
  %v22 = vmul.f32 %v14, %v20
  %v23 = vmul.f32 %v15, %v20
  %v24 = vmul.f32 %v16, %v20
  %v25 = vmul.f32 %v17, %v20
  %v26 = vld [vmem:[%s2] sm:$0x1]
  %v28 = vperm.slane %v26, 0
  %v30 = vadd.f32 %v22, %v28
  %v31 = vadd.f32 %v23, %v28
  %v32 = vadd.f32 %v24, %v28
  %v33 = vadd.f32 %v25, %v28
  %v34 = vmax.f32 %v30, 0.0
  %v35 = vmax.f32 %v31, 0.0
  %v36 = vmax.f32 %v32, 0.0
  %v37 = vmax.f32 %v33, 0.0
  %38 = vst [vmem:[%s3] sm:$0xff] %v34
  %39 = vst [vmem:[%s3 + $0x8] sm:$0xff] %v35
  %40 = vst [vmem:[%s3 + $0x10] sm:$0xff] %v36
  %41 = vst [vmem:[%s3 + $0x18] sm:$0xff] %v37
  // Predicated region
  $region14: #{generator_forward.26} parent=0 // pred_check
    _
  $region15: #{generator_forward.26} parent=0 // pred_check_branch
    %43 = sbr.rel (0) target = $region17
  $region16: #{generator_forward.26} parent=0 // pred_region
    _
  $region17: #{generator_forward.26} parent=0 // pred_fallthru
    _
  // Predicated region
  $region18: #{generator_forward.26} parent=0 // pred_check
    _
  $region19: #{generator_forward.26} parent=0 // pred_check_branch
    %45 = sbr.rel (0) target = $region21
  $region20: #{generator_forward.26} parent=0 // pred_region
    _
  $region21: #{generator_forward.26} parent=0 // pred_fallthru
    _

// kernel: generator_forward.25
$region0: #{generator_forward.25}
  #allocation0 [shape = 'u32[]', space=smem, size = 0x4, offset = 0x4, fixed_abs, tag = 'smem constant byte address 0x4 - core index']
  #allocation1 [shape = 'u32[72,128]{1,0:T(1,128)}', space=vmem, size = 0x9000, scoped, tag = 'internal scratch']
  %s0 = inlined_call_operand.vmem [shape: bf16[32,192], index: 0, kind: input, shape index: {}]
  %s1 = inlined_call_operand.vmem [shape: bf16[192,128], index: 1, kind: input, shape index: {}]
  %s2 = inlined_call_operand.vmem [shape: f32[1,128], index: 2, kind: input, shape index: {}]
  %s3 = inlined_call_operand.vmem [shape: f32[32,128], index: 3, kind: output, shape index: {0}]
  %s4 = inlined_call_operand.vmem [shape: f32[8,128], index: 4, kind: output, shape index: {1}]
  %s5 = inlined_call_operand.vmem [shape: f32[8,128], index: 5, kind: output, shape index: {2}]
  %6 = xla_tuple %s3, %s4, %s5
  %s7 = sld [smem:[#allocation0]]
  $region38: #{generator_forward.25} parent=0
    _
  %s9 = ssub.s32 1, %s7
  %s10 = scalar_select 0, %s9, %s7
  // Predicated region
  $region2: #{generator_forward.25} parent=0 // pred_check
    _
  $region3: #{generator_forward.25} parent=0 // pred_check_branch
    %12 = sbr.rel (0) target = $region5
  $region4: #{generator_forward.25} parent=0 // pred_region
    _
  $region5: #{generator_forward.25} parent=0 // pred_fallthru
    _
  // Predicated region
  $region6: #{generator_forward.25} parent=0 // pred_check
    _
  $region7: #{generator_forward.25} parent=0 // pred_check_branch
    %14 = sbr.rel (0) target = $region9
  $region8: #{generator_forward.25} parent=0 // pred_region
    _
  $region9: #{generator_forward.25} parent=0 // pred_fallthru
    _
  // Predicated region
  $region10: #{generator_forward.25} parent=0 // pred_check
    _
  $region11: #{generator_forward.25} parent=0 // pred_check_branch
    %16 = sbr.rel (0) target = $region13
  $region12: #{generator_forward.25} parent=0 // pred_region
    _
  $region13: #{generator_forward.25} parent=0 // pred_fallthru
    _
  %v18 = vld [vmem:[%s0] sm:$0xff]
  %v19 = vld [vmem:[%s0 + $0x8] sm:$0xff]
  %v20 = vld [vmem:[%s0 + $0x10] sm:$0xff]
  %v21 = vld [vmem:[%s0 + $0x18] sm:$0xff]
  %v22 = vld [vmem:[%s1] sm:$0xf]
  %v23 = vld [vmem:[%s1 + $0x4] sm:$0xf]
  %v24 = vld [vmem:[%s1 + $0x8] sm:$0xf]
  %v25 = vld [vmem:[%s1 + $0xc] sm:$0xf]
  %v26 = vld [vmem:[%s1 + $0x10] sm:$0xf]
  %v27 = vld [vmem:[%s1 + $0x14] sm:$0xf]
  %v28 = vld [vmem:[%s1 + $0x18] sm:$0xf]
  %v29 = vld [vmem:[%s1 + $0x1c] sm:$0xf]
  %v30 = vld [vmem:[%s1 + $0x20] sm:$0xf]
  %v31 = vld [vmem:[%s1 + $0x24] sm:$0xf]
  %v32 = vld [vmem:[%s1 + $0x28] sm:$0xf]
  %v33 = vld [vmem:[%s1 + $0x2c] sm:$0xf]
  %v34 = vld [vmem:[%s1 + $0x30] sm:$0xf]
  %v35 = vld [vmem:[%s1 + $0x34] sm:$0xf]
  %v36 = vld [vmem:[%s1 + $0x38] sm:$0xf]
  %v37 = vld [vmem:[%s1 + $0x3c] sm:$0xf]
  %v38 = vld [vmem:[%s1 + $0x40] sm:$0xf]
  %v39 = vld [vmem:[%s1 + $0x44] sm:$0xf]
  %v40 = vld [vmem:[%s1 + $0x48] sm:$0xf]
  %v41 = vld [vmem:[%s1 + $0x4c] sm:$0xf]
  %v42 = vld [vmem:[%s1 + $0x50] sm:$0xf]
  %v43 = vld [vmem:[%s1 + $0x54] sm:$0xf]
  %v44 = vld [vmem:[%s1 + $0x58] sm:$0xf]
  %v45 = vld [vmem:[%s1 + $0x5c] sm:$0xf]
  %v46 = vld [vmem:[%s2] sm:$0x1]
  %v48 = vperm.slane %v46, 0
  %v54 = vunpack.c.l.b16 %v18
  %v55 = vunpack.c.h.b16 %v18
  %v56 = vunpack.c.l.b16 %v19
  %v57 = vunpack.c.h.b16 %v19
  %v58 = vunpack.c.l.b16 %v20
  %v59 = vunpack.c.h.b16 %v20
  %v60 = vunpack.c.l.b16 %v21
  %v61 = vunpack.c.h.b16 %v21
  %v62 = vpack.c.b16 %v56, %v54
  %v63 = vpack.c.b16 %v57, %v55
  %v64 = vpack.c.b16 %v60, %v58
  %v65 = vpack.c.b16 %v61, %v59
  %v92 = vunpack.c.l.b16 %v22
  %v93 = vunpack.c.l.b16 %v23
  %v94 = vunpack.c.l.b16 %v24
  %v95 = vunpack.c.l.b16 %v25
  %v96 = vunpack.c.l.b16 %v26
  %v97 = vunpack.c.l.b16 %v27
  %v98 = vunpack.c.l.b16 %v28
  %v99 = vunpack.c.l.b16 %v29
  %v100 = vunpack.c.l.b16 %v30
  %v101 = vunpack.c.l.b16 %v31
  %v102 = vunpack.c.l.b16 %v32
  %v103 = vunpack.c.l.b16 %v33
  %v104 = vunpack.c.l.b16 %v34
  %v105 = vunpack.c.l.b16 %v35
  %v106 = vunpack.c.l.b16 %v36
  %v107 = vunpack.c.l.b16 %v37
  %v108 = vunpack.c.l.b16 %v38
  %v109 = vunpack.c.l.b16 %v39
  %v110 = vunpack.c.l.b16 %v40
  %v111 = vunpack.c.l.b16 %v41
  %v112 = vunpack.c.l.b16 %v42
  %v113 = vunpack.c.l.b16 %v43
  %v114 = vunpack.c.l.b16 %v44
  %v115 = vunpack.c.l.b16 %v45
  %v116 = vpack.c.b16 %v93, %v92
  %v117 = vpack.c.b16 %v95, %v94
  %v118 = vpack.c.b16 %v97, %v96
  %v119 = vpack.c.b16 %v99, %v98
  %v120 = vpack.c.b16 %v101, %v100
  %v121 = vpack.c.b16 %v103, %v102
  %v122 = vpack.c.b16 %v105, %v104
  %v123 = vpack.c.b16 %v107, %v106
  %v124 = vpack.c.b16 %v109, %v108
  %v125 = vpack.c.b16 %v111, %v110
  %v126 = vpack.c.b16 %v113, %v112
  %v127 = vpack.c.b16 %v115, %v114
  %vm140 = vcmask 523264
  %v142 = vsel %vm140, %v63, 0
  %v145 = vsel %vm140, %v65, 0
  %147 = vmatpush.bf16.msra.mxu0 %v123
  %148 = vmatpush.bf16.msra.mxu0 %v122
  %149 = vmatpush.bf16.msra.mxu0 %v121
  %150 = vmatpush.bf16.msra.mxu0 %v120
  %151 = vmatpush.bf16.msra.mxu0 %v119
  %152 = vmatpush.bf16.msra.mxu0 %v118
  %153 = vmatpush.bf16.msra.mxu0 %v117
  %154 = vmatpush.bf16.msra.mxu0 %v116
  %155 = vmatmul.bf16.gmra.mxu0 %v62
  %v156 = vpop.f32.mrf.mxu0
  %v157 = vadd.f32 %v48, %v156
  %v158 = vpop.f32.mrf.mxu0
  %v159 = vadd.f32 %v48, %v158
  %160 = vmatmul.bf16.gmra.mxu0 %v64
  %v161 = vpop.f32.mrf.mxu0
  %v162 = vadd.f32 %v48, %v161
  %v163 = vpop.f32.mrf.mxu0
  %v164 = vadd.f32 %v48, %v163
  %165 = vdwg.mxu0
  %166 = vmatpush.bf16.msra.mxu0 0
  %167 = vmatpush.bf16.msra.mxu0 0
  %168 = vmatpush.bf16.msra.mxu0 0
  %169 = vmatpush.bf16.msra.mxu0 0
  %170 = vmatpush.bf16.msra.mxu0 %v127
  %171 = vmatpush.bf16.msra.mxu0 %v126
  %172 = vmatpush.bf16.msra.mxu0 %v125
  %173 = vmatpush.bf16.msra.mxu0 %v124
  %174 = vmatmul.bf16.gmra.mxu0 %v142
  %v175 = vpop.f32.mrf.mxu0
  %v176 = vadd.f32 %v157, %v175
  %v177 = vpop.f32.mrf.mxu0
  %v178 = vadd.f32 %v159, %v177
  %179 = vmatmul.bf16.gmra.mxu0 %v145
  %v180 = vpop.f32.mrf.mxu0
  %v181 = vadd.f32 %v162, %v180
  %v182 = vpop.f32.mrf.mxu0
  %v183 = vadd.f32 %v164, %v182
  %184 = vdwg.mxu0
  %185 = vst [vmem:[%s3] sm:$0xff] %v176
  %186 = vst [vmem:[%s3 + $0x8] sm:$0xff] %v178
  %187 = vst [vmem:[%s3 + $0x10] sm:$0xff] %v181
  %188 = vst [vmem:[%s3 + $0x18] sm:$0xff] %v183
  %v189 = vadd.f32 %v176, %v178
  %v190 = vadd.f32 %v189, %v181
  %v191 = vadd.f32 %v190, %v183
  %v192 = vrot.slane %v191, 4
  %v193 = vadd.f32 %v191, %v192
  %v194 = vrot.slane %v193, 2
  %v195 = vadd.f32 %v193, %v194
  %v196 = vrot.slane %v195, 1
  %v197 = vadd.f32 %v195, %v196
  %v198 = vmul.f32 %v176, %v176
  %v199 = vmul.f32 %v178, %v178
  %v200 = vmul.f32 %v181, %v181
  %v201 = vmul.f32 %v183, %v183
  %v202 = vadd.f32 %v198, %v199
  %v203 = vadd.f32 %v202, %v200
  %v204 = vadd.f32 %v203, %v201
  %v205 = vrot.slane %v204, 4
  %v206 = vadd.f32 %v204, %v205
  %v207 = vrot.slane %v206, 2
  %v208 = vadd.f32 %v206, %v207
  %v209 = vrot.slane %v208, 1
  %v210 = vadd.f32 %v208, %v209
  %211 = vst [vmem:[%s4] sm:$0xff] %v197
  %212 = vst [vmem:[%s5] sm:$0xff] %v210
  // Predicated region
  $region14: #{generator_forward.25} parent=0 // pred_check
    _
  $region15: #{generator_forward.25} parent=0 // pred_check_branch
    %214 = sbr.rel (0) target = $region17
  $region16: #{generator_forward.25} parent=0 // pred_region
    _
  $region17: #{generator_forward.25} parent=0 // pred_fallthru
    _
  // Predicated region
  $region18: #{generator_forward.25} parent=0 // pred_check
    _
  $region19: #{generator_forward.25} parent=0 // pred_check_branch
    %216 = sbr.rel (0) target = $region21
  $region20: #{generator_forward.25} parent=0 // pred_region
    _
  $region21: #{generator_forward.25} parent=0 // pred_fallthru
    _
  // Predicated region
  $region22: #{generator_forward.25} parent=0 // pred_check
    _
  $region23: #{generator_forward.25} parent=0 // pred_check_branch
    %218 = sbr.rel (0) target = $region25
  $region24: #{generator_forward.25} parent=0 // pred_region
    _
  $region25: #{generator_forward.25} parent=0 // pred_fallthru
    _
  // Predicated region
  $region26: #{generator_forward.25} parent=0 // pred_check
    _
  $region27: #{generator_forward.25} parent=0 // pred_check_branch
    %220 = sbr.rel (0) target = $region29
  $region28: #{generator_forward.25} parent=0 // pred_region
    _
  $region29: #{generator_forward.25} parent=0 // pred_fallthru
    _
  // Predicated region
  $region30: #{generator_forward.25} parent=0 // pred_check
    _
  $region31: #{generator_forward.25} parent=0 // pred_check_branch
    %222 = sbr.rel (0) target = $region33
  $region32: #{generator_forward.25} parent=0 // pred_region
    _
  $region33: #{generator_forward.25} parent=0 // pred_fallthru
    _
  // Predicated region
  $region34: #{generator_forward.25} parent=0 // pred_check
    _
  $region35: #{generator_forward.25} parent=0 // pred_check_branch
    %224 = sbr.rel (0) target = $region37
  $region36: #{generator_forward.25} parent=0 // pred_region
    _
  $region37: #{generator_forward.25} parent=0 // pred_fallthru
    _

// kernel: tile.63
$region0: #{tile.63}
  #allocation0 [shape = 's32[1]{0}', space=sflag, size = 0x4, scoped, tag = 'scoped memory for tile.63']
  %s0 = inlined_call_operand.vmem [shape: f32[16], index: 0, kind: input, shape index: {}]
  %s1 = inlined_call_operand.vmem [shape: f32[4,16], index: 1, kind: output, shape index: {}]
  // Predicated region
  $region2: #{tile.63} parent=0 // pred_check
    _
  $region3: #{tile.63} parent=0 // pred_check_branch
    %3 = sbr.rel (0) target = $region5
  $region4: #{tile.63} parent=0 // pred_region
    _
  $region5: #{tile.63} parent=0 // pred_fallthru
    _
  %v4 = vld [vmem:[%s0] ss:$0 sm:$0xff]
  %5 = vst [vmem:[%s1] sm:$0xf] %v4

// kernel: generator_forward.27
$region0: #{generator_forward.27}
  #allocation0 [shape = 'u32[]', space=smem, size = 0x4, offset = 0x4, fixed_abs, tag = 'smem constant byte address 0x4 - core index']
  #allocation1 [shape = 'u32[72,128]{1,0:T(1,128)}', space=vmem, size = 0x9000, scoped, tag = 'internal scratch']
  %s0 = inlined_call_operand.vmem [shape: bf16[16,256], index: 0, kind: input, shape index: {}]
  %s1 = inlined_call_operand.vmem [shape: bf16[256,128], index: 1, kind: input, shape index: {}]
  %s2 = inlined_call_operand.vmem [shape: f32[1,128], index: 2, kind: input, shape index: {}]
  %s3 = inlined_call_operand.vmem [shape: f32[16,128], index: 3, kind: output, shape index: {0}]
  %s4 = inlined_call_operand.vmem [shape: f32[8,128], index: 4, kind: output, shape index: {1}]
  %s5 = inlined_call_operand.vmem [shape: f32[8,128], index: 5, kind: output, shape index: {2}]
  %6 = xla_tuple %s3, %s4, %s5
  %s7 = sld [smem:[#allocation0]]
  $region38: #{generator_forward.27} parent=0
    _
  %s9 = ssub.s32 1, %s7
  %s10 = scalar_select 0, %s9, %s7
  // Predicated region
  $region2: #{generator_forward.27} parent=0 // pred_check
    _
  $region3: #{generator_forward.27} parent=0 // pred_check_branch
    %12 = sbr.rel (0) target = $region5
  $region4: #{generator_forward.27} parent=0 // pred_region
    _
  $region5: #{generator_forward.27} parent=0 // pred_fallthru
    _
  // Predicated region
  $region6: #{generator_forward.27} parent=0 // pred_check
    _
  $region7: #{generator_forward.27} parent=0 // pred_check_branch
    %14 = sbr.rel (0) target = $region9
  $region8: #{generator_forward.27} parent=0 // pred_region
    _
  $region9: #{generator_forward.27} parent=0 // pred_fallthru
    _
  // Predicated region
  $region10: #{generator_forward.27} parent=0 // pred_check
    _
  $region11: #{generator_forward.27} parent=0 // pred_check_branch
    %16 = sbr.rel (0) target = $region13
  $region12: #{generator_forward.27} parent=0 // pred_region
    _
  $region13: #{generator_forward.27} parent=0 // pred_fallthru
    _
  %v17 = vld [vmem:[%s0] sm:$0xff]
  %v18 = vld [vmem:[%s0 + $0x8] sm:$0xff]
  %v19 = vld [vmem:[%s1] sm:$0xf]
  %v20 = vld [vmem:[%s1 + $0x4] sm:$0xf]
  %v21 = vld [vmem:[%s1 + $0x8] sm:$0xf]
  %v22 = vld [vmem:[%s1 + $0xc] sm:$0xf]
  %v23 = vld [vmem:[%s1 + $0x10] sm:$0xf]
  %v24 = vld [vmem:[%s1 + $0x14] sm:$0xf]
  %v25 = vld [vmem:[%s1 + $0x18] sm:$0xf]
  %v26 = vld [vmem:[%s1 + $0x1c] sm:$0xf]
  %v27 = vld [vmem:[%s1 + $0x20] sm:$0xf]
  %v28 = vld [vmem:[%s1 + $0x24] sm:$0xf]
  %v29 = vld [vmem:[%s1 + $0x28] sm:$0xf]
  %v30 = vld [vmem:[%s1 + $0x2c] sm:$0xf]
  %v31 = vld [vmem:[%s1 + $0x30] sm:$0xf]
  %v32 = vld [vmem:[%s1 + $0x34] sm:$0xf]
  %v33 = vld [vmem:[%s1 + $0x38] sm:$0xf]
  %v34 = vld [vmem:[%s1 + $0x3c] sm:$0xf]
  %v35 = vld [vmem:[%s1 + $0x40] sm:$0xf]
  %v36 = vld [vmem:[%s1 + $0x44] sm:$0xf]
  %v37 = vld [vmem:[%s1 + $0x48] sm:$0xf]
  %v38 = vld [vmem:[%s1 + $0x4c] sm:$0xf]
  %v39 = vld [vmem:[%s1 + $0x50] sm:$0xf]
  %v40 = vld [vmem:[%s1 + $0x54] sm:$0xf]
  %v41 = vld [vmem:[%s1 + $0x58] sm:$0xf]
  %v42 = vld [vmem:[%s1 + $0x5c] sm:$0xf]
  %v43 = vld [vmem:[%s1 + $0x60] sm:$0xf]
  %v44 = vld [vmem:[%s1 + $0x64] sm:$0xf]
  %v45 = vld [vmem:[%s1 + $0x68] sm:$0xf]
  %v46 = vld [vmem:[%s1 + $0x6c] sm:$0xf]
  %v47 = vld [vmem:[%s1 + $0x70] sm:$0xf]
  %v48 = vld [vmem:[%s1 + $0x74] sm:$0xf]
  %v49 = vld [vmem:[%s1 + $0x78] sm:$0xf]
  %v50 = vld [vmem:[%s1 + $0x7c] sm:$0xf]
  %v51 = vld [vmem:[%s2] sm:$0x1]
  %v53 = vperm.slane %v51, 0
  %v57 = vunpack.c.l.b16 %v17
  %v58 = vunpack.c.h.b16 %v17
  %v59 = vunpack.c.l.b16 %v18
  %v60 = vunpack.c.h.b16 %v18
  %v61 = vpack.c.b16 %v59, %v57
  %v62 = vpack.c.b16 %v60, %v58
  %v97 = vunpack.c.l.b16 %v19
  %v98 = vunpack.c.l.b16 %v20
  %v99 = vunpack.c.l.b16 %v21
  %v100 = vunpack.c.l.b16 %v22
  %v101 = vunpack.c.l.b16 %v23
  %v102 = vunpack.c.l.b16 %v24
  %v103 = vunpack.c.l.b16 %v25
  %v104 = vunpack.c.l.b16 %v26
  %v105 = vunpack.c.l.b16 %v27
  %v106 = vunpack.c.l.b16 %v28
  %v107 = vunpack.c.l.b16 %v29
  %v108 = vunpack.c.l.b16 %v30
  %v109 = vunpack.c.l.b16 %v31
  %v110 = vunpack.c.l.b16 %v32
  %v111 = vunpack.c.l.b16 %v33
  %v112 = vunpack.c.l.b16 %v34
  %v113 = vunpack.c.l.b16 %v35
  %v114 = vunpack.c.l.b16 %v36
  %v115 = vunpack.c.l.b16 %v37
  %v116 = vunpack.c.l.b16 %v38
  %v117 = vunpack.c.l.b16 %v39
  %v118 = vunpack.c.l.b16 %v40
  %v119 = vunpack.c.l.b16 %v41
  %v120 = vunpack.c.l.b16 %v42
  %v121 = vunpack.c.l.b16 %v43
  %v122 = vunpack.c.l.b16 %v44
  %v123 = vunpack.c.l.b16 %v45
  %v124 = vunpack.c.l.b16 %v46
  %v125 = vunpack.c.l.b16 %v47
  %v126 = vunpack.c.l.b16 %v48
  %v127 = vunpack.c.l.b16 %v49
  %v128 = vunpack.c.l.b16 %v50
  %v129 = vpack.c.b16 %v98, %v97
  %v130 = vpack.c.b16 %v100, %v99
  %v131 = vpack.c.b16 %v102, %v101
  %v132 = vpack.c.b16 %v104, %v103
  %v133 = vpack.c.b16 %v106, %v105
  %v134 = vpack.c.b16 %v108, %v107
  %v135 = vpack.c.b16 %v110, %v109
  %v136 = vpack.c.b16 %v112, %v111
  %v137 = vpack.c.b16 %v114, %v113
  %v138 = vpack.c.b16 %v116, %v115
  %v139 = vpack.c.b16 %v118, %v117
  %v140 = vpack.c.b16 %v120, %v119
  %v141 = vpack.c.b16 %v122, %v121
  %v142 = vpack.c.b16 %v124, %v123
  %v143 = vpack.c.b16 %v126, %v125
  %v144 = vpack.c.b16 %v128, %v127
  %161 = vmatpush.bf16.msra.mxu0 %v136
  %162 = vmatpush.bf16.msra.mxu0 %v135
  %163 = vmatpush.bf16.msra.mxu0 %v134
  %164 = vmatpush.bf16.msra.mxu0 %v133
  %165 = vmatpush.bf16.msra.mxu0 %v132
  %166 = vmatpush.bf16.msra.mxu0 %v131
  %167 = vmatpush.bf16.msra.mxu0 %v130
  %168 = vmatpush.bf16.msra.mxu0 %v129
  %169 = vmatmul.bf16.gmra.mxu0 %v61
  %v170 = vpop.f32.mrf.mxu0
  %v171 = vadd.f32 %v53, %v170
  %v172 = vpop.f32.mrf.mxu0
  %v173 = vadd.f32 %v53, %v172
  %174 = vdwg.mxu0
  %175 = vmatpush.bf16.msra.mxu0 %v144
  %176 = vmatpush.bf16.msra.mxu0 %v143
  %177 = vmatpush.bf16.msra.mxu0 %v142
  %178 = vmatpush.bf16.msra.mxu0 %v141
  %179 = vmatpush.bf16.msra.mxu0 %v140
  %180 = vmatpush.bf16.msra.mxu0 %v139
  %181 = vmatpush.bf16.msra.mxu0 %v138
  %182 = vmatpush.bf16.msra.mxu0 %v137
  %183 = vmatmul.bf16.gmra.mxu0 %v62
  %v184 = vpop.f32.mrf.mxu0
  %v185 = vadd.f32 %v171, %v184
  %v186 = vpop.f32.mrf.mxu0
  %v187 = vadd.f32 %v173, %v186
  %188 = vdwg.mxu0
  %189 = vst [vmem:[%s3] sm:$0xff] %v185
  %190 = vst [vmem:[%s3 + $0x8] sm:$0xff] %v187
  %v191 = vadd.f32 %v185, %v187
  %v192 = vrot.slane %v191, 4
  %v193 = vadd.f32 %v191, %v192
  %v194 = vrot.slane %v193, 2
  %v195 = vadd.f32 %v193, %v194
  %v196 = vrot.slane %v195, 1
  %v197 = vadd.f32 %v195, %v196
  %v198 = vmul.f32 %v185, %v185
  %v199 = vmul.f32 %v187, %v187
  %v200 = vadd.f32 %v198, %v199
  %v201 = vrot.slane %v200, 4
  %v202 = vadd.f32 %v200, %v201
  %v203 = vrot.slane %v202, 2
  %v204 = vadd.f32 %v202, %v203
  %v205 = vrot.slane %v204, 1
  %v206 = vadd.f32 %v204, %v205
  %207 = vst [vmem:[%s4] sm:$0xff] %v197
  %208 = vst [vmem:[%s5] sm:$0xff] %v206
  // Predicated region
  $region14: #{generator_forward.27} parent=0 // pred_check
    _
  $region15: #{generator_forward.27} parent=0 // pred_check_branch
    %210 = sbr.rel (0) target = $region17
  $region16: #{generator_forward.27} parent=0 // pred_region
    _
  $region17: #{generator_forward.27} parent=0 // pred_fallthru
    _
  // Predicated region
  $region18: #{generator_forward.27} parent=0 // pred_check
    _
  $region19: #{generator_forward.27} parent=0 // pred_check_branch
    %212 = sbr.rel (0) target = $region21
  $region20: #{generator_forward.27} parent=0 // pred_region
    _
  $region21: #{generator_forward.27} parent=0 // pred_fallthru
    _
  // Predicated region
  $region22: #{generator_forward.27} parent=0 // pred_check
    _
  $region23: #{generator_forward.27} parent=0 // pred_check_branch
    %214 = sbr.rel (0) target = $region25
  $region24: #{generator_forward.27} parent=0 // pred_region
    _
  $region25: #{generator_forward.27} parent=0 // pred_fallthru
    _
  // Predicated region
  $region26: #{generator_forward.27} parent=0 // pred_check
    _
  $region27: #{generator_forward.27} parent=0 // pred_check_branch
    %216 = sbr.rel (0) target = $region29
  $region28: #{generator_forward.27} parent=0 // pred_region
    _
  $region29: #{generator_forward.27} parent=0 // pred_fallthru
    _
  // Predicated region
  $region30: #{generator_forward.27} parent=0 // pred_check
    _
  $region31: #{generator_forward.27} parent=0 // pred_check_branch
    %218 = sbr.rel (0) target = $region33
  $region32: #{generator_forward.27} parent=0 // pred_region
    _
  $region33: #{generator_forward.27} parent=0 // pred_fallthru
    _
  // Predicated region
  $region34: #{generator_forward.27} parent=0 // pred_check
    _
  $region35: #{generator_forward.27} parent=0 // pred_check_branch
    %220 = sbr.rel (0) target = $region37
  $region36: #{generator_forward.27} parent=0 // pred_region
    _
  $region37: #{generator_forward.27} parent=0 // pred_fallthru
    _

// kernel: tile.64
$region0: #{tile.64}
  %s0 = inlined_call_operand.vmem [shape: f32[4,16], index: 0, kind: input, shape index: {}]
  %s1 = inlined_call_operand.vmem [shape: f32[64], index: 1, kind: output, shape index: {}]
  $region1: #{tile.64} parent=0
    #allocation0 [shape = 'u8[4096]{0}', space=vmem, size = 0x1000, scoped, tag = 'scoped mem for output reshape']
    #allocation1 [shape = 'u8[4096]{0}', space=vmem, size = 0x1000, scoped, tag = 'scoped mem for input reshape']
    %s3 = ssub.s32 16, 1
    %v4 = vld [vmem:[%s0] sm:%s3]
    %5 = vst [vmem:[#allocation1] sm:%s3] %v4
    %v6 = vld [vmem:[#allocation1] sm:$0x1]
    %vm7 = vcmask 130048
    %8 = vst.msk [vmem:[#allocation0] sm:$0x1] %vm7, %v6
    %s9 = scalar_lea.vmem [#allocation1], 3
    %v10 = vld [vmem:[%s9] sm:$0x1]
    %11 = vrot.lane.b32.xlu0 %v10, 48
    %v12 = vpop.permute.xlu0 %11
    %vm13 = vcmask 523648
    %14 = vst.msk [vmem:[#allocation0] sm:$0x1] %vm13, %v12
    %s15 = scalar_lea.vmem [#allocation1], 2
    %v16 = vld [vmem:[%s15] sm:$0x1]
    %17 = vrot.lane.b32.xlu0 %v16, 32
    %v18 = vpop.permute.xlu0 %17
    %vm19 = vcmask 392448
    %20 = vst.msk [vmem:[#allocation0] sm:$0x1] %vm19, %v18
    %s21 = scalar_lea.vmem [#allocation1], 1
    %v22 = vld [vmem:[%s21] sm:$0x1]
    %23 = vrot.lane.b32.xlu0 %v22, 16
    %v24 = vpop.permute.xlu0 %23
    %vm25 = vcmask 261248
    %26 = vst.msk [vmem:[#allocation0] sm:$0x1] %vm25, %v24
    %s28 = ssub.s32 2, 1
    %v29 = vld [vmem:[#allocation0] sm:%s28]
    %s31 = ssub.s32 2, 1
    %32 = vst [vmem:[%s1] sm:%s31] %v29

// kernel: generator_forward.28
$region0: #{generator_forward.28}
  #allocation0 [shape = 'u32[]', space=smem, size = 0x4, offset = 0x4, fixed_abs, tag = 'smem constant byte address 0x4 - core index']
  #allocation1 [shape = 'u32[72,128]{1,0:T(1,128)}', space=vmem, size = 0x9000, scoped, tag = 'internal scratch']
  %s0 = inlined_call_operand.vmem [shape: f32[16,128], index: 0, kind: input, shape index: {}]
  %s1 = inlined_call_operand.vmem [shape: f32[1,128], index: 1, kind: input, shape index: {}]
  %s2 = inlined_call_operand.vmem [shape: f32[1,128], index: 2, kind: input, shape index: {}]
  %s3 = inlined_call_operand.vmem [shape: f32[16,128], index: 3, kind: output, shape index: {}]
  %s4 = sld [smem:[#allocation0]]
  $region22: #{generator_forward.28} parent=0
    _
  %s6 = ssub.s32 1, %s4
  %s7 = scalar_select 0, %s6, %s4
  // Predicated region
  $region2: #{generator_forward.28} parent=0 // pred_check
    _
  $region3: #{generator_forward.28} parent=0 // pred_check_branch
    %9 = sbr.rel (0) target = $region5
  $region4: #{generator_forward.28} parent=0 // pred_region
    _
  $region5: #{generator_forward.28} parent=0 // pred_fallthru
    _
  // Predicated region
  $region6: #{generator_forward.28} parent=0 // pred_check
    _
  $region7: #{generator_forward.28} parent=0 // pred_check_branch
    %11 = sbr.rel (0) target = $region9
  $region8: #{generator_forward.28} parent=0 // pred_region
    _
  $region9: #{generator_forward.28} parent=0 // pred_fallthru
    _
  // Predicated region
  $region10: #{generator_forward.28} parent=0 // pred_check
    _
  $region11: #{generator_forward.28} parent=0 // pred_check_branch
    %13 = sbr.rel (0) target = $region13
  $region12: #{generator_forward.28} parent=0 // pred_region
    _
  $region13: #{generator_forward.28} parent=0 // pred_fallthru
    _
  %v14 = vld [vmem:[%s0] sm:$0xff]
  %v15 = vld [vmem:[%s0 + $0x8] sm:$0xff]
  %v16 = vld [vmem:[%s1] sm:$0x1]
  %v18 = vperm.slane %v16, 0
  %v20 = vmul.f32 %v14, %v18
  %v21 = vmul.f32 %v15, %v18
  %v22 = vld [vmem:[%s2] sm:$0x1]
  %v24 = vperm.slane %v22, 0
  %v26 = vadd.f32 %v20, %v24
  %v27 = vadd.f32 %v21, %v24
  %v28 = vmax.f32 %v26, 0.0
  %v29 = vmax.f32 %v27, 0.0
  %30 = vst [vmem:[%s3] sm:$0xff] %v28
  %31 = vst [vmem:[%s3 + $0x8] sm:$0xff] %v29
  // Predicated region
  $region14: #{generator_forward.28} parent=0 // pred_check
    _
  $region15: #{generator_forward.28} parent=0 // pred_check_branch
    %33 = sbr.rel (0) target = $region17
  $region16: #{generator_forward.28} parent=0 // pred_region
    _
  $region17: #{generator_forward.28} parent=0 // pred_fallthru
    _
  // Predicated region
  $region18: #{generator_forward.28} parent=0 // pred_check
    _
  $region19: #{generator_forward.28} parent=0 // pred_check_branch
    %35 = sbr.rel (0) target = $region21
  $region20: #{generator_forward.28} parent=0 // pred_region
    _
  $region21: #{generator_forward.28} parent=0 // pred_fallthru
    _

// kernel: tile.78
$region0: #{tile.78}
  #allocation0 [shape = 's32[1]{0}', space=sflag, size = 0x4, scoped, tag = 'scoped memory for tile.78']
  %s0 = inlined_call_operand.vmem [shape: f32[12], index: 0, kind: input, shape index: {}]
  %s1 = inlined_call_operand.vmem [shape: f32[4,12], index: 1, kind: output, shape index: {}]
  // Predicated region
  $region2: #{tile.78} parent=0 // pred_check
    _
  $region3: #{tile.78} parent=0 // pred_check_branch
    %3 = sbr.rel (0) target = $region5
  $region4: #{tile.78} parent=0 // pred_region
    _
  $region5: #{tile.78} parent=0 // pred_fallthru
    _
  %v4 = vld [vmem:[%s0] ss:$0 sm:$0xff]
  %5 = vst [vmem:[%s1] sm:$0xf] %v4

// kernel: tile.79
$region0: #{tile.79}
  %s0 = inlined_call_operand.vmem [shape: f32[4,12], index: 0, kind: input, shape index: {}]
  %s1 = inlined_call_operand.vmem [shape: f32[48], index: 1, kind: output, shape index: {}]
  $region1: #{tile.79} parent=0
    #allocation0 [shape = 'u8[4096]{0}', space=vmem, size = 0x1000, scoped, tag = 'scoped mem for output reshape']
    #allocation1 [shape = 'u8[4096]{0}', space=vmem, size = 0x1000, scoped, tag = 'scoped mem for input reshape']
    %s3 = ssub.s32 16, 1
    %v4 = vld [vmem:[%s0] sm:%s3]
    %5 = vst [vmem:[#allocation1] sm:%s3] %v4
    %v6 = vld [vmem:[#allocation1] sm:$0x1]
    %vm7 = vcmask 97280
    %8 = vst.msk [vmem:[#allocation0] sm:$0x1] %vm7, %v6
    %s9 = scalar_lea.vmem [#allocation1], 3
    %v10 = vld [vmem:[%s9] sm:$0x1]
    %11 = vrot.lane.b32.xlu0 %v10, 36
    %v12 = vpop.permute.xlu0 %11
    %vm13 = vcmask 392480
    %14 = vst.msk [vmem:[#allocation0] sm:$0x1] %vm13, %v12
    %s15 = scalar_lea.vmem [#allocation1], 2
    %v16 = vld [vmem:[%s15] sm:$0x1]
    %17 = vrot.lane.b32.xlu0 %v16, 24
    %v18 = vpop.permute.xlu0 %17
    %vm19 = vcmask 294080
    %20 = vst.msk [vmem:[#allocation0] sm:$0x1] %vm19, %v18
    %s21 = scalar_lea.vmem [#allocation1], 1
    %v22 = vld [vmem:[%s21] sm:$0x1]
    %23 = vrot.lane.b32.xlu0 %v22, 12
    %v24 = vpop.permute.xlu0 %23
    %vm25 = vcmask 195680
    %26 = vst.msk [vmem:[#allocation0] sm:$0x1] %vm25, %v24
    %s28 = ssub.s32 2, 1
    %v29 = vld [vmem:[#allocation0] sm:%s28]
    %s31 = ssub.s32 2, 1
    %32 = vst [vmem:[%s1] sm:%s31] %v29

// kernel: generator_forward.29
$region0: #{generator_forward.29}
  #allocation0 [shape = 'u32[]', space=smem, size = 0x4, offset = 0x4, fixed_abs, tag = 'smem constant byte address 0x4 - core index']
  #allocation1 [shape = 'u32[72,128]{1,0:T(1,128)}', space=vmem, size = 0x9000, scoped, tag = 'internal scratch']
  %s0 = inlined_call_operand.vmem [shape: bf16[16,80], index: 0, kind: input, shape index: {}]
  %s1 = inlined_call_operand.vmem [shape: bf16[80,128], index: 1, kind: input, shape index: {}]
  %s2 = inlined_call_operand.vmem [shape: f32[1,128], index: 2, kind: input, shape index: {}]
  %s3 = inlined_call_operand.vmem [shape: f32[16,128], index: 3, kind: output, shape index: {0}]
  %s4 = inlined_call_operand.vmem [shape: f32[8,128], index: 4, kind: output, shape index: {1}]
  %s5 = inlined_call_operand.vmem [shape: f32[8,128], index: 5, kind: output, shape index: {2}]
  %6 = xla_tuple %s3, %s4, %s5
  %s7 = sld [smem:[#allocation0]]
  $region38: #{generator_forward.29} parent=0
    _
  %s9 = ssub.s32 1, %s7
  %s10 = scalar_select 0, %s9, %s7
  // Predicated region
  $region2: #{generator_forward.29} parent=0 // pred_check
    _
  $region3: #{generator_forward.29} parent=0 // pred_check_branch
    %12 = sbr.rel (0) target = $region5
  $region4: #{generator_forward.29} parent=0 // pred_region
    _
  $region5: #{generator_forward.29} parent=0 // pred_fallthru
    _
  // Predicated region
  $region6: #{generator_forward.29} parent=0 // pred_check
    _
  $region7: #{generator_forward.29} parent=0 // pred_check_branch
    %14 = sbr.rel (0) target = $region9
  $region8: #{generator_forward.29} parent=0 // pred_region
    _
  $region9: #{generator_forward.29} parent=0 // pred_fallthru
    _
  // Predicated region
  $region10: #{generator_forward.29} parent=0 // pred_check
    _
  $region11: #{generator_forward.29} parent=0 // pred_check_branch
    %16 = sbr.rel (0) target = $region13
  $region12: #{generator_forward.29} parent=0 // pred_region
    _
  $region13: #{generator_forward.29} parent=0 // pred_fallthru
    _
  %v18 = vld [vmem:[%s0] sm:$0xf]
  %v19 = vld [vmem:[%s0 + $0x4] sm:$0xf]
  %v20 = vld [vmem:[%s1] sm:$0xf]
  %v21 = vld [vmem:[%s1 + $0x4] sm:$0xf]
  %v22 = vld [vmem:[%s1 + $0x8] sm:$0xf]
  %v23 = vld [vmem:[%s1 + $0xc] sm:$0xf]
  %v24 = vld [vmem:[%s1 + $0x10] sm:$0xf]
  %v25 = vld [vmem:[%s1 + $0x14] sm:$0xf]
  %v26 = vld [vmem:[%s1 + $0x18] sm:$0xf]
  %v27 = vld [vmem:[%s1 + $0x1c] sm:$0xf]
  %v28 = vld [vmem:[%s1 + $0x20] sm:$0xf]
  %v29 = vld [vmem:[%s1 + $0x24] sm:$0xf]
  %v30 = vld [vmem:[%s2] sm:$0x1]
  %v32 = vperm.slane %v30, 0
  %v36 = vunpack.c.l.b16 %v18
  %v37 = vunpack.c.l.b16 %v19
  %v38 = vpack.c.b16 %v37, %v36
  %v49 = vunpack.c.l.b16 %v20
  %v50 = vunpack.c.l.b16 %v21
  %v51 = vunpack.c.l.b16 %v22
  %v52 = vunpack.c.l.b16 %v23
  %v53 = vunpack.c.l.b16 %v24
  %v54 = vunpack.c.l.b16 %v25
  %v55 = vunpack.c.l.b16 %v26
  %v56 = vunpack.c.l.b16 %v27
  %v57 = vunpack.c.l.b16 %v28
  %v58 = vunpack.c.l.b16 %v29
  %v59 = vpack.c.b16 %v50, %v49
  %v60 = vpack.c.b16 %v52, %v51
  %v61 = vpack.c.b16 %v54, %v53
  %v62 = vpack.c.b16 %v56, %v55
  %v63 = vpack.c.b16 %v58, %v57
  %vm69 = vcmask 654336
  %v71 = vsel %vm69, %v38, 0
  %73 = vmatpush.bf16.msra.mxu0 0
  %74 = vmatpush.bf16.msra.mxu0 0
  %75 = vmatpush.bf16.msra.mxu0 0
  %76 = vmatpush.bf16.msra.mxu0 %v63
  %77 = vmatpush.bf16.msra.mxu0 %v62
  %78 = vmatpush.bf16.msra.mxu0 %v61
  %79 = vmatpush.bf16.msra.mxu0 %v60
  %80 = vmatpush.bf16.msra.mxu0 %v59
  %81 = vmatmul.bf16.gmra.mxu0 %v71
  %v82 = vpop.f32.mrf.mxu0
  %v83 = vadd.f32 %v32, %v82
  %v84 = vpop.f32.mrf.mxu0
  %v85 = vadd.f32 %v32, %v84
  %86 = vdwg.mxu0
  %87 = vst [vmem:[%s3] sm:$0xff] %v83
  %88 = vst [vmem:[%s3 + $0x8] sm:$0xff] %v85
  %v89 = vadd.f32 %v83, %v85
  %v90 = vrot.slane %v89, 4
  %v91 = vadd.f32 %v89, %v90
  %v92 = vrot.slane %v91, 2
  %v93 = vadd.f32 %v91, %v92
  %v94 = vrot.slane %v93, 1
  %v95 = vadd.f32 %v93, %v94
  %v96 = vmul.f32 %v83, %v83
  %v97 = vmul.f32 %v85, %v85
  %v98 = vadd.f32 %v96, %v97
  %v99 = vrot.slane %v98, 4
  %v100 = vadd.f32 %v98, %v99
  %v101 = vrot.slane %v100, 2
  %v102 = vadd.f32 %v100, %v101
  %v103 = vrot.slane %v102, 1
  %v104 = vadd.f32 %v102, %v103
  %105 = vst [vmem:[%s4] sm:$0xff] %v95
  %106 = vst [vmem:[%s5] sm:$0xff] %v104
  // Predicated region
  $region14: #{generator_forward.29} parent=0 // pred_check
    _
  $region15: #{generator_forward.29} parent=0 // pred_check_branch
    %108 = sbr.rel (0) target = $region17
  $region16: #{generator_forward.29} parent=0 // pred_region
    _
  $region17: #{generator_forward.29} parent=0 // pred_fallthru
    _
  // Predicated region
  $region18: #{generator_forward.29} parent=0 // pred_check
    _
  $region19: #{generator_forward.29} parent=0 // pred_check_branch
    %110 = sbr.rel (0) target = $region21
  $region20: #{generator_forward.29} parent=0 // pred_region
    _
  $region21: #{generator_forward.29} parent=0 // pred_fallthru
    _
  // Predicated region
  $region22: #{generator_forward.29} parent=0 // pred_check
    _
  $region23: #{generator_forward.29} parent=0 // pred_check_branch
    %112 = sbr.rel (0) target = $region25
  $region24: #{generator_forward.29} parent=0 // pred_region
    _
  $region25: #{generator_forward.29} parent=0 // pred_fallthru
    _
  // Predicated region
  $region26: #{generator_forward.29} parent=0 // pred_check
    _
  $region27: #{generator_forward.29} parent=0 // pred_check_branch
    %114 = sbr.rel (0) target = $region29
  $region28: #{generator_forward.29} parent=0 // pred_region
    _
  $region29: #{generator_forward.29} parent=0 // pred_fallthru
    _
  // Predicated region
  $region30: #{generator_forward.29} parent=0 // pred_check
    _
  $region31: #{generator_forward.29} parent=0 // pred_check_branch
    %116 = sbr.rel (0) target = $region33
  $region32: #{generator_forward.29} parent=0 // pred_region
    _
  $region33: #{generator_forward.29} parent=0 // pred_fallthru
    _
  // Predicated region
  $region34: #{generator_forward.29} parent=0 // pred_check
    _
  $region35: #{generator_forward.29} parent=0 // pred_check_branch
    %118 = sbr.rel (0) target = $region37
  $region36: #{generator_forward.29} parent=0 // pred_region
    _
  $region37: #{generator_forward.29} parent=0 // pred_fallthru
    _

// kernel: generator_forward.32
$region0: #{generator_forward.32}
  #allocation0 [shape = 'u32[]', space=smem, size = 0x4, offset = 0x4, fixed_abs, tag = 'smem constant byte address 0x4 - core index']
  #allocation1 [shape = 'u32[72,128]{1,0:T(1,128)}', space=vmem, size = 0x9000, scoped, tag = 'internal scratch']
  %s0 = inlined_call_operand.vmem [shape: f32[64,128], index: 0, kind: input, shape index: {}]
  %s1 = inlined_call_operand.vmem [shape: f32[1,128], index: 1, kind: input, shape index: {}]
  %s2 = inlined_call_operand.vmem [shape: f32[1,128], index: 2, kind: input, shape index: {}]
  %s3 = inlined_call_operand.vmem [shape: f32[64,128], index: 3, kind: output, shape index: {}]
  %s4 = sld [smem:[#allocation0]]
  $region22: #{generator_forward.32} parent=0
    _
  %s6 = ssub.s32 1, %s4
  %s7 = scalar_select 0, %s6, %s4
  // Predicated region
  $region2: #{generator_forward.32} parent=0 // pred_check
    _
  $region3: #{generator_forward.32} parent=0 // pred_check_branch
    %9 = sbr.rel (0) target = $region5
  $region4: #{generator_forward.32} parent=0 // pred_region
    _
  $region5: #{generator_forward.32} parent=0 // pred_fallthru
    _
  // Predicated region
  $region6: #{generator_forward.32} parent=0 // pred_check
    _
  $region7: #{generator_forward.32} parent=0 // pred_check_branch
    %11 = sbr.rel (0) target = $region9
  $region8: #{generator_forward.32} parent=0 // pred_region
    _
  $region9: #{generator_forward.32} parent=0 // pred_fallthru
    _
  // Predicated region
  $region10: #{generator_forward.32} parent=0 // pred_check
    _
  $region11: #{generator_forward.32} parent=0 // pred_check_branch
    %13 = sbr.rel (0) target = $region13
  $region12: #{generator_forward.32} parent=0 // pred_region
    _
  $region13: #{generator_forward.32} parent=0 // pred_fallthru
    _
  %v14 = vld [vmem:[%s0] sm:$0xff]
  %v15 = vld [vmem:[%s0 + $0x8] sm:$0xff]
  %v16 = vld [vmem:[%s0 + $0x10] sm:$0xff]
  %v17 = vld [vmem:[%s0 + $0x18] sm:$0xff]
  %v18 = vld [vmem:[%s0 + $0x20] sm:$0xff]
  %v19 = vld [vmem:[%s0 + $0x28] sm:$0xff]
  %v20 = vld [vmem:[%s0 + $0x30] sm:$0xff]
  %v21 = vld [vmem:[%s0 + $0x38] sm:$0xff]
  %v22 = vld [vmem:[%s1] sm:$0x1]
  %v24 = vperm.slane %v22, 0
  %v26 = vmul.f32 %v14, %v24
  %v27 = vmul.f32 %v15, %v24
  %v28 = vmul.f32 %v16, %v24
  %v29 = vmul.f32 %v17, %v24
  %v30 = vmul.f32 %v18, %v24
  %v31 = vmul.f32 %v19, %v24
  %v32 = vmul.f32 %v20, %v24
  %v33 = vmul.f32 %v21, %v24
  %v34 = vld [vmem:[%s2] sm:$0x1]
  %v36 = vperm.slane %v34, 0
  %v38 = vadd.f32 %v26, %v36
  %v39 = vadd.f32 %v27, %v36
  %v40 = vadd.f32 %v28, %v36
  %v41 = vadd.f32 %v29, %v36
  %v42 = vadd.f32 %v30, %v36
  %v43 = vadd.f32 %v31, %v36
  %v44 = vadd.f32 %v32, %v36
  %v45 = vadd.f32 %v33, %v36
  %v46 = vmax.f32 %v38, 0.0
  %v47 = vmax.f32 %v39, 0.0
  %v48 = vmax.f32 %v40, 0.0
  %v49 = vmax.f32 %v41, 0.0
  %v50 = vmax.f32 %v42, 0.0
  %v51 = vmax.f32 %v43, 0.0
  %v52 = vmax.f32 %v44, 0.0
  %v53 = vmax.f32 %v45, 0.0
  %54 = vst [vmem:[%s3] sm:$0xff] %v46
  %55 = vst [vmem:[%s3 + $0x8] sm:$0xff] %v47
  %56 = vst [vmem:[%s3 + $0x10] sm:$0xff] %v48
  %57 = vst [vmem:[%s3 + $0x18] sm:$0xff] %v49
  %58 = vst [vmem:[%s3 + $0x20] sm:$0xff] %v50
  %59 = vst [vmem:[%s3 + $0x28] sm:$0xff] %v51
  %60 = vst [vmem:[%s3 + $0x30] sm:$0xff] %v52
  %61 = vst [vmem:[%s3 + $0x38] sm:$0xff] %v53
  // Predicated region
  $region14: #{generator_forward.32} parent=0 // pred_check
    _
  $region15: #{generator_forward.32} parent=0 // pred_check_branch
    %63 = sbr.rel (0) target = $region17
  $region16: #{generator_forward.32} parent=0 // pred_region
    _
  $region17: #{generator_forward.32} parent=0 // pred_fallthru
    _
  // Predicated region
  $region18: #{generator_forward.32} parent=0 // pred_check
    _
  $region19: #{generator_forward.32} parent=0 // pred_check_branch
    %65 = sbr.rel (0) target = $region21
  $region20: #{generator_forward.32} parent=0 // pred_region
    _
  $region21: #{generator_forward.32} parent=0 // pred_fallthru
    _

// kernel: generator_forward.31
$region0: #{generator_forward.31}
  #allocation0 [shape = 'u32[]', space=smem, size = 0x4, offset = 0x4, fixed_abs, tag = 'smem constant byte address 0x4 - core index']
  #allocation1 [shape = 'u32[72,128]{1,0:T(1,128)}', space=vmem, size = 0x9000, scoped, tag = 'internal scratch']
  %s0 = inlined_call_operand.vmem [shape: bf16[64,64], index: 0, kind: input, shape index: {}]
  %s1 = inlined_call_operand.vmem [shape: bf16[64,128], index: 1, kind: input, shape index: {}]
  %s2 = inlined_call_operand.vmem [shape: f32[1,128], index: 2, kind: input, shape index: {}]
  %s3 = inlined_call_operand.vmem [shape: f32[64,128], index: 3, kind: output, shape index: {0}]
  %s4 = inlined_call_operand.vmem [shape: f32[8,128], index: 4, kind: output, shape index: {1}]
  %s5 = inlined_call_operand.vmem [shape: f32[8,128], index: 5, kind: output, shape index: {2}]
  %6 = xla_tuple %s3, %s4, %s5
  %s7 = sld [smem:[#allocation0]]
  $region38: #{generator_forward.31} parent=0
    _
  %s9 = ssub.s32 1, %s7
  %s10 = scalar_select 0, %s9, %s7
  // Predicated region
  $region2: #{generator_forward.31} parent=0 // pred_check
    _
  $region3: #{generator_forward.31} parent=0 // pred_check_branch
    %12 = sbr.rel (0) target = $region5
  $region4: #{generator_forward.31} parent=0 // pred_region
    _
  $region5: #{generator_forward.31} parent=0 // pred_fallthru
    _
  // Predicated region
  $region6: #{generator_forward.31} parent=0 // pred_check
    _
  $region7: #{generator_forward.31} parent=0 // pred_check_branch
    %14 = sbr.rel (0) target = $region9
  $region8: #{generator_forward.31} parent=0 // pred_region
    _
  $region9: #{generator_forward.31} parent=0 // pred_fallthru
    _
  // Predicated region
  $region10: #{generator_forward.31} parent=0 // pred_check
    _
  $region11: #{generator_forward.31} parent=0 // pred_check_branch
    %16 = sbr.rel (0) target = $region13
  $region12: #{generator_forward.31} parent=0 // pred_region
    _
  $region13: #{generator_forward.31} parent=0 // pred_fallthru
    _
  %v18 = vld [vmem:[%s0] sm:$0xf]
  %v19 = vld [vmem:[%s0 + $0x4] sm:$0xf]
  %v20 = vld [vmem:[%s0 + $0x8] sm:$0xf]
  %v21 = vld [vmem:[%s0 + $0xc] sm:$0xf]
  %v22 = vld [vmem:[%s0 + $0x10] sm:$0xf]
  %v23 = vld [vmem:[%s0 + $0x14] sm:$0xf]
  %v24 = vld [vmem:[%s0 + $0x18] sm:$0xf]
  %v25 = vld [vmem:[%s0 + $0x1c] sm:$0xf]
  %v26 = vld [vmem:[%s1] sm:$0xf]
  %v27 = vld [vmem:[%s1 + $0x4] sm:$0xf]
  %v28 = vld [vmem:[%s1 + $0x8] sm:$0xf]
  %v29 = vld [vmem:[%s1 + $0xc] sm:$0xf]
  %v30 = vld [vmem:[%s1 + $0x10] sm:$0xf]
  %v31 = vld [vmem:[%s1 + $0x14] sm:$0xf]
  %v32 = vld [vmem:[%s1 + $0x18] sm:$0xf]
  %v33 = vld [vmem:[%s1 + $0x1c] sm:$0xf]
  %v34 = vld [vmem:[%s2] sm:$0x1]
  %v36 = vperm.slane %v34, 0
  %v46 = vunpack.c.l.b16 %v18
  %v47 = vunpack.c.l.b16 %v19
  %v48 = vunpack.c.l.b16 %v20
  %v49 = vunpack.c.l.b16 %v21
  %v50 = vunpack.c.l.b16 %v22
  %v51 = vunpack.c.l.b16 %v23
  %v52 = vunpack.c.l.b16 %v24
  %v53 = vunpack.c.l.b16 %v25
  %v54 = vpack.c.b16 %v47, %v46
  %v55 = vpack.c.b16 %v49, %v48
  %v56 = vpack.c.b16 %v51, %v50
  %v57 = vpack.c.b16 %v53, %v52
  %v66 = vunpack.c.l.b16 %v26
  %v67 = vunpack.c.l.b16 %v27
  %v68 = vunpack.c.l.b16 %v28
  %v69 = vunpack.c.l.b16 %v29
  %v70 = vunpack.c.l.b16 %v30
  %v71 = vunpack.c.l.b16 %v31
  %v72 = vunpack.c.l.b16 %v32
  %v73 = vunpack.c.l.b16 %v33
  %v74 = vpack.c.b16 %v67, %v66
  %v75 = vpack.c.b16 %v69, %v68
  %v76 = vpack.c.b16 %v71, %v70
  %v77 = vpack.c.b16 %v73, %v72
  %vm82 = vcmask 523264
  %v84 = vsel %vm82, %v54, 0
  %v87 = vsel %vm82, %v55, 0
  %v90 = vsel %vm82, %v56, 0
  %v93 = vsel %vm82, %v57, 0
  %95 = vmatpush.bf16.msra.mxu0 0
  %96 = vmatpush.bf16.msra.mxu0 0
  %97 = vmatpush.bf16.msra.mxu0 0
  %98 = vmatpush.bf16.msra.mxu0 0
  %99 = vmatpush.bf16.msra.mxu0 %v77
  %100 = vmatpush.bf16.msra.mxu0 %v76
  %101 = vmatpush.bf16.msra.mxu0 %v75
  %102 = vmatpush.bf16.msra.mxu0 %v74
  %103 = vmatmul.bf16.gmra.mxu0 %v84
  %v104 = vpop.f32.mrf.mxu0
  %v105 = vadd.f32 %v36, %v104
  %v106 = vpop.f32.mrf.mxu0
  %v107 = vadd.f32 %v36, %v106
  %108 = vmatmul.bf16.gmra.mxu0 %v87
  %v109 = vpop.f32.mrf.mxu0
  %v110 = vadd.f32 %v36, %v109
  %v111 = vpop.f32.mrf.mxu0
  %v112 = vadd.f32 %v36, %v111
  %113 = vmatmul.bf16.gmra.mxu0 %v90
  %v114 = vpop.f32.mrf.mxu0
  %v115 = vadd.f32 %v36, %v114
  %v116 = vpop.f32.mrf.mxu0
  %v117 = vadd.f32 %v36, %v116
  %118 = vmatmul.bf16.gmra.mxu0 %v93
  %v119 = vpop.f32.mrf.mxu0
  %v120 = vadd.f32 %v36, %v119
  %v121 = vpop.f32.mrf.mxu0
  %v122 = vadd.f32 %v36, %v121
  %123 = vdwg.mxu0
  %124 = vst [vmem:[%s3] sm:$0xff] %v105
  %125 = vst [vmem:[%s3 + $0x8] sm:$0xff] %v107
  %126 = vst [vmem:[%s3 + $0x10] sm:$0xff] %v110
  %127 = vst [vmem:[%s3 + $0x18] sm:$0xff] %v112
  %128 = vst [vmem:[%s3 + $0x20] sm:$0xff] %v115
  %129 = vst [vmem:[%s3 + $0x28] sm:$0xff] %v117
  %130 = vst [vmem:[%s3 + $0x30] sm:$0xff] %v120
  %131 = vst [vmem:[%s3 + $0x38] sm:$0xff] %v122
  %v132 = vadd.f32 %v105, %v107
  %v133 = vadd.f32 %v132, %v110
  %v134 = vadd.f32 %v133, %v112
  %v135 = vadd.f32 %v134, %v115
  %v136 = vadd.f32 %v135, %v117
  %v137 = vadd.f32 %v136, %v120
  %v138 = vadd.f32 %v137, %v122
  %v139 = vrot.slane %v138, 4
  %v140 = vadd.f32 %v138, %v139
  %v141 = vrot.slane %v140, 2
  %v142 = vadd.f32 %v140, %v141
  %v143 = vrot.slane %v142, 1
  %v144 = vadd.f32 %v142, %v143
  %v145 = vmul.f32 %v105, %v105
  %v146 = vmul.f32 %v107, %v107
  %v147 = vmul.f32 %v110, %v110
  %v148 = vmul.f32 %v112, %v112
  %v149 = vmul.f32 %v115, %v115
  %v150 = vmul.f32 %v117, %v117
  %v151 = vmul.f32 %v120, %v120
  %v152 = vmul.f32 %v122, %v122
  %v153 = vadd.f32 %v145, %v146
  %v154 = vadd.f32 %v153, %v147
  %v155 = vadd.f32 %v154, %v148
  %v156 = vadd.f32 %v155, %v149
  %v157 = vadd.f32 %v156, %v150
  %v158 = vadd.f32 %v157, %v151
  %v159 = vadd.f32 %v158, %v152
  %v160 = vrot.slane %v159, 4
  %v161 = vadd.f32 %v159, %v160
  %v162 = vrot.slane %v161, 2
  %v163 = vadd.f32 %v161, %v162
  %v164 = vrot.slane %v163, 1
  %v165 = vadd.f32 %v163, %v164
  %166 = vst [vmem:[%s4] sm:$0xff] %v144
  %167 = vst [vmem:[%s5] sm:$0xff] %v165
  // Predicated region
  $region14: #{generator_forward.31} parent=0 // pred_check
    _
  $region15: #{generator_forward.31} parent=0 // pred_check_branch
    %169 = sbr.rel (0) target = $region17
  $region16: #{generator_forward.31} parent=0 // pred_region
    _
  $region17: #{generator_forward.31} parent=0 // pred_fallthru
    _
  // Predicated region
  $region18: #{generator_forward.31} parent=0 // pred_check
    _
  $region19: #{generator_forward.31} parent=0 // pred_check_branch
    %171 = sbr.rel (0) target = $region21
  $region20: #{generator_forward.31} parent=0 // pred_region
    _
  $region21: #{generator_forward.31} parent=0 // pred_fallthru
    _
  // Predicated region
  $region22: #{generator_forward.31} parent=0 // pred_check
    _
  $region23: #{generator_forward.31} parent=0 // pred_check_branch
    %173 = sbr.rel (0) target = $region25
  $region24: #{generator_forward.31} parent=0 // pred_region
    _
  $region25: #{generator_forward.31} parent=0 // pred_fallthru
    _
  // Predicated region
  $region26: #{generator_forward.31} parent=0 // pred_check
    _
  $region27: #{generator_forward.31} parent=0 // pred_check_branch
    %175 = sbr.rel (0) target = $region29
  $region28: #{generator_forward.31} parent=0 // pred_region
    _
  $region29: #{generator_forward.31} parent=0 // pred_fallthru
    _
  // Predicated region
  $region30: #{generator_forward.31} parent=0 // pred_check
    _
  $region31: #{generator_forward.31} parent=0 // pred_check_branch
    %177 = sbr.rel (0) target = $region33
  $region32: #{generator_forward.31} parent=0 // pred_region
    _
  $region33: #{generator_forward.31} parent=0 // pred_fallthru
    _
  // Predicated region
  $region34: #{generator_forward.31} parent=0 // pred_check
    _
  $region35: #{generator_forward.31} parent=0 // pred_check_branch
    %179 = sbr.rel (0) target = $region37
  $region36: #{generator_forward.31} parent=0 // pred_region
    _
  $region37: #{generator_forward.31} parent=0 // pred_fallthru
    _

// kernel: tile.93
$region0: #{tile.93}
  #allocation0 [shape = 's32[1]{0}', space=sflag, size = 0x4, scoped, tag = 'scoped memory for tile.93']
  %s0 = inlined_call_operand.vmem [shape: f32[8], index: 0, kind: input, shape index: {}]
  %s1 = inlined_call_operand.vmem [shape: f32[4,8], index: 1, kind: output, shape index: {}]
  // Predicated region
  $region2: #{tile.93} parent=0 // pred_check
    _
  $region3: #{tile.93} parent=0 // pred_check_branch
    %3 = sbr.rel (0) target = $region5
  $region4: #{tile.93} parent=0 // pred_region
    _
  $region5: #{tile.93} parent=0 // pred_fallthru
    _
  %v4 = vld [vmem:[%s0] ss:$0 sm:$0xff]
  %5 = vst [vmem:[%s1] sm:$0xf] %v4

// kernel: tile.94
$region0: #{tile.94}
  %s0 = inlined_call_operand.vmem [shape: f32[4,8], index: 0, kind: input, shape index: {}]
  %s1 = inlined_call_operand.vmem [shape: f32[32], index: 1, kind: output, shape index: {}]
  $region1: #{tile.94} parent=0
    #allocation0 [shape = 'u8[4096]{0}', space=vmem, size = 0x1000, scoped, tag = 'scoped mem for output reshape']
    #allocation1 [shape = 'u8[4096]{0}', space=vmem, size = 0x1000, scoped, tag = 'scoped mem for input reshape']
    %s3 = ssub.s32 16, 1
    %v4 = vld [vmem:[%s0] sm:%s3]
    %5 = vst [vmem:[#allocation1] sm:%s3] %v4
    %v6 = vld [vmem:[#allocation1] sm:$0x1]
    %vm7 = vcmask 64512
    %8 = vst.msk [vmem:[#allocation0] sm:$0x1] %vm7, %v6
    %s9 = scalar_lea.vmem [#allocation1], 3
    %v10 = vld [vmem:[%s9] sm:$0x1]
    %11 = vrot.lane.b32.xlu0 %v10, 24
    %v12 = vpop.permute.xlu0 %11
    %vm13 = vcmask 261312
    %14 = vst.msk [vmem:[#allocation0] sm:$0x1] %vm13, %v12
    %s15 = scalar_lea.vmem [#allocation1], 2
    %v16 = vld [vmem:[%s15] sm:$0x1]
    %17 = vrot.lane.b32.xlu0 %v16, 16
    %v18 = vpop.permute.xlu0 %17
    %vm19 = vcmask 195712
    %20 = vst.msk [vmem:[#allocation0] sm:$0x1] %vm19, %v18
    %s21 = scalar_lea.vmem [#allocation1], 1
    %v22 = vld [vmem:[%s21] sm:$0x1]
    %23 = vrot.lane.b32.xlu0 %v22, 8
    %v24 = vpop.permute.xlu0 %23
    %vm25 = vcmask 130112
    %26 = vst.msk [vmem:[#allocation0] sm:$0x1] %vm25, %v24
    %s28 = ssub.s32 2, 1
    %v29 = vld [vmem:[#allocation0] sm:%s28]
    %s31 = ssub.s32 2, 1
    %32 = vst [vmem:[%s1] sm:%s31] %v29

// kernel: generator_forward.33
$region0: #{generator_forward.33}
  #allocation0 [shape = 'u32[]', space=smem, size = 0x4, offset = 0x4, fixed_abs, tag = 'smem constant byte address 0x4 - core index']
  #allocation1 [shape = 'u32[72,128]{1,0:T(1,128)}', space=vmem, size = 0x9000, scoped, tag = 'internal scratch']
  %s0 = inlined_call_operand.vmem [shape: bf16[256,48], index: 0, kind: input, shape index: {}]
  %s1 = inlined_call_operand.vmem [shape: bf16[48,128], index: 1, kind: input, shape index: {}]
  %s2 = inlined_call_operand.vmem [shape: f32[1,128], index: 2, kind: input, shape index: {}]
  %s3 = inlined_call_operand.vmem [shape: f32[256,128], index: 3, kind: output, shape index: {0}]
  %s4 = inlined_call_operand.vmem [shape: f32[8,128], index: 4, kind: output, shape index: {1}]
  %s5 = inlined_call_operand.vmem [shape: f32[8,128], index: 5, kind: output, shape index: {2}]
  %6 = xla_tuple %s3, %s4, %s5
  %s7 = sld [smem:[#allocation0]]
  $region38: #{generator_forward.33} parent=0
    _
  %s9 = ssub.s32 1, %s7
  %s10 = scalar_select 0, %s9, %s7
  // Predicated region
  $region2: #{generator_forward.33} parent=0 // pred_check
    _
  $region3: #{generator_forward.33} parent=0 // pred_check_branch
    %12 = sbr.rel (0) target = $region5
  $region4: #{generator_forward.33} parent=0 // pred_region
    _
  $region5: #{generator_forward.33} parent=0 // pred_fallthru
    _
  // Predicated region
  $region6: #{generator_forward.33} parent=0 // pred_check
    _
  $region7: #{generator_forward.33} parent=0 // pred_check_branch
    %14 = sbr.rel (0) target = $region9
  $region8: #{generator_forward.33} parent=0 // pred_region
    _
  $region9: #{generator_forward.33} parent=0 // pred_fallthru
    _
  // Predicated region
  $region10: #{generator_forward.33} parent=0 // pred_check
    _
  $region11: #{generator_forward.33} parent=0 // pred_check_branch
    %16 = sbr.rel (0) target = $region13
  $region12: #{generator_forward.33} parent=0 // pred_region
    _
  $region13: #{generator_forward.33} parent=0 // pred_fallthru
    _
  %v18 = vld [vmem:[%s0] sm:$0xf]
  %v19 = vld [vmem:[%s0 + $0x4] sm:$0xf]
  %v20 = vld [vmem:[%s0 + $0x8] sm:$0xf]
  %v21 = vld [vmem:[%s0 + $0xc] sm:$0xf]
  %v22 = vld [vmem:[%s0 + $0x10] sm:$0xf]
  %v23 = vld [vmem:[%s0 + $0x14] sm:$0xf]
  %v24 = vld [vmem:[%s0 + $0x18] sm:$0xf]
  %v25 = vld [vmem:[%s0 + $0x1c] sm:$0xf]
  %v26 = vld [vmem:[%s0 + $0x20] sm:$0xf]
  %v27 = vld [vmem:[%s0 + $0x24] sm:$0xf]
  %v28 = vld [vmem:[%s0 + $0x28] sm:$0xf]
  %v29 = vld [vmem:[%s0 + $0x2c] sm:$0xf]
  %v30 = vld [vmem:[%s0 + $0x30] sm:$0xf]
  %v31 = vld [vmem:[%s0 + $0x34] sm:$0xf]
  %v32 = vld [vmem:[%s0 + $0x38] sm:$0xf]
  %v33 = vld [vmem:[%s0 + $0x3c] sm:$0xf]
  %v34 = vld [vmem:[%s0 + $0x40] sm:$0xf]
  %v35 = vld [vmem:[%s0 + $0x44] sm:$0xf]
  %v36 = vld [vmem:[%s0 + $0x48] sm:$0xf]
  %v37 = vld [vmem:[%s0 + $0x4c] sm:$0xf]
  %v38 = vld [vmem:[%s0 + $0x50] sm:$0xf]
  %v39 = vld [vmem:[%s0 + $0x54] sm:$0xf]
  %v40 = vld [vmem:[%s0 + $0x58] sm:$0xf]
  %v41 = vld [vmem:[%s0 + $0x5c] sm:$0xf]
  %v42 = vld [vmem:[%s0 + $0x60] sm:$0xf]
  %v43 = vld [vmem:[%s0 + $0x64] sm:$0xf]
  %v44 = vld [vmem:[%s0 + $0x68] sm:$0xf]
  %v45 = vld [vmem:[%s0 + $0x6c] sm:$0xf]
  %v46 = vld [vmem:[%s0 + $0x70] sm:$0xf]
  %v47 = vld [vmem:[%s0 + $0x74] sm:$0xf]
  %v48 = vld [vmem:[%s0 + $0x78] sm:$0xf]
  %v49 = vld [vmem:[%s0 + $0x7c] sm:$0xf]
  %v50 = vld [vmem:[%s1] sm:$0xf]
  %v51 = vld [vmem:[%s1 + $0x4] sm:$0xf]
  %v52 = vld [vmem:[%s1 + $0x8] sm:$0xf]
  %v53 = vld [vmem:[%s1 + $0xc] sm:$0xf]
  %v54 = vld [vmem:[%s1 + $0x10] sm:$0xf]
  %v55 = vld [vmem:[%s1 + $0x14] sm:$0xf]
  %v56 = vld [vmem:[%s2] sm:$0x1]
  %v58 = vperm.slane %v56, 0
  %v92 = vunpack.c.l.b16 %v18
  %v93 = vunpack.c.l.b16 %v19
  %v94 = vunpack.c.l.b16 %v20
  %v95 = vunpack.c.l.b16 %v21
  %v96 = vunpack.c.l.b16 %v22
  %v97 = vunpack.c.l.b16 %v23
  %v98 = vunpack.c.l.b16 %v24
  %v99 = vunpack.c.l.b16 %v25
  %v100 = vunpack.c.l.b16 %v26
  %v101 = vunpack.c.l.b16 %v27
  %v102 = vunpack.c.l.b16 %v28
  %v103 = vunpack.c.l.b16 %v29
  %v104 = vunpack.c.l.b16 %v30
  %v105 = vunpack.c.l.b16 %v31
  %v106 = vunpack.c.l.b16 %v32
  %v107 = vunpack.c.l.b16 %v33
  %v108 = vunpack.c.l.b16 %v34
  %v109 = vunpack.c.l.b16 %v35
  %v110 = vunpack.c.l.b16 %v36
  %v111 = vunpack.c.l.b16 %v37
  %v112 = vunpack.c.l.b16 %v38
  %v113 = vunpack.c.l.b16 %v39
  %v114 = vunpack.c.l.b16 %v40
  %v115 = vunpack.c.l.b16 %v41
  %v116 = vunpack.c.l.b16 %v42
  %v117 = vunpack.c.l.b16 %v43
  %v118 = vunpack.c.l.b16 %v44
  %v119 = vunpack.c.l.b16 %v45
  %v120 = vunpack.c.l.b16 %v46
  %v121 = vunpack.c.l.b16 %v47
  %v122 = vunpack.c.l.b16 %v48
  %v123 = vunpack.c.l.b16 %v49
  %v124 = vpack.c.b16 %v93, %v92
  %v125 = vpack.c.b16 %v95, %v94
  %v126 = vpack.c.b16 %v97, %v96
  %v127 = vpack.c.b16 %v99, %v98
  %v128 = vpack.c.b16 %v101, %v100
  %v129 = vpack.c.b16 %v103, %v102
  %v130 = vpack.c.b16 %v105, %v104
  %v131 = vpack.c.b16 %v107, %v106
  %v132 = vpack.c.b16 %v109, %v108
  %v133 = vpack.c.b16 %v111, %v110
  %v134 = vpack.c.b16 %v113, %v112
  %v135 = vpack.c.b16 %v115, %v114
  %v136 = vpack.c.b16 %v117, %v116
  %v137 = vpack.c.b16 %v119, %v118
  %v138 = vpack.c.b16 %v121, %v120
  %v139 = vpack.c.b16 %v123, %v122
  %v146 = vunpack.c.l.b16 %v50
  %v147 = vunpack.c.l.b16 %v51
  %v148 = vunpack.c.l.b16 %v52
  %v149 = vunpack.c.l.b16 %v53
  %v150 = vunpack.c.l.b16 %v54
  %v151 = vunpack.c.l.b16 %v55
  %v152 = vpack.c.b16 %v147, %v146
  %v153 = vpack.c.b16 %v149, %v148
  %v154 = vpack.c.b16 %v151, %v150
  %vm158 = vcmask 392192
  %v160 = vsel %vm158, %v124, 0
  %v163 = vsel %vm158, %v125, 0
  %v166 = vsel %vm158, %v126, 0
  %v169 = vsel %vm158, %v127, 0
  %v172 = vsel %vm158, %v128, 0
  %v175 = vsel %vm158, %v129, 0
  %v178 = vsel %vm158, %v130, 0
  %v181 = vsel %vm158, %v131, 0
  %v184 = vsel %vm158, %v132, 0
  %v187 = vsel %vm158, %v133, 0
  %v190 = vsel %vm158, %v134, 0
  %v193 = vsel %vm158, %v135, 0
  %v196 = vsel %vm158, %v136, 0
  %v199 = vsel %vm158, %v137, 0
  %v202 = vsel %vm158, %v138, 0
  %v205 = vsel %vm158, %v139, 0
  %207 = vmatpush.bf16.msra.mxu0 0
  %208 = vmatpush.bf16.msra.mxu0 0
  %209 = vmatpush.bf16.msra.mxu0 0
  %210 = vmatpush.bf16.msra.mxu0 0
  %211 = vmatpush.bf16.msra.mxu0 0
  %212 = vmatpush.bf16.msra.mxu0 %v154
  %213 = vmatpush.bf16.msra.mxu0 %v153
  %214 = vmatpush.bf16.msra.mxu0 %v152
  %215 = vmatmul.bf16.gmra.mxu0 %v160
  %v216 = vpop.f32.mrf.mxu0
  %v217 = vadd.f32 %v58, %v216
  %v218 = vpop.f32.mrf.mxu0
  %v219 = vadd.f32 %v58, %v218
  %220 = vmatmul.bf16.gmra.mxu0 %v163
  %v221 = vpop.f32.mrf.mxu0
  %v222 = vadd.f32 %v58, %v221
  %v223 = vpop.f32.mrf.mxu0
  %v224 = vadd.f32 %v58, %v223
  %225 = vmatmul.bf16.gmra.mxu0 %v166
  %v226 = vpop.f32.mrf.mxu0
  %v227 = vadd.f32 %v58, %v226
  %v228 = vpop.f32.mrf.mxu0
  %v229 = vadd.f32 %v58, %v228
  %230 = vmatmul.bf16.gmra.mxu0 %v169
  %v231 = vpop.f32.mrf.mxu0
  %v232 = vadd.f32 %v58, %v231
  %v233 = vpop.f32.mrf.mxu0
  %v234 = vadd.f32 %v58, %v233
  %235 = vmatmul.bf16.gmra.mxu0 %v172
  %v236 = vpop.f32.mrf.mxu0
  %v237 = vadd.f32 %v58, %v236
  %v238 = vpop.f32.mrf.mxu0
  %v239 = vadd.f32 %v58, %v238
  %240 = vmatmul.bf16.gmra.mxu0 %v175
  %v241 = vpop.f32.mrf.mxu0
  %v242 = vadd.f32 %v58, %v241
  %v243 = vpop.f32.mrf.mxu0
  %v244 = vadd.f32 %v58, %v243
  %245 = vmatmul.bf16.gmra.mxu0 %v178
  %v246 = vpop.f32.mrf.mxu0
  %v247 = vadd.f32 %v58, %v246
  %v248 = vpop.f32.mrf.mxu0
  %v249 = vadd.f32 %v58, %v248
  %250 = vmatmul.bf16.gmra.mxu0 %v181
  %v251 = vpop.f32.mrf.mxu0
  %v252 = vadd.f32 %v58, %v251
  %v253 = vpop.f32.mrf.mxu0
  %v254 = vadd.f32 %v58, %v253
  %255 = vmatmul.bf16.gmra.mxu0 %v184
  %v256 = vpop.f32.mrf.mxu0
  %v257 = vadd.f32 %v58, %v256
  %v258 = vpop.f32.mrf.mxu0
  %v259 = vadd.f32 %v58, %v258
  %260 = vmatmul.bf16.gmra.mxu0 %v187
  %v261 = vpop.f32.mrf.mxu0
  %v262 = vadd.f32 %v58, %v261
  %v263 = vpop.f32.mrf.mxu0
  %v264 = vadd.f32 %v58, %v263
  %265 = vmatmul.bf16.gmra.mxu0 %v190
  %v266 = vpop.f32.mrf.mxu0
  %v267 = vadd.f32 %v58, %v266
  %v268 = vpop.f32.mrf.mxu0
  %v269 = vadd.f32 %v58, %v268
  %270 = vmatmul.bf16.gmra.mxu0 %v193
  %v271 = vpop.f32.mrf.mxu0
  %v272 = vadd.f32 %v58, %v271
  %v273 = vpop.f32.mrf.mxu0
  %v274 = vadd.f32 %v58, %v273
  %275 = vmatmul.bf16.gmra.mxu0 %v196
  %v276 = vpop.f32.mrf.mxu0
  %v277 = vadd.f32 %v58, %v276
  %v278 = vpop.f32.mrf.mxu0
  %v279 = vadd.f32 %v58, %v278
  %280 = vmatmul.bf16.gmra.mxu0 %v199
  %v281 = vpop.f32.mrf.mxu0
  %v282 = vadd.f32 %v58, %v281
  %v283 = vpop.f32.mrf.mxu0
  %v284 = vadd.f32 %v58, %v283
  %285 = vmatmul.bf16.gmra.mxu0 %v202
  %v286 = vpop.f32.mrf.mxu0
  %v287 = vadd.f32 %v58, %v286
  %v288 = vpop.f32.mrf.mxu0
  %v289 = vadd.f32 %v58, %v288
  %290 = vmatmul.bf16.gmra.mxu0 %v205
  %v291 = vpop.f32.mrf.mxu0
  %v292 = vadd.f32 %v58, %v291
  %v293 = vpop.f32.mrf.mxu0
  %v294 = vadd.f32 %v58, %v293
  %295 = vdwg.mxu0
  %296 = vst [vmem:[%s3] sm:$0xff] %v217
  %297 = vst [vmem:[%s3 + $0x8] sm:$0xff] %v219
  %298 = vst [vmem:[%s3 + $0x10] sm:$0xff] %v222
  %299 = vst [vmem:[%s3 + $0x18] sm:$0xff] %v224
  %300 = vst [vmem:[%s3 + $0x20] sm:$0xff] %v227
  %301 = vst [vmem:[%s3 + $0x28] sm:$0xff] %v229
  %302 = vst [vmem:[%s3 + $0x30] sm:$0xff] %v232
  %303 = vst [vmem:[%s3 + $0x38] sm:$0xff] %v234
  %304 = vst [vmem:[%s3 + $0x40] sm:$0xff] %v237
  %305 = vst [vmem:[%s3 + $0x48] sm:$0xff] %v239
  %306 = vst [vmem:[%s3 + $0x50] sm:$0xff] %v242
  %307 = vst [vmem:[%s3 + $0x58] sm:$0xff] %v244
  %308 = vst [vmem:[%s3 + $0x60] sm:$0xff] %v247
  %309 = vst [vmem:[%s3 + $0x68] sm:$0xff] %v249
  %310 = vst [vmem:[%s3 + $0x70] sm:$0xff] %v252
  %311 = vst [vmem:[%s3 + $0x78] sm:$0xff] %v254
  %312 = vst [vmem:[%s3 + $0x80] sm:$0xff] %v257
  %313 = vst [vmem:[%s3 + $0x88] sm:$0xff] %v259
  %314 = vst [vmem:[%s3 + $0x90] sm:$0xff] %v262
  %315 = vst [vmem:[%s3 + $0x98] sm:$0xff] %v264
  %316 = vst [vmem:[%s3 + $0xa0] sm:$0xff] %v267
  %317 = vst [vmem:[%s3 + $0xa8] sm:$0xff] %v269
  %318 = vst [vmem:[%s3 + $0xb0] sm:$0xff] %v272
  %319 = vst [vmem:[%s3 + $0xb8] sm:$0xff] %v274
  %320 = vst [vmem:[%s3 + $0xc0] sm:$0xff] %v277
  %321 = vst [vmem:[%s3 + $0xc8] sm:$0xff] %v279
  %322 = vst [vmem:[%s3 + $0xd0] sm:$0xff] %v282
  %323 = vst [vmem:[%s3 + $0xd8] sm:$0xff] %v284
  %324 = vst [vmem:[%s3 + $0xe0] sm:$0xff] %v287
  %325 = vst [vmem:[%s3 + $0xe8] sm:$0xff] %v289
  %326 = vst [vmem:[%s3 + $0xf0] sm:$0xff] %v292
  %327 = vst [vmem:[%s3 + $0xf8] sm:$0xff] %v294
  %v328 = vadd.f32 %v217, %v219
  %v329 = vadd.f32 %v328, %v222
  %v330 = vadd.f32 %v329, %v224
  %v331 = vadd.f32 %v330, %v227
  %v332 = vadd.f32 %v331, %v229
  %v333 = vadd.f32 %v332, %v232
  %v334 = vadd.f32 %v333, %v234
  %v335 = vadd.f32 %v334, %v237
  %v336 = vadd.f32 %v335, %v239
  %v337 = vadd.f32 %v336, %v242
  %v338 = vadd.f32 %v337, %v244
  %v339 = vadd.f32 %v338, %v247
  %v340 = vadd.f32 %v339, %v249
  %v341 = vadd.f32 %v340, %v252
  %v342 = vadd.f32 %v341, %v254
  %v343 = vadd.f32 %v342, %v257
  %v344 = vadd.f32 %v343, %v259
  %v345 = vadd.f32 %v344, %v262
  %v346 = vadd.f32 %v345, %v264
  %v347 = vadd.f32 %v346, %v267
  %v348 = vadd.f32 %v347, %v269
  %v349 = vadd.f32 %v348, %v272
  %v350 = vadd.f32 %v349, %v274
  %v351 = vadd.f32 %v350, %v277
  %v352 = vadd.f32 %v351, %v279
  %v353 = vadd.f32 %v352, %v282
  %v354 = vadd.f32 %v353, %v284
  %v355 = vadd.f32 %v354, %v287
  %v356 = vadd.f32 %v355, %v289
  %v357 = vadd.f32 %v356, %v292
  %v358 = vadd.f32 %v357, %v294
  %v359 = vrot.slane %v358, 4
  %v360 = vadd.f32 %v358, %v359
  %v361 = vrot.slane %v360, 2
  %v362 = vadd.f32 %v360, %v361
  %v363 = vrot.slane %v362, 1
  %v364 = vadd.f32 %v362, %v363
  %v365 = vmul.f32 %v217, %v217
  %v366 = vmul.f32 %v219, %v219
  %v367 = vmul.f32 %v222, %v222
  %v368 = vmul.f32 %v224, %v224
  %v369 = vmul.f32 %v227, %v227
  %v370 = vmul.f32 %v229, %v229
  %v371 = vmul.f32 %v232, %v232
  %v372 = vmul.f32 %v234, %v234
  %v373 = vmul.f32 %v237, %v237
  %v374 = vmul.f32 %v239, %v239
  %v375 = vmul.f32 %v242, %v242
  %v376 = vmul.f32 %v244, %v244
  %v377 = vmul.f32 %v247, %v247
  %v378 = vmul.f32 %v249, %v249
  %v379 = vmul.f32 %v252, %v252
  %v380 = vmul.f32 %v254, %v254
  %v381 = vmul.f32 %v257, %v257
  %v382 = vmul.f32 %v259, %v259
  %v383 = vmul.f32 %v262, %v262
  %v384 = vmul.f32 %v264, %v264
  %v385 = vmul.f32 %v267, %v267
  %v386 = vmul.f32 %v269, %v269
  %v387 = vmul.f32 %v272, %v272
  %v388 = vmul.f32 %v274, %v274
  %v389 = vmul.f32 %v277, %v277
  %v390 = vmul.f32 %v279, %v279
  %v391 = vmul.f32 %v282, %v282
  %v392 = vmul.f32 %v284, %v284
  %v393 = vmul.f32 %v287, %v287
  %v394 = vmul.f32 %v289, %v289
  %v395 = vmul.f32 %v292, %v292
  %v396 = vmul.f32 %v294, %v294
  %v397 = vadd.f32 %v365, %v366
  %v398 = vadd.f32 %v397, %v367
  %v399 = vadd.f32 %v398, %v368
  %v400 = vadd.f32 %v399, %v369
  %v401 = vadd.f32 %v400, %v370
  %v402 = vadd.f32 %v401, %v371
  %v403 = vadd.f32 %v402, %v372
  %v404 = vadd.f32 %v403, %v373
  %v405 = vadd.f32 %v404, %v374
  %v406 = vadd.f32 %v405, %v375
  %v407 = vadd.f32 %v406, %v376
  %v408 = vadd.f32 %v407, %v377
  %v409 = vadd.f32 %v408, %v378
  %v410 = vadd.f32 %v409, %v379
  %v411 = vadd.f32 %v410, %v380
  %v412 = vadd.f32 %v411, %v381
  %v413 = vadd.f32 %v412, %v382
  %v414 = vadd.f32 %v413, %v383
  %v415 = vadd.f32 %v414, %v384
  %v416 = vadd.f32 %v415, %v385
  %v417 = vadd.f32 %v416, %v386
  %v418 = vadd.f32 %v417, %v387
  %v419 = vadd.f32 %v418, %v388
  %v420 = vadd.f32 %v419, %v389
  %v421 = vadd.f32 %v420, %v390
  %v422 = vadd.f32 %v421, %v391
  %v423 = vadd.f32 %v422, %v392
  %v424 = vadd.f32 %v423, %v393
  %v425 = vadd.f32 %v424, %v394
  %v426 = vadd.f32 %v425, %v395
  %v427 = vadd.f32 %v426, %v396
  %v428 = vrot.slane %v427, 4
  %v429 = vadd.f32 %v427, %v428
  %v430 = vrot.slane %v429, 2
  %v431 = vadd.f32 %v429, %v430
  %v432 = vrot.slane %v431, 1
  %v433 = vadd.f32 %v431, %v432
  %434 = vst [vmem:[%s4] sm:$0xff] %v364
  %435 = vst [vmem:[%s5] sm:$0xff] %v433
  // Predicated region
  $region14: #{generator_forward.33} parent=0 // pred_check
    _
  $region15: #{generator_forward.33} parent=0 // pred_check_branch
    %437 = sbr.rel (0) target = $region17
  $region16: #{generator_forward.33} parent=0 // pred_region
    _
  $region17: #{generator_forward.33} parent=0 // pred_fallthru
    _
  // Predicated region
  $region18: #{generator_forward.33} parent=0 // pred_check
    _
  $region19: #{generator_forward.33} parent=0 // pred_check_branch
    %439 = sbr.rel (0) target = $region21
  $region20: #{generator_forward.33} parent=0 // pred_region
    _
  $region21: #{generator_forward.33} parent=0 // pred_fallthru
    _
  // Predicated region
  $region22: #{generator_forward.33} parent=0 // pred_check
    _
  $region23: #{generator_forward.33} parent=0 // pred_check_branch
    %441 = sbr.rel (0) target = $region25
  $region24: #{generator_forward.33} parent=0 // pred_region
    _
  $region25: #{generator_forward.33} parent=0 // pred_fallthru
    _
  // Predicated region
  $region26: #{generator_forward.33} parent=0 // pred_check
    _
  $region27: #{generator_forward.33} parent=0 // pred_check_branch
    %443 = sbr.rel (0) target = $region29
  $region28: #{generator_forward.33} parent=0 // pred_region
    _
  $region29: #{generator_forward.33} parent=0 // pred_fallthru
    _
  // Predicated region
  $region30: #{generator_forward.33} parent=0 // pred_check
    _
  $region31: #{generator_forward.33} parent=0 // pred_check_branch
    %445 = sbr.rel (0) target = $region33
  $region32: #{generator_forward.33} parent=0 // pred_region
    _
  $region33: #{generator_forward.33} parent=0 // pred_fallthru
    _
  // Predicated region
  $region34: #{generator_forward.33} parent=0 // pred_check
    _
  $region35: #{generator_forward.33} parent=0 // pred_check_branch
    %447 = sbr.rel (0) target = $region37
  $region36: #{generator_forward.33} parent=0 // pred_region
    _
  $region37: #{generator_forward.33} parent=0 // pred_fallthru
    _

// kernel: generator_forward.34
$region0: #{generator_forward.34}
  #allocation0 [shape = 'u32[]', space=smem, size = 0x4, offset = 0x4, fixed_abs, tag = 'smem constant byte address 0x4 - core index']
  #allocation1 [shape = 'u32[72,128]{1,0:T(1,128)}', space=vmem, size = 0x9000, scoped, tag = 'internal scratch']
  %s0 = inlined_call_operand.vmem [shape: f32[256,128], index: 0, kind: input, shape index: {}]
  %s1 = inlined_call_operand.vmem [shape: f32[1,128], index: 1, kind: input, shape index: {}]
  %s2 = inlined_call_operand.vmem [shape: f32[1,128], index: 2, kind: input, shape index: {}]
  %s3 = inlined_call_operand.vmem [shape: f32[256,128], index: 3, kind: output, shape index: {}]
  %s4 = sld [smem:[#allocation0]]
  $region22: #{generator_forward.34} parent=0
    _
  %s6 = ssub.s32 1, %s4
  %s7 = scalar_select 0, %s6, %s4
  // Predicated region
  $region2: #{generator_forward.34} parent=0 // pred_check
    _
  $region3: #{generator_forward.34} parent=0 // pred_check_branch
    %9 = sbr.rel (0) target = $region5
  $region4: #{generator_forward.34} parent=0 // pred_region
    _
  $region5: #{generator_forward.34} parent=0 // pred_fallthru
    _
  // Predicated region
  $region6: #{generator_forward.34} parent=0 // pred_check
    _
  $region7: #{generator_forward.34} parent=0 // pred_check_branch
    %11 = sbr.rel (0) target = $region9
  $region8: #{generator_forward.34} parent=0 // pred_region
    _
  $region9: #{generator_forward.34} parent=0 // pred_fallthru
    _
  // Predicated region
  $region10: #{generator_forward.34} parent=0 // pred_check
    _
  $region11: #{generator_forward.34} parent=0 // pred_check_branch
    %13 = sbr.rel (0) target = $region13
  $region12: #{generator_forward.34} parent=0 // pred_region
    _
  $region13: #{generator_forward.34} parent=0 // pred_fallthru
    _
  %v14 = vld [vmem:[%s0] sm:$0xff]
  %v15 = vld [vmem:[%s0 + $0x8] sm:$0xff]
  %v16 = vld [vmem:[%s0 + $0x10] sm:$0xff]
  %v17 = vld [vmem:[%s0 + $0x18] sm:$0xff]
  %v18 = vld [vmem:[%s0 + $0x20] sm:$0xff]
  %v19 = vld [vmem:[%s0 + $0x28] sm:$0xff]
  %v20 = vld [vmem:[%s0 + $0x30] sm:$0xff]
  %v21 = vld [vmem:[%s0 + $0x38] sm:$0xff]
  %v22 = vld [vmem:[%s0 + $0x40] sm:$0xff]
  %v23 = vld [vmem:[%s0 + $0x48] sm:$0xff]
  %v24 = vld [vmem:[%s0 + $0x50] sm:$0xff]
  %v25 = vld [vmem:[%s0 + $0x58] sm:$0xff]
  %v26 = vld [vmem:[%s0 + $0x60] sm:$0xff]
  %v27 = vld [vmem:[%s0 + $0x68] sm:$0xff]
  %v28 = vld [vmem:[%s0 + $0x70] sm:$0xff]
  %v29 = vld [vmem:[%s0 + $0x78] sm:$0xff]
  %v30 = vld [vmem:[%s0 + $0x80] sm:$0xff]
  %v31 = vld [vmem:[%s0 + $0x88] sm:$0xff]
  %v32 = vld [vmem:[%s0 + $0x90] sm:$0xff]
  %v33 = vld [vmem:[%s0 + $0x98] sm:$0xff]
  %v34 = vld [vmem:[%s0 + $0xa0] sm:$0xff]
  %v35 = vld [vmem:[%s0 + $0xa8] sm:$0xff]
  %v36 = vld [vmem:[%s0 + $0xb0] sm:$0xff]
  %v37 = vld [vmem:[%s0 + $0xb8] sm:$0xff]
  %v38 = vld [vmem:[%s0 + $0xc0] sm:$0xff]
  %v39 = vld [vmem:[%s0 + $0xc8] sm:$0xff]
  %v40 = vld [vmem:[%s0 + $0xd0] sm:$0xff]
  %v41 = vld [vmem:[%s0 + $0xd8] sm:$0xff]
  %v42 = vld [vmem:[%s0 + $0xe0] sm:$0xff]
  %v43 = vld [vmem:[%s0 + $0xe8] sm:$0xff]
  %v44 = vld [vmem:[%s0 + $0xf0] sm:$0xff]
  %v45 = vld [vmem:[%s0 + $0xf8] sm:$0xff]
  %v46 = vld [vmem:[%s1] sm:$0x1]
  %v48 = vperm.slane %v46, 0
  %v50 = vmul.f32 %v14, %v48
  %v51 = vmul.f32 %v15, %v48
  %v52 = vmul.f32 %v16, %v48
  %v53 = vmul.f32 %v17, %v48
  %v54 = vmul.f32 %v18, %v48
  %v55 = vmul.f32 %v19, %v48
  %v56 = vmul.f32 %v20, %v48
  %v57 = vmul.f32 %v21, %v48
  %v58 = vmul.f32 %v22, %v48
  %v59 = vmul.f32 %v23, %v48
  %v60 = vmul.f32 %v24, %v48
  %v61 = vmul.f32 %v25, %v48
  %v62 = vmul.f32 %v26, %v48
  %v63 = vmul.f32 %v27, %v48
  %v64 = vmul.f32 %v28, %v48
  %v65 = vmul.f32 %v29, %v48
  %v66 = vmul.f32 %v30, %v48
  %v67 = vmul.f32 %v31, %v48
  %v68 = vmul.f32 %v32, %v48
  %v69 = vmul.f32 %v33, %v48
  %v70 = vmul.f32 %v34, %v48
  %v71 = vmul.f32 %v35, %v48
  %v72 = vmul.f32 %v36, %v48
  %v73 = vmul.f32 %v37, %v48
  %v74 = vmul.f32 %v38, %v48
  %v75 = vmul.f32 %v39, %v48
  %v76 = vmul.f32 %v40, %v48
  %v77 = vmul.f32 %v41, %v48
  %v78 = vmul.f32 %v42, %v48
  %v79 = vmul.f32 %v43, %v48
  %v80 = vmul.f32 %v44, %v48
  %v81 = vmul.f32 %v45, %v48
  %v82 = vld [vmem:[%s2] sm:$0x1]
  %v84 = vperm.slane %v82, 0
  %v86 = vadd.f32 %v50, %v84
  %v87 = vadd.f32 %v51, %v84
  %v88 = vadd.f32 %v52, %v84
  %v89 = vadd.f32 %v53, %v84
  %v90 = vadd.f32 %v54, %v84
  %v91 = vadd.f32 %v55, %v84
  %v92 = vadd.f32 %v56, %v84
  %v93 = vadd.f32 %v57, %v84
  %v94 = vadd.f32 %v58, %v84
  %v95 = vadd.f32 %v59, %v84
  %v96 = vadd.f32 %v60, %v84
  %v97 = vadd.f32 %v61, %v84
  %v98 = vadd.f32 %v62, %v84
  %v99 = vadd.f32 %v63, %v84
  %v100 = vadd.f32 %v64, %v84
  %v101 = vadd.f32 %v65, %v84
  %v102 = vadd.f32 %v66, %v84
  %v103 = vadd.f32 %v67, %v84
  %v104 = vadd.f32 %v68, %v84
  %v105 = vadd.f32 %v69, %v84
  %v106 = vadd.f32 %v70, %v84
  %v107 = vadd.f32 %v71, %v84
  %v108 = vadd.f32 %v72, %v84
  %v109 = vadd.f32 %v73, %v84
  %v110 = vadd.f32 %v74, %v84
  %v111 = vadd.f32 %v75, %v84
  %v112 = vadd.f32 %v76, %v84
  %v113 = vadd.f32 %v77, %v84
  %v114 = vadd.f32 %v78, %v84
  %v115 = vadd.f32 %v79, %v84
  %v116 = vadd.f32 %v80, %v84
  %v117 = vadd.f32 %v81, %v84
  %v118 = vmax.f32 %v86, 0.0
  %v119 = vmax.f32 %v87, 0.0
  %v120 = vmax.f32 %v88, 0.0
  %v121 = vmax.f32 %v89, 0.0
  %v122 = vmax.f32 %v90, 0.0
  %v123 = vmax.f32 %v91, 0.0
  %v124 = vmax.f32 %v92, 0.0
  %v125 = vmax.f32 %v93, 0.0
  %v126 = vmax.f32 %v94, 0.0
  %v127 = vmax.f32 %v95, 0.0
  %v128 = vmax.f32 %v96, 0.0
  %v129 = vmax.f32 %v97, 0.0
  %v130 = vmax.f32 %v98, 0.0
  %v131 = vmax.f32 %v99, 0.0
  %v132 = vmax.f32 %v100, 0.0
  %v133 = vmax.f32 %v101, 0.0
  %v134 = vmax.f32 %v102, 0.0
  %v135 = vmax.f32 %v103, 0.0
  %v136 = vmax.f32 %v104, 0.0
  %v137 = vmax.f32 %v105, 0.0
  %v138 = vmax.f32 %v106, 0.0
  %v139 = vmax.f32 %v107, 0.0
  %v140 = vmax.f32 %v108, 0.0
  %v141 = vmax.f32 %v109, 0.0
  %v142 = vmax.f32 %v110, 0.0
  %v143 = vmax.f32 %v111, 0.0
  %v144 = vmax.f32 %v112, 0.0
  %v145 = vmax.f32 %v113, 0.0
  %v146 = vmax.f32 %v114, 0.0
  %v147 = vmax.f32 %v115, 0.0
  %v148 = vmax.f32 %v116, 0.0
  %v149 = vmax.f32 %v117, 0.0
  %150 = vst [vmem:[%s3] sm:$0xff] %v118
  %151 = vst [vmem:[%s3 + $0x8] sm:$0xff] %v119
  %152 = vst [vmem:[%s3 + $0x10] sm:$0xff] %v120
  %153 = vst [vmem:[%s3 + $0x18] sm:$0xff] %v121
  %154 = vst [vmem:[%s3 + $0x20] sm:$0xff] %v122
  %155 = vst [vmem:[%s3 + $0x28] sm:$0xff] %v123
  %156 = vst [vmem:[%s3 + $0x30] sm:$0xff] %v124
  %157 = vst [vmem:[%s3 + $0x38] sm:$0xff] %v125
  %158 = vst [vmem:[%s3 + $0x40] sm:$0xff] %v126
  %159 = vst [vmem:[%s3 + $0x48] sm:$0xff] %v127
  %160 = vst [vmem:[%s3 + $0x50] sm:$0xff] %v128
  %161 = vst [vmem:[%s3 + $0x58] sm:$0xff] %v129
  %162 = vst [vmem:[%s3 + $0x60] sm:$0xff] %v130
  %163 = vst [vmem:[%s3 + $0x68] sm:$0xff] %v131
  %164 = vst [vmem:[%s3 + $0x70] sm:$0xff] %v132
  %165 = vst [vmem:[%s3 + $0x78] sm:$0xff] %v133
  %166 = vst [vmem:[%s3 + $0x80] sm:$0xff] %v134
  %167 = vst [vmem:[%s3 + $0x88] sm:$0xff] %v135
  %168 = vst [vmem:[%s3 + $0x90] sm:$0xff] %v136
  %169 = vst [vmem:[%s3 + $0x98] sm:$0xff] %v137
  %170 = vst [vmem:[%s3 + $0xa0] sm:$0xff] %v138
  %171 = vst [vmem:[%s3 + $0xa8] sm:$0xff] %v139
  %172 = vst [vmem:[%s3 + $0xb0] sm:$0xff] %v140
  %173 = vst [vmem:[%s3 + $0xb8] sm:$0xff] %v141
  %174 = vst [vmem:[%s3 + $0xc0] sm:$0xff] %v142
  %175 = vst [vmem:[%s3 + $0xc8] sm:$0xff] %v143
  %176 = vst [vmem:[%s3 + $0xd0] sm:$0xff] %v144
  %177 = vst [vmem:[%s3 + $0xd8] sm:$0xff] %v145
  %178 = vst [vmem:[%s3 + $0xe0] sm:$0xff] %v146
  %179 = vst [vmem:[%s3 + $0xe8] sm:$0xff] %v147
  %180 = vst [vmem:[%s3 + $0xf0] sm:$0xff] %v148
  %181 = vst [vmem:[%s3 + $0xf8] sm:$0xff] %v149
  // Predicated region
  $region14: #{generator_forward.34} parent=0 // pred_check
    _
  $region15: #{generator_forward.34} parent=0 // pred_check_branch
    %183 = sbr.rel (0) target = $region17
  $region16: #{generator_forward.34} parent=0 // pred_region
    _
  $region17: #{generator_forward.34} parent=0 // pred_fallthru
    _
  // Predicated region
  $region18: #{generator_forward.34} parent=0 // pred_check
    _
  $region19: #{generator_forward.34} parent=0 // pred_check_branch
    %185 = sbr.rel (0) target = $region21
  $region20: #{generator_forward.34} parent=0 // pred_region
    _
  $region21: #{generator_forward.34} parent=0 // pred_fallthru
    _

// kernel: tile.108
$region0: #{tile.108}
  #allocation0 [shape = 's32[1]{0}', space=sflag, size = 0x4, scoped, tag = 'scoped memory for tile.108']
  %s0 = inlined_call_operand.vmem [shape: f32[4], index: 0, kind: input, shape index: {}]
  %s1 = inlined_call_operand.vmem [shape: f32[4,4], index: 1, kind: output, shape index: {}]
  // Predicated region
  $region2: #{tile.108} parent=0 // pred_check
    _
  $region3: #{tile.108} parent=0 // pred_check_branch
    %3 = sbr.rel (0) target = $region5
  $region4: #{tile.108} parent=0 // pred_region
    _
  $region5: #{tile.108} parent=0 // pred_fallthru
    _
  %v4 = vld [vmem:[%s0] ss:$0 sm:$0xff]
  %5 = vst [vmem:[%s1] sm:$0xf] %v4

// kernel: tile.109
$region0: #{tile.109}
  %s0 = inlined_call_operand.vmem [shape: f32[4,4], index: 0, kind: input, shape index: {}]
  %s1 = inlined_call_operand.vmem [shape: f32[16], index: 1, kind: output, shape index: {}]
  $region1: #{tile.109} parent=0
    #allocation0 [shape = 'u8[4096]{0}', space=vmem, size = 0x1000, scoped, tag = 'scoped mem for output reshape']
    #allocation1 [shape = 'u8[4096]{0}', space=vmem, size = 0x1000, scoped, tag = 'scoped mem for input reshape']
    %s3 = ssub.s32 16, 1
    %v4 = vld [vmem:[%s0] sm:%s3]
    %5 = vst [vmem:[#allocation1] sm:%s3] %v4
    %v6 = vld [vmem:[#allocation1] sm:$0x1]
    %vm7 = vcmask 31744
    %8 = vst.msk [vmem:[#allocation0] sm:$0x1] %vm7, %v6
    %s9 = scalar_lea.vmem [#allocation1], 3
    %v10 = vld [vmem:[%s9] sm:$0x1]
    %11 = vrot.lane.b32.xlu0 %v10, 12
    %v12 = vpop.permute.xlu0 %11
    %vm13 = vcmask 130144
    %14 = vst.msk [vmem:[#allocation0] sm:$0x1] %vm13, %v12
    %s15 = scalar_lea.vmem [#allocation1], 2
    %v16 = vld [vmem:[%s15] sm:$0x1]
    %17 = vrot.lane.b32.xlu0 %v16, 8
    %v18 = vpop.permute.xlu0 %17
    %vm19 = vcmask 97344
    %20 = vst.msk [vmem:[#allocation0] sm:$0x1] %vm19, %v18
    %s21 = scalar_lea.vmem [#allocation1], 1
    %v22 = vld [vmem:[%s21] sm:$0x1]
    %23 = vrot.lane.b32.xlu0 %v22, 4
    %v24 = vpop.permute.xlu0 %23
    %vm25 = vcmask 64544
    %26 = vst.msk [vmem:[#allocation0] sm:$0x1] %vm25, %v24
    %s28 = ssub.s32 2, 1
    %v29 = vld [vmem:[#allocation0] sm:%s28]
    %s31 = ssub.s32 2, 1
    %32 = vst [vmem:[%s1] sm:%s31] %v29

// kernel: generator_forward.35
$region0: #{generator_forward.35}
  #allocation0 [shape = 'u32[]', space=smem, size = 0x4, offset = 0x4, fixed_abs, tag = 'smem constant byte address 0x4 - core index']
  #allocation1 [shape = 'u32[72,128]{1,0:T(1,128)}', space=vmem, size = 0x9000, scoped, tag = 'internal scratch']
  %s0 = inlined_call_operand.vmem [shape: bf16[1536,32], index: 0, kind: input, shape index: {}]
  %s1 = inlined_call_operand.vmem [shape: bf16[32,128], index: 1, kind: input, shape index: {}]
  %s2 = inlined_call_operand.vmem [shape: f32[1,128], index: 2, kind: input, shape index: {}]
  %s3 = inlined_call_operand.vmem [shape: f32[1536,128], index: 3, kind: output, shape index: {0}]
  %s4 = inlined_call_operand.vmem [shape: f32[24,128], index: 4, kind: output, shape index: {1}]
  %s5 = inlined_call_operand.vmem [shape: f32[24,128], index: 5, kind: output, shape index: {2}]
  %6 = xla_tuple %s3, %s4, %s5
  %s7 = sld [smem:[#allocation0]]
  $region61: #{generator_forward.35} parent=0
    _
  %s9 = ssub.s32 1, %s7
  %s10 = scalar_select 0, %s9, %s7
  loop: start=0, step=1, limit=5
  $region2: #{generator_forward.35} parent=0 // loop_pre_header
    _
  $region3: #{generator_forward.35} parent=0 // loop_header
    %s12 = sphi 0, %s16
    %p13 = scmp.ge.s32.totalorder %s12, 5
    %s22 = sphi 0, %s24
    %s25 = sphi 0, %s22
    %s26 = sphi 0, %s25
    %s42 = sphi 0, %s26
    %s46 = sphi 0, %s46
    %s48 = sphi 0, %s46
    %s49 = sphi 0, %s48
    %s63 = sphi 0, %s49
    %s67 = sphi 0, %s67
    %s69 = sphi 0, %s67
    %s70 = sphi 0, %s69
    %s84 = sphi 0, %s70
    %s90 = sphi 0, %s92
    %s93 = sphi 0, %s90
    %s94 = sphi 0, %s93
    %s110 = sphi 0, %s94
    %s116 = sphi 0, %s118
    %s119 = sphi 0, %s116
    %s120 = sphi 0, %s119
    %s136 = sphi 0, %s120
    %s142 = sphi 0, %s144
    %s145 = sphi 0, %s142
    %s146 = sphi 0, %s145
    %s162 = sphi 0, %s146
  $region4: #{generator_forward.35} parent=0 // loop_header_branch
    %15 = sbr.rel (%p13) target = $region8
  $region5: #{generator_forward.35} parent=0 // loop_body
    %s17 = ssub.s32 %s12, 1
    %s18 = ssub.s32 %s12, 2
    %s19 = sadd.s32 %s12, 1
    %s20 = ssub.s32 %s12, %s19
    %p21 = scmp.eq.s32.totalorder %s20, 0
    %s23 = sadd.s32 %s22, 1
    %s24 = scalar_select %p21, %s22, %s23
    %p27 = pneg %p21
    %p28 = scmp.eq.s32.totalorder %s12, 2
    %p29 = por %p27, %p28
    %p30 = scmp.ne.s32.totalorder %s22, %s25
    %p31 = scmp.eq.s32.totalorder %s12, 0
    %p32 = por %p30, %p31
    %p33 = scmp.ne.s32.totalorder %s22, %s25
    %p34 = scmp.eq.s32.totalorder %s17, 2
    %p35 = por %p33, %p34
    %p36 = scmp.ne.s32.totalorder %s25, %s26
    %p37 = scmp.eq.s32.totalorder %s17, 0
    %p38 = por %p36, %p37
    %p39 = scmp.ne.s32.totalorder %s25, %s26
    %p40 = scmp.eq.s32.totalorder %s18, 2
    %p41 = por %p39, %p40
    %p43 = scmp.ne.s32.totalorder %s26, %s42
    %p44 = scmp.eq.s32.totalorder %s18, 0
    %p45 = por %p43, %p44
    %s47 = sadd.s32 %s46, 1
    %p50 = scmp.eq.s32.totalorder %s12, 2
    %p51 = scmp.ne.s32.totalorder %s46, %s48
    %p52 = scmp.eq.s32.totalorder %s12, 0
    %p53 = por %p51, %p52
    %p54 = scmp.ne.s32.totalorder %s46, %s48
    %p55 = scmp.eq.s32.totalorder %s17, 2
    %p56 = por %p54, %p55
    %p57 = scmp.ne.s32.totalorder %s48, %s49
    %p58 = scmp.eq.s32.totalorder %s17, 0
    %p59 = por %p57, %p58
    %p60 = scmp.ne.s32.totalorder %s48, %s49
    %p61 = scmp.eq.s32.totalorder %s18, 2
    %p62 = por %p60, %p61
    %p64 = scmp.ne.s32.totalorder %s49, %s63
    %p65 = scmp.eq.s32.totalorder %s18, 0
    %p66 = por %p64, %p65
    %s68 = sadd.s32 %s67, 1
    %p71 = scmp.eq.s32.totalorder %s12, 2
    %p72 = scmp.ne.s32.totalorder %s67, %s69
    %p73 = scmp.eq.s32.totalorder %s12, 0
    %p74 = por %p72, %p73
    %p75 = scmp.ne.s32.totalorder %s67, %s69
    %p76 = scmp.eq.s32.totalorder %s17, 2
    %p77 = por %p75, %p76
    %p78 = scmp.ne.s32.totalorder %s69, %s70
    %p79 = scmp.eq.s32.totalorder %s17, 0
    %p80 = por %p78, %p79
    %p81 = scmp.ne.s32.totalorder %s69, %s70
    %p82 = scmp.eq.s32.totalorder %s18, 2
    %p83 = por %p81, %p82
    %p85 = scmp.ne.s32.totalorder %s70, %s84
    %p86 = scmp.eq.s32.totalorder %s18, 0
    %p87 = por %p85, %p86
    %s88 = ssub.s32 %s12, %s19
    %p89 = scmp.eq.s32.totalorder %s88, 0
    %s91 = sadd.s32 %s90, 1
    %s92 = scalar_select %p89, %s90, %s91
    %p95 = pneg %p89
    %p96 = scmp.eq.s32.totalorder %s12, 2
    %p97 = por %p95, %p96
    %p98 = scmp.ne.s32.totalorder %s90, %s93
    %p99 = scmp.eq.s32.totalorder %s12, 0
    %p100 = por %p98, %p99
    %p101 = scmp.ne.s32.totalorder %s90, %s93
    %p102 = scmp.eq.s32.totalorder %s17, 2
    %p103 = por %p101, %p102
    %p104 = scmp.ne.s32.totalorder %s93, %s94
    %p105 = scmp.eq.s32.totalorder %s17, 0
    %p106 = por %p104, %p105
    %p107 = scmp.ne.s32.totalorder %s93, %s94
    %p108 = scmp.eq.s32.totalorder %s18, 2
    %p109 = por %p107, %p108
    %p111 = scmp.ne.s32.totalorder %s94, %s110
    %p112 = scmp.eq.s32.totalorder %s18, 0
    %p113 = por %p111, %p112
    %s114 = ssub.s32 %s12, %s19
    %p115 = scmp.eq.s32.totalorder %s114, 0
    %s117 = sadd.s32 %s116, 1
    %s118 = scalar_select %p115, %s116, %s117
    %p121 = pneg %p115
    %p122 = scmp.eq.s32.totalorder %s12, 2
    %p123 = por %p121, %p122
    %p124 = scmp.ne.s32.totalorder %s116, %s119
    %p125 = scmp.eq.s32.totalorder %s12, 0
    %p126 = por %p124, %p125
    %p127 = scmp.ne.s32.totalorder %s116, %s119
    %p128 = scmp.eq.s32.totalorder %s17, 2
    %p129 = por %p127, %p128
    %p130 = scmp.ne.s32.totalorder %s119, %s120
    %p131 = scmp.eq.s32.totalorder %s17, 0
    %p132 = por %p130, %p131
    %p133 = scmp.ne.s32.totalorder %s119, %s120
    %p134 = scmp.eq.s32.totalorder %s18, 2
    %p135 = por %p133, %p134
    %p137 = scmp.ne.s32.totalorder %s120, %s136
    %p138 = scmp.eq.s32.totalorder %s18, 0
    %p139 = por %p137, %p138
    %s140 = ssub.s32 %s12, %s19
    %p141 = scmp.eq.s32.totalorder %s140, 0
    %s143 = sadd.s32 %s142, 1
    %s144 = scalar_select %p141, %s142, %s143
    %p147 = pneg %p141
    %p148 = scmp.eq.s32.totalorder %s12, 2
    %p149 = por %p147, %p148
    %p150 = scmp.ne.s32.totalorder %s142, %s145
    %p151 = scmp.eq.s32.totalorder %s12, 0
    %p152 = por %p150, %p151
    %p153 = scmp.ne.s32.totalorder %s142, %s145
    %p154 = scmp.eq.s32.totalorder %s17, 2
    %p155 = por %p153, %p154
    %p156 = scmp.ne.s32.totalorder %s145, %s146
    %p157 = scmp.eq.s32.totalorder %s17, 0
    %p158 = por %p156, %p157
    %p159 = scmp.ne.s32.totalorder %s145, %s146
    %p160 = scmp.eq.s32.totalorder %s18, 2
    %p161 = por %p159, %p160
    %p163 = scmp.ne.s32.totalorder %s146, %s162
    %p164 = scmp.eq.s32.totalorder %s18, 0
    %p165 = por %p163, %p164
    %p166 = scmp.le.s32.totalorder 1, %s12
    %p167 = scmp.lt.s32.totalorder %s12, 4
    %p168 = pnand %p166, %p167
    %p169 = pneg %p168
    // Predicated region
    $region9: #{generator_forward.35} parent=5 // pred_check
      _
    $region10: #{generator_forward.35} parent=5 // pred_check_branch
      %171 = sbr.rel (%p168) target = $region12
    $region11: #{generator_forward.35} parent=5 // pred_region
      %s172 = ssub.s32 %s12, 1
      // Predicated region
      $region13: #{generator_forward.35} parent=11 // pred_check
        %p173 = pneg %p59
      $region14: #{generator_forward.35} parent=11 // pred_check_branch
        %175 = sbr.rel (%p173) target = $region16
      $region15: #{generator_forward.35} parent=11 // pred_region
        _
      $region16: #{generator_forward.35} parent=11 // pred_fallthru
        _
      // Predicated region
      $region17: #{generator_forward.35} parent=11 // pred_check
        %p176 = pneg %p80
      $region18: #{generator_forward.35} parent=11 // pred_check_branch
        %178 = sbr.rel (%p176) target = $region20
      $region19: #{generator_forward.35} parent=11 // pred_region
        _
      $region20: #{generator_forward.35} parent=11 // pred_fallthru
        _
    $region12: #{generator_forward.35} parent=5 // pred_fallthru
      _
    %p179 = scmp.lt.s32.totalorder %s12, 3
    // Predicated region
    $region21: #{generator_forward.35} parent=5 // pred_check
      %p180 = pneg %p179
    $region22: #{generator_forward.35} parent=5 // pred_check_branch
      %182 = sbr.rel (%p180) target = $region24
    $region23: #{generator_forward.35} parent=5 // pred_region
      // Predicated region
      $region25: #{generator_forward.35} parent=23 // pred_check
        %p183 = pneg %p32
      $region26: #{generator_forward.35} parent=23 // pred_check_branch
        %185 = sbr.rel (%p183) target = $region28
      $region27: #{generator_forward.35} parent=23 // pred_region
        %s186 = smul.u32 64, %s12
        %p187 = scmp.lt.s32.totalorder %s186, 191
        %s188 = scalar_select %p187, %s186, 191
        %s189 = smul.addr %s188, 4
        %s190 = scalar_lea.vmem %s0, %s189
        %s191 = smul.u32 64, %s12
      $region28: #{generator_forward.35} parent=23 // pred_fallthru
        _
    $region24: #{generator_forward.35} parent=5 // pred_fallthru
      _
    %p192 = scmp.le.s32.totalorder 1, %s12
    %p193 = scmp.lt.s32.totalorder %s12, 4
    %p194 = pnand %p192, %p193
    %p195 = pneg %p194
    // Predicated region
    $region29: #{generator_forward.35} parent=5 // pred_check
      _
    $region30: #{generator_forward.35} parent=5 // pred_check_branch
      %197 = sbr.rel (%p194) target = $region32
    $region31: #{generator_forward.35} parent=5 // pred_region
      %s198 = ssub.s32 %s12, 1
      %s199 = smul.u32 64, %s17
      %p200 = scmp.lt.s32.totalorder %s199, 191
      %s201 = scalar_select %p200, %s199, 191
      %s202 = smul.addr %s201, 4
      %s203 = scalar_lea.vmem %s0, %s202
      %p204 = pneg %p38
      %p205 = pneg %p35
      %p206 = pneg %p59
      %p207 = pneg %p56
      %p208 = pneg %p80
      %p209 = pneg %p77
      %p210 = pneg %p106
      %p211 = pneg %p103
      %s212 = smul.u32 64, %s17
      %p213 = scmp.lt.s32.totalorder %s212, 191
      %s214 = scalar_select %p213, %s212, 191
      %s215 = smul.addr %s214, 8
      %s216 = scalar_lea.vmem %s3, %s215
      %p217 = pneg %p132
      %p218 = pneg %p129
      %p219 = scmp.lt.s32.totalorder %s17, 2
      %s220 = scalar_select %p219, %s17, 2
      %s221 = smul.addr %s220, 8
      %s222 = scalar_lea.vmem %s4, %s221
      %p223 = pneg %p158
      %p224 = pneg %p155
      %p225 = scmp.lt.s32.totalorder %s17, 2
      %s226 = scalar_select %p225, %s17, 2
      %s227 = smul.addr %s226, 8
      %s228 = scalar_lea.vmem %s5, %s227
      %s229 = smul.u32 64, %s17
      %p230 = scmp.lt.s32.totalorder %s229, 191
      %s231 = scalar_select %p230, %s229, 191
      %s232 = smul.addr %s231, 4
      %s233 = scalar_lea.vmem %s0, %s232
      %s234 = smul.u32 64, %s17
      %s235 = smul.u32 64, %s17
      %p236 = scmp.lt.s32.totalorder %s235, 191
      %s237 = scalar_select %p236, %s235, 191
      %s238 = smul.addr %s237, 8
      %s239 = scalar_lea.vmem %s3, %s238
      %s240 = smul.u32 64, %s17
      %p241 = scmp.lt.s32.totalorder %s17, 2
      %s242 = scalar_select %p241, %s17, 2
      %s243 = smul.addr %s242, 8
      %s244 = scalar_lea.vmem %s4, %s243
      %p245 = scmp.lt.s32.totalorder %s17, 2
      %s246 = scalar_select %p245, %s17, 2
      %s247 = smul.addr %s246, 8
      %s248 = scalar_lea.vmem %s5, %s247
      %v250 = vld [vmem:[%s233] sm:$0xf]
      %v251 = vld [vmem:[%s233 + $0x4] sm:$0xf]
      %v252 = vld [vmem:[%s233 + $0x8] sm:$0xf]
      %v253 = vld [vmem:[%s233 + $0xc] sm:$0xf]
      %v254 = vld [vmem:[%s233 + $0x10] sm:$0xf]
      %v255 = vld [vmem:[%s233 + $0x14] sm:$0xf]
      %v256 = vld [vmem:[%s233 + $0x18] sm:$0xf]
      %v257 = vld [vmem:[%s233 + $0x1c] sm:$0xf]
      %v258 = vld [vmem:[%s233 + $0x20] sm:$0xf]
      %v259 = vld [vmem:[%s233 + $0x24] sm:$0xf]
      %v260 = vld [vmem:[%s233 + $0x28] sm:$0xf]
      %v261 = vld [vmem:[%s233 + $0x2c] sm:$0xf]
      %v262 = vld [vmem:[%s233 + $0x30] sm:$0xf]
      %v263 = vld [vmem:[%s233 + $0x34] sm:$0xf]
      %v264 = vld [vmem:[%s233 + $0x38] sm:$0xf]
      %v265 = vld [vmem:[%s233 + $0x3c] sm:$0xf]
      %v266 = vld [vmem:[%s233 + $0x40] sm:$0xf]
      %v267 = vld [vmem:[%s233 + $0x44] sm:$0xf]
      %v268 = vld [vmem:[%s233 + $0x48] sm:$0xf]
      %v269 = vld [vmem:[%s233 + $0x4c] sm:$0xf]
      %v270 = vld [vmem:[%s233 + $0x50] sm:$0xf]
      %v271 = vld [vmem:[%s233 + $0x54] sm:$0xf]
      %v272 = vld [vmem:[%s233 + $0x58] sm:$0xf]
      %v273 = vld [vmem:[%s233 + $0x5c] sm:$0xf]
      %v274 = vld [vmem:[%s233 + $0x60] sm:$0xf]
      %v275 = vld [vmem:[%s233 + $0x64] sm:$0xf]
      %v276 = vld [vmem:[%s233 + $0x68] sm:$0xf]
      %v277 = vld [vmem:[%s233 + $0x6c] sm:$0xf]
      %v278 = vld [vmem:[%s233 + $0x70] sm:$0xf]
      %v279 = vld [vmem:[%s233 + $0x74] sm:$0xf]
      %v280 = vld [vmem:[%s233 + $0x78] sm:$0xf]
      %v281 = vld [vmem:[%s233 + $0x7c] sm:$0xf]
      %v282 = vld [vmem:[%s233 + $0x80] sm:$0xf]
      %v283 = vld [vmem:[%s233 + $0x84] sm:$0xf]
      %v284 = vld [vmem:[%s233 + $0x88] sm:$0xf]
      %v285 = vld [vmem:[%s233 + $0x8c] sm:$0xf]
      %v286 = vld [vmem:[%s233 + $0x90] sm:$0xf]
      %v287 = vld [vmem:[%s233 + $0x94] sm:$0xf]
      %v288 = vld [vmem:[%s233 + $0x98] sm:$0xf]
      %v289 = vld [vmem:[%s233 + $0x9c] sm:$0xf]
      %v290 = vld [vmem:[%s233 + $0xa0] sm:$0xf]
      %v291 = vld [vmem:[%s233 + $0xa4] sm:$0xf]
      %v292 = vld [vmem:[%s233 + $0xa8] sm:$0xf]
      %v293 = vld [vmem:[%s233 + $0xac] sm:$0xf]
      %v294 = vld [vmem:[%s233 + $0xb0] sm:$0xf]
      %v295 = vld [vmem:[%s233 + $0xb4] sm:$0xf]
      %v296 = vld [vmem:[%s233 + $0xb8] sm:$0xf]
      %v297 = vld [vmem:[%s233 + $0xbc] sm:$0xf]
      %v298 = vld [vmem:[%s233 + $0xc0] sm:$0xf]
      %v299 = vld [vmem:[%s233 + $0xc4] sm:$0xf]
      %v300 = vld [vmem:[%s233 + $0xc8] sm:$0xf]
      %v301 = vld [vmem:[%s233 + $0xcc] sm:$0xf]
      %v302 = vld [vmem:[%s233 + $0xd0] sm:$0xf]
      %v303 = vld [vmem:[%s233 + $0xd4] sm:$0xf]
      %v304 = vld [vmem:[%s233 + $0xd8] sm:$0xf]
      %v305 = vld [vmem:[%s233 + $0xdc] sm:$0xf]
      %v306 = vld [vmem:[%s233 + $0xe0] sm:$0xf]
      %v307 = vld [vmem:[%s233 + $0xe4] sm:$0xf]
      %v308 = vld [vmem:[%s233 + $0xe8] sm:$0xf]
      %v309 = vld [vmem:[%s233 + $0xec] sm:$0xf]
      %v310 = vld [vmem:[%s233 + $0xf0] sm:$0xf]
      %v311 = vld [vmem:[%s233 + $0xf4] sm:$0xf]
      %v312 = vld [vmem:[%s233 + $0xf8] sm:$0xf]
      %v313 = vld [vmem:[%s233 + $0xfc] sm:$0xf]
      %v314 = vld [vmem:[%s1] sm:$0xf]
      %v315 = vld [vmem:[%s1 + $0x4] sm:$0xf]
      %v316 = vld [vmem:[%s1 + $0x8] sm:$0xf]
      %v317 = vld [vmem:[%s1 + $0xc] sm:$0xf]
      %v318 = vld [vmem:[%s2] sm:$0x1]
      %v320 = vperm.slane %v318, 0
      %v386 = vunpack.c.l.b16 %v250
      %v387 = vunpack.c.l.b16 %v251
      %v388 = vunpack.c.l.b16 %v252
      %v389 = vunpack.c.l.b16 %v253
      %v390 = vunpack.c.l.b16 %v254
      %v391 = vunpack.c.l.b16 %v255
      %v392 = vunpack.c.l.b16 %v256
      %v393 = vunpack.c.l.b16 %v257
      %v394 = vunpack.c.l.b16 %v258
      %v395 = vunpack.c.l.b16 %v259
      %v396 = vunpack.c.l.b16 %v260
      %v397 = vunpack.c.l.b16 %v261
      %v398 = vunpack.c.l.b16 %v262
      %v399 = vunpack.c.l.b16 %v263
      %v400 = vunpack.c.l.b16 %v264
      %v401 = vunpack.c.l.b16 %v265
      %v402 = vunpack.c.l.b16 %v266
      %v403 = vunpack.c.l.b16 %v267
      %v404 = vunpack.c.l.b16 %v268
      %v405 = vunpack.c.l.b16 %v269
      %v406 = vunpack.c.l.b16 %v270
      %v407 = vunpack.c.l.b16 %v271
      %v408 = vunpack.c.l.b16 %v272
      %v409 = vunpack.c.l.b16 %v273
      %v410 = vunpack.c.l.b16 %v274
      %v411 = vunpack.c.l.b16 %v275
      %v412 = vunpack.c.l.b16 %v276
      %v413 = vunpack.c.l.b16 %v277
      %v414 = vunpack.c.l.b16 %v278
      %v415 = vunpack.c.l.b16 %v279
      %v416 = vunpack.c.l.b16 %v280
      %v417 = vunpack.c.l.b16 %v281
      %v418 = vunpack.c.l.b16 %v282
      %v419 = vunpack.c.l.b16 %v283
      %v420 = vunpack.c.l.b16 %v284
      %v421 = vunpack.c.l.b16 %v285
      %v422 = vunpack.c.l.b16 %v286
      %v423 = vunpack.c.l.b16 %v287
      %v424 = vunpack.c.l.b16 %v288
      %v425 = vunpack.c.l.b16 %v289
      %v426 = vunpack.c.l.b16 %v290
      %v427 = vunpack.c.l.b16 %v291
      %v428 = vunpack.c.l.b16 %v292
      %v429 = vunpack.c.l.b16 %v293
      %v430 = vunpack.c.l.b16 %v294
      %v431 = vunpack.c.l.b16 %v295
      %v432 = vunpack.c.l.b16 %v296
      %v433 = vunpack.c.l.b16 %v297
      %v434 = vunpack.c.l.b16 %v298
      %v435 = vunpack.c.l.b16 %v299
      %v436 = vunpack.c.l.b16 %v300
      %v437 = vunpack.c.l.b16 %v301
      %v438 = vunpack.c.l.b16 %v302
      %v439 = vunpack.c.l.b16 %v303
      %v440 = vunpack.c.l.b16 %v304
      %v441 = vunpack.c.l.b16 %v305
      %v442 = vunpack.c.l.b16 %v306
      %v443 = vunpack.c.l.b16 %v307
      %v444 = vunpack.c.l.b16 %v308
      %v445 = vunpack.c.l.b16 %v309
      %v446 = vunpack.c.l.b16 %v310
      %v447 = vunpack.c.l.b16 %v311
      %v448 = vunpack.c.l.b16 %v312
      %v449 = vunpack.c.l.b16 %v313
      %v450 = vpack.c.b16 %v387, %v386
      %v451 = vpack.c.b16 %v389, %v388
      %v452 = vpack.c.b16 %v391, %v390
      %v453 = vpack.c.b16 %v393, %v392
      %v454 = vpack.c.b16 %v395, %v394
      %v455 = vpack.c.b16 %v397, %v396
      %v456 = vpack.c.b16 %v399, %v398
      %v457 = vpack.c.b16 %v401, %v400
      %v458 = vpack.c.b16 %v403, %v402
      %v459 = vpack.c.b16 %v405, %v404
      %v460 = vpack.c.b16 %v407, %v406
      %v461 = vpack.c.b16 %v409, %v408
      %v462 = vpack.c.b16 %v411, %v410
      %v463 = vpack.c.b16 %v413, %v412
      %v464 = vpack.c.b16 %v415, %v414
      %v465 = vpack.c.b16 %v417, %v416
      %v466 = vpack.c.b16 %v419, %v418
      %v467 = vpack.c.b16 %v421, %v420
      %v468 = vpack.c.b16 %v423, %v422
      %v469 = vpack.c.b16 %v425, %v424
      %v470 = vpack.c.b16 %v427, %v426
      %v471 = vpack.c.b16 %v429, %v428
      %v472 = vpack.c.b16 %v431, %v430
      %v473 = vpack.c.b16 %v433, %v432
      %v474 = vpack.c.b16 %v435, %v434
      %v475 = vpack.c.b16 %v437, %v436
      %v476 = vpack.c.b16 %v439, %v438
      %v477 = vpack.c.b16 %v441, %v440
      %v478 = vpack.c.b16 %v443, %v442
      %v479 = vpack.c.b16 %v445, %v444
      %v480 = vpack.c.b16 %v447, %v446
      %v481 = vpack.c.b16 %v449, %v448
      %v486 = vunpack.c.l.b16 %v314
      %v487 = vunpack.c.l.b16 %v315
      %v488 = vunpack.c.l.b16 %v316
      %v489 = vunpack.c.l.b16 %v317
      %v490 = vpack.c.b16 %v487, %v486
      %v491 = vpack.c.b16 %v489, %v488
      %vm494 = vcmask 261120
      %v496 = vsel %vm494, %v450, 0
      %v499 = vsel %vm494, %v451, 0
      %v502 = vsel %vm494, %v452, 0
      %v505 = vsel %vm494, %v453, 0
      %v508 = vsel %vm494, %v454, 0
      %v511 = vsel %vm494, %v455, 0
      %v514 = vsel %vm494, %v456, 0
      %v517 = vsel %vm494, %v457, 0
      %v520 = vsel %vm494, %v458, 0
      %v523 = vsel %vm494, %v459, 0
      %v526 = vsel %vm494, %v460, 0
      %v529 = vsel %vm494, %v461, 0
      %v532 = vsel %vm494, %v462, 0
      %v535 = vsel %vm494, %v463, 0
      %v538 = vsel %vm494, %v464, 0
      %v541 = vsel %vm494, %v465, 0
      %v544 = vsel %vm494, %v466, 0
      %v547 = vsel %vm494, %v467, 0
      %v550 = vsel %vm494, %v468, 0
      %v553 = vsel %vm494, %v469, 0
      %v556 = vsel %vm494, %v470, 0
      %v559 = vsel %vm494, %v471, 0
      %v562 = vsel %vm494, %v472, 0
      %v565 = vsel %vm494, %v473, 0
      %v568 = vsel %vm494, %v474, 0
      %v571 = vsel %vm494, %v475, 0
      %v574 = vsel %vm494, %v476, 0
      %v577 = vsel %vm494, %v477, 0
      %v580 = vsel %vm494, %v478, 0
      %v583 = vsel %vm494, %v479, 0
      %v586 = vsel %vm494, %v480, 0
      %v589 = vsel %vm494, %v481, 0
      %591 = vmatpush.bf16.msra.mxu0 0
      %592 = vmatpush.bf16.msra.mxu0 0
      %593 = vmatpush.bf16.msra.mxu0 0
      %594 = vmatpush.bf16.msra.mxu0 0
      %595 = vmatpush.bf16.msra.mxu0 0
      %596 = vmatpush.bf16.msra.mxu0 0
      %597 = vmatpush.bf16.msra.mxu0 %v491
      %598 = vmatpush.bf16.msra.mxu0 %v490
      %599 = vmatmul.bf16.gmra.mxu0 %v496
      %v600 = vpop.f32.mrf.mxu0
      %v601 = vadd.f32 %v320, %v600
      %v602 = vpop.f32.mrf.mxu0
      %v603 = vadd.f32 %v320, %v602
      %604 = vmatmul.bf16.gmra.mxu0 %v499
      %v605 = vpop.f32.mrf.mxu0
      %v606 = vadd.f32 %v320, %v605
      %v607 = vpop.f32.mrf.mxu0
      %v608 = vadd.f32 %v320, %v607
      %609 = vmatmul.bf16.gmra.mxu0 %v502
      %v610 = vpop.f32.mrf.mxu0
      %v611 = vadd.f32 %v320, %v610
      %v612 = vpop.f32.mrf.mxu0
      %v613 = vadd.f32 %v320, %v612
      %614 = vmatmul.bf16.gmra.mxu0 %v505
      %v615 = vpop.f32.mrf.mxu0
      %v616 = vadd.f32 %v320, %v615
      %v617 = vpop.f32.mrf.mxu0
      %v618 = vadd.f32 %v320, %v617
      %619 = vmatmul.bf16.gmra.mxu0 %v508
      %v620 = vpop.f32.mrf.mxu0
      %v621 = vadd.f32 %v320, %v620
      %v622 = vpop.f32.mrf.mxu0
      %v623 = vadd.f32 %v320, %v622
      %624 = vmatmul.bf16.gmra.mxu0 %v511
      %v625 = vpop.f32.mrf.mxu0
      %v626 = vadd.f32 %v320, %v625
      %v627 = vpop.f32.mrf.mxu0
      %v628 = vadd.f32 %v320, %v627
      %629 = vmatmul.bf16.gmra.mxu0 %v514
      %v630 = vpop.f32.mrf.mxu0
      %v631 = vadd.f32 %v320, %v630
      %v632 = vpop.f32.mrf.mxu0
      %v633 = vadd.f32 %v320, %v632
      %634 = vmatmul.bf16.gmra.mxu0 %v517
      %v635 = vpop.f32.mrf.mxu0
      %v636 = vadd.f32 %v320, %v635
      %v637 = vpop.f32.mrf.mxu0
      %v638 = vadd.f32 %v320, %v637
      %639 = vmatmul.bf16.gmra.mxu0 %v520
      %v640 = vpop.f32.mrf.mxu0
      %v641 = vadd.f32 %v320, %v640
      %v642 = vpop.f32.mrf.mxu0
      %v643 = vadd.f32 %v320, %v642
      %644 = vmatmul.bf16.gmra.mxu0 %v523
      %v645 = vpop.f32.mrf.mxu0
      %v646 = vadd.f32 %v320, %v645
      %v647 = vpop.f32.mrf.mxu0
      %v648 = vadd.f32 %v320, %v647
      %649 = vmatmul.bf16.gmra.mxu0 %v526
      %v650 = vpop.f32.mrf.mxu0
      %v651 = vadd.f32 %v320, %v650
      %v652 = vpop.f32.mrf.mxu0
      %v653 = vadd.f32 %v320, %v652
      %654 = vmatmul.bf16.gmra.mxu0 %v529
      %v655 = vpop.f32.mrf.mxu0
      %v656 = vadd.f32 %v320, %v655
      %v657 = vpop.f32.mrf.mxu0
      %v658 = vadd.f32 %v320, %v657
      %659 = vmatmul.bf16.gmra.mxu0 %v532
      %v660 = vpop.f32.mrf.mxu0
      %v661 = vadd.f32 %v320, %v660
      %v662 = vpop.f32.mrf.mxu0
      %v663 = vadd.f32 %v320, %v662
      %664 = vmatmul.bf16.gmra.mxu0 %v535
      %v665 = vpop.f32.mrf.mxu0
      %v666 = vadd.f32 %v320, %v665
      %v667 = vpop.f32.mrf.mxu0
      %v668 = vadd.f32 %v320, %v667
      %669 = vmatmul.bf16.gmra.mxu0 %v538
      %v670 = vpop.f32.mrf.mxu0
      %v671 = vadd.f32 %v320, %v670
      %v672 = vpop.f32.mrf.mxu0
      %v673 = vadd.f32 %v320, %v672
      %674 = vmatmul.bf16.gmra.mxu0 %v541
      %v675 = vpop.f32.mrf.mxu0
      %v676 = vadd.f32 %v320, %v675
      %v677 = vpop.f32.mrf.mxu0
      %v678 = vadd.f32 %v320, %v677
      %679 = vmatmul.bf16.gmra.mxu0 %v544
      %v680 = vpop.f32.mrf.mxu0
      %v681 = vadd.f32 %v320, %v680
      %v682 = vpop.f32.mrf.mxu0
      %v683 = vadd.f32 %v320, %v682
      %684 = vmatmul.bf16.gmra.mxu0 %v547
      %v685 = vpop.f32.mrf.mxu0
      %v686 = vadd.f32 %v320, %v685
      %v687 = vpop.f32.mrf.mxu0
      %v688 = vadd.f32 %v320, %v687
      %689 = vmatmul.bf16.gmra.mxu0 %v550
      %v690 = vpop.f32.mrf.mxu0
      %v691 = vadd.f32 %v320, %v690
      %v692 = vpop.f32.mrf.mxu0
      %v693 = vadd.f32 %v320, %v692
      %694 = vmatmul.bf16.gmra.mxu0 %v553
      %v695 = vpop.f32.mrf.mxu0
      %v696 = vadd.f32 %v320, %v695
      %v697 = vpop.f32.mrf.mxu0
      %v698 = vadd.f32 %v320, %v697
      %699 = vmatmul.bf16.gmra.mxu0 %v556
      %v700 = vpop.f32.mrf.mxu0
      %v701 = vadd.f32 %v320, %v700
      %v702 = vpop.f32.mrf.mxu0
      %v703 = vadd.f32 %v320, %v702
      %704 = vmatmul.bf16.gmra.mxu0 %v559
      %v705 = vpop.f32.mrf.mxu0
      %v706 = vadd.f32 %v320, %v705
      %v707 = vpop.f32.mrf.mxu0
      %v708 = vadd.f32 %v320, %v707
      %709 = vmatmul.bf16.gmra.mxu0 %v562
      %v710 = vpop.f32.mrf.mxu0
      %v711 = vadd.f32 %v320, %v710
      %v712 = vpop.f32.mrf.mxu0
      %v713 = vadd.f32 %v320, %v712
      %714 = vmatmul.bf16.gmra.mxu0 %v565
      %v715 = vpop.f32.mrf.mxu0
      %v716 = vadd.f32 %v320, %v715
      %v717 = vpop.f32.mrf.mxu0
      %v718 = vadd.f32 %v320, %v717
      %719 = vmatmul.bf16.gmra.mxu0 %v568
      %v720 = vpop.f32.mrf.mxu0
      %v721 = vadd.f32 %v320, %v720
      %v722 = vpop.f32.mrf.mxu0
      %v723 = vadd.f32 %v320, %v722
      %724 = vmatmul.bf16.gmra.mxu0 %v571
      %v725 = vpop.f32.mrf.mxu0
      %v726 = vadd.f32 %v320, %v725
      %v727 = vpop.f32.mrf.mxu0
      %v728 = vadd.f32 %v320, %v727
      %729 = vmatmul.bf16.gmra.mxu0 %v574
      %v730 = vpop.f32.mrf.mxu0
      %v731 = vadd.f32 %v320, %v730
      %v732 = vpop.f32.mrf.mxu0
      %v733 = vadd.f32 %v320, %v732
      %734 = vmatmul.bf16.gmra.mxu0 %v577
      %v735 = vpop.f32.mrf.mxu0
      %v736 = vadd.f32 %v320, %v735
      %v737 = vpop.f32.mrf.mxu0
      %v738 = vadd.f32 %v320, %v737
      %739 = vmatmul.bf16.gmra.mxu0 %v580
      %v740 = vpop.f32.mrf.mxu0
      %v741 = vadd.f32 %v320, %v740
      %v742 = vpop.f32.mrf.mxu0
      %v743 = vadd.f32 %v320, %v742
      %744 = vmatmul.bf16.gmra.mxu0 %v583
      %v745 = vpop.f32.mrf.mxu0
      %v746 = vadd.f32 %v320, %v745
      %v747 = vpop.f32.mrf.mxu0
      %v748 = vadd.f32 %v320, %v747
      %749 = vmatmul.bf16.gmra.mxu0 %v586
      %v750 = vpop.f32.mrf.mxu0
      %v751 = vadd.f32 %v320, %v750
      %v752 = vpop.f32.mrf.mxu0
      %v753 = vadd.f32 %v320, %v752
      %754 = vmatmul.bf16.gmra.mxu0 %v589
      %v755 = vpop.f32.mrf.mxu0
      %v756 = vadd.f32 %v320, %v755
      %v757 = vpop.f32.mrf.mxu0
      %v758 = vadd.f32 %v320, %v757
      %759 = vdwg.mxu0
      %760 = vst [vmem:[%s239] sm:$0xff] %v601
      %761 = vst [vmem:[%s239 + $0x8] sm:$0xff] %v603
      %762 = vst [vmem:[%s239 + $0x10] sm:$0xff] %v606
      %763 = vst [vmem:[%s239 + $0x18] sm:$0xff] %v608
      %764 = vst [vmem:[%s239 + $0x20] sm:$0xff] %v611
      %765 = vst [vmem:[%s239 + $0x28] sm:$0xff] %v613
      %766 = vst [vmem:[%s239 + $0x30] sm:$0xff] %v616
      %767 = vst [vmem:[%s239 + $0x38] sm:$0xff] %v618
      %768 = vst [vmem:[%s239 + $0x40] sm:$0xff] %v621
      %769 = vst [vmem:[%s239 + $0x48] sm:$0xff] %v623
      %770 = vst [vmem:[%s239 + $0x50] sm:$0xff] %v626
      %771 = vst [vmem:[%s239 + $0x58] sm:$0xff] %v628
      %772 = vst [vmem:[%s239 + $0x60] sm:$0xff] %v631
      %773 = vst [vmem:[%s239 + $0x68] sm:$0xff] %v633
      %774 = vst [vmem:[%s239 + $0x70] sm:$0xff] %v636
      %775 = vst [vmem:[%s239 + $0x78] sm:$0xff] %v638
      %776 = vst [vmem:[%s239 + $0x80] sm:$0xff] %v641
      %777 = vst [vmem:[%s239 + $0x88] sm:$0xff] %v643
      %778 = vst [vmem:[%s239 + $0x90] sm:$0xff] %v646
      %779 = vst [vmem:[%s239 + $0x98] sm:$0xff] %v648
      %780 = vst [vmem:[%s239 + $0xa0] sm:$0xff] %v651
      %781 = vst [vmem:[%s239 + $0xa8] sm:$0xff] %v653
      %782 = vst [vmem:[%s239 + $0xb0] sm:$0xff] %v656
      %783 = vst [vmem:[%s239 + $0xb8] sm:$0xff] %v658
      %784 = vst [vmem:[%s239 + $0xc0] sm:$0xff] %v661
      %785 = vst [vmem:[%s239 + $0xc8] sm:$0xff] %v663
      %786 = vst [vmem:[%s239 + $0xd0] sm:$0xff] %v666
      %787 = vst [vmem:[%s239 + $0xd8] sm:$0xff] %v668
      %788 = vst [vmem:[%s239 + $0xe0] sm:$0xff] %v671
      %789 = vst [vmem:[%s239 + $0xe8] sm:$0xff] %v673
      %790 = vst [vmem:[%s239 + $0xf0] sm:$0xff] %v676
      %791 = vst [vmem:[%s239 + $0xf8] sm:$0xff] %v678
      %792 = vst [vmem:[%s239 + $0x100] sm:$0xff] %v681
      %793 = vst [vmem:[%s239 + $0x108] sm:$0xff] %v683
      %794 = vst [vmem:[%s239 + $0x110] sm:$0xff] %v686
      %795 = vst [vmem:[%s239 + $0x118] sm:$0xff] %v688
      %796 = vst [vmem:[%s239 + $0x120] sm:$0xff] %v691
      %797 = vst [vmem:[%s239 + $0x128] sm:$0xff] %v693
      %798 = vst [vmem:[%s239 + $0x130] sm:$0xff] %v696
      %799 = vst [vmem:[%s239 + $0x138] sm:$0xff] %v698
      %800 = vst [vmem:[%s239 + $0x140] sm:$0xff] %v701
      %801 = vst [vmem:[%s239 + $0x148] sm:$0xff] %v703
      %802 = vst [vmem:[%s239 + $0x150] sm:$0xff] %v706
      %803 = vst [vmem:[%s239 + $0x158] sm:$0xff] %v708
      %804 = vst [vmem:[%s239 + $0x160] sm:$0xff] %v711
      %805 = vst [vmem:[%s239 + $0x168] sm:$0xff] %v713
      %806 = vst [vmem:[%s239 + $0x170] sm:$0xff] %v716
      %807 = vst [vmem:[%s239 + $0x178] sm:$0xff] %v718
      %808 = vst [vmem:[%s239 + $0x180] sm:$0xff] %v721
      %809 = vst [vmem:[%s239 + $0x188] sm:$0xff] %v723
      %810 = vst [vmem:[%s239 + $0x190] sm:$0xff] %v726
      %811 = vst [vmem:[%s239 + $0x198] sm:$0xff] %v728
      %812 = vst [vmem:[%s239 + $0x1a0] sm:$0xff] %v731
      %813 = vst [vmem:[%s239 + $0x1a8] sm:$0xff] %v733
      %814 = vst [vmem:[%s239 + $0x1b0] sm:$0xff] %v736
      %815 = vst [vmem:[%s239 + $0x1b8] sm:$0xff] %v738
      %816 = vst [vmem:[%s239 + $0x1c0] sm:$0xff] %v741
      %817 = vst [vmem:[%s239 + $0x1c8] sm:$0xff] %v743
      %818 = vst [vmem:[%s239 + $0x1d0] sm:$0xff] %v746
      %819 = vst [vmem:[%s239 + $0x1d8] sm:$0xff] %v748
      %820 = vst [vmem:[%s239 + $0x1e0] sm:$0xff] %v751
      %821 = vst [vmem:[%s239 + $0x1e8] sm:$0xff] %v753
      %822 = vst [vmem:[%s239 + $0x1f0] sm:$0xff] %v756
      %823 = vst [vmem:[%s239 + $0x1f8] sm:$0xff] %v758
      %v824 = vadd.f32 %v601, %v603
      %v825 = vadd.f32 %v824, %v606
      %v826 = vadd.f32 %v825, %v608
      %v827 = vadd.f32 %v826, %v611
      %v828 = vadd.f32 %v827, %v613
      %v829 = vadd.f32 %v828, %v616
      %v830 = vadd.f32 %v829, %v618
      %v831 = vadd.f32 %v830, %v621
      %v832 = vadd.f32 %v831, %v623
      %v833 = vadd.f32 %v832, %v626
      %v834 = vadd.f32 %v833, %v628
      %v835 = vadd.f32 %v834, %v631
      %v836 = vadd.f32 %v835, %v633
      %v837 = vadd.f32 %v836, %v636
      %v838 = vadd.f32 %v837, %v638
      %v839 = vadd.f32 %v838, %v641
      %v840 = vadd.f32 %v839, %v643
      %v841 = vadd.f32 %v840, %v646
      %v842 = vadd.f32 %v841, %v648
      %v843 = vadd.f32 %v842, %v651
      %v844 = vadd.f32 %v843, %v653
      %v845 = vadd.f32 %v844, %v656
      %v846 = vadd.f32 %v845, %v658
      %v847 = vadd.f32 %v846, %v661
      %v848 = vadd.f32 %v847, %v663
      %v849 = vadd.f32 %v848, %v666
      %v850 = vadd.f32 %v849, %v668
      %v851 = vadd.f32 %v850, %v671
      %v852 = vadd.f32 %v851, %v673
      %v853 = vadd.f32 %v852, %v676
      %v854 = vadd.f32 %v853, %v678
      %v855 = vadd.f32 %v854, %v681
      %v856 = vadd.f32 %v855, %v683
      %v857 = vadd.f32 %v856, %v686
      %v858 = vadd.f32 %v857, %v688
      %v859 = vadd.f32 %v858, %v691
      %v860 = vadd.f32 %v859, %v693
      %v861 = vadd.f32 %v860, %v696
      %v862 = vadd.f32 %v861, %v698
      %v863 = vadd.f32 %v862, %v701
      %v864 = vadd.f32 %v863, %v703
      %v865 = vadd.f32 %v864, %v706
      %v866 = vadd.f32 %v865, %v708
      %v867 = vadd.f32 %v866, %v711
      %v868 = vadd.f32 %v867, %v713
      %v869 = vadd.f32 %v868, %v716
      %v870 = vadd.f32 %v869, %v718
      %v871 = vadd.f32 %v870, %v721
      %v872 = vadd.f32 %v871, %v723
      %v873 = vadd.f32 %v872, %v726
      %v874 = vadd.f32 %v873, %v728
      %v875 = vadd.f32 %v874, %v731
      %v876 = vadd.f32 %v875, %v733
      %v877 = vadd.f32 %v876, %v736
      %v878 = vadd.f32 %v877, %v738
      %v879 = vadd.f32 %v878, %v741
      %v880 = vadd.f32 %v879, %v743
      %v881 = vadd.f32 %v880, %v746
      %v882 = vadd.f32 %v881, %v748
      %v883 = vadd.f32 %v882, %v751
      %v884 = vadd.f32 %v883, %v753
      %v885 = vadd.f32 %v884, %v756
      %v886 = vadd.f32 %v885, %v758
      %v887 = vrot.slane %v886, 4
      %v888 = vadd.f32 %v886, %v887
      %v889 = vrot.slane %v888, 2
      %v890 = vadd.f32 %v888, %v889
      %v891 = vrot.slane %v890, 1
      %v892 = vadd.f32 %v890, %v891
      %v893 = vmul.f32 %v601, %v601
      %v894 = vmul.f32 %v603, %v603
      %v895 = vmul.f32 %v606, %v606
      %v896 = vmul.f32 %v608, %v608
      %v897 = vmul.f32 %v611, %v611
      %v898 = vmul.f32 %v613, %v613
      %v899 = vmul.f32 %v616, %v616
      %v900 = vmul.f32 %v618, %v618
      %v901 = vmul.f32 %v621, %v621
      %v902 = vmul.f32 %v623, %v623
      %v903 = vmul.f32 %v626, %v626
      %v904 = vmul.f32 %v628, %v628
      %v905 = vmul.f32 %v631, %v631
      %v906 = vmul.f32 %v633, %v633
      %v907 = vmul.f32 %v636, %v636
      %v908 = vmul.f32 %v638, %v638
      %v909 = vmul.f32 %v641, %v641
      %v910 = vmul.f32 %v643, %v643
      %v911 = vmul.f32 %v646, %v646
      %v912 = vmul.f32 %v648, %v648
      %v913 = vmul.f32 %v651, %v651
      %v914 = vmul.f32 %v653, %v653
      %v915 = vmul.f32 %v656, %v656
      %v916 = vmul.f32 %v658, %v658
      %v917 = vmul.f32 %v661, %v661
      %v918 = vmul.f32 %v663, %v663
      %v919 = vmul.f32 %v666, %v666
      %v920 = vmul.f32 %v668, %v668
      %v921 = vmul.f32 %v671, %v671
      %v922 = vmul.f32 %v673, %v673
      %v923 = vmul.f32 %v676, %v676
      %v924 = vmul.f32 %v678, %v678
      %v925 = vmul.f32 %v681, %v681
      %v926 = vmul.f32 %v683, %v683
      %v927 = vmul.f32 %v686, %v686
      %v928 = vmul.f32 %v688, %v688
      %v929 = vmul.f32 %v691, %v691
      %v930 = vmul.f32 %v693, %v693
      %v931 = vmul.f32 %v696, %v696
      %v932 = vmul.f32 %v698, %v698
      %v933 = vmul.f32 %v701, %v701
      %v934 = vmul.f32 %v703, %v703
      %v935 = vmul.f32 %v706, %v706
      %v936 = vmul.f32 %v708, %v708
      %v937 = vmul.f32 %v711, %v711
      %v938 = vmul.f32 %v713, %v713
      %v939 = vmul.f32 %v716, %v716
      %v940 = vmul.f32 %v718, %v718
      %v941 = vmul.f32 %v721, %v721
      %v942 = vmul.f32 %v723, %v723
      %v943 = vmul.f32 %v726, %v726
      %v944 = vmul.f32 %v728, %v728
      %v945 = vmul.f32 %v731, %v731
      %v946 = vmul.f32 %v733, %v733
      %v947 = vmul.f32 %v736, %v736
      %v948 = vmul.f32 %v738, %v738
      %v949 = vmul.f32 %v741, %v741
      %v950 = vmul.f32 %v743, %v743
      %v951 = vmul.f32 %v746, %v746
      %v952 = vmul.f32 %v748, %v748
      %v953 = vmul.f32 %v751, %v751
      %v954 = vmul.f32 %v753, %v753
      %v955 = vmul.f32 %v756, %v756
      %v956 = vmul.f32 %v758, %v758
      %v957 = vadd.f32 %v893, %v894
      %v958 = vadd.f32 %v957, %v895
      %v959 = vadd.f32 %v958, %v896
      %v960 = vadd.f32 %v959, %v897
      %v961 = vadd.f32 %v960, %v898
      %v962 = vadd.f32 %v961, %v899
      %v963 = vadd.f32 %v962, %v900
      %v964 = vadd.f32 %v963, %v901
      %v965 = vadd.f32 %v964, %v902
      %v966 = vadd.f32 %v965, %v903
      %v967 = vadd.f32 %v966, %v904
      %v968 = vadd.f32 %v967, %v905
      %v969 = vadd.f32 %v968, %v906
      %v970 = vadd.f32 %v969, %v907
      %v971 = vadd.f32 %v970, %v908
      %v972 = vadd.f32 %v971, %v909
      %v973 = vadd.f32 %v972, %v910
      %v974 = vadd.f32 %v973, %v911
      %v975 = vadd.f32 %v974, %v912
      %v976 = vadd.f32 %v975, %v913
      %v977 = vadd.f32 %v976, %v914
      %v978 = vadd.f32 %v977, %v915
      %v979 = vadd.f32 %v978, %v916
      %v980 = vadd.f32 %v979, %v917
      %v981 = vadd.f32 %v980, %v918
      %v982 = vadd.f32 %v981, %v919
      %v983 = vadd.f32 %v982, %v920
      %v984 = vadd.f32 %v983, %v921
      %v985 = vadd.f32 %v984, %v922
      %v986 = vadd.f32 %v985, %v923
      %v987 = vadd.f32 %v986, %v924
      %v988 = vadd.f32 %v987, %v925
      %v989 = vadd.f32 %v988, %v926
      %v990 = vadd.f32 %v989, %v927
      %v991 = vadd.f32 %v990, %v928
      %v992 = vadd.f32 %v991, %v929
      %v993 = vadd.f32 %v992, %v930
      %v994 = vadd.f32 %v993, %v931
      %v995 = vadd.f32 %v994, %v932
      %v996 = vadd.f32 %v995, %v933
      %v997 = vadd.f32 %v996, %v934
      %v998 = vadd.f32 %v997, %v935
      %v999 = vadd.f32 %v998, %v936
      %v1000 = vadd.f32 %v999, %v937
      %v1001 = vadd.f32 %v1000, %v938
      %v1002 = vadd.f32 %v1001, %v939
      %v1003 = vadd.f32 %v1002, %v940
      %v1004 = vadd.f32 %v1003, %v941
      %v1005 = vadd.f32 %v1004, %v942
      %v1006 = vadd.f32 %v1005, %v943
      %v1007 = vadd.f32 %v1006, %v944
      %v1008 = vadd.f32 %v1007, %v945
      %v1009 = vadd.f32 %v1008, %v946
      %v1010 = vadd.f32 %v1009, %v947
      %v1011 = vadd.f32 %v1010, %v948
      %v1012 = vadd.f32 %v1011, %v949
      %v1013 = vadd.f32 %v1012, %v950
      %v1014 = vadd.f32 %v1013, %v951
      %v1015 = vadd.f32 %v1014, %v952
      %v1016 = vadd.f32 %v1015, %v953
      %v1017 = vadd.f32 %v1016, %v954
      %v1018 = vadd.f32 %v1017, %v955
      %v1019 = vadd.f32 %v1018, %v956
      %v1020 = vrot.slane %v1019, 4
      %v1021 = vadd.f32 %v1019, %v1020
      %v1022 = vrot.slane %v1021, 2
      %v1023 = vadd.f32 %v1021, %v1022
      %v1024 = vrot.slane %v1023, 1
      %v1025 = vadd.f32 %v1023, %v1024
      %1026 = vst [vmem:[%s244] sm:$0xff] %v892
      %1027 = vst [vmem:[%s248] sm:$0xff] %v1025
      %s1028 = smul.u32 64, %s17
      %p1029 = scmp.lt.s32.totalorder %s1028, 191
      %s1030 = scalar_select %p1029, %s1028, 191
      %s1031 = smul.addr %s1030, 8
      %s1032 = scalar_lea.vmem %s3, %s1031
      %p1033 = scmp.lt.s32.totalorder %s17, 2
      %s1034 = scalar_select %p1033, %s17, 2
      %s1035 = smul.addr %s1034, 8
      %s1036 = scalar_lea.vmem %s4, %s1035
      %p1037 = scmp.lt.s32.totalorder %s17, 2
      %s1038 = scalar_select %p1037, %s17, 2
      %s1039 = smul.addr %s1038, 8
      %s1040 = scalar_lea.vmem %s5, %s1039
      // Predicated region
      $region33: #{generator_forward.35} parent=31 // pred_check
        %p1041 = pneg %p103
      $region34: #{generator_forward.35} parent=31 // pred_check_branch
        %1043 = sbr.rel (%p1041) target = $region36
      $region35: #{generator_forward.35} parent=31 // pred_region
        %s1044 = smul.u32 64, %s17
      $region36: #{generator_forward.35} parent=31 // pred_fallthru
        _
      // Predicated region
      $region37: #{generator_forward.35} parent=31 // pred_check
        %p1045 = pneg %p129
      $region38: #{generator_forward.35} parent=31 // pred_check_branch
        %1047 = sbr.rel (%p1045) target = $region40
      $region39: #{generator_forward.35} parent=31 // pred_region
        _
      $region40: #{generator_forward.35} parent=31 // pred_fallthru
        _
      // Predicated region
      $region41: #{generator_forward.35} parent=31 // pred_check
        %p1048 = pneg %p155
      $region42: #{generator_forward.35} parent=31 // pred_check_branch
        %1050 = sbr.rel (%p1048) target = $region44
      $region43: #{generator_forward.35} parent=31 // pred_region
        _
      $region44: #{generator_forward.35} parent=31 // pred_fallthru
        _
    $region32: #{generator_forward.35} parent=5 // pred_fallthru
      _
    %p1051 = scmp.le.s32.totalorder 2, %s12
    // Predicated region
    $region45: #{generator_forward.35} parent=5 // pred_check
      %p1052 = pneg %p1051
    $region46: #{generator_forward.35} parent=5 // pred_check_branch
      %1054 = sbr.rel (%p1052) target = $region48
    $region47: #{generator_forward.35} parent=5 // pred_region
      %s1055 = ssub.s32 %s12, 2
      // Predicated region
      $region49: #{generator_forward.35} parent=47 // pred_check
        %p1056 = pneg %p109
      $region50: #{generator_forward.35} parent=47 // pred_check_branch
        %1058 = sbr.rel (%p1056) target = $region52
      $region51: #{generator_forward.35} parent=47 // pred_region
        %s1059 = smul.u32 64, %s18
        %p1060 = scmp.lt.s32.totalorder %s1059, 191
        %s1061 = scalar_select %p1060, %s1059, 191
        %s1062 = smul.addr %s1061, 8
        %s1063 = scalar_lea.vmem %s3, %s1062
      $region52: #{generator_forward.35} parent=47 // pred_fallthru
        _
      // Predicated region
      $region53: #{generator_forward.35} parent=47 // pred_check
        %p1064 = pneg %p135
      $region54: #{generator_forward.35} parent=47 // pred_check_branch
        %1066 = sbr.rel (%p1064) target = $region56
      $region55: #{generator_forward.35} parent=47 // pred_region
        %p1067 = scmp.lt.s32.totalorder %s18, 2
        %s1068 = scalar_select %p1067, %s18, 2
        %s1069 = smul.addr %s1068, 8
        %s1070 = scalar_lea.vmem %s4, %s1069
      $region56: #{generator_forward.35} parent=47 // pred_fallthru
        _
      // Predicated region
      $region57: #{generator_forward.35} parent=47 // pred_check
        %p1071 = pneg %p161
      $region58: #{generator_forward.35} parent=47 // pred_check_branch
        %1073 = sbr.rel (%p1071) target = $region60
      $region59: #{generator_forward.35} parent=47 // pred_region
        %p1074 = scmp.lt.s32.totalorder %s18, 2
        %s1075 = scalar_select %p1074, %s18, 2
        %s1076 = smul.addr %s1075, 8
        %s1077 = scalar_lea.vmem %s5, %s1076
      $region60: #{generator_forward.35} parent=47 // pred_fallthru
        _
    $region48: #{generator_forward.35} parent=5 // pred_fallthru
      _
  $region6: #{generator_forward.35} parent=0 // loop_footer
    %s16 = sadd.s32 1, %s12
  $region7: #{generator_forward.35} parent=0 // loop_footer_branch
    %11 = sbr.rel target = $region3
  $region8: #{generator_forward.35} parent=0 // loop_exit
    _

// kernel: generator_forward.36
$region0: #{generator_forward.36}
  #allocation0 [shape = 'u32[]', space=smem, size = 0x4, offset = 0x4, fixed_abs, tag = 'smem constant byte address 0x4 - core index']
  #allocation1 [shape = 'u32[72,128]{1,0:T(1,128)}', space=vmem, size = 0x9000, scoped, tag = 'internal scratch']
  %s0 = inlined_call_operand.vmem [shape: f32[1536,128], index: 0, kind: input, shape index: {}]
  %s1 = inlined_call_operand.vmem [shape: f32[1,128], index: 1, kind: input, shape index: {}]
  %s2 = inlined_call_operand.vmem [shape: f32[1,128], index: 2, kind: input, shape index: {}]
  %s3 = inlined_call_operand.vmem [shape: f32[1536,128], index: 3, kind: output, shape index: {}]
  %s4 = sld [smem:[#allocation0]]
  $region45: #{generator_forward.36} parent=0
    _
  %s6 = ssub.s32 1, %s4
  %s7 = scalar_select 0, %s6, %s4
  loop: start=0, step=1, limit=5
  $region2: #{generator_forward.36} parent=0 // loop_pre_header
    _
  $region3: #{generator_forward.36} parent=0 // loop_header
    %s9 = sphi 0, %s13
    %p10 = scmp.ge.s32.totalorder %s9, 5
    %s19 = sphi 0, %s21
    %s22 = sphi 0, %s19
    %s23 = sphi 0, %s22
    %s39 = sphi 0, %s23
    %s43 = sphi 0, %s43
    %s45 = sphi 0, %s43
    %s46 = sphi 0, %s45
    %s60 = sphi 0, %s46
    %s64 = sphi 0, %s64
    %s66 = sphi 0, %s64
    %s67 = sphi 0, %s66
    %s81 = sphi 0, %s67
    %s87 = sphi 0, %s89
    %s90 = sphi 0, %s87
    %s91 = sphi 0, %s90
    %s107 = sphi 0, %s91
  $region4: #{generator_forward.36} parent=0 // loop_header_branch
    %12 = sbr.rel (%p10) target = $region8
  $region5: #{generator_forward.36} parent=0 // loop_body
    %s14 = ssub.s32 %s9, 1
    %s15 = ssub.s32 %s9, 2
    %s16 = sadd.s32 %s9, 1
    %s17 = ssub.s32 %s9, %s16
    %p18 = scmp.eq.s32.totalorder %s17, 0
    %s20 = sadd.s32 %s19, 1
    %s21 = scalar_select %p18, %s19, %s20
    %p24 = pneg %p18
    %p25 = scmp.eq.s32.totalorder %s9, 2
    %p26 = por %p24, %p25
    %p27 = scmp.ne.s32.totalorder %s19, %s22
    %p28 = scmp.eq.s32.totalorder %s9, 0
    %p29 = por %p27, %p28
    %p30 = scmp.ne.s32.totalorder %s19, %s22
    %p31 = scmp.eq.s32.totalorder %s14, 2
    %p32 = por %p30, %p31
    %p33 = scmp.ne.s32.totalorder %s22, %s23
    %p34 = scmp.eq.s32.totalorder %s14, 0
    %p35 = por %p33, %p34
    %p36 = scmp.ne.s32.totalorder %s22, %s23
    %p37 = scmp.eq.s32.totalorder %s15, 2
    %p38 = por %p36, %p37
    %p40 = scmp.ne.s32.totalorder %s23, %s39
    %p41 = scmp.eq.s32.totalorder %s15, 0
    %p42 = por %p40, %p41
    %s44 = sadd.s32 %s43, 1
    %p47 = scmp.eq.s32.totalorder %s9, 2
    %p48 = scmp.ne.s32.totalorder %s43, %s45
    %p49 = scmp.eq.s32.totalorder %s9, 0
    %p50 = por %p48, %p49
    %p51 = scmp.ne.s32.totalorder %s43, %s45
    %p52 = scmp.eq.s32.totalorder %s14, 2
    %p53 = por %p51, %p52
    %p54 = scmp.ne.s32.totalorder %s45, %s46
    %p55 = scmp.eq.s32.totalorder %s14, 0
    %p56 = por %p54, %p55
    %p57 = scmp.ne.s32.totalorder %s45, %s46
    %p58 = scmp.eq.s32.totalorder %s15, 2
    %p59 = por %p57, %p58
    %p61 = scmp.ne.s32.totalorder %s46, %s60
    %p62 = scmp.eq.s32.totalorder %s15, 0
    %p63 = por %p61, %p62
    %s65 = sadd.s32 %s64, 1
    %p68 = scmp.eq.s32.totalorder %s9, 2
    %p69 = scmp.ne.s32.totalorder %s64, %s66
    %p70 = scmp.eq.s32.totalorder %s9, 0
    %p71 = por %p69, %p70
    %p72 = scmp.ne.s32.totalorder %s64, %s66
    %p73 = scmp.eq.s32.totalorder %s14, 2
    %p74 = por %p72, %p73
    %p75 = scmp.ne.s32.totalorder %s66, %s67
    %p76 = scmp.eq.s32.totalorder %s14, 0
    %p77 = por %p75, %p76
    %p78 = scmp.ne.s32.totalorder %s66, %s67
    %p79 = scmp.eq.s32.totalorder %s15, 2
    %p80 = por %p78, %p79
    %p82 = scmp.ne.s32.totalorder %s67, %s81
    %p83 = scmp.eq.s32.totalorder %s15, 0
    %p84 = por %p82, %p83
    %s85 = ssub.s32 %s9, %s16
    %p86 = scmp.eq.s32.totalorder %s85, 0
    %s88 = sadd.s32 %s87, 1
    %s89 = scalar_select %p86, %s87, %s88
    %p92 = pneg %p86
    %p93 = scmp.eq.s32.totalorder %s9, 2
    %p94 = por %p92, %p93
    %p95 = scmp.ne.s32.totalorder %s87, %s90
    %p96 = scmp.eq.s32.totalorder %s9, 0
    %p97 = por %p95, %p96
    %p98 = scmp.ne.s32.totalorder %s87, %s90
    %p99 = scmp.eq.s32.totalorder %s14, 2
    %p100 = por %p98, %p99
    %p101 = scmp.ne.s32.totalorder %s90, %s91
    %p102 = scmp.eq.s32.totalorder %s14, 0
    %p103 = por %p101, %p102
    %p104 = scmp.ne.s32.totalorder %s90, %s91
    %p105 = scmp.eq.s32.totalorder %s15, 2
    %p106 = por %p104, %p105
    %p108 = scmp.ne.s32.totalorder %s91, %s107
    %p109 = scmp.eq.s32.totalorder %s15, 0
    %p110 = por %p108, %p109
    %p111 = scmp.le.s32.totalorder 1, %s9
    %p112 = scmp.lt.s32.totalorder %s9, 4
    %p113 = pnand %p111, %p112
    %p114 = pneg %p113
    // Predicated region
    $region9: #{generator_forward.36} parent=5 // pred_check
      _
    $region10: #{generator_forward.36} parent=5 // pred_check_branch
      %116 = sbr.rel (%p113) target = $region12
    $region11: #{generator_forward.36} parent=5 // pred_region
      %s117 = ssub.s32 %s9, 1
      // Predicated region
      $region13: #{generator_forward.36} parent=11 // pred_check
        %p118 = pneg %p56
      $region14: #{generator_forward.36} parent=11 // pred_check_branch
        %120 = sbr.rel (%p118) target = $region16
      $region15: #{generator_forward.36} parent=11 // pred_region
        _
      $region16: #{generator_forward.36} parent=11 // pred_fallthru
        _
      // Predicated region
      $region17: #{generator_forward.36} parent=11 // pred_check
        %p121 = pneg %p77
      $region18: #{generator_forward.36} parent=11 // pred_check_branch
        %123 = sbr.rel (%p121) target = $region20
      $region19: #{generator_forward.36} parent=11 // pred_region
        _
      $region20: #{generator_forward.36} parent=11 // pred_fallthru
        _
    $region12: #{generator_forward.36} parent=5 // pred_fallthru
      _
    %p124 = scmp.lt.s32.totalorder %s9, 3
    // Predicated region
    $region21: #{generator_forward.36} parent=5 // pred_check
      %p125 = pneg %p124
    $region22: #{generator_forward.36} parent=5 // pred_check_branch
      %127 = sbr.rel (%p125) target = $region24
    $region23: #{generator_forward.36} parent=5 // pred_region
      // Predicated region
      $region25: #{generator_forward.36} parent=23 // pred_check
        %p128 = pneg %p29
      $region26: #{generator_forward.36} parent=23 // pred_check_branch
        %130 = sbr.rel (%p128) target = $region28
      $region27: #{generator_forward.36} parent=23 // pred_region
        %s131 = smul.u32 64, %s9
        %p132 = scmp.lt.s32.totalorder %s131, 191
        %s133 = scalar_select %p132, %s131, 191
        %s134 = smul.addr %s133, 8
        %s135 = scalar_lea.vmem %s0, %s134
        %s136 = smul.u32 64, %s9
      $region28: #{generator_forward.36} parent=23 // pred_fallthru
        _
    $region24: #{generator_forward.36} parent=5 // pred_fallthru
      _
    %p137 = scmp.le.s32.totalorder 1, %s9
    %p138 = scmp.lt.s32.totalorder %s9, 4
    %p139 = pnand %p137, %p138
    %p140 = pneg %p139
    // Predicated region
    $region29: #{generator_forward.36} parent=5 // pred_check
      _
    $region30: #{generator_forward.36} parent=5 // pred_check_branch
      %142 = sbr.rel (%p139) target = $region32
    $region31: #{generator_forward.36} parent=5 // pred_region
      %s143 = ssub.s32 %s9, 1
      %s144 = smul.u32 64, %s14
      %p145 = scmp.lt.s32.totalorder %s144, 191
      %s146 = scalar_select %p145, %s144, 191
      %s147 = smul.addr %s146, 8
      %s148 = scalar_lea.vmem %s0, %s147
      %p149 = pneg %p35
      %p150 = pneg %p32
      %p151 = pneg %p56
      %p152 = pneg %p53
      %p153 = pneg %p77
      %p154 = pneg %p74
      %p155 = pneg %p103
      %p156 = pneg %p100
      %s157 = smul.u32 64, %s14
      %p158 = scmp.lt.s32.totalorder %s157, 191
      %s159 = scalar_select %p158, %s157, 191
      %s160 = smul.addr %s159, 8
      %s161 = scalar_lea.vmem %s3, %s160
      %s162 = smul.u32 64, %s14
      %p163 = scmp.lt.s32.totalorder %s162, 191
      %s164 = scalar_select %p163, %s162, 191
      %s165 = smul.addr %s164, 8
      %s166 = scalar_lea.vmem %s0, %s165
      %s167 = smul.u32 64, %s14
      %s168 = smul.u32 64, %s14
      %p169 = scmp.lt.s32.totalorder %s168, 191
      %s170 = scalar_select %p169, %s168, 191
      %s171 = smul.addr %s170, 8
      %s172 = scalar_lea.vmem %s3, %s171
      %s173 = smul.u32 64, %s14
      %v174 = vld [vmem:[%s166] sm:$0xff]
      %v175 = vld [vmem:[%s166 + $0x8] sm:$0xff]
      %v176 = vld [vmem:[%s166 + $0x10] sm:$0xff]
      %v177 = vld [vmem:[%s166 + $0x18] sm:$0xff]
      %v178 = vld [vmem:[%s166 + $0x20] sm:$0xff]
      %v179 = vld [vmem:[%s166 + $0x28] sm:$0xff]
      %v180 = vld [vmem:[%s166 + $0x30] sm:$0xff]
      %v181 = vld [vmem:[%s166 + $0x38] sm:$0xff]
      %v182 = vld [vmem:[%s166 + $0x40] sm:$0xff]
      %v183 = vld [vmem:[%s166 + $0x48] sm:$0xff]
      %v184 = vld [vmem:[%s166 + $0x50] sm:$0xff]
      %v185 = vld [vmem:[%s166 + $0x58] sm:$0xff]
      %v186 = vld [vmem:[%s166 + $0x60] sm:$0xff]
      %v187 = vld [vmem:[%s166 + $0x68] sm:$0xff]
      %v188 = vld [vmem:[%s166 + $0x70] sm:$0xff]
      %v189 = vld [vmem:[%s166 + $0x78] sm:$0xff]
      %v190 = vld [vmem:[%s166 + $0x80] sm:$0xff]
      %v191 = vld [vmem:[%s166 + $0x88] sm:$0xff]
      %v192 = vld [vmem:[%s166 + $0x90] sm:$0xff]
      %v193 = vld [vmem:[%s166 + $0x98] sm:$0xff]
      %v194 = vld [vmem:[%s166 + $0xa0] sm:$0xff]
      %v195 = vld [vmem:[%s166 + $0xa8] sm:$0xff]
      %v196 = vld [vmem:[%s166 + $0xb0] sm:$0xff]
      %v197 = vld [vmem:[%s166 + $0xb8] sm:$0xff]
      %v198 = vld [vmem:[%s166 + $0xc0] sm:$0xff]
      %v199 = vld [vmem:[%s166 + $0xc8] sm:$0xff]
      %v200 = vld [vmem:[%s166 + $0xd0] sm:$0xff]
      %v201 = vld [vmem:[%s166 + $0xd8] sm:$0xff]
      %v202 = vld [vmem:[%s166 + $0xe0] sm:$0xff]
      %v203 = vld [vmem:[%s166 + $0xe8] sm:$0xff]
      %v204 = vld [vmem:[%s166 + $0xf0] sm:$0xff]
      %v205 = vld [vmem:[%s166 + $0xf8] sm:$0xff]
      %v206 = vld [vmem:[%s166 + $0x100] sm:$0xff]
      %v207 = vld [vmem:[%s166 + $0x108] sm:$0xff]
      %v208 = vld [vmem:[%s166 + $0x110] sm:$0xff]
      %v209 = vld [vmem:[%s166 + $0x118] sm:$0xff]
      %v210 = vld [vmem:[%s166 + $0x120] sm:$0xff]
      %v211 = vld [vmem:[%s166 + $0x128] sm:$0xff]
      %v212 = vld [vmem:[%s166 + $0x130] sm:$0xff]
      %v213 = vld [vmem:[%s166 + $0x138] sm:$0xff]
      %v214 = vld [vmem:[%s166 + $0x140] sm:$0xff]
      %v215 = vld [vmem:[%s166 + $0x148] sm:$0xff]
      %v216 = vld [vmem:[%s166 + $0x150] sm:$0xff]
      %v217 = vld [vmem:[%s166 + $0x158] sm:$0xff]
      %v218 = vld [vmem:[%s166 + $0x160] sm:$0xff]
      %v219 = vld [vmem:[%s166 + $0x168] sm:$0xff]
      %v220 = vld [vmem:[%s166 + $0x170] sm:$0xff]
      %v221 = vld [vmem:[%s166 + $0x178] sm:$0xff]
      %v222 = vld [vmem:[%s166 + $0x180] sm:$0xff]
      %v223 = vld [vmem:[%s166 + $0x188] sm:$0xff]
      %v224 = vld [vmem:[%s166 + $0x190] sm:$0xff]
      %v225 = vld [vmem:[%s166 + $0x198] sm:$0xff]
      %v226 = vld [vmem:[%s166 + $0x1a0] sm:$0xff]
      %v227 = vld [vmem:[%s166 + $0x1a8] sm:$0xff]
      %v228 = vld [vmem:[%s166 + $0x1b0] sm:$0xff]
      %v229 = vld [vmem:[%s166 + $0x1b8] sm:$0xff]
      %v230 = vld [vmem:[%s166 + $0x1c0] sm:$0xff]
      %v231 = vld [vmem:[%s166 + $0x1c8] sm:$0xff]
      %v232 = vld [vmem:[%s166 + $0x1d0] sm:$0xff]
      %v233 = vld [vmem:[%s166 + $0x1d8] sm:$0xff]
      %v234 = vld [vmem:[%s166 + $0x1e0] sm:$0xff]
      %v235 = vld [vmem:[%s166 + $0x1e8] sm:$0xff]
      %v236 = vld [vmem:[%s166 + $0x1f0] sm:$0xff]
      %v237 = vld [vmem:[%s166 + $0x1f8] sm:$0xff]
      %v238 = vld [vmem:[%s1] sm:$0x1]
      %v240 = vperm.slane %v238, 0
      %v242 = vmul.f32 %v174, %v240
      %v243 = vmul.f32 %v175, %v240
      %v244 = vmul.f32 %v176, %v240
      %v245 = vmul.f32 %v177, %v240
      %v246 = vmul.f32 %v178, %v240
      %v247 = vmul.f32 %v179, %v240
      %v248 = vmul.f32 %v180, %v240
      %v249 = vmul.f32 %v181, %v240
      %v250 = vmul.f32 %v182, %v240
      %v251 = vmul.f32 %v183, %v240
      %v252 = vmul.f32 %v184, %v240
      %v253 = vmul.f32 %v185, %v240
      %v254 = vmul.f32 %v186, %v240
      %v255 = vmul.f32 %v187, %v240
      %v256 = vmul.f32 %v188, %v240
      %v257 = vmul.f32 %v189, %v240
      %v258 = vmul.f32 %v190, %v240
      %v259 = vmul.f32 %v191, %v240
      %v260 = vmul.f32 %v192, %v240
      %v261 = vmul.f32 %v193, %v240
      %v262 = vmul.f32 %v194, %v240
      %v263 = vmul.f32 %v195, %v240
      %v264 = vmul.f32 %v196, %v240
      %v265 = vmul.f32 %v197, %v240
      %v266 = vmul.f32 %v198, %v240
      %v267 = vmul.f32 %v199, %v240
      %v268 = vmul.f32 %v200, %v240
      %v269 = vmul.f32 %v201, %v240
      %v270 = vmul.f32 %v202, %v240
      %v271 = vmul.f32 %v203, %v240
      %v272 = vmul.f32 %v204, %v240
      %v273 = vmul.f32 %v205, %v240
      %v274 = vmul.f32 %v206, %v240
      %v275 = vmul.f32 %v207, %v240
      %v276 = vmul.f32 %v208, %v240
      %v277 = vmul.f32 %v209, %v240
      %v278 = vmul.f32 %v210, %v240
      %v279 = vmul.f32 %v211, %v240
      %v280 = vmul.f32 %v212, %v240
      %v281 = vmul.f32 %v213, %v240
      %v282 = vmul.f32 %v214, %v240
      %v283 = vmul.f32 %v215, %v240
      %v284 = vmul.f32 %v216, %v240
      %v285 = vmul.f32 %v217, %v240
      %v286 = vmul.f32 %v218, %v240
      %v287 = vmul.f32 %v219, %v240
      %v288 = vmul.f32 %v220, %v240
      %v289 = vmul.f32 %v221, %v240
      %v290 = vmul.f32 %v222, %v240
      %v291 = vmul.f32 %v223, %v240
      %v292 = vmul.f32 %v224, %v240
      %v293 = vmul.f32 %v225, %v240
      %v294 = vmul.f32 %v226, %v240
      %v295 = vmul.f32 %v227, %v240
      %v296 = vmul.f32 %v228, %v240
      %v297 = vmul.f32 %v229, %v240
      %v298 = vmul.f32 %v230, %v240
      %v299 = vmul.f32 %v231, %v240
      %v300 = vmul.f32 %v232, %v240
      %v301 = vmul.f32 %v233, %v240
      %v302 = vmul.f32 %v234, %v240
      %v303 = vmul.f32 %v235, %v240
      %v304 = vmul.f32 %v236, %v240
      %v305 = vmul.f32 %v237, %v240
      %v306 = vld [vmem:[%s2] sm:$0x1]
      %v308 = vperm.slane %v306, 0
      %v310 = vadd.f32 %v242, %v308
      %v311 = vadd.f32 %v243, %v308
      %v312 = vadd.f32 %v244, %v308
      %v313 = vadd.f32 %v245, %v308
      %v314 = vadd.f32 %v246, %v308
      %v315 = vadd.f32 %v247, %v308
      %v316 = vadd.f32 %v248, %v308
      %v317 = vadd.f32 %v249, %v308
      %v318 = vadd.f32 %v250, %v308
      %v319 = vadd.f32 %v251, %v308
      %v320 = vadd.f32 %v252, %v308
      %v321 = vadd.f32 %v253, %v308
      %v322 = vadd.f32 %v254, %v308
      %v323 = vadd.f32 %v255, %v308
      %v324 = vadd.f32 %v256, %v308
      %v325 = vadd.f32 %v257, %v308
      %v326 = vadd.f32 %v258, %v308
      %v327 = vadd.f32 %v259, %v308
      %v328 = vadd.f32 %v260, %v308
      %v329 = vadd.f32 %v261, %v308
      %v330 = vadd.f32 %v262, %v308
      %v331 = vadd.f32 %v263, %v308
      %v332 = vadd.f32 %v264, %v308
      %v333 = vadd.f32 %v265, %v308
      %v334 = vadd.f32 %v266, %v308
      %v335 = vadd.f32 %v267, %v308
      %v336 = vadd.f32 %v268, %v308
      %v337 = vadd.f32 %v269, %v308
      %v338 = vadd.f32 %v270, %v308
      %v339 = vadd.f32 %v271, %v308
      %v340 = vadd.f32 %v272, %v308
      %v341 = vadd.f32 %v273, %v308
      %v342 = vadd.f32 %v274, %v308
      %v343 = vadd.f32 %v275, %v308
      %v344 = vadd.f32 %v276, %v308
      %v345 = vadd.f32 %v277, %v308
      %v346 = vadd.f32 %v278, %v308
      %v347 = vadd.f32 %v279, %v308
      %v348 = vadd.f32 %v280, %v308
      %v349 = vadd.f32 %v281, %v308
      %v350 = vadd.f32 %v282, %v308
      %v351 = vadd.f32 %v283, %v308
      %v352 = vadd.f32 %v284, %v308
      %v353 = vadd.f32 %v285, %v308
      %v354 = vadd.f32 %v286, %v308
      %v355 = vadd.f32 %v287, %v308
      %v356 = vadd.f32 %v288, %v308
      %v357 = vadd.f32 %v289, %v308
      %v358 = vadd.f32 %v290, %v308
      %v359 = vadd.f32 %v291, %v308
      %v360 = vadd.f32 %v292, %v308
      %v361 = vadd.f32 %v293, %v308
      %v362 = vadd.f32 %v294, %v308
      %v363 = vadd.f32 %v295, %v308
      %v364 = vadd.f32 %v296, %v308
      %v365 = vadd.f32 %v297, %v308
      %v366 = vadd.f32 %v298, %v308
      %v367 = vadd.f32 %v299, %v308
      %v368 = vadd.f32 %v300, %v308
      %v369 = vadd.f32 %v301, %v308
      %v370 = vadd.f32 %v302, %v308
      %v371 = vadd.f32 %v303, %v308
      %v372 = vadd.f32 %v304, %v308
      %v373 = vadd.f32 %v305, %v308
      %v374 = vmax.f32 %v310, 0.0
      %v375 = vmax.f32 %v311, 0.0
      %v376 = vmax.f32 %v312, 0.0
      %v377 = vmax.f32 %v313, 0.0
      %v378 = vmax.f32 %v314, 0.0
      %v379 = vmax.f32 %v315, 0.0
      %v380 = vmax.f32 %v316, 0.0
      %v381 = vmax.f32 %v317, 0.0
      %v382 = vmax.f32 %v318, 0.0
      %v383 = vmax.f32 %v319, 0.0
      %v384 = vmax.f32 %v320, 0.0
      %v385 = vmax.f32 %v321, 0.0
      %v386 = vmax.f32 %v322, 0.0
      %v387 = vmax.f32 %v323, 0.0
      %v388 = vmax.f32 %v324, 0.0
      %v389 = vmax.f32 %v325, 0.0
      %v390 = vmax.f32 %v326, 0.0
      %v391 = vmax.f32 %v327, 0.0
      %v392 = vmax.f32 %v328, 0.0
      %v393 = vmax.f32 %v329, 0.0
      %v394 = vmax.f32 %v330, 0.0
      %v395 = vmax.f32 %v331, 0.0
      %v396 = vmax.f32 %v332, 0.0
      %v397 = vmax.f32 %v333, 0.0
      %v398 = vmax.f32 %v334, 0.0
      %v399 = vmax.f32 %v335, 0.0
      %v400 = vmax.f32 %v336, 0.0
      %v401 = vmax.f32 %v337, 0.0
      %v402 = vmax.f32 %v338, 0.0
      %v403 = vmax.f32 %v339, 0.0
      %v404 = vmax.f32 %v340, 0.0
      %v405 = vmax.f32 %v341, 0.0
      %v406 = vmax.f32 %v342, 0.0
      %v407 = vmax.f32 %v343, 0.0
      %v408 = vmax.f32 %v344, 0.0
      %v409 = vmax.f32 %v345, 0.0
      %v410 = vmax.f32 %v346, 0.0
      %v411 = vmax.f32 %v347, 0.0
      %v412 = vmax.f32 %v348, 0.0
      %v413 = vmax.f32 %v349, 0.0
      %v414 = vmax.f32 %v350, 0.0
      %v415 = vmax.f32 %v351, 0.0
      %v416 = vmax.f32 %v352, 0.0
      %v417 = vmax.f32 %v353, 0.0
      %v418 = vmax.f32 %v354, 0.0
      %v419 = vmax.f32 %v355, 0.0
      %v420 = vmax.f32 %v356, 0.0
      %v421 = vmax.f32 %v357, 0.0
      %v422 = vmax.f32 %v358, 0.0
      %v423 = vmax.f32 %v359, 0.0
      %v424 = vmax.f32 %v360, 0.0
      %v425 = vmax.f32 %v361, 0.0
      %v426 = vmax.f32 %v362, 0.0
      %v427 = vmax.f32 %v363, 0.0
      %v428 = vmax.f32 %v364, 0.0
      %v429 = vmax.f32 %v365, 0.0
      %v430 = vmax.f32 %v366, 0.0
      %v431 = vmax.f32 %v367, 0.0
      %v432 = vmax.f32 %v368, 0.0
      %v433 = vmax.f32 %v369, 0.0
      %v434 = vmax.f32 %v370, 0.0
      %v435 = vmax.f32 %v371, 0.0
      %v436 = vmax.f32 %v372, 0.0
      %v437 = vmax.f32 %v373, 0.0
      %438 = vst [vmem:[%s172] sm:$0xff] %v374
      %439 = vst [vmem:[%s172 + $0x8] sm:$0xff] %v375
      %440 = vst [vmem:[%s172 + $0x10] sm:$0xff] %v376
      %441 = vst [vmem:[%s172 + $0x18] sm:$0xff] %v377
      %442 = vst [vmem:[%s172 + $0x20] sm:$0xff] %v378
      %443 = vst [vmem:[%s172 + $0x28] sm:$0xff] %v379
      %444 = vst [vmem:[%s172 + $0x30] sm:$0xff] %v380
      %445 = vst [vmem:[%s172 + $0x38] sm:$0xff] %v381
      %446 = vst [vmem:[%s172 + $0x40] sm:$0xff] %v382
      %447 = vst [vmem:[%s172 + $0x48] sm:$0xff] %v383
      %448 = vst [vmem:[%s172 + $0x50] sm:$0xff] %v384
      %449 = vst [vmem:[%s172 + $0x58] sm:$0xff] %v385
      %450 = vst [vmem:[%s172 + $0x60] sm:$0xff] %v386
      %451 = vst [vmem:[%s172 + $0x68] sm:$0xff] %v387
      %452 = vst [vmem:[%s172 + $0x70] sm:$0xff] %v388
      %453 = vst [vmem:[%s172 + $0x78] sm:$0xff] %v389
      %454 = vst [vmem:[%s172 + $0x80] sm:$0xff] %v390
      %455 = vst [vmem:[%s172 + $0x88] sm:$0xff] %v391
      %456 = vst [vmem:[%s172 + $0x90] sm:$0xff] %v392
      %457 = vst [vmem:[%s172 + $0x98] sm:$0xff] %v393
      %458 = vst [vmem:[%s172 + $0xa0] sm:$0xff] %v394
      %459 = vst [vmem:[%s172 + $0xa8] sm:$0xff] %v395
      %460 = vst [vmem:[%s172 + $0xb0] sm:$0xff] %v396
      %461 = vst [vmem:[%s172 + $0xb8] sm:$0xff] %v397
      %462 = vst [vmem:[%s172 + $0xc0] sm:$0xff] %v398
      %463 = vst [vmem:[%s172 + $0xc8] sm:$0xff] %v399
      %464 = vst [vmem:[%s172 + $0xd0] sm:$0xff] %v400
      %465 = vst [vmem:[%s172 + $0xd8] sm:$0xff] %v401
      %466 = vst [vmem:[%s172 + $0xe0] sm:$0xff] %v402
      %467 = vst [vmem:[%s172 + $0xe8] sm:$0xff] %v403
      %468 = vst [vmem:[%s172 + $0xf0] sm:$0xff] %v404
      %469 = vst [vmem:[%s172 + $0xf8] sm:$0xff] %v405
      %470 = vst [vmem:[%s172 + $0x100] sm:$0xff] %v406
      %471 = vst [vmem:[%s172 + $0x108] sm:$0xff] %v407
      %472 = vst [vmem:[%s172 + $0x110] sm:$0xff] %v408
      %473 = vst [vmem:[%s172 + $0x118] sm:$0xff] %v409
      %474 = vst [vmem:[%s172 + $0x120] sm:$0xff] %v410
      %475 = vst [vmem:[%s172 + $0x128] sm:$0xff] %v411
      %476 = vst [vmem:[%s172 + $0x130] sm:$0xff] %v412
      %477 = vst [vmem:[%s172 + $0x138] sm:$0xff] %v413
      %478 = vst [vmem:[%s172 + $0x140] sm:$0xff] %v414
      %479 = vst [vmem:[%s172 + $0x148] sm:$0xff] %v415
      %480 = vst [vmem:[%s172 + $0x150] sm:$0xff] %v416
      %481 = vst [vmem:[%s172 + $0x158] sm:$0xff] %v417
      %482 = vst [vmem:[%s172 + $0x160] sm:$0xff] %v418
      %483 = vst [vmem:[%s172 + $0x168] sm:$0xff] %v419
      %484 = vst [vmem:[%s172 + $0x170] sm:$0xff] %v420
      %485 = vst [vmem:[%s172 + $0x178] sm:$0xff] %v421
      %486 = vst [vmem:[%s172 + $0x180] sm:$0xff] %v422
      %487 = vst [vmem:[%s172 + $0x188] sm:$0xff] %v423
      %488 = vst [vmem:[%s172 + $0x190] sm:$0xff] %v424
      %489 = vst [vmem:[%s172 + $0x198] sm:$0xff] %v425
      %490 = vst [vmem:[%s172 + $0x1a0] sm:$0xff] %v426
      %491 = vst [vmem:[%s172 + $0x1a8] sm:$0xff] %v427
      %492 = vst [vmem:[%s172 + $0x1b0] sm:$0xff] %v428
      %493 = vst [vmem:[%s172 + $0x1b8] sm:$0xff] %v429
      %494 = vst [vmem:[%s172 + $0x1c0] sm:$0xff] %v430
      %495 = vst [vmem:[%s172 + $0x1c8] sm:$0xff] %v431
      %496 = vst [vmem:[%s172 + $0x1d0] sm:$0xff] %v432
      %497 = vst [vmem:[%s172 + $0x1d8] sm:$0xff] %v433
      %498 = vst [vmem:[%s172 + $0x1e0] sm:$0xff] %v434
      %499 = vst [vmem:[%s172 + $0x1e8] sm:$0xff] %v435
      %500 = vst [vmem:[%s172 + $0x1f0] sm:$0xff] %v436
      %501 = vst [vmem:[%s172 + $0x1f8] sm:$0xff] %v437
      %s502 = smul.u32 64, %s14
      %p503 = scmp.lt.s32.totalorder %s502, 191
      %s504 = scalar_select %p503, %s502, 191
      %s505 = smul.addr %s504, 8
      %s506 = scalar_lea.vmem %s3, %s505
      // Predicated region
      $region33: #{generator_forward.36} parent=31 // pred_check
        %p507 = pneg %p100
      $region34: #{generator_forward.36} parent=31 // pred_check_branch
        %509 = sbr.rel (%p507) target = $region36
      $region35: #{generator_forward.36} parent=31 // pred_region
        %s510 = smul.u32 64, %s14
      $region36: #{generator_forward.36} parent=31 // pred_fallthru
        _
    $region32: #{generator_forward.36} parent=5 // pred_fallthru
      _
    %p511 = scmp.le.s32.totalorder 2, %s9
    // Predicated region
    $region37: #{generator_forward.36} parent=5 // pred_check
      %p512 = pneg %p511
    $region38: #{generator_forward.36} parent=5 // pred_check_branch
      %514 = sbr.rel (%p512) target = $region40
    $region39: #{generator_forward.36} parent=5 // pred_region
      %s515 = ssub.s32 %s9, 2
      // Predicated region
      $region41: #{generator_forward.36} parent=39 // pred_check
        %p516 = pneg %p106
      $region42: #{generator_forward.36} parent=39 // pred_check_branch
        %518 = sbr.rel (%p516) target = $region44
      $region43: #{generator_forward.36} parent=39 // pred_region
        %s519 = smul.u32 64, %s15
        %p520 = scmp.lt.s32.totalorder %s519, 191
        %s521 = scalar_select %p520, %s519, 191
        %s522 = smul.addr %s521, 8
        %s523 = scalar_lea.vmem %s3, %s522
      $region44: #{generator_forward.36} parent=39 // pred_fallthru
        _
    $region40: #{generator_forward.36} parent=5 // pred_fallthru
      _
  $region6: #{generator_forward.36} parent=0 // loop_footer
    %s13 = sadd.s32 1, %s9
  $region7: #{generator_forward.36} parent=0 // loop_footer_branch
    %8 = sbr.rel target = $region3
  $region8: #{generator_forward.36} parent=0 // loop_exit
    _

// kernel: generator_forward.37
$region0: #{generator_forward.37}
  #allocation0 [shape = 'u32[]', space=smem, size = 0x4, offset = 0x4, fixed_abs, tag = 'smem constant byte address 0x4 - core index']
  #allocation1 [shape = 'u32[72,128]{1,0:T(1,128)}', space=vmem, size = 0x9000, scoped, tag = 'internal scratch']
  %s0 = inlined_call_operand.vmem [shape: bf16[4608,36], index: 0, kind: input, shape index: {}]
  %s1 = inlined_call_operand.vmem [shape: bf16[36,128], index: 1, kind: input, shape index: {}]
  %s2 = inlined_call_operand.vmem [shape: f32[1,128], index: 2, kind: input, shape index: {}]
  %s3 = inlined_call_operand.vmem [shape: f32[4608,128], index: 3, kind: output, shape index: {0}]
  %s4 = inlined_call_operand.hbm [shape: f32[72,128], index: 4, kind: output, shape index: {1}]
  %s5 = inlined_call_operand.hbm [shape: f32[72,128], index: 5, kind: output, shape index: {2}]
  %6 = xla_tuple %s3, %s4, %s5
  %s7 = sld [smem:[#allocation0]]
  $region61: #{generator_forward.37} parent=0
    _
  %s9 = ssub.s32 1, %s7
  %s10 = scalar_select 0, %s9, %s7
  $region1: #{generator_forward.37} parent=0
    #allocation2 [shape = 'u8[8192]{0}', space=vmem, size = 0x2000, scoped, tag = 'output window, operand 1']
    #allocation3 [shape = 's32[2]{0}', space=sflag, size = 0x8, scoped, tag = 'scoped memory for generator_forward.37']
    #allocation4 [shape = 'u8[8192]{0}', space=vmem, size = 0x2000, scoped, tag = 'output window, operand 2']
    #allocation5 [shape = 's32[2]{0}', space=sflag, size = 0x8, scoped, tag = 'scoped memory for generator_forward.37']
    %11 = vsyncpa [#allocation3], 0
    %s12 = scalar_lea.sflag [#allocation3], 1
    %13 = vsyncpa %s12, 0
    %14 = vsyncpa [#allocation5], 0
    %s15 = scalar_lea.sflag [#allocation5], 1
    %16 = vsyncpa %s15, 0
    loop: start=0, step=1, limit=11
    $region2: #{generator_forward.37} parent=1 // loop_pre_header
      _
    $region3: #{generator_forward.37} parent=1 // loop_header
      %s18 = sphi 0, %s22
      %p19 = scmp.ge.s32.totalorder %s18, 11
      %s28 = sphi 0, %s30
      %s31 = sphi 0, %s28
      %s32 = sphi 0, %s31
      %s48 = sphi 0, %s32
      %s52 = sphi 0, %s52
      %s54 = sphi 0, %s52
      %s55 = sphi 0, %s54
      %s69 = sphi 0, %s55
      %s73 = sphi 0, %s73
      %s75 = sphi 0, %s73
      %s76 = sphi 0, %s75
      %s90 = sphi 0, %s76
      %s96 = sphi 0, %s98
      %s99 = sphi 0, %s96
      %s100 = sphi 0, %s99
      %s116 = sphi 0, %s100
      %s122 = sphi 0, %s124
      %s125 = sphi 0, %s122
      %s126 = sphi 0, %s125
      %s142 = sphi 0, %s126
      %s148 = sphi 0, %s150
      %s151 = sphi 0, %s148
      %s152 = sphi 0, %s151
      %s168 = sphi 0, %s152
    $region4: #{generator_forward.37} parent=1 // loop_header_branch
      %21 = sbr.rel (%p19) target = $region8
    $region5: #{generator_forward.37} parent=1 // loop_body
      %s23 = ssub.s32 %s18, 1
      %s24 = ssub.s32 %s18, 2
      %s25 = sadd.s32 %s18, 1
      %s26 = ssub.s32 %s18, %s25
      %p27 = scmp.eq.s32.totalorder %s26, 0
      %s29 = sadd.s32 %s28, 1
      %s30 = scalar_select %p27, %s28, %s29
      %p33 = pneg %p27
      %p34 = scmp.eq.s32.totalorder %s18, 8
      %p35 = por %p33, %p34
      %p36 = scmp.ne.s32.totalorder %s28, %s31
      %p37 = scmp.eq.s32.totalorder %s18, 0
      %p38 = por %p36, %p37
      %p39 = scmp.ne.s32.totalorder %s28, %s31
      %p40 = scmp.eq.s32.totalorder %s23, 8
      %p41 = por %p39, %p40
      %p42 = scmp.ne.s32.totalorder %s31, %s32
      %p43 = scmp.eq.s32.totalorder %s23, 0
      %p44 = por %p42, %p43
      %p45 = scmp.ne.s32.totalorder %s31, %s32
      %p46 = scmp.eq.s32.totalorder %s24, 8
      %p47 = por %p45, %p46
      %p49 = scmp.ne.s32.totalorder %s32, %s48
      %p50 = scmp.eq.s32.totalorder %s24, 0
      %p51 = por %p49, %p50
      %s53 = sadd.s32 %s52, 1
      %p56 = scmp.eq.s32.totalorder %s18, 8
      %p57 = scmp.ne.s32.totalorder %s52, %s54
      %p58 = scmp.eq.s32.totalorder %s18, 0
      %p59 = por %p57, %p58
      %p60 = scmp.ne.s32.totalorder %s52, %s54
      %p61 = scmp.eq.s32.totalorder %s23, 8
      %p62 = por %p60, %p61
      %p63 = scmp.ne.s32.totalorder %s54, %s55
      %p64 = scmp.eq.s32.totalorder %s23, 0
      %p65 = por %p63, %p64
      %p66 = scmp.ne.s32.totalorder %s54, %s55
      %p67 = scmp.eq.s32.totalorder %s24, 8
      %p68 = por %p66, %p67
      %p70 = scmp.ne.s32.totalorder %s55, %s69
      %p71 = scmp.eq.s32.totalorder %s24, 0
      %p72 = por %p70, %p71
      %s74 = sadd.s32 %s73, 1
      %p77 = scmp.eq.s32.totalorder %s18, 8
      %p78 = scmp.ne.s32.totalorder %s73, %s75
      %p79 = scmp.eq.s32.totalorder %s18, 0
      %p80 = por %p78, %p79
      %p81 = scmp.ne.s32.totalorder %s73, %s75
      %p82 = scmp.eq.s32.totalorder %s23, 8
      %p83 = por %p81, %p82
      %p84 = scmp.ne.s32.totalorder %s75, %s76
      %p85 = scmp.eq.s32.totalorder %s23, 0
      %p86 = por %p84, %p85
      %p87 = scmp.ne.s32.totalorder %s75, %s76
      %p88 = scmp.eq.s32.totalorder %s24, 8
      %p89 = por %p87, %p88
      %p91 = scmp.ne.s32.totalorder %s76, %s90
      %p92 = scmp.eq.s32.totalorder %s24, 0
      %p93 = por %p91, %p92
      %s94 = ssub.s32 %s18, %s25
      %p95 = scmp.eq.s32.totalorder %s94, 0
      %s97 = sadd.s32 %s96, 1
      %s98 = scalar_select %p95, %s96, %s97
      %p101 = pneg %p95
      %p102 = scmp.eq.s32.totalorder %s18, 8
      %p103 = por %p101, %p102
      %p104 = scmp.ne.s32.totalorder %s96, %s99
      %p105 = scmp.eq.s32.totalorder %s18, 0
      %p106 = por %p104, %p105
      %p107 = scmp.ne.s32.totalorder %s96, %s99
      %p108 = scmp.eq.s32.totalorder %s23, 8
      %p109 = por %p107, %p108
      %p110 = scmp.ne.s32.totalorder %s99, %s100
      %p111 = scmp.eq.s32.totalorder %s23, 0
      %p112 = por %p110, %p111
      %p113 = scmp.ne.s32.totalorder %s99, %s100
      %p114 = scmp.eq.s32.totalorder %s24, 8
      %p115 = por %p113, %p114
      %p117 = scmp.ne.s32.totalorder %s100, %s116
      %p118 = scmp.eq.s32.totalorder %s24, 0
      %p119 = por %p117, %p118
      %s120 = ssub.s32 %s18, %s25
      %p121 = scmp.eq.s32.totalorder %s120, 0
      %s123 = sadd.s32 %s122, 1
      %s124 = scalar_select %p121, %s122, %s123
      %p127 = pneg %p121
      %p128 = scmp.eq.s32.totalorder %s18, 8
      %p129 = por %p127, %p128
      %p130 = scmp.ne.s32.totalorder %s122, %s125
      %p131 = scmp.eq.s32.totalorder %s18, 0
      %p132 = por %p130, %p131
      %p133 = scmp.ne.s32.totalorder %s122, %s125
      %p134 = scmp.eq.s32.totalorder %s23, 8
      %p135 = por %p133, %p134
      %p136 = scmp.ne.s32.totalorder %s125, %s126
      %p137 = scmp.eq.s32.totalorder %s23, 0
      %p138 = por %p136, %p137
      %p139 = scmp.ne.s32.totalorder %s125, %s126
      %p140 = scmp.eq.s32.totalorder %s24, 8
      %p141 = por %p139, %p140
      %p143 = scmp.ne.s32.totalorder %s126, %s142
      %p144 = scmp.eq.s32.totalorder %s24, 0
      %p145 = por %p143, %p144
      %s146 = ssub.s32 %s18, %s25
      %p147 = scmp.eq.s32.totalorder %s146, 0
      %s149 = sadd.s32 %s148, 1
      %s150 = scalar_select %p147, %s148, %s149
      %p153 = pneg %p147
      %p154 = scmp.eq.s32.totalorder %s18, 8
      %p155 = por %p153, %p154
      %p156 = scmp.ne.s32.totalorder %s148, %s151
      %p157 = scmp.eq.s32.totalorder %s18, 0
      %p158 = por %p156, %p157
      %p159 = scmp.ne.s32.totalorder %s148, %s151
      %p160 = scmp.eq.s32.totalorder %s23, 8
      %p161 = por %p159, %p160
      %p162 = scmp.ne.s32.totalorder %s151, %s152
      %p163 = scmp.eq.s32.totalorder %s23, 0
      %p164 = por %p162, %p163
      %p165 = scmp.ne.s32.totalorder %s151, %s152
      %p166 = scmp.eq.s32.totalorder %s24, 8
      %p167 = por %p165, %p166
      %p169 = scmp.ne.s32.totalorder %s152, %s168
      %p170 = scmp.eq.s32.totalorder %s24, 0
      %p171 = por %p169, %p170
      %p172 = scmp.le.s32.totalorder 1, %s18
      %p173 = scmp.lt.s32.totalorder %s18, 10
      %p174 = pnand %p172, %p173
      %p175 = pneg %p174
      // Predicated region
      $region9: #{generator_forward.37} parent=5 // pred_check
        _
      $region10: #{generator_forward.37} parent=5 // pred_check_branch
        %177 = sbr.rel (%p174) target = $region12
      $region11: #{generator_forward.37} parent=5 // pred_region
        %s178 = ssub.s32 %s18, 1
        // Predicated region
        $region13: #{generator_forward.37} parent=11 // pred_check
          %p179 = pneg %p65
        $region14: #{generator_forward.37} parent=11 // pred_check_branch
          %181 = sbr.rel (%p179) target = $region16
        $region15: #{generator_forward.37} parent=11 // pred_region
          _
        $region16: #{generator_forward.37} parent=11 // pred_fallthru
          _
        // Predicated region
        $region17: #{generator_forward.37} parent=11 // pred_check
          %p182 = pneg %p86
        $region18: #{generator_forward.37} parent=11 // pred_check_branch
          %184 = sbr.rel (%p182) target = $region20
        $region19: #{generator_forward.37} parent=11 // pred_region
          _
        $region20: #{generator_forward.37} parent=11 // pred_fallthru
          _
      $region12: #{generator_forward.37} parent=5 // pred_fallthru
        _
      %p185 = scmp.lt.s32.totalorder %s18, 9
      // Predicated region
      $region21: #{generator_forward.37} parent=5 // pred_check
        %p186 = pneg %p185
      $region22: #{generator_forward.37} parent=5 // pred_check_branch
        %188 = sbr.rel (%p186) target = $region24
      $region23: #{generator_forward.37} parent=5 // pred_region
        // Predicated region
        $region25: #{generator_forward.37} parent=23 // pred_check
          %p189 = pneg %p38
        $region26: #{generator_forward.37} parent=23 // pred_check_branch
          %191 = sbr.rel (%p189) target = $region28
        $region27: #{generator_forward.37} parent=23 // pred_region
          %s192 = smul.u32 64, %s18
          %p193 = scmp.lt.s32.totalorder %s192, 575
          %s194 = scalar_select %p193, %s192, 575
          %s195 = smul.addr %s194, 4
          %s196 = scalar_lea.vmem %s0, %s195
          %s197 = smul.u32 64, %s18
        $region28: #{generator_forward.37} parent=23 // pred_fallthru
          _
      $region24: #{generator_forward.37} parent=5 // pred_fallthru
        _
      %p198 = scmp.le.s32.totalorder 1, %s18
      %p199 = scmp.lt.s32.totalorder %s18, 10
      %p200 = pnand %p198, %p199
      %p201 = pneg %p200
      // Predicated region
      $region29: #{generator_forward.37} parent=5 // pred_check
        _
      $region30: #{generator_forward.37} parent=5 // pred_check_branch
        %203 = sbr.rel (%p200) target = $region32
      $region31: #{generator_forward.37} parent=5 // pred_region
        %s204 = ssub.s32 %s18, 1
        %s205 = smul.u32 64, %s23
        %p206 = scmp.lt.s32.totalorder %s205, 575
        %s207 = scalar_select %p206, %s205, 575
        %s208 = smul.addr %s207, 4
        %s209 = scalar_lea.vmem %s0, %s208
        %p210 = pneg %p44
        %p211 = pneg %p41
        %p212 = pneg %p65
        %p213 = pneg %p62
        %p214 = pneg %p86
        %p215 = pneg %p83
        %p216 = pneg %p112
        %p217 = pneg %p109
        %s218 = smul.u32 64, %s23
        %p219 = scmp.lt.s32.totalorder %s218, 575
        %s220 = scalar_select %p219, %s218, 575
        %s221 = smul.addr %s220, 8
        %s222 = scalar_lea.vmem %s3, %s221
        %p223 = pneg %p138
        %p224 = pneg %p135
        %s225 = sand.u32 %s125, 1
        %s226 = scalar_lea.sflag [#allocation3], %s225
        %s227 = sand.u32 %s125, 1
        %s228 = smul.addr %s227, 8
        %s229 = scalar_lea.vmem [#allocation2], %s228
        %p230 = pneg %p164
        %p231 = pneg %p161
        %s232 = sand.u32 %s151, 1
        %s233 = scalar_lea.sflag [#allocation5], %s232
        %s234 = sand.u32 %s151, 1
        %s235 = smul.addr %s234, 8
        %s236 = scalar_lea.vmem [#allocation4], %s235
        %s237 = smul.u32 64, %s23
        %p238 = scmp.lt.s32.totalorder %s237, 575
        %s239 = scalar_select %p238, %s237, 575
        %s240 = smul.addr %s239, 4
        %s241 = scalar_lea.vmem %s0, %s240
        %s242 = smul.u32 64, %s23
        %s243 = smul.u32 64, %s23
        %p244 = scmp.lt.s32.totalorder %s243, 575
        %s245 = scalar_select %p244, %s243, 575
        %s246 = smul.addr %s245, 8
        %s247 = scalar_lea.vmem %s3, %s246
        %s248 = smul.u32 64, %s23
        %v250 = vld [vmem:[%s241] sm:$0xf]
        %v251 = vld [vmem:[%s241 + $0x4] sm:$0xf]
        %v252 = vld [vmem:[%s241 + $0x8] sm:$0xf]
        %v253 = vld [vmem:[%s241 + $0xc] sm:$0xf]
        %v254 = vld [vmem:[%s241 + $0x10] sm:$0xf]
        %v255 = vld [vmem:[%s241 + $0x14] sm:$0xf]
        %v256 = vld [vmem:[%s241 + $0x18] sm:$0xf]
        %v257 = vld [vmem:[%s241 + $0x1c] sm:$0xf]
        %v258 = vld [vmem:[%s241 + $0x20] sm:$0xf]
        %v259 = vld [vmem:[%s241 + $0x24] sm:$0xf]
        %v260 = vld [vmem:[%s241 + $0x28] sm:$0xf]
        %v261 = vld [vmem:[%s241 + $0x2c] sm:$0xf]
        %v262 = vld [vmem:[%s241 + $0x30] sm:$0xf]
        %v263 = vld [vmem:[%s241 + $0x34] sm:$0xf]
        %v264 = vld [vmem:[%s241 + $0x38] sm:$0xf]
        %v265 = vld [vmem:[%s241 + $0x3c] sm:$0xf]
        %v266 = vld [vmem:[%s241 + $0x40] sm:$0xf]
        %v267 = vld [vmem:[%s241 + $0x44] sm:$0xf]
        %v268 = vld [vmem:[%s241 + $0x48] sm:$0xf]
        %v269 = vld [vmem:[%s241 + $0x4c] sm:$0xf]
        %v270 = vld [vmem:[%s241 + $0x50] sm:$0xf]
        %v271 = vld [vmem:[%s241 + $0x54] sm:$0xf]
        %v272 = vld [vmem:[%s241 + $0x58] sm:$0xf]
        %v273 = vld [vmem:[%s241 + $0x5c] sm:$0xf]
        %v274 = vld [vmem:[%s241 + $0x60] sm:$0xf]
        %v275 = vld [vmem:[%s241 + $0x64] sm:$0xf]
        %v276 = vld [vmem:[%s241 + $0x68] sm:$0xf]
        %v277 = vld [vmem:[%s241 + $0x6c] sm:$0xf]
        %v278 = vld [vmem:[%s241 + $0x70] sm:$0xf]
        %v279 = vld [vmem:[%s241 + $0x74] sm:$0xf]
        %v280 = vld [vmem:[%s241 + $0x78] sm:$0xf]
        %v281 = vld [vmem:[%s241 + $0x7c] sm:$0xf]
        %v282 = vld [vmem:[%s241 + $0x80] sm:$0xf]
        %v283 = vld [vmem:[%s241 + $0x84] sm:$0xf]
        %v284 = vld [vmem:[%s241 + $0x88] sm:$0xf]
        %v285 = vld [vmem:[%s241 + $0x8c] sm:$0xf]
        %v286 = vld [vmem:[%s241 + $0x90] sm:$0xf]
        %v287 = vld [vmem:[%s241 + $0x94] sm:$0xf]
        %v288 = vld [vmem:[%s241 + $0x98] sm:$0xf]
        %v289 = vld [vmem:[%s241 + $0x9c] sm:$0xf]
        %v290 = vld [vmem:[%s241 + $0xa0] sm:$0xf]
        %v291 = vld [vmem:[%s241 + $0xa4] sm:$0xf]
        %v292 = vld [vmem:[%s241 + $0xa8] sm:$0xf]
        %v293 = vld [vmem:[%s241 + $0xac] sm:$0xf]
        %v294 = vld [vmem:[%s241 + $0xb0] sm:$0xf]
        %v295 = vld [vmem:[%s241 + $0xb4] sm:$0xf]
        %v296 = vld [vmem:[%s241 + $0xb8] sm:$0xf]
        %v297 = vld [vmem:[%s241 + $0xbc] sm:$0xf]
        %v298 = vld [vmem:[%s241 + $0xc0] sm:$0xf]
        %v299 = vld [vmem:[%s241 + $0xc4] sm:$0xf]
        %v300 = vld [vmem:[%s241 + $0xc8] sm:$0xf]
        %v301 = vld [vmem:[%s241 + $0xcc] sm:$0xf]
        %v302 = vld [vmem:[%s241 + $0xd0] sm:$0xf]
        %v303 = vld [vmem:[%s241 + $0xd4] sm:$0xf]
        %v304 = vld [vmem:[%s241 + $0xd8] sm:$0xf]
        %v305 = vld [vmem:[%s241 + $0xdc] sm:$0xf]
        %v306 = vld [vmem:[%s241 + $0xe0] sm:$0xf]
        %v307 = vld [vmem:[%s241 + $0xe4] sm:$0xf]
        %v308 = vld [vmem:[%s241 + $0xe8] sm:$0xf]
        %v309 = vld [vmem:[%s241 + $0xec] sm:$0xf]
        %v310 = vld [vmem:[%s241 + $0xf0] sm:$0xf]
        %v311 = vld [vmem:[%s241 + $0xf4] sm:$0xf]
        %v312 = vld [vmem:[%s241 + $0xf8] sm:$0xf]
        %v313 = vld [vmem:[%s241 + $0xfc] sm:$0xf]
        %v314 = vld [vmem:[%s1] sm:$0xf]
        %v315 = vld [vmem:[%s1 + $0x4] sm:$0xf]
        %v316 = vld [vmem:[%s1 + $0x8] sm:$0xf]
        %v317 = vld [vmem:[%s1 + $0xc] sm:$0xf]
        %v318 = vld [vmem:[%s1 + $0x10] sm:$0x3]
        %v319 = vld [vmem:[%s2] sm:$0x1]
        %v321 = vperm.slane %v319, 0
        %v387 = vunpack.c.l.b16 %v250
        %v388 = vunpack.c.l.b16 %v251
        %v389 = vunpack.c.l.b16 %v252
        %v390 = vunpack.c.l.b16 %v253
        %v391 = vunpack.c.l.b16 %v254
        %v392 = vunpack.c.l.b16 %v255
        %v393 = vunpack.c.l.b16 %v256
        %v394 = vunpack.c.l.b16 %v257
        %v395 = vunpack.c.l.b16 %v258
        %v396 = vunpack.c.l.b16 %v259
        %v397 = vunpack.c.l.b16 %v260
        %v398 = vunpack.c.l.b16 %v261
        %v399 = vunpack.c.l.b16 %v262
        %v400 = vunpack.c.l.b16 %v263
        %v401 = vunpack.c.l.b16 %v264
        %v402 = vunpack.c.l.b16 %v265
        %v403 = vunpack.c.l.b16 %v266
        %v404 = vunpack.c.l.b16 %v267
        %v405 = vunpack.c.l.b16 %v268
        %v406 = vunpack.c.l.b16 %v269
        %v407 = vunpack.c.l.b16 %v270
        %v408 = vunpack.c.l.b16 %v271
        %v409 = vunpack.c.l.b16 %v272
        %v410 = vunpack.c.l.b16 %v273
        %v411 = vunpack.c.l.b16 %v274
        %v412 = vunpack.c.l.b16 %v275
        %v413 = vunpack.c.l.b16 %v276
        %v414 = vunpack.c.l.b16 %v277
        %v415 = vunpack.c.l.b16 %v278
        %v416 = vunpack.c.l.b16 %v279
        %v417 = vunpack.c.l.b16 %v280
        %v418 = vunpack.c.l.b16 %v281
        %v419 = vunpack.c.l.b16 %v282
        %v420 = vunpack.c.l.b16 %v283
        %v421 = vunpack.c.l.b16 %v284
        %v422 = vunpack.c.l.b16 %v285
        %v423 = vunpack.c.l.b16 %v286
        %v424 = vunpack.c.l.b16 %v287
        %v425 = vunpack.c.l.b16 %v288
        %v426 = vunpack.c.l.b16 %v289
        %v427 = vunpack.c.l.b16 %v290
        %v428 = vunpack.c.l.b16 %v291
        %v429 = vunpack.c.l.b16 %v292
        %v430 = vunpack.c.l.b16 %v293
        %v431 = vunpack.c.l.b16 %v294
        %v432 = vunpack.c.l.b16 %v295
        %v433 = vunpack.c.l.b16 %v296
        %v434 = vunpack.c.l.b16 %v297
        %v435 = vunpack.c.l.b16 %v298
        %v436 = vunpack.c.l.b16 %v299
        %v437 = vunpack.c.l.b16 %v300
        %v438 = vunpack.c.l.b16 %v301
        %v439 = vunpack.c.l.b16 %v302
        %v440 = vunpack.c.l.b16 %v303
        %v441 = vunpack.c.l.b16 %v304
        %v442 = vunpack.c.l.b16 %v305
        %v443 = vunpack.c.l.b16 %v306
        %v444 = vunpack.c.l.b16 %v307
        %v445 = vunpack.c.l.b16 %v308
        %v446 = vunpack.c.l.b16 %v309
        %v447 = vunpack.c.l.b16 %v310
        %v448 = vunpack.c.l.b16 %v311
        %v449 = vunpack.c.l.b16 %v312
        %v450 = vunpack.c.l.b16 %v313
        %v451 = vpack.c.b16 %v388, %v387
        %v452 = vpack.c.b16 %v390, %v389
        %v453 = vpack.c.b16 %v392, %v391
        %v454 = vpack.c.b16 %v394, %v393
        %v455 = vpack.c.b16 %v396, %v395
        %v456 = vpack.c.b16 %v398, %v397
        %v457 = vpack.c.b16 %v400, %v399
        %v458 = vpack.c.b16 %v402, %v401
        %v459 = vpack.c.b16 %v404, %v403
        %v460 = vpack.c.b16 %v406, %v405
        %v461 = vpack.c.b16 %v408, %v407
        %v462 = vpack.c.b16 %v410, %v409
        %v463 = vpack.c.b16 %v412, %v411
        %v464 = vpack.c.b16 %v414, %v413
        %v465 = vpack.c.b16 %v416, %v415
        %v466 = vpack.c.b16 %v418, %v417
        %v467 = vpack.c.b16 %v420, %v419
        %v468 = vpack.c.b16 %v422, %v421
        %v469 = vpack.c.b16 %v424, %v423
        %v470 = vpack.c.b16 %v426, %v425
        %v471 = vpack.c.b16 %v428, %v427
        %v472 = vpack.c.b16 %v430, %v429
        %v473 = vpack.c.b16 %v432, %v431
        %v474 = vpack.c.b16 %v434, %v433
        %v475 = vpack.c.b16 %v436, %v435
        %v476 = vpack.c.b16 %v438, %v437
        %v477 = vpack.c.b16 %v440, %v439
        %v478 = vpack.c.b16 %v442, %v441
        %v479 = vpack.c.b16 %v444, %v443
        %v480 = vpack.c.b16 %v446, %v445
        %v481 = vpack.c.b16 %v448, %v447
        %v482 = vpack.c.b16 %v450, %v449
        %v488 = vunpack.c.l.b16 %v314
        %v489 = vunpack.c.l.b16 %v315
        %v490 = vunpack.c.l.b16 %v316
        %v491 = vunpack.c.l.b16 %v317
        %v492 = vunpack.c.l.b16 %v318
        %v493 = vpack.c.b16 %v489, %v488
        %v494 = vpack.c.b16 %v491, %v490
        %v495 = vpack.c.b16 %v492, %v492
        %vm498 = vcmask 293888
        %v500 = vsel %vm498, %v451, 0
        %v503 = vsel %vm498, %v452, 0
        %v506 = vsel %vm498, %v453, 0
        %v509 = vsel %vm498, %v454, 0
        %v512 = vsel %vm498, %v455, 0
        %v515 = vsel %vm498, %v456, 0
        %v518 = vsel %vm498, %v457, 0
        %v521 = vsel %vm498, %v458, 0
        %v524 = vsel %vm498, %v459, 0
        %v527 = vsel %vm498, %v460, 0
        %v530 = vsel %vm498, %v461, 0
        %v533 = vsel %vm498, %v462, 0
        %v536 = vsel %vm498, %v463, 0
        %v539 = vsel %vm498, %v464, 0
        %v542 = vsel %vm498, %v465, 0
        %v545 = vsel %vm498, %v466, 0
        %v548 = vsel %vm498, %v467, 0
        %v551 = vsel %vm498, %v468, 0
        %v554 = vsel %vm498, %v469, 0
        %v557 = vsel %vm498, %v470, 0
        %v560 = vsel %vm498, %v471, 0
        %v563 = vsel %vm498, %v472, 0
        %v566 = vsel %vm498, %v473, 0
        %v569 = vsel %vm498, %v474, 0
        %v572 = vsel %vm498, %v475, 0
        %v575 = vsel %vm498, %v476, 0
        %v578 = vsel %vm498, %v477, 0
        %v581 = vsel %vm498, %v478, 0
        %v584 = vsel %vm498, %v479, 0
        %v587 = vsel %vm498, %v480, 0
        %v590 = vsel %vm498, %v481, 0
        %v593 = vsel %vm498, %v482, 0
        %vm595 = vcmask 1041408
        %v597 = vsel %vm595, %v495, 0
        %599 = vmatpush.bf16.msra.mxu0 0
        %600 = vmatpush.bf16.msra.mxu0 0
        %601 = vmatpush.bf16.msra.mxu0 0
        %602 = vmatpush.bf16.msra.mxu0 0
        %603 = vmatpush.bf16.msra.mxu0 0
        %604 = vmatpush.bf16.msra.mxu0 %v597
        %605 = vmatpush.bf16.msra.mxu0 %v494
        %606 = vmatpush.bf16.msra.mxu0 %v493
        %607 = vmatmul.bf16.gmra.mxu0 %v500
        %v608 = vpop.f32.mrf.mxu0
        %v609 = vadd.f32 %v321, %v608
        %v610 = vpop.f32.mrf.mxu0
        %v611 = vadd.f32 %v321, %v610
        %612 = vmatmul.bf16.gmra.mxu0 %v503
        %v613 = vpop.f32.mrf.mxu0
        %v614 = vadd.f32 %v321, %v613
        %v615 = vpop.f32.mrf.mxu0
        %v616 = vadd.f32 %v321, %v615
        %617 = vmatmul.bf16.gmra.mxu0 %v506
        %v618 = vpop.f32.mrf.mxu0
        %v619 = vadd.f32 %v321, %v618
        %v620 = vpop.f32.mrf.mxu0
        %v621 = vadd.f32 %v321, %v620
        %622 = vmatmul.bf16.gmra.mxu0 %v509
        %v623 = vpop.f32.mrf.mxu0
        %v624 = vadd.f32 %v321, %v623
        %v625 = vpop.f32.mrf.mxu0
        %v626 = vadd.f32 %v321, %v625
        %627 = vmatmul.bf16.gmra.mxu0 %v512
        %v628 = vpop.f32.mrf.mxu0
        %v629 = vadd.f32 %v321, %v628
        %v630 = vpop.f32.mrf.mxu0
        %v631 = vadd.f32 %v321, %v630
        %632 = vmatmul.bf16.gmra.mxu0 %v515
        %v633 = vpop.f32.mrf.mxu0
        %v634 = vadd.f32 %v321, %v633
        %v635 = vpop.f32.mrf.mxu0
        %v636 = vadd.f32 %v321, %v635
        %637 = vmatmul.bf16.gmra.mxu0 %v518
        %v638 = vpop.f32.mrf.mxu0
        %v639 = vadd.f32 %v321, %v638
        %v640 = vpop.f32.mrf.mxu0
        %v641 = vadd.f32 %v321, %v640
        %642 = vmatmul.bf16.gmra.mxu0 %v521
        %v643 = vpop.f32.mrf.mxu0
        %v644 = vadd.f32 %v321, %v643
        %v645 = vpop.f32.mrf.mxu0
        %v646 = vadd.f32 %v321, %v645
        %647 = vmatmul.bf16.gmra.mxu0 %v524
        %v648 = vpop.f32.mrf.mxu0
        %v649 = vadd.f32 %v321, %v648
        %v650 = vpop.f32.mrf.mxu0
        %v651 = vadd.f32 %v321, %v650
        %652 = vmatmul.bf16.gmra.mxu0 %v527
        %v653 = vpop.f32.mrf.mxu0
        %v654 = vadd.f32 %v321, %v653
        %v655 = vpop.f32.mrf.mxu0
        %v656 = vadd.f32 %v321, %v655
        %657 = vmatmul.bf16.gmra.mxu0 %v530
        %v658 = vpop.f32.mrf.mxu0
        %v659 = vadd.f32 %v321, %v658
        %v660 = vpop.f32.mrf.mxu0
        %v661 = vadd.f32 %v321, %v660
        %662 = vmatmul.bf16.gmra.mxu0 %v533
        %v663 = vpop.f32.mrf.mxu0
        %v664 = vadd.f32 %v321, %v663
        %v665 = vpop.f32.mrf.mxu0
        %v666 = vadd.f32 %v321, %v665
        %667 = vmatmul.bf16.gmra.mxu0 %v536
        %v668 = vpop.f32.mrf.mxu0
        %v669 = vadd.f32 %v321, %v668
        %v670 = vpop.f32.mrf.mxu0
        %v671 = vadd.f32 %v321, %v670
        %672 = vmatmul.bf16.gmra.mxu0 %v539
        %v673 = vpop.f32.mrf.mxu0
        %v674 = vadd.f32 %v321, %v673
        %v675 = vpop.f32.mrf.mxu0
        %v676 = vadd.f32 %v321, %v675
        %677 = vmatmul.bf16.gmra.mxu0 %v542
        %v678 = vpop.f32.mrf.mxu0
        %v679 = vadd.f32 %v321, %v678
        %v680 = vpop.f32.mrf.mxu0
        %v681 = vadd.f32 %v321, %v680
        %682 = vmatmul.bf16.gmra.mxu0 %v545
        %v683 = vpop.f32.mrf.mxu0
        %v684 = vadd.f32 %v321, %v683
        %v685 = vpop.f32.mrf.mxu0
        %v686 = vadd.f32 %v321, %v685
        %687 = vmatmul.bf16.gmra.mxu0 %v548
        %v688 = vpop.f32.mrf.mxu0
        %v689 = vadd.f32 %v321, %v688
        %v690 = vpop.f32.mrf.mxu0
        %v691 = vadd.f32 %v321, %v690
        %692 = vmatmul.bf16.gmra.mxu0 %v551
        %v693 = vpop.f32.mrf.mxu0
        %v694 = vadd.f32 %v321, %v693
        %v695 = vpop.f32.mrf.mxu0
        %v696 = vadd.f32 %v321, %v695
        %697 = vmatmul.bf16.gmra.mxu0 %v554
        %v698 = vpop.f32.mrf.mxu0
        %v699 = vadd.f32 %v321, %v698
        %v700 = vpop.f32.mrf.mxu0
        %v701 = vadd.f32 %v321, %v700
        %702 = vmatmul.bf16.gmra.mxu0 %v557
        %v703 = vpop.f32.mrf.mxu0
        %v704 = vadd.f32 %v321, %v703
        %v705 = vpop.f32.mrf.mxu0
        %v706 = vadd.f32 %v321, %v705
        %707 = vmatmul.bf16.gmra.mxu0 %v560
        %v708 = vpop.f32.mrf.mxu0
        %v709 = vadd.f32 %v321, %v708
        %v710 = vpop.f32.mrf.mxu0
        %v711 = vadd.f32 %v321, %v710
        %712 = vmatmul.bf16.gmra.mxu0 %v563
        %v713 = vpop.f32.mrf.mxu0
        %v714 = vadd.f32 %v321, %v713
        %v715 = vpop.f32.mrf.mxu0
        %v716 = vadd.f32 %v321, %v715
        %717 = vmatmul.bf16.gmra.mxu0 %v566
        %v718 = vpop.f32.mrf.mxu0
        %v719 = vadd.f32 %v321, %v718
        %v720 = vpop.f32.mrf.mxu0
        %v721 = vadd.f32 %v321, %v720
        %722 = vmatmul.bf16.gmra.mxu0 %v569
        %v723 = vpop.f32.mrf.mxu0
        %v724 = vadd.f32 %v321, %v723
        %v725 = vpop.f32.mrf.mxu0
        %v726 = vadd.f32 %v321, %v725
        %727 = vmatmul.bf16.gmra.mxu0 %v572
        %v728 = vpop.f32.mrf.mxu0
        %v729 = vadd.f32 %v321, %v728
        %v730 = vpop.f32.mrf.mxu0
        %v731 = vadd.f32 %v321, %v730
        %732 = vmatmul.bf16.gmra.mxu0 %v575
        %v733 = vpop.f32.mrf.mxu0
        %v734 = vadd.f32 %v321, %v733
        %v735 = vpop.f32.mrf.mxu0
        %v736 = vadd.f32 %v321, %v735
        %737 = vmatmul.bf16.gmra.mxu0 %v578
        %v738 = vpop.f32.mrf.mxu0
        %v739 = vadd.f32 %v321, %v738
        %v740 = vpop.f32.mrf.mxu0
        %v741 = vadd.f32 %v321, %v740
        %742 = vmatmul.bf16.gmra.mxu0 %v581
        %v743 = vpop.f32.mrf.mxu0
        %v744 = vadd.f32 %v321, %v743
        %v745 = vpop.f32.mrf.mxu0
        %v746 = vadd.f32 %v321, %v745
        %747 = vmatmul.bf16.gmra.mxu0 %v584
        %v748 = vpop.f32.mrf.mxu0
        %v749 = vadd.f32 %v321, %v748
        %v750 = vpop.f32.mrf.mxu0
        %v751 = vadd.f32 %v321, %v750
        %752 = vmatmul.bf16.gmra.mxu0 %v587
        %v753 = vpop.f32.mrf.mxu0
        %v754 = vadd.f32 %v321, %v753
        %v755 = vpop.f32.mrf.mxu0
        %v756 = vadd.f32 %v321, %v755
        %757 = vmatmul.bf16.gmra.mxu0 %v590
        %v758 = vpop.f32.mrf.mxu0
        %v759 = vadd.f32 %v321, %v758
        %v760 = vpop.f32.mrf.mxu0
        %v761 = vadd.f32 %v321, %v760
        %762 = vmatmul.bf16.gmra.mxu0 %v593
        %v763 = vpop.f32.mrf.mxu0
        %v764 = vadd.f32 %v321, %v763
        %v765 = vpop.f32.mrf.mxu0
        %v766 = vadd.f32 %v321, %v765
        %767 = vdwg.mxu0
        %v768 = vxor.u32 %v609, 2147483648
        %v769 = vxor.u32 %v611, 2147483648
        %v770 = vxor.u32 %v614, 2147483648
        %v771 = vxor.u32 %v616, 2147483648
        %v772 = vxor.u32 %v619, 2147483648
        %v773 = vxor.u32 %v621, 2147483648
        %v774 = vxor.u32 %v624, 2147483648
        %v775 = vxor.u32 %v626, 2147483648
        %v776 = vxor.u32 %v629, 2147483648
        %v777 = vxor.u32 %v631, 2147483648
        %v778 = vxor.u32 %v634, 2147483648
        %v779 = vxor.u32 %v636, 2147483648
        %v780 = vxor.u32 %v639, 2147483648
        %v781 = vxor.u32 %v641, 2147483648
        %v782 = vxor.u32 %v644, 2147483648
        %v783 = vxor.u32 %v646, 2147483648
        %v784 = vxor.u32 %v649, 2147483648
        %v785 = vxor.u32 %v651, 2147483648
        %v786 = vxor.u32 %v654, 2147483648
        %v787 = vxor.u32 %v656, 2147483648
        %v788 = vxor.u32 %v659, 2147483648
        %v789 = vxor.u32 %v661, 2147483648
        %v790 = vxor.u32 %v664, 2147483648
        %v791 = vxor.u32 %v666, 2147483648
        %v792 = vxor.u32 %v669, 2147483648
        %v793 = vxor.u32 %v671, 2147483648
        %v794 = vxor.u32 %v674, 2147483648
        %v795 = vxor.u32 %v676, 2147483648
        %v796 = vxor.u32 %v679, 2147483648
        %v797 = vxor.u32 %v681, 2147483648
        %v798 = vxor.u32 %v684, 2147483648
        %v799 = vxor.u32 %v686, 2147483648
        %v800 = vxor.u32 %v689, 2147483648
        %v801 = vxor.u32 %v691, 2147483648
        %v802 = vxor.u32 %v694, 2147483648
        %v803 = vxor.u32 %v696, 2147483648
        %v804 = vxor.u32 %v699, 2147483648
        %v805 = vxor.u32 %v701, 2147483648
        %v806 = vxor.u32 %v704, 2147483648
        %v807 = vxor.u32 %v706, 2147483648
        %v808 = vxor.u32 %v709, 2147483648
        %v809 = vxor.u32 %v711, 2147483648
        %v810 = vxor.u32 %v714, 2147483648
        %v811 = vxor.u32 %v716, 2147483648
        %v812 = vxor.u32 %v719, 2147483648
        %v813 = vxor.u32 %v721, 2147483648
        %v814 = vxor.u32 %v724, 2147483648
        %v815 = vxor.u32 %v726, 2147483648
        %v816 = vxor.u32 %v729, 2147483648
        %v817 = vxor.u32 %v731, 2147483648
        %v818 = vxor.u32 %v734, 2147483648
        %v819 = vxor.u32 %v736, 2147483648
        %v820 = vxor.u32 %v739, 2147483648
        %v821 = vxor.u32 %v741, 2147483648
        %v822 = vxor.u32 %v744, 2147483648
        %v823 = vxor.u32 %v746, 2147483648
        %v824 = vxor.u32 %v749, 2147483648
        %v825 = vxor.u32 %v751, 2147483648
        %v826 = vxor.u32 %v754, 2147483648
        %v827 = vxor.u32 %v756, 2147483648
        %v828 = vxor.u32 %v759, 2147483648
        %v829 = vxor.u32 %v761, 2147483648
        %v830 = vxor.u32 %v764, 2147483648
        %v831 = vxor.u32 %v766, 2147483648
        %v832 = vmul.f32 %v768, 1.442695
        %v833 = vpow.pop %v832
        %v834 = vmul.f32 %v769, 1.442695
        %v835 = vpow.pop %v834
        %v836 = vmul.f32 %v770, 1.442695
        %v837 = vpow.pop %v836
        %v838 = vmul.f32 %v771, 1.442695
        %v839 = vpow.pop %v838
        %v840 = vmul.f32 %v772, 1.442695
        %v841 = vpow.pop %v840
        %v842 = vmul.f32 %v773, 1.442695
        %v843 = vpow.pop %v842
        %v844 = vmul.f32 %v774, 1.442695
        %v845 = vpow.pop %v844
        %v846 = vmul.f32 %v775, 1.442695
        %v847 = vpow.pop %v846
        %v848 = vmul.f32 %v776, 1.442695
        %v849 = vpow.pop %v848
        %v850 = vmul.f32 %v777, 1.442695
        %v851 = vpow.pop %v850
        %v852 = vmul.f32 %v778, 1.442695
        %v853 = vpow.pop %v852
        %v854 = vmul.f32 %v779, 1.442695
        %v855 = vpow.pop %v854
        %v856 = vmul.f32 %v780, 1.442695
        %v857 = vpow.pop %v856
        %v858 = vmul.f32 %v781, 1.442695
        %v859 = vpow.pop %v858
        %v860 = vmul.f32 %v782, 1.442695
        %v861 = vpow.pop %v860
        %v862 = vmul.f32 %v783, 1.442695
        %v863 = vpow.pop %v862
        %v864 = vmul.f32 %v784, 1.442695
        %v865 = vpow.pop %v864
        %v866 = vmul.f32 %v785, 1.442695
        %v867 = vpow.pop %v866
        %v868 = vmul.f32 %v786, 1.442695
        %v869 = vpow.pop %v868
        %v870 = vmul.f32 %v787, 1.442695
        %v871 = vpow.pop %v870
        %v872 = vmul.f32 %v788, 1.442695
        %v873 = vpow.pop %v872
        %v874 = vmul.f32 %v789, 1.442695
        %v875 = vpow.pop %v874
        %v876 = vmul.f32 %v790, 1.442695
        %v877 = vpow.pop %v876
        %v878 = vmul.f32 %v791, 1.442695
        %v879 = vpow.pop %v878
        %v880 = vmul.f32 %v792, 1.442695
        %v881 = vpow.pop %v880
        %v882 = vmul.f32 %v793, 1.442695
        %v883 = vpow.pop %v882
        %v884 = vmul.f32 %v794, 1.442695
        %v885 = vpow.pop %v884
        %v886 = vmul.f32 %v795, 1.442695
        %v887 = vpow.pop %v886
        %v888 = vmul.f32 %v796, 1.442695
        %v889 = vpow.pop %v888
        %v890 = vmul.f32 %v797, 1.442695
        %v891 = vpow.pop %v890
        %v892 = vmul.f32 %v798, 1.442695
        %v893 = vpow.pop %v892
        %v894 = vmul.f32 %v799, 1.442695
        %v895 = vpow.pop %v894
        %v896 = vmul.f32 %v800, 1.442695
        %v897 = vpow.pop %v896
        %v898 = vmul.f32 %v801, 1.442695
        %v899 = vpow.pop %v898
        %v900 = vmul.f32 %v802, 1.442695
        %v901 = vpow.pop %v900
        %v902 = vmul.f32 %v803, 1.442695
        %v903 = vpow.pop %v902
        %v904 = vmul.f32 %v804, 1.442695
        %v905 = vpow.pop %v904
        %v906 = vmul.f32 %v805, 1.442695
        %v907 = vpow.pop %v906
        %v908 = vmul.f32 %v806, 1.442695
        %v909 = vpow.pop %v908
        %v910 = vmul.f32 %v807, 1.442695
        %v911 = vpow.pop %v910
        %v912 = vmul.f32 %v808, 1.442695
        %v913 = vpow.pop %v912
        %v914 = vmul.f32 %v809, 1.442695
        %v915 = vpow.pop %v914
        %v916 = vmul.f32 %v810, 1.442695
        %v917 = vpow.pop %v916
        %v918 = vmul.f32 %v811, 1.442695
        %v919 = vpow.pop %v918
        %v920 = vmul.f32 %v812, 1.442695
        %v921 = vpow.pop %v920
        %v922 = vmul.f32 %v813, 1.442695
        %v923 = vpow.pop %v922
        %v924 = vmul.f32 %v814, 1.442695
        %v925 = vpow.pop %v924
        %v926 = vmul.f32 %v815, 1.442695
        %v927 = vpow.pop %v926
        %v928 = vmul.f32 %v816, 1.442695
        %v929 = vpow.pop %v928
        %v930 = vmul.f32 %v817, 1.442695
        %v931 = vpow.pop %v930
        %v932 = vmul.f32 %v818, 1.442695
        %v933 = vpow.pop %v932
        %v934 = vmul.f32 %v819, 1.442695
        %v935 = vpow.pop %v934
        %v936 = vmul.f32 %v820, 1.442695
        %v937 = vpow.pop %v936
        %v938 = vmul.f32 %v821, 1.442695
        %v939 = vpow.pop %v938
        %v940 = vmul.f32 %v822, 1.442695
        %v941 = vpow.pop %v940
        %v942 = vmul.f32 %v823, 1.442695
        %v943 = vpow.pop %v942
        %v944 = vmul.f32 %v824, 1.442695
        %v945 = vpow.pop %v944
        %v946 = vmul.f32 %v825, 1.442695
        %v947 = vpow.pop %v946
        %v948 = vmul.f32 %v826, 1.442695
        %v949 = vpow.pop %v948
        %v950 = vmul.f32 %v827, 1.442695
        %v951 = vpow.pop %v950
        %v952 = vmul.f32 %v828, 1.442695
        %v953 = vpow.pop %v952
        %v954 = vmul.f32 %v829, 1.442695
        %v955 = vpow.pop %v954
        %v956 = vmul.f32 %v830, 1.442695
        %v957 = vpow.pop %v956
        %v958 = vmul.f32 %v831, 1.442695
        %v959 = vpow.pop %v958
        %v960 = vadd.f32 %v833, 1.0
        %v961 = vadd.f32 %v835, 1.0
        %v962 = vadd.f32 %v837, 1.0
        %v963 = vadd.f32 %v839, 1.0
        %v964 = vadd.f32 %v841, 1.0
        %v965 = vadd.f32 %v843, 1.0
        %v966 = vadd.f32 %v845, 1.0
        %v967 = vadd.f32 %v847, 1.0
        %v968 = vadd.f32 %v849, 1.0
        %v969 = vadd.f32 %v851, 1.0
        %v970 = vadd.f32 %v853, 1.0
        %v971 = vadd.f32 %v855, 1.0
        %v972 = vadd.f32 %v857, 1.0
        %v973 = vadd.f32 %v859, 1.0
        %v974 = vadd.f32 %v861, 1.0
        %v975 = vadd.f32 %v863, 1.0
        %v976 = vadd.f32 %v865, 1.0
        %v977 = vadd.f32 %v867, 1.0
        %v978 = vadd.f32 %v869, 1.0
        %v979 = vadd.f32 %v871, 1.0
        %v980 = vadd.f32 %v873, 1.0
        %v981 = vadd.f32 %v875, 1.0
        %v982 = vadd.f32 %v877, 1.0
        %v983 = vadd.f32 %v879, 1.0
        %v984 = vadd.f32 %v881, 1.0
        %v985 = vadd.f32 %v883, 1.0
        %v986 = vadd.f32 %v885, 1.0
        %v987 = vadd.f32 %v887, 1.0
        %v988 = vadd.f32 %v889, 1.0
        %v989 = vadd.f32 %v891, 1.0
        %v990 = vadd.f32 %v893, 1.0
        %v991 = vadd.f32 %v895, 1.0
        %v992 = vadd.f32 %v897, 1.0
        %v993 = vadd.f32 %v899, 1.0
        %v994 = vadd.f32 %v901, 1.0
        %v995 = vadd.f32 %v903, 1.0
        %v996 = vadd.f32 %v905, 1.0
        %v997 = vadd.f32 %v907, 1.0
        %v998 = vadd.f32 %v909, 1.0
        %v999 = vadd.f32 %v911, 1.0
        %v1000 = vadd.f32 %v913, 1.0
        %v1001 = vadd.f32 %v915, 1.0
        %v1002 = vadd.f32 %v917, 1.0
        %v1003 = vadd.f32 %v919, 1.0
        %v1004 = vadd.f32 %v921, 1.0
        %v1005 = vadd.f32 %v923, 1.0
        %v1006 = vadd.f32 %v925, 1.0
        %v1007 = vadd.f32 %v927, 1.0
        %v1008 = vadd.f32 %v929, 1.0
        %v1009 = vadd.f32 %v931, 1.0
        %v1010 = vadd.f32 %v933, 1.0
        %v1011 = vadd.f32 %v935, 1.0
        %v1012 = vadd.f32 %v937, 1.0
        %v1013 = vadd.f32 %v939, 1.0
        %v1014 = vadd.f32 %v941, 1.0
        %v1015 = vadd.f32 %v943, 1.0
        %v1016 = vadd.f32 %v945, 1.0
        %v1017 = vadd.f32 %v947, 1.0
        %v1018 = vadd.f32 %v949, 1.0
        %v1019 = vadd.f32 %v951, 1.0
        %v1020 = vadd.f32 %v953, 1.0
        %v1021 = vadd.f32 %v955, 1.0
        %v1022 = vadd.f32 %v957, 1.0
        %v1023 = vadd.f32 %v959, 1.0
        %v1024 = vrcp.pop %v960
        %v1025 = vmul.f32 %v960, %v1024
        %v1026 = vsub.f32 1.0, %v1025
        %v1027 = vmul.f32 %v1024, %v1026
        %v1028 = vadd.f32 %v1024, %v1027
        %vm1029 = vweird.f32 %v960
        %vm1030 = vweird.f32 %v1024
        %vm1031 = vmor %vm1029, %vm1030
        %v1032 = vsel %vm1031, %v1024, %v1028
        %v1033 = vand.u32 2147483647, %v960
        %vm1034 = vcmp.eq.f32.partialorder %v1033, 8.507059e+37
        %v1035 = vand.u32 %v960, 2147483648
        %v1036 = vor.u32 1.1754944e-38, %v1035
        %v1037 = vsel %vm1034, %v1036, %v1032
        %v1038 = vmul.f32 1.0, %v1037
        %v1039 = vrcp.pop %v961
        %v1040 = vmul.f32 %v961, %v1039
        %v1041 = vsub.f32 1.0, %v1040
        %v1042 = vmul.f32 %v1039, %v1041
        %v1043 = vadd.f32 %v1039, %v1042
        %vm1044 = vweird.f32 %v961
        %vm1045 = vweird.f32 %v1039
        %vm1046 = vmor %vm1044, %vm1045
        %v1047 = vsel %vm1046, %v1039, %v1043
        %v1048 = vand.u32 2147483647, %v961
        %vm1049 = vcmp.eq.f32.partialorder %v1048, 8.507059e+37
        %v1050 = vand.u32 %v961, 2147483648
        %v1051 = vor.u32 1.1754944e-38, %v1050
        %v1052 = vsel %vm1049, %v1051, %v1047
        %v1053 = vmul.f32 1.0, %v1052
        %v1054 = vrcp.pop %v962
        %v1055 = vmul.f32 %v962, %v1054
        %v1056 = vsub.f32 1.0, %v1055
        %v1057 = vmul.f32 %v1054, %v1056
        %v1058 = vadd.f32 %v1054, %v1057
        %vm1059 = vweird.f32 %v962
        %vm1060 = vweird.f32 %v1054
        %vm1061 = vmor %vm1059, %vm1060
        %v1062 = vsel %vm1061, %v1054, %v1058
        %v1063 = vand.u32 2147483647, %v962
        %vm1064 = vcmp.eq.f32.partialorder %v1063, 8.507059e+37
        %v1065 = vand.u32 %v962, 2147483648
        %v1066 = vor.u32 1.1754944e-38, %v1065
        %v1067 = vsel %vm1064, %v1066, %v1062
        %v1068 = vmul.f32 1.0, %v1067
        %v1069 = vrcp.pop %v963
        %v1070 = vmul.f32 %v963, %v1069
        %v1071 = vsub.f32 1.0, %v1070
        %v1072 = vmul.f32 %v1069, %v1071
        %v1073 = vadd.f32 %v1069, %v1072
        %vm1074 = vweird.f32 %v963
        %vm1075 = vweird.f32 %v1069
        %vm1076 = vmor %vm1074, %vm1075
        %v1077 = vsel %vm1076, %v1069, %v1073
        %v1078 = vand.u32 2147483647, %v963
        %vm1079 = vcmp.eq.f32.partialorder %v1078, 8.507059e+37
        %v1080 = vand.u32 %v963, 2147483648
        %v1081 = vor.u32 1.1754944e-38, %v1080
        %v1082 = vsel %vm1079, %v1081, %v1077
        %v1083 = vmul.f32 1.0, %v1082
        %v1084 = vrcp.pop %v964
        %v1085 = vmul.f32 %v964, %v1084
        %v1086 = vsub.f32 1.0, %v1085
        %v1087 = vmul.f32 %v1084, %v1086
        %v1088 = vadd.f32 %v1084, %v1087
        %vm1089 = vweird.f32 %v964
        %vm1090 = vweird.f32 %v1084
        %vm1091 = vmor %vm1089, %vm1090
        %v1092 = vsel %vm1091, %v1084, %v1088
        %v1093 = vand.u32 2147483647, %v964
        %vm1094 = vcmp.eq.f32.partialorder %v1093, 8.507059e+37
        %v1095 = vand.u32 %v964, 2147483648
        %v1096 = vor.u32 1.1754944e-38, %v1095
        %v1097 = vsel %vm1094, %v1096, %v1092
        %v1098 = vmul.f32 1.0, %v1097
        %v1099 = vrcp.pop %v965
        %v1100 = vmul.f32 %v965, %v1099
        %v1101 = vsub.f32 1.0, %v1100
        %v1102 = vmul.f32 %v1099, %v1101
        %v1103 = vadd.f32 %v1099, %v1102
        %vm1104 = vweird.f32 %v965
        %vm1105 = vweird.f32 %v1099
        %vm1106 = vmor %vm1104, %vm1105
        %v1107 = vsel %vm1106, %v1099, %v1103
        %v1108 = vand.u32 2147483647, %v965
        %vm1109 = vcmp.eq.f32.partialorder %v1108, 8.507059e+37
        %v1110 = vand.u32 %v965, 2147483648
        %v1111 = vor.u32 1.1754944e-38, %v1110
        %v1112 = vsel %vm1109, %v1111, %v1107
        %v1113 = vmul.f32 1.0, %v1112
        %v1114 = vrcp.pop %v966
        %v1115 = vmul.f32 %v966, %v1114
        %v1116 = vsub.f32 1.0, %v1115
        %v1117 = vmul.f32 %v1114, %v1116
        %v1118 = vadd.f32 %v1114, %v1117
        %vm1119 = vweird.f32 %v966
        %vm1120 = vweird.f32 %v1114
        %vm1121 = vmor %vm1119, %vm1120
        %v1122 = vsel %vm1121, %v1114, %v1118
        %v1123 = vand.u32 2147483647, %v966
        %vm1124 = vcmp.eq.f32.partialorder %v1123, 8.507059e+37
        %v1125 = vand.u32 %v966, 2147483648
        %v1126 = vor.u32 1.1754944e-38, %v1125
        %v1127 = vsel %vm1124, %v1126, %v1122
        %v1128 = vmul.f32 1.0, %v1127
        %v1129 = vrcp.pop %v967
        %v1130 = vmul.f32 %v967, %v1129
        %v1131 = vsub.f32 1.0, %v1130
        %v1132 = vmul.f32 %v1129, %v1131
        %v1133 = vadd.f32 %v1129, %v1132
        %vm1134 = vweird.f32 %v967
        %vm1135 = vweird.f32 %v1129
        %vm1136 = vmor %vm1134, %vm1135
        %v1137 = vsel %vm1136, %v1129, %v1133
        %v1138 = vand.u32 2147483647, %v967
        %vm1139 = vcmp.eq.f32.partialorder %v1138, 8.507059e+37
        %v1140 = vand.u32 %v967, 2147483648
        %v1141 = vor.u32 1.1754944e-38, %v1140
        %v1142 = vsel %vm1139, %v1141, %v1137
        %v1143 = vmul.f32 1.0, %v1142
        %v1144 = vrcp.pop %v968
        %v1145 = vmul.f32 %v968, %v1144
        %v1146 = vsub.f32 1.0, %v1145
        %v1147 = vmul.f32 %v1144, %v1146
        %v1148 = vadd.f32 %v1144, %v1147
        %vm1149 = vweird.f32 %v968
        %vm1150 = vweird.f32 %v1144
        %vm1151 = vmor %vm1149, %vm1150
        %v1152 = vsel %vm1151, %v1144, %v1148
        %v1153 = vand.u32 2147483647, %v968
        %vm1154 = vcmp.eq.f32.partialorder %v1153, 8.507059e+37
        %v1155 = vand.u32 %v968, 2147483648
        %v1156 = vor.u32 1.1754944e-38, %v1155
        %v1157 = vsel %vm1154, %v1156, %v1152
        %v1158 = vmul.f32 1.0, %v1157
        %v1159 = vrcp.pop %v969
        %v1160 = vmul.f32 %v969, %v1159
        %v1161 = vsub.f32 1.0, %v1160
        %v1162 = vmul.f32 %v1159, %v1161
        %v1163 = vadd.f32 %v1159, %v1162
        %vm1164 = vweird.f32 %v969
        %vm1165 = vweird.f32 %v1159
        %vm1166 = vmor %vm1164, %vm1165
        %v1167 = vsel %vm1166, %v1159, %v1163
        %v1168 = vand.u32 2147483647, %v969
        %vm1169 = vcmp.eq.f32.partialorder %v1168, 8.507059e+37
        %v1170 = vand.u32 %v969, 2147483648
        %v1171 = vor.u32 1.1754944e-38, %v1170
        %v1172 = vsel %vm1169, %v1171, %v1167
        %v1173 = vmul.f32 1.0, %v1172
        %v1174 = vrcp.pop %v970
        %v1175 = vmul.f32 %v970, %v1174
        %v1176 = vsub.f32 1.0, %v1175
        %v1177 = vmul.f32 %v1174, %v1176
        %v1178 = vadd.f32 %v1174, %v1177
        %vm1179 = vweird.f32 %v970
        %vm1180 = vweird.f32 %v1174
        %vm1181 = vmor %vm1179, %vm1180
        %v1182 = vsel %vm1181, %v1174, %v1178
        %v1183 = vand.u32 2147483647, %v970
        %vm1184 = vcmp.eq.f32.partialorder %v1183, 8.507059e+37
        %v1185 = vand.u32 %v970, 2147483648
        %v1186 = vor.u32 1.1754944e-38, %v1185
        %v1187 = vsel %vm1184, %v1186, %v1182
        %v1188 = vmul.f32 1.0, %v1187
        %v1189 = vrcp.pop %v971
        %v1190 = vmul.f32 %v971, %v1189
        %v1191 = vsub.f32 1.0, %v1190
        %v1192 = vmul.f32 %v1189, %v1191
        %v1193 = vadd.f32 %v1189, %v1192
        %vm1194 = vweird.f32 %v971
        %vm1195 = vweird.f32 %v1189
        %vm1196 = vmor %vm1194, %vm1195
        %v1197 = vsel %vm1196, %v1189, %v1193
        %v1198 = vand.u32 2147483647, %v971
        %vm1199 = vcmp.eq.f32.partialorder %v1198, 8.507059e+37
        %v1200 = vand.u32 %v971, 2147483648
        %v1201 = vor.u32 1.1754944e-38, %v1200
        %v1202 = vsel %vm1199, %v1201, %v1197
        %v1203 = vmul.f32 1.0, %v1202
        %v1204 = vrcp.pop %v972
        %v1205 = vmul.f32 %v972, %v1204
        %v1206 = vsub.f32 1.0, %v1205
        %v1207 = vmul.f32 %v1204, %v1206
        %v1208 = vadd.f32 %v1204, %v1207
        %vm1209 = vweird.f32 %v972
        %vm1210 = vweird.f32 %v1204
        %vm1211 = vmor %vm1209, %vm1210
        %v1212 = vsel %vm1211, %v1204, %v1208
        %v1213 = vand.u32 2147483647, %v972
        %vm1214 = vcmp.eq.f32.partialorder %v1213, 8.507059e+37
        %v1215 = vand.u32 %v972, 2147483648
        %v1216 = vor.u32 1.1754944e-38, %v1215
        %v1217 = vsel %vm1214, %v1216, %v1212
        %v1218 = vmul.f32 1.0, %v1217
        %v1219 = vrcp.pop %v973
        %v1220 = vmul.f32 %v973, %v1219
        %v1221 = vsub.f32 1.0, %v1220
        %v1222 = vmul.f32 %v1219, %v1221
        %v1223 = vadd.f32 %v1219, %v1222
        %vm1224 = vweird.f32 %v973
        %vm1225 = vweird.f32 %v1219
        %vm1226 = vmor %vm1224, %vm1225
        %v1227 = vsel %vm1226, %v1219, %v1223
        %v1228 = vand.u32 2147483647, %v973
        %vm1229 = vcmp.eq.f32.partialorder %v1228, 8.507059e+37
        %v1230 = vand.u32 %v973, 2147483648
        %v1231 = vor.u32 1.1754944e-38, %v1230
        %v1232 = vsel %vm1229, %v1231, %v1227
        %v1233 = vmul.f32 1.0, %v1232
        %v1234 = vrcp.pop %v974
        %v1235 = vmul.f32 %v974, %v1234
        %v1236 = vsub.f32 1.0, %v1235
        %v1237 = vmul.f32 %v1234, %v1236
        %v1238 = vadd.f32 %v1234, %v1237
        %vm1239 = vweird.f32 %v974
        %vm1240 = vweird.f32 %v1234
        %vm1241 = vmor %vm1239, %vm1240
        %v1242 = vsel %vm1241, %v1234, %v1238
        %v1243 = vand.u32 2147483647, %v974
        %vm1244 = vcmp.eq.f32.partialorder %v1243, 8.507059e+37
        %v1245 = vand.u32 %v974, 2147483648
        %v1246 = vor.u32 1.1754944e-38, %v1245
        %v1247 = vsel %vm1244, %v1246, %v1242
        %v1248 = vmul.f32 1.0, %v1247
        %v1249 = vrcp.pop %v975
        %v1250 = vmul.f32 %v975, %v1249
        %v1251 = vsub.f32 1.0, %v1250
        %v1252 = vmul.f32 %v1249, %v1251
        %v1253 = vadd.f32 %v1249, %v1252
        %vm1254 = vweird.f32 %v975
        %vm1255 = vweird.f32 %v1249
        %vm1256 = vmor %vm1254, %vm1255
        %v1257 = vsel %vm1256, %v1249, %v1253
        %v1258 = vand.u32 2147483647, %v975
        %vm1259 = vcmp.eq.f32.partialorder %v1258, 8.507059e+37
        %v1260 = vand.u32 %v975, 2147483648
        %v1261 = vor.u32 1.1754944e-38, %v1260
        %v1262 = vsel %vm1259, %v1261, %v1257
        %v1263 = vmul.f32 1.0, %v1262
        %v1264 = vrcp.pop %v976
        %v1265 = vmul.f32 %v976, %v1264
        %v1266 = vsub.f32 1.0, %v1265
        %v1267 = vmul.f32 %v1264, %v1266
        %v1268 = vadd.f32 %v1264, %v1267
        %vm1269 = vweird.f32 %v976
        %vm1270 = vweird.f32 %v1264
        %vm1271 = vmor %vm1269, %vm1270
        %v1272 = vsel %vm1271, %v1264, %v1268
        %v1273 = vand.u32 2147483647, %v976
        %vm1274 = vcmp.eq.f32.partialorder %v1273, 8.507059e+37
        %v1275 = vand.u32 %v976, 2147483648
        %v1276 = vor.u32 1.1754944e-38, %v1275
        %v1277 = vsel %vm1274, %v1276, %v1272
        %v1278 = vmul.f32 1.0, %v1277
        %v1279 = vrcp.pop %v977
        %v1280 = vmul.f32 %v977, %v1279
        %v1281 = vsub.f32 1.0, %v1280
        %v1282 = vmul.f32 %v1279, %v1281
        %v1283 = vadd.f32 %v1279, %v1282
        %vm1284 = vweird.f32 %v977
        %vm1285 = vweird.f32 %v1279
        %vm1286 = vmor %vm1284, %vm1285
        %v1287 = vsel %vm1286, %v1279, %v1283
        %v1288 = vand.u32 2147483647, %v977
        %vm1289 = vcmp.eq.f32.partialorder %v1288, 8.507059e+37
        %v1290 = vand.u32 %v977, 2147483648
        %v1291 = vor.u32 1.1754944e-38, %v1290
        %v1292 = vsel %vm1289, %v1291, %v1287
        %v1293 = vmul.f32 1.0, %v1292
        %v1294 = vrcp.pop %v978
        %v1295 = vmul.f32 %v978, %v1294
        %v1296 = vsub.f32 1.0, %v1295
        %v1297 = vmul.f32 %v1294, %v1296
        %v1298 = vadd.f32 %v1294, %v1297
        %vm1299 = vweird.f32 %v978
        %vm1300 = vweird.f32 %v1294
        %vm1301 = vmor %vm1299, %vm1300
        %v1302 = vsel %vm1301, %v1294, %v1298
        %v1303 = vand.u32 2147483647, %v978
        %vm1304 = vcmp.eq.f32.partialorder %v1303, 8.507059e+37
        %v1305 = vand.u32 %v978, 2147483648
        %v1306 = vor.u32 1.1754944e-38, %v1305
        %v1307 = vsel %vm1304, %v1306, %v1302
        %v1308 = vmul.f32 1.0, %v1307
        %v1309 = vrcp.pop %v979
        %v1310 = vmul.f32 %v979, %v1309
        %v1311 = vsub.f32 1.0, %v1310
        %v1312 = vmul.f32 %v1309, %v1311
        %v1313 = vadd.f32 %v1309, %v1312
        %vm1314 = vweird.f32 %v979
        %vm1315 = vweird.f32 %v1309
        %vm1316 = vmor %vm1314, %vm1315
        %v1317 = vsel %vm1316, %v1309, %v1313
        %v1318 = vand.u32 2147483647, %v979
        %vm1319 = vcmp.eq.f32.partialorder %v1318, 8.507059e+37
        %v1320 = vand.u32 %v979, 2147483648
        %v1321 = vor.u32 1.1754944e-38, %v1320
        %v1322 = vsel %vm1319, %v1321, %v1317
        %v1323 = vmul.f32 1.0, %v1322
        %v1324 = vrcp.pop %v980
        %v1325 = vmul.f32 %v980, %v1324
        %v1326 = vsub.f32 1.0, %v1325
        %v1327 = vmul.f32 %v1324, %v1326
        %v1328 = vadd.f32 %v1324, %v1327
        %vm1329 = vweird.f32 %v980
        %vm1330 = vweird.f32 %v1324
        %vm1331 = vmor %vm1329, %vm1330
        %v1332 = vsel %vm1331, %v1324, %v1328
        %v1333 = vand.u32 2147483647, %v980
        %vm1334 = vcmp.eq.f32.partialorder %v1333, 8.507059e+37
        %v1335 = vand.u32 %v980, 2147483648
        %v1336 = vor.u32 1.1754944e-38, %v1335
        %v1337 = vsel %vm1334, %v1336, %v1332
        %v1338 = vmul.f32 1.0, %v1337
        %v1339 = vrcp.pop %v981
        %v1340 = vmul.f32 %v981, %v1339
        %v1341 = vsub.f32 1.0, %v1340
        %v1342 = vmul.f32 %v1339, %v1341
        %v1343 = vadd.f32 %v1339, %v1342
        %vm1344 = vweird.f32 %v981
        %vm1345 = vweird.f32 %v1339
        %vm1346 = vmor %vm1344, %vm1345
        %v1347 = vsel %vm1346, %v1339, %v1343
        %v1348 = vand.u32 2147483647, %v981
        %vm1349 = vcmp.eq.f32.partialorder %v1348, 8.507059e+37
        %v1350 = vand.u32 %v981, 2147483648
        %v1351 = vor.u32 1.1754944e-38, %v1350
        %v1352 = vsel %vm1349, %v1351, %v1347
        %v1353 = vmul.f32 1.0, %v1352
        %v1354 = vrcp.pop %v982
        %v1355 = vmul.f32 %v982, %v1354
        %v1356 = vsub.f32 1.0, %v1355
        %v1357 = vmul.f32 %v1354, %v1356
        %v1358 = vadd.f32 %v1354, %v1357
        %vm1359 = vweird.f32 %v982
        %vm1360 = vweird.f32 %v1354
        %vm1361 = vmor %vm1359, %vm1360
        %v1362 = vsel %vm1361, %v1354, %v1358
        %v1363 = vand.u32 2147483647, %v982
        %vm1364 = vcmp.eq.f32.partialorder %v1363, 8.507059e+37
        %v1365 = vand.u32 %v982, 2147483648
        %v1366 = vor.u32 1.1754944e-38, %v1365
        %v1367 = vsel %vm1364, %v1366, %v1362
        %v1368 = vmul.f32 1.0, %v1367
        %v1369 = vrcp.pop %v983
        %v1370 = vmul.f32 %v983, %v1369
        %v1371 = vsub.f32 1.0, %v1370
        %v1372 = vmul.f32 %v1369, %v1371
        %v1373 = vadd.f32 %v1369, %v1372
        %vm1374 = vweird.f32 %v983
        %vm1375 = vweird.f32 %v1369
        %vm1376 = vmor %vm1374, %vm1375
        %v1377 = vsel %vm1376, %v1369, %v1373
        %v1378 = vand.u32 2147483647, %v983
        %vm1379 = vcmp.eq.f32.partialorder %v1378, 8.507059e+37
        %v1380 = vand.u32 %v983, 2147483648
        %v1381 = vor.u32 1.1754944e-38, %v1380
        %v1382 = vsel %vm1379, %v1381, %v1377
        %v1383 = vmul.f32 1.0, %v1382
        %v1384 = vrcp.pop %v984
        %v1385 = vmul.f32 %v984, %v1384
        %v1386 = vsub.f32 1.0, %v1385
        %v1387 = vmul.f32 %v1384, %v1386
        %v1388 = vadd.f32 %v1384, %v1387
        %vm1389 = vweird.f32 %v984
        %vm1390 = vweird.f32 %v1384
        %vm1391 = vmor %vm1389, %vm1390
        %v1392 = vsel %vm1391, %v1384, %v1388
        %v1393 = vand.u32 2147483647, %v984
        %vm1394 = vcmp.eq.f32.partialorder %v1393, 8.507059e+37
        %v1395 = vand.u32 %v984, 2147483648
        %v1396 = vor.u32 1.1754944e-38, %v1395
        %v1397 = vsel %vm1394, %v1396, %v1392
        %v1398 = vmul.f32 1.0, %v1397
        %v1399 = vrcp.pop %v985
        %v1400 = vmul.f32 %v985, %v1399
        %v1401 = vsub.f32 1.0, %v1400
        %v1402 = vmul.f32 %v1399, %v1401
        %v1403 = vadd.f32 %v1399, %v1402
        %vm1404 = vweird.f32 %v985
        %vm1405 = vweird.f32 %v1399
        %vm1406 = vmor %vm1404, %vm1405
        %v1407 = vsel %vm1406, %v1399, %v1403
        %v1408 = vand.u32 2147483647, %v985
        %vm1409 = vcmp.eq.f32.partialorder %v1408, 8.507059e+37
        %v1410 = vand.u32 %v985, 2147483648
        %v1411 = vor.u32 1.1754944e-38, %v1410
        %v1412 = vsel %vm1409, %v1411, %v1407
        %v1413 = vmul.f32 1.0, %v1412
        %v1414 = vrcp.pop %v986
        %v1415 = vmul.f32 %v986, %v1414
        %v1416 = vsub.f32 1.0, %v1415
        %v1417 = vmul.f32 %v1414, %v1416
        %v1418 = vadd.f32 %v1414, %v1417
        %vm1419 = vweird.f32 %v986
        %vm1420 = vweird.f32 %v1414
        %vm1421 = vmor %vm1419, %vm1420
        %v1422 = vsel %vm1421, %v1414, %v1418
        %v1423 = vand.u32 2147483647, %v986
        %vm1424 = vcmp.eq.f32.partialorder %v1423, 8.507059e+37
        %v1425 = vand.u32 %v986, 2147483648
        %v1426 = vor.u32 1.1754944e-38, %v1425
        %v1427 = vsel %vm1424, %v1426, %v1422
        %v1428 = vmul.f32 1.0, %v1427
        %v1429 = vrcp.pop %v987
        %v1430 = vmul.f32 %v987, %v1429
        %v1431 = vsub.f32 1.0, %v1430
        %v1432 = vmul.f32 %v1429, %v1431
        %v1433 = vadd.f32 %v1429, %v1432
        %vm1434 = vweird.f32 %v987
        %vm1435 = vweird.f32 %v1429
        %vm1436 = vmor %vm1434, %vm1435
        %v1437 = vsel %vm1436, %v1429, %v1433
        %v1438 = vand.u32 2147483647, %v987
        %vm1439 = vcmp.eq.f32.partialorder %v1438, 8.507059e+37
        %v1440 = vand.u32 %v987, 2147483648
        %v1441 = vor.u32 1.1754944e-38, %v1440
        %v1442 = vsel %vm1439, %v1441, %v1437
        %v1443 = vmul.f32 1.0, %v1442
        %v1444 = vrcp.pop %v988
        %v1445 = vmul.f32 %v988, %v1444
        %v1446 = vsub.f32 1.0, %v1445
        %v1447 = vmul.f32 %v1444, %v1446
        %v1448 = vadd.f32 %v1444, %v1447
        %vm1449 = vweird.f32 %v988
        %vm1450 = vweird.f32 %v1444
        %vm1451 = vmor %vm1449, %vm1450
        %v1452 = vsel %vm1451, %v1444, %v1448
        %v1453 = vand.u32 2147483647, %v988
        %vm1454 = vcmp.eq.f32.partialorder %v1453, 8.507059e+37
        %v1455 = vand.u32 %v988, 2147483648
        %v1456 = vor.u32 1.1754944e-38, %v1455
        %v1457 = vsel %vm1454, %v1456, %v1452
        %v1458 = vmul.f32 1.0, %v1457
        %v1459 = vrcp.pop %v989
        %v1460 = vmul.f32 %v989, %v1459
        %v1461 = vsub.f32 1.0, %v1460
        %v1462 = vmul.f32 %v1459, %v1461
        %v1463 = vadd.f32 %v1459, %v1462
        %vm1464 = vweird.f32 %v989
        %vm1465 = vweird.f32 %v1459
        %vm1466 = vmor %vm1464, %vm1465
        %v1467 = vsel %vm1466, %v1459, %v1463
        %v1468 = vand.u32 2147483647, %v989
        %vm1469 = vcmp.eq.f32.partialorder %v1468, 8.507059e+37
        %v1470 = vand.u32 %v989, 2147483648
        %v1471 = vor.u32 1.1754944e-38, %v1470
        %v1472 = vsel %vm1469, %v1471, %v1467
        %v1473 = vmul.f32 1.0, %v1472
        %v1474 = vrcp.pop %v990
        %v1475 = vmul.f32 %v990, %v1474
        %v1476 = vsub.f32 1.0, %v1475
        %v1477 = vmul.f32 %v1474, %v1476
        %v1478 = vadd.f32 %v1474, %v1477
        %vm1479 = vweird.f32 %v990
        %vm1480 = vweird.f32 %v1474
        %vm1481 = vmor %vm1479, %vm1480
        %v1482 = vsel %vm1481, %v1474, %v1478
        %v1483 = vand.u32 2147483647, %v990
        %vm1484 = vcmp.eq.f32.partialorder %v1483, 8.507059e+37
        %v1485 = vand.u32 %v990, 2147483648
        %v1486 = vor.u32 1.1754944e-38, %v1485
        %v1487 = vsel %vm1484, %v1486, %v1482
        %v1488 = vmul.f32 1.0, %v1487
        %v1489 = vrcp.pop %v991
        %v1490 = vmul.f32 %v991, %v1489
        %v1491 = vsub.f32 1.0, %v1490
        %v1492 = vmul.f32 %v1489, %v1491
        %v1493 = vadd.f32 %v1489, %v1492
        %vm1494 = vweird.f32 %v991
        %vm1495 = vweird.f32 %v1489
        %vm1496 = vmor %vm1494, %vm1495
        %v1497 = vsel %vm1496, %v1489, %v1493
        %v1498 = vand.u32 2147483647, %v991
        %vm1499 = vcmp.eq.f32.partialorder %v1498, 8.507059e+37
        %v1500 = vand.u32 %v991, 2147483648
        %v1501 = vor.u32 1.1754944e-38, %v1500
        %v1502 = vsel %vm1499, %v1501, %v1497
        %v1503 = vmul.f32 1.0, %v1502
        %v1504 = vrcp.pop %v992
        %v1505 = vmul.f32 %v992, %v1504
        %v1506 = vsub.f32 1.0, %v1505
        %v1507 = vmul.f32 %v1504, %v1506
        %v1508 = vadd.f32 %v1504, %v1507
        %vm1509 = vweird.f32 %v992
        %vm1510 = vweird.f32 %v1504
        %vm1511 = vmor %vm1509, %vm1510
        %v1512 = vsel %vm1511, %v1504, %v1508
        %v1513 = vand.u32 2147483647, %v992
        %vm1514 = vcmp.eq.f32.partialorder %v1513, 8.507059e+37
        %v1515 = vand.u32 %v992, 2147483648
        %v1516 = vor.u32 1.1754944e-38, %v1515
        %v1517 = vsel %vm1514, %v1516, %v1512
        %v1518 = vmul.f32 1.0, %v1517
        %v1519 = vrcp.pop %v993
        %v1520 = vmul.f32 %v993, %v1519
        %v1521 = vsub.f32 1.0, %v1520
        %v1522 = vmul.f32 %v1519, %v1521
        %v1523 = vadd.f32 %v1519, %v1522
        %vm1524 = vweird.f32 %v993
        %vm1525 = vweird.f32 %v1519
        %vm1526 = vmor %vm1524, %vm1525
        %v1527 = vsel %vm1526, %v1519, %v1523
        %v1528 = vand.u32 2147483647, %v993
        %vm1529 = vcmp.eq.f32.partialorder %v1528, 8.507059e+37
        %v1530 = vand.u32 %v993, 2147483648
        %v1531 = vor.u32 1.1754944e-38, %v1530
        %v1532 = vsel %vm1529, %v1531, %v1527
        %v1533 = vmul.f32 1.0, %v1532
        %v1534 = vrcp.pop %v994
        %v1535 = vmul.f32 %v994, %v1534
        %v1536 = vsub.f32 1.0, %v1535
        %v1537 = vmul.f32 %v1534, %v1536
        %v1538 = vadd.f32 %v1534, %v1537
        %vm1539 = vweird.f32 %v994
        %vm1540 = vweird.f32 %v1534
        %vm1541 = vmor %vm1539, %vm1540
        %v1542 = vsel %vm1541, %v1534, %v1538
        %v1543 = vand.u32 2147483647, %v994
        %vm1544 = vcmp.eq.f32.partialorder %v1543, 8.507059e+37
        %v1545 = vand.u32 %v994, 2147483648
        %v1546 = vor.u32 1.1754944e-38, %v1545
        %v1547 = vsel %vm1544, %v1546, %v1542
        %v1548 = vmul.f32 1.0, %v1547
        %v1549 = vrcp.pop %v995
        %v1550 = vmul.f32 %v995, %v1549
        %v1551 = vsub.f32 1.0, %v1550
        %v1552 = vmul.f32 %v1549, %v1551
        %v1553 = vadd.f32 %v1549, %v1552
        %vm1554 = vweird.f32 %v995
        %vm1555 = vweird.f32 %v1549
        %vm1556 = vmor %vm1554, %vm1555
        %v1557 = vsel %vm1556, %v1549, %v1553
        %v1558 = vand.u32 2147483647, %v995
        %vm1559 = vcmp.eq.f32.partialorder %v1558, 8.507059e+37
        %v1560 = vand.u32 %v995, 2147483648
        %v1561 = vor.u32 1.1754944e-38, %v1560
        %v1562 = vsel %vm1559, %v1561, %v1557
        %v1563 = vmul.f32 1.0, %v1562
        %v1564 = vrcp.pop %v996
        %v1565 = vmul.f32 %v996, %v1564
        %v1566 = vsub.f32 1.0, %v1565
        %v1567 = vmul.f32 %v1564, %v1566
        %v1568 = vadd.f32 %v1564, %v1567
        %vm1569 = vweird.f32 %v996
        %vm1570 = vweird.f32 %v1564
        %vm1571 = vmor %vm1569, %vm1570
        %v1572 = vsel %vm1571, %v1564, %v1568
        %v1573 = vand.u32 2147483647, %v996
        %vm1574 = vcmp.eq.f32.partialorder %v1573, 8.507059e+37
        %v1575 = vand.u32 %v996, 2147483648
        %v1576 = vor.u32 1.1754944e-38, %v1575
        %v1577 = vsel %vm1574, %v1576, %v1572
        %v1578 = vmul.f32 1.0, %v1577
        %v1579 = vrcp.pop %v997
        %v1580 = vmul.f32 %v997, %v1579
        %v1581 = vsub.f32 1.0, %v1580
        %v1582 = vmul.f32 %v1579, %v1581
        %v1583 = vadd.f32 %v1579, %v1582
        %vm1584 = vweird.f32 %v997
        %vm1585 = vweird.f32 %v1579
        %vm1586 = vmor %vm1584, %vm1585
        %v1587 = vsel %vm1586, %v1579, %v1583
        %v1588 = vand.u32 2147483647, %v997
        %vm1589 = vcmp.eq.f32.partialorder %v1588, 8.507059e+37
        %v1590 = vand.u32 %v997, 2147483648
        %v1591 = vor.u32 1.1754944e-38, %v1590
        %v1592 = vsel %vm1589, %v1591, %v1587
        %v1593 = vmul.f32 1.0, %v1592
        %v1594 = vrcp.pop %v998
        %v1595 = vmul.f32 %v998, %v1594
        %v1596 = vsub.f32 1.0, %v1595
        %v1597 = vmul.f32 %v1594, %v1596
        %v1598 = vadd.f32 %v1594, %v1597
        %vm1599 = vweird.f32 %v998
        %vm1600 = vweird.f32 %v1594
        %vm1601 = vmor %vm1599, %vm1600
        %v1602 = vsel %vm1601, %v1594, %v1598
        %v1603 = vand.u32 2147483647, %v998
        %vm1604 = vcmp.eq.f32.partialorder %v1603, 8.507059e+37
        %v1605 = vand.u32 %v998, 2147483648
        %v1606 = vor.u32 1.1754944e-38, %v1605
        %v1607 = vsel %vm1604, %v1606, %v1602
        %v1608 = vmul.f32 1.0, %v1607
        %v1609 = vrcp.pop %v999
        %v1610 = vmul.f32 %v999, %v1609
        %v1611 = vsub.f32 1.0, %v1610
        %v1612 = vmul.f32 %v1609, %v1611
        %v1613 = vadd.f32 %v1609, %v1612
        %vm1614 = vweird.f32 %v999
        %vm1615 = vweird.f32 %v1609
        %vm1616 = vmor %vm1614, %vm1615
        %v1617 = vsel %vm1616, %v1609, %v1613
        %v1618 = vand.u32 2147483647, %v999
        %vm1619 = vcmp.eq.f32.partialorder %v1618, 8.507059e+37
        %v1620 = vand.u32 %v999, 2147483648
        %v1621 = vor.u32 1.1754944e-38, %v1620
        %v1622 = vsel %vm1619, %v1621, %v1617
        %v1623 = vmul.f32 1.0, %v1622
        %v1624 = vrcp.pop %v1000
        %v1625 = vmul.f32 %v1000, %v1624
        %v1626 = vsub.f32 1.0, %v1625
        %v1627 = vmul.f32 %v1624, %v1626
        %v1628 = vadd.f32 %v1624, %v1627
        %vm1629 = vweird.f32 %v1000
        %vm1630 = vweird.f32 %v1624
        %vm1631 = vmor %vm1629, %vm1630
        %v1632 = vsel %vm1631, %v1624, %v1628
        %v1633 = vand.u32 2147483647, %v1000
        %vm1634 = vcmp.eq.f32.partialorder %v1633, 8.507059e+37
        %v1635 = vand.u32 %v1000, 2147483648
        %v1636 = vor.u32 1.1754944e-38, %v1635
        %v1637 = vsel %vm1634, %v1636, %v1632
        %v1638 = vmul.f32 1.0, %v1637
        %v1639 = vrcp.pop %v1001
        %v1640 = vmul.f32 %v1001, %v1639
        %v1641 = vsub.f32 1.0, %v1640
        %v1642 = vmul.f32 %v1639, %v1641
        %v1643 = vadd.f32 %v1639, %v1642
        %vm1644 = vweird.f32 %v1001
        %vm1645 = vweird.f32 %v1639
        %vm1646 = vmor %vm1644, %vm1645
        %v1647 = vsel %vm1646, %v1639, %v1643
        %v1648 = vand.u32 2147483647, %v1001
        %vm1649 = vcmp.eq.f32.partialorder %v1648, 8.507059e+37
        %v1650 = vand.u32 %v1001, 2147483648
        %v1651 = vor.u32 1.1754944e-38, %v1650
        %v1652 = vsel %vm1649, %v1651, %v1647
        %v1653 = vmul.f32 1.0, %v1652
        %v1654 = vrcp.pop %v1002
        %v1655 = vmul.f32 %v1002, %v1654
        %v1656 = vsub.f32 1.0, %v1655
        %v1657 = vmul.f32 %v1654, %v1656
        %v1658 = vadd.f32 %v1654, %v1657
        %vm1659 = vweird.f32 %v1002
        %vm1660 = vweird.f32 %v1654
        %vm1661 = vmor %vm1659, %vm1660
        %v1662 = vsel %vm1661, %v1654, %v1658
        %v1663 = vand.u32 2147483647, %v1002
        %vm1664 = vcmp.eq.f32.partialorder %v1663, 8.507059e+37
        %v1665 = vand.u32 %v1002, 2147483648
        %v1666 = vor.u32 1.1754944e-38, %v1665
        %v1667 = vsel %vm1664, %v1666, %v1662
        %v1668 = vmul.f32 1.0, %v1667
        %v1669 = vrcp.pop %v1003
        %v1670 = vmul.f32 %v1003, %v1669
        %v1671 = vsub.f32 1.0, %v1670
        %v1672 = vmul.f32 %v1669, %v1671
        %v1673 = vadd.f32 %v1669, %v1672
        %vm1674 = vweird.f32 %v1003
        %vm1675 = vweird.f32 %v1669
        %vm1676 = vmor %vm1674, %vm1675
        %v1677 = vsel %vm1676, %v1669, %v1673
        %v1678 = vand.u32 2147483647, %v1003
        %vm1679 = vcmp.eq.f32.partialorder %v1678, 8.507059e+37
        %v1680 = vand.u32 %v1003, 2147483648
        %v1681 = vor.u32 1.1754944e-38, %v1680
        %v1682 = vsel %vm1679, %v1681, %v1677
        %v1683 = vmul.f32 1.0, %v1682
        %v1684 = vrcp.pop %v1004
        %v1685 = vmul.f32 %v1004, %v1684
        %v1686 = vsub.f32 1.0, %v1685
        %v1687 = vmul.f32 %v1684, %v1686
        %v1688 = vadd.f32 %v1684, %v1687
        %vm1689 = vweird.f32 %v1004
        %vm1690 = vweird.f32 %v1684
        %vm1691 = vmor %vm1689, %vm1690
        %v1692 = vsel %vm1691, %v1684, %v1688
        %v1693 = vand.u32 2147483647, %v1004
        %vm1694 = vcmp.eq.f32.partialorder %v1693, 8.507059e+37
        %v1695 = vand.u32 %v1004, 2147483648
        %v1696 = vor.u32 1.1754944e-38, %v1695
        %v1697 = vsel %vm1694, %v1696, %v1692
        %v1698 = vmul.f32 1.0, %v1697
        %v1699 = vrcp.pop %v1005
        %v1700 = vmul.f32 %v1005, %v1699
        %v1701 = vsub.f32 1.0, %v1700
        %v1702 = vmul.f32 %v1699, %v1701
        %v1703 = vadd.f32 %v1699, %v1702
        %vm1704 = vweird.f32 %v1005
        %vm1705 = vweird.f32 %v1699
        %vm1706 = vmor %vm1704, %vm1705
        %v1707 = vsel %vm1706, %v1699, %v1703
        %v1708 = vand.u32 2147483647, %v1005
        %vm1709 = vcmp.eq.f32.partialorder %v1708, 8.507059e+37
        %v1710 = vand.u32 %v1005, 2147483648
        %v1711 = vor.u32 1.1754944e-38, %v1710
        %v1712 = vsel %vm1709, %v1711, %v1707
        %v1713 = vmul.f32 1.0, %v1712
        %v1714 = vrcp.pop %v1006
        %v1715 = vmul.f32 %v1006, %v1714
        %v1716 = vsub.f32 1.0, %v1715
        %v1717 = vmul.f32 %v1714, %v1716
        %v1718 = vadd.f32 %v1714, %v1717
        %vm1719 = vweird.f32 %v1006
        %vm1720 = vweird.f32 %v1714
        %vm1721 = vmor %vm1719, %vm1720
        %v1722 = vsel %vm1721, %v1714, %v1718
        %v1723 = vand.u32 2147483647, %v1006
        %vm1724 = vcmp.eq.f32.partialorder %v1723, 8.507059e+37
        %v1725 = vand.u32 %v1006, 2147483648
        %v1726 = vor.u32 1.1754944e-38, %v1725
        %v1727 = vsel %vm1724, %v1726, %v1722
        %v1728 = vmul.f32 1.0, %v1727
        %v1729 = vrcp.pop %v1007
        %v1730 = vmul.f32 %v1007, %v1729
        %v1731 = vsub.f32 1.0, %v1730
        %v1732 = vmul.f32 %v1729, %v1731
        %v1733 = vadd.f32 %v1729, %v1732
        %vm1734 = vweird.f32 %v1007
        %vm1735 = vweird.f32 %v1729
        %vm1736 = vmor %vm1734, %vm1735
        %v1737 = vsel %vm1736, %v1729, %v1733
        %v1738 = vand.u32 2147483647, %v1007
        %vm1739 = vcmp.eq.f32.partialorder %v1738, 8.507059e+37
        %v1740 = vand.u32 %v1007, 2147483648
        %v1741 = vor.u32 1.1754944e-38, %v1740
        %v1742 = vsel %vm1739, %v1741, %v1737
        %v1743 = vmul.f32 1.0, %v1742
        %v1744 = vrcp.pop %v1008
        %v1745 = vmul.f32 %v1008, %v1744
        %v1746 = vsub.f32 1.0, %v1745
        %v1747 = vmul.f32 %v1744, %v1746
        %v1748 = vadd.f32 %v1744, %v1747
        %vm1749 = vweird.f32 %v1008
        %vm1750 = vweird.f32 %v1744
        %vm1751 = vmor %vm1749, %vm1750
        %v1752 = vsel %vm1751, %v1744, %v1748
        %v1753 = vand.u32 2147483647, %v1008
        %vm1754 = vcmp.eq.f32.partialorder %v1753, 8.507059e+37
        %v1755 = vand.u32 %v1008, 2147483648
        %v1756 = vor.u32 1.1754944e-38, %v1755
        %v1757 = vsel %vm1754, %v1756, %v1752
        %v1758 = vmul.f32 1.0, %v1757
        %v1759 = vrcp.pop %v1009
        %v1760 = vmul.f32 %v1009, %v1759
        %v1761 = vsub.f32 1.0, %v1760
        %v1762 = vmul.f32 %v1759, %v1761
        %v1763 = vadd.f32 %v1759, %v1762
        %vm1764 = vweird.f32 %v1009
        %vm1765 = vweird.f32 %v1759
        %vm1766 = vmor %vm1764, %vm1765
        %v1767 = vsel %vm1766, %v1759, %v1763
        %v1768 = vand.u32 2147483647, %v1009
        %vm1769 = vcmp.eq.f32.partialorder %v1768, 8.507059e+37
        %v1770 = vand.u32 %v1009, 2147483648
        %v1771 = vor.u32 1.1754944e-38, %v1770
        %v1772 = vsel %vm1769, %v1771, %v1767
        %v1773 = vmul.f32 1.0, %v1772
        %v1774 = vrcp.pop %v1010
        %v1775 = vmul.f32 %v1010, %v1774
        %v1776 = vsub.f32 1.0, %v1775
        %v1777 = vmul.f32 %v1774, %v1776
        %v1778 = vadd.f32 %v1774, %v1777
        %vm1779 = vweird.f32 %v1010
        %vm1780 = vweird.f32 %v1774
        %vm1781 = vmor %vm1779, %vm1780
        %v1782 = vsel %vm1781, %v1774, %v1778
        %v1783 = vand.u32 2147483647, %v1010
        %vm1784 = vcmp.eq.f32.partialorder %v1783, 8.507059e+37
        %v1785 = vand.u32 %v1010, 2147483648
        %v1786 = vor.u32 1.1754944e-38, %v1785
        %v1787 = vsel %vm1784, %v1786, %v1782
        %v1788 = vmul.f32 1.0, %v1787
        %v1789 = vrcp.pop %v1011
        %v1790 = vmul.f32 %v1011, %v1789
        %v1791 = vsub.f32 1.0, %v1790
        %v1792 = vmul.f32 %v1789, %v1791
        %v1793 = vadd.f32 %v1789, %v1792
        %vm1794 = vweird.f32 %v1011
        %vm1795 = vweird.f32 %v1789
        %vm1796 = vmor %vm1794, %vm1795
        %v1797 = vsel %vm1796, %v1789, %v1793
        %v1798 = vand.u32 2147483647, %v1011
        %vm1799 = vcmp.eq.f32.partialorder %v1798, 8.507059e+37
        %v1800 = vand.u32 %v1011, 2147483648
        %v1801 = vor.u32 1.1754944e-38, %v1800
        %v1802 = vsel %vm1799, %v1801, %v1797
        %v1803 = vmul.f32 1.0, %v1802
        %v1804 = vrcp.pop %v1012
        %v1805 = vmul.f32 %v1012, %v1804
        %v1806 = vsub.f32 1.0, %v1805
        %v1807 = vmul.f32 %v1804, %v1806
        %v1808 = vadd.f32 %v1804, %v1807
        %vm1809 = vweird.f32 %v1012
        %vm1810 = vweird.f32 %v1804
        %vm1811 = vmor %vm1809, %vm1810
        %v1812 = vsel %vm1811, %v1804, %v1808
        %v1813 = vand.u32 2147483647, %v1012
        %vm1814 = vcmp.eq.f32.partialorder %v1813, 8.507059e+37
        %v1815 = vand.u32 %v1012, 2147483648
        %v1816 = vor.u32 1.1754944e-38, %v1815
        %v1817 = vsel %vm1814, %v1816, %v1812
        %v1818 = vmul.f32 1.0, %v1817
        %v1819 = vrcp.pop %v1013
        %v1820 = vmul.f32 %v1013, %v1819
        %v1821 = vsub.f32 1.0, %v1820
        %v1822 = vmul.f32 %v1819, %v1821
        %v1823 = vadd.f32 %v1819, %v1822
        %vm1824 = vweird.f32 %v1013
        %vm1825 = vweird.f32 %v1819
        %vm1826 = vmor %vm1824, %vm1825
        %v1827 = vsel %vm1826, %v1819, %v1823
        %v1828 = vand.u32 2147483647, %v1013
        %vm1829 = vcmp.eq.f32.partialorder %v1828, 8.507059e+37
        %v1830 = vand.u32 %v1013, 2147483648
        %v1831 = vor.u32 1.1754944e-38, %v1830
        %v1832 = vsel %vm1829, %v1831, %v1827
        %v1833 = vmul.f32 1.0, %v1832
        %v1834 = vrcp.pop %v1014
        %v1835 = vmul.f32 %v1014, %v1834
        %v1836 = vsub.f32 1.0, %v1835
        %v1837 = vmul.f32 %v1834, %v1836
        %v1838 = vadd.f32 %v1834, %v1837
        %vm1839 = vweird.f32 %v1014
        %vm1840 = vweird.f32 %v1834
        %vm1841 = vmor %vm1839, %vm1840
        %v1842 = vsel %vm1841, %v1834, %v1838
        %v1843 = vand.u32 2147483647, %v1014
        %vm1844 = vcmp.eq.f32.partialorder %v1843, 8.507059e+37
        %v1845 = vand.u32 %v1014, 2147483648
        %v1846 = vor.u32 1.1754944e-38, %v1845
        %v1847 = vsel %vm1844, %v1846, %v1842
        %v1848 = vmul.f32 1.0, %v1847
        %v1849 = vrcp.pop %v1015
        %v1850 = vmul.f32 %v1015, %v1849
        %v1851 = vsub.f32 1.0, %v1850
        %v1852 = vmul.f32 %v1849, %v1851
        %v1853 = vadd.f32 %v1849, %v1852
        %vm1854 = vweird.f32 %v1015
        %vm1855 = vweird.f32 %v1849
        %vm1856 = vmor %vm1854, %vm1855
        %v1857 = vsel %vm1856, %v1849, %v1853
        %v1858 = vand.u32 2147483647, %v1015
        %vm1859 = vcmp.eq.f32.partialorder %v1858, 8.507059e+37
        %v1860 = vand.u32 %v1015, 2147483648
        %v1861 = vor.u32 1.1754944e-38, %v1860
        %v1862 = vsel %vm1859, %v1861, %v1857
        %v1863 = vmul.f32 1.0, %v1862
        %v1864 = vrcp.pop %v1016
        %v1865 = vmul.f32 %v1016, %v1864
        %v1866 = vsub.f32 1.0, %v1865
        %v1867 = vmul.f32 %v1864, %v1866
        %v1868 = vadd.f32 %v1864, %v1867
        %vm1869 = vweird.f32 %v1016
        %vm1870 = vweird.f32 %v1864
        %vm1871 = vmor %vm1869, %vm1870
        %v1872 = vsel %vm1871, %v1864, %v1868
        %v1873 = vand.u32 2147483647, %v1016
        %vm1874 = vcmp.eq.f32.partialorder %v1873, 8.507059e+37
        %v1875 = vand.u32 %v1016, 2147483648
        %v1876 = vor.u32 1.1754944e-38, %v1875
        %v1877 = vsel %vm1874, %v1876, %v1872
        %v1878 = vmul.f32 1.0, %v1877
        %v1879 = vrcp.pop %v1017
        %v1880 = vmul.f32 %v1017, %v1879
        %v1881 = vsub.f32 1.0, %v1880
        %v1882 = vmul.f32 %v1879, %v1881
        %v1883 = vadd.f32 %v1879, %v1882
        %vm1884 = vweird.f32 %v1017
        %vm1885 = vweird.f32 %v1879
        %vm1886 = vmor %vm1884, %vm1885
        %v1887 = vsel %vm1886, %v1879, %v1883
        %v1888 = vand.u32 2147483647, %v1017
        %vm1889 = vcmp.eq.f32.partialorder %v1888, 8.507059e+37
        %v1890 = vand.u32 %v1017, 2147483648
        %v1891 = vor.u32 1.1754944e-38, %v1890
        %v1892 = vsel %vm1889, %v1891, %v1887
        %v1893 = vmul.f32 1.0, %v1892
        %v1894 = vrcp.pop %v1018
        %v1895 = vmul.f32 %v1018, %v1894
        %v1896 = vsub.f32 1.0, %v1895
        %v1897 = vmul.f32 %v1894, %v1896
        %v1898 = vadd.f32 %v1894, %v1897
        %vm1899 = vweird.f32 %v1018
        %vm1900 = vweird.f32 %v1894
        %vm1901 = vmor %vm1899, %vm1900
        %v1902 = vsel %vm1901, %v1894, %v1898
        %v1903 = vand.u32 2147483647, %v1018
        %vm1904 = vcmp.eq.f32.partialorder %v1903, 8.507059e+37
        %v1905 = vand.u32 %v1018, 2147483648
        %v1906 = vor.u32 1.1754944e-38, %v1905
        %v1907 = vsel %vm1904, %v1906, %v1902
        %v1908 = vmul.f32 1.0, %v1907
        %v1909 = vrcp.pop %v1019
        %v1910 = vmul.f32 %v1019, %v1909
        %v1911 = vsub.f32 1.0, %v1910
        %v1912 = vmul.f32 %v1909, %v1911
        %v1913 = vadd.f32 %v1909, %v1912
        %vm1914 = vweird.f32 %v1019
        %vm1915 = vweird.f32 %v1909
        %vm1916 = vmor %vm1914, %vm1915
        %v1917 = vsel %vm1916, %v1909, %v1913
        %v1918 = vand.u32 2147483647, %v1019
        %vm1919 = vcmp.eq.f32.partialorder %v1918, 8.507059e+37
        %v1920 = vand.u32 %v1019, 2147483648
        %v1921 = vor.u32 1.1754944e-38, %v1920
        %v1922 = vsel %vm1919, %v1921, %v1917
        %v1923 = vmul.f32 1.0, %v1922
        %v1924 = vrcp.pop %v1020
        %v1925 = vmul.f32 %v1020, %v1924
        %v1926 = vsub.f32 1.0, %v1925
        %v1927 = vmul.f32 %v1924, %v1926
        %v1928 = vadd.f32 %v1924, %v1927
        %vm1929 = vweird.f32 %v1020
        %vm1930 = vweird.f32 %v1924
        %vm1931 = vmor %vm1929, %vm1930
        %v1932 = vsel %vm1931, %v1924, %v1928
        %v1933 = vand.u32 2147483647, %v1020
        %vm1934 = vcmp.eq.f32.partialorder %v1933, 8.507059e+37
        %v1935 = vand.u32 %v1020, 2147483648
        %v1936 = vor.u32 1.1754944e-38, %v1935
        %v1937 = vsel %vm1934, %v1936, %v1932
        %v1938 = vmul.f32 1.0, %v1937
        %v1939 = vrcp.pop %v1021
        %v1940 = vmul.f32 %v1021, %v1939
        %v1941 = vsub.f32 1.0, %v1940
        %v1942 = vmul.f32 %v1939, %v1941
        %v1943 = vadd.f32 %v1939, %v1942
        %vm1944 = vweird.f32 %v1021
        %vm1945 = vweird.f32 %v1939
        %vm1946 = vmor %vm1944, %vm1945
        %v1947 = vsel %vm1946, %v1939, %v1943
        %v1948 = vand.u32 2147483647, %v1021
        %vm1949 = vcmp.eq.f32.partialorder %v1948, 8.507059e+37
        %v1950 = vand.u32 %v1021, 2147483648
        %v1951 = vor.u32 1.1754944e-38, %v1950
        %v1952 = vsel %vm1949, %v1951, %v1947
        %v1953 = vmul.f32 1.0, %v1952
        %v1954 = vrcp.pop %v1022
        %v1955 = vmul.f32 %v1022, %v1954
        %v1956 = vsub.f32 1.0, %v1955
        %v1957 = vmul.f32 %v1954, %v1956
        %v1958 = vadd.f32 %v1954, %v1957
        %vm1959 = vweird.f32 %v1022
        %vm1960 = vweird.f32 %v1954
        %vm1961 = vmor %vm1959, %vm1960
        %v1962 = vsel %vm1961, %v1954, %v1958
        %v1963 = vand.u32 2147483647, %v1022
        %vm1964 = vcmp.eq.f32.partialorder %v1963, 8.507059e+37
        %v1965 = vand.u32 %v1022, 2147483648
        %v1966 = vor.u32 1.1754944e-38, %v1965
        %v1967 = vsel %vm1964, %v1966, %v1962
        %v1968 = vmul.f32 1.0, %v1967
        %v1969 = vrcp.pop %v1023
        %v1970 = vmul.f32 %v1023, %v1969
        %v1971 = vsub.f32 1.0, %v1970
        %v1972 = vmul.f32 %v1969, %v1971
        %v1973 = vadd.f32 %v1969, %v1972
        %vm1974 = vweird.f32 %v1023
        %vm1975 = vweird.f32 %v1969
        %vm1976 = vmor %vm1974, %vm1975
        %v1977 = vsel %vm1976, %v1969, %v1973
        %v1978 = vand.u32 2147483647, %v1023
        %vm1979 = vcmp.eq.f32.partialorder %v1978, 8.507059e+37
        %v1980 = vand.u32 %v1023, 2147483648
        %v1981 = vor.u32 1.1754944e-38, %v1980
        %v1982 = vsel %vm1979, %v1981, %v1977
        %v1983 = vmul.f32 1.0, %v1982
        %1984 = vst [vmem:[%s247] sm:$0xff] %v1038
        %1985 = vst [vmem:[%s247 + $0x8] sm:$0xff] %v1053
        %1986 = vst [vmem:[%s247 + $0x10] sm:$0xff] %v1068
        %1987 = vst [vmem:[%s247 + $0x18] sm:$0xff] %v1083
        %1988 = vst [vmem:[%s247 + $0x20] sm:$0xff] %v1098
        %1989 = vst [vmem:[%s247 + $0x28] sm:$0xff] %v1113
        %1990 = vst [vmem:[%s247 + $0x30] sm:$0xff] %v1128
        %1991 = vst [vmem:[%s247 + $0x38] sm:$0xff] %v1143
        %1992 = vst [vmem:[%s247 + $0x40] sm:$0xff] %v1158
        %1993 = vst [vmem:[%s247 + $0x48] sm:$0xff] %v1173
        %1994 = vst [vmem:[%s247 + $0x50] sm:$0xff] %v1188
        %1995 = vst [vmem:[%s247 + $0x58] sm:$0xff] %v1203
        %1996 = vst [vmem:[%s247 + $0x60] sm:$0xff] %v1218
        %1997 = vst [vmem:[%s247 + $0x68] sm:$0xff] %v1233
        %1998 = vst [vmem:[%s247 + $0x70] sm:$0xff] %v1248
        %1999 = vst [vmem:[%s247 + $0x78] sm:$0xff] %v1263
        %2000 = vst [vmem:[%s247 + $0x80] sm:$0xff] %v1278
        %2001 = vst [vmem:[%s247 + $0x88] sm:$0xff] %v1293
        %2002 = vst [vmem:[%s247 + $0x90] sm:$0xff] %v1308
        %2003 = vst [vmem:[%s247 + $0x98] sm:$0xff] %v1323
        %2004 = vst [vmem:[%s247 + $0xa0] sm:$0xff] %v1338
        %2005 = vst [vmem:[%s247 + $0xa8] sm:$0xff] %v1353
        %2006 = vst [vmem:[%s247 + $0xb0] sm:$0xff] %v1368
        %2007 = vst [vmem:[%s247 + $0xb8] sm:$0xff] %v1383
        %2008 = vst [vmem:[%s247 + $0xc0] sm:$0xff] %v1398
        %2009 = vst [vmem:[%s247 + $0xc8] sm:$0xff] %v1413
        %2010 = vst [vmem:[%s247 + $0xd0] sm:$0xff] %v1428
        %2011 = vst [vmem:[%s247 + $0xd8] sm:$0xff] %v1443
        %2012 = vst [vmem:[%s247 + $0xe0] sm:$0xff] %v1458
        %2013 = vst [vmem:[%s247 + $0xe8] sm:$0xff] %v1473
        %2014 = vst [vmem:[%s247 + $0xf0] sm:$0xff] %v1488
        %2015 = vst [vmem:[%s247 + $0xf8] sm:$0xff] %v1503
        %2016 = vst [vmem:[%s247 + $0x100] sm:$0xff] %v1518
        %2017 = vst [vmem:[%s247 + $0x108] sm:$0xff] %v1533
        %2018 = vst [vmem:[%s247 + $0x110] sm:$0xff] %v1548
        %2019 = vst [vmem:[%s247 + $0x118] sm:$0xff] %v1563
        %2020 = vst [vmem:[%s247 + $0x120] sm:$0xff] %v1578
        %2021 = vst [vmem:[%s247 + $0x128] sm:$0xff] %v1593
        %2022 = vst [vmem:[%s247 + $0x130] sm:$0xff] %v1608
        %2023 = vst [vmem:[%s247 + $0x138] sm:$0xff] %v1623
        %2024 = vst [vmem:[%s247 + $0x140] sm:$0xff] %v1638
        %2025 = vst [vmem:[%s247 + $0x148] sm:$0xff] %v1653
        %2026 = vst [vmem:[%s247 + $0x150] sm:$0xff] %v1668
        %2027 = vst [vmem:[%s247 + $0x158] sm:$0xff] %v1683
        %2028 = vst [vmem:[%s247 + $0x160] sm:$0xff] %v1698
        %2029 = vst [vmem:[%s247 + $0x168] sm:$0xff] %v1713
        %2030 = vst [vmem:[%s247 + $0x170] sm:$0xff] %v1728
        %2031 = vst [vmem:[%s247 + $0x178] sm:$0xff] %v1743
        %2032 = vst [vmem:[%s247 + $0x180] sm:$0xff] %v1758
        %2033 = vst [vmem:[%s247 + $0x188] sm:$0xff] %v1773
        %2034 = vst [vmem:[%s247 + $0x190] sm:$0xff] %v1788
        %2035 = vst [vmem:[%s247 + $0x198] sm:$0xff] %v1803
        %2036 = vst [vmem:[%s247 + $0x1a0] sm:$0xff] %v1818
        %2037 = vst [vmem:[%s247 + $0x1a8] sm:$0xff] %v1833
        %2038 = vst [vmem:[%s247 + $0x1b0] sm:$0xff] %v1848
        %2039 = vst [vmem:[%s247 + $0x1b8] sm:$0xff] %v1863
        %2040 = vst [vmem:[%s247 + $0x1c0] sm:$0xff] %v1878
        %2041 = vst [vmem:[%s247 + $0x1c8] sm:$0xff] %v1893
        %2042 = vst [vmem:[%s247 + $0x1d0] sm:$0xff] %v1908
        %2043 = vst [vmem:[%s247 + $0x1d8] sm:$0xff] %v1923
        %2044 = vst [vmem:[%s247 + $0x1e0] sm:$0xff] %v1938
        %2045 = vst [vmem:[%s247 + $0x1e8] sm:$0xff] %v1953
        %2046 = vst [vmem:[%s247 + $0x1f0] sm:$0xff] %v1968
        %2047 = vst [vmem:[%s247 + $0x1f8] sm:$0xff] %v1983
        %v2048 = vadd.f32 %v1038, %v1053
        %v2049 = vadd.f32 %v2048, %v1068
        %v2050 = vadd.f32 %v2049, %v1083
        %v2051 = vadd.f32 %v2050, %v1098
        %v2052 = vadd.f32 %v2051, %v1113
        %v2053 = vadd.f32 %v2052, %v1128
        %v2054 = vadd.f32 %v2053, %v1143
        %v2055 = vadd.f32 %v2054, %v1158
        %v2056 = vadd.f32 %v2055, %v1173
        %v2057 = vadd.f32 %v2056, %v1188
        %v2058 = vadd.f32 %v2057, %v1203
        %v2059 = vadd.f32 %v2058, %v1218
        %v2060 = vadd.f32 %v2059, %v1233
        %v2061 = vadd.f32 %v2060, %v1248
        %v2062 = vadd.f32 %v2061, %v1263
        %v2063 = vadd.f32 %v2062, %v1278
        %v2064 = vadd.f32 %v2063, %v1293
        %v2065 = vadd.f32 %v2064, %v1308
        %v2066 = vadd.f32 %v2065, %v1323
        %v2067 = vadd.f32 %v2066, %v1338
        %v2068 = vadd.f32 %v2067, %v1353
        %v2069 = vadd.f32 %v2068, %v1368
        %v2070 = vadd.f32 %v2069, %v1383
        %v2071 = vadd.f32 %v2070, %v1398
        %v2072 = vadd.f32 %v2071, %v1413
        %v2073 = vadd.f32 %v2072, %v1428
        %v2074 = vadd.f32 %v2073, %v1443
        %v2075 = vadd.f32 %v2074, %v1458
        %v2076 = vadd.f32 %v2075, %v1473
        %v2077 = vadd.f32 %v2076, %v1488
        %v2078 = vadd.f32 %v2077, %v1503
        %v2079 = vadd.f32 %v2078, %v1518
        %v2080 = vadd.f32 %v2079, %v1533
        %v2081 = vadd.f32 %v2080, %v1548
        %v2082 = vadd.f32 %v2081, %v1563
        %v2083 = vadd.f32 %v2082, %v1578
        %v2084 = vadd.f32 %v2083, %v1593
        %v2085 = vadd.f32 %v2084, %v1608
        %v2086 = vadd.f32 %v2085, %v1623
        %v2087 = vadd.f32 %v2086, %v1638
        %v2088 = vadd.f32 %v2087, %v1653
        %v2089 = vadd.f32 %v2088, %v1668
        %v2090 = vadd.f32 %v2089, %v1683
        %v2091 = vadd.f32 %v2090, %v1698
        %v2092 = vadd.f32 %v2091, %v1713
        %v2093 = vadd.f32 %v2092, %v1728
        %v2094 = vadd.f32 %v2093, %v1743
        %v2095 = vadd.f32 %v2094, %v1758
        %v2096 = vadd.f32 %v2095, %v1773
        %v2097 = vadd.f32 %v2096, %v1788
        %v2098 = vadd.f32 %v2097, %v1803
        %v2099 = vadd.f32 %v2098, %v1818
        %v2100 = vadd.f32 %v2099, %v1833
        %v2101 = vadd.f32 %v2100, %v1848
        %v2102 = vadd.f32 %v2101, %v1863
        %v2103 = vadd.f32 %v2102, %v1878
        %v2104 = vadd.f32 %v2103, %v1893
        %v2105 = vadd.f32 %v2104, %v1908
        %v2106 = vadd.f32 %v2105, %v1923
        %v2107 = vadd.f32 %v2106, %v1938
        %v2108 = vadd.f32 %v2107, %v1953
        %v2109 = vadd.f32 %v2108, %v1968
        %v2110 = vadd.f32 %v2109, %v1983
        %v2111 = vrot.slane %v2110, 4
        %v2112 = vadd.f32 %v2110, %v2111
        %v2113 = vrot.slane %v2112, 2
        %v2114 = vadd.f32 %v2112, %v2113
        %v2115 = vrot.slane %v2114, 1
        %v2116 = vadd.f32 %v2114, %v2115
        %v2117 = vmul.f32 %v1038, %v1038
        %v2118 = vmul.f32 %v1053, %v1053
        %v2119 = vmul.f32 %v1068, %v1068
        %v2120 = vmul.f32 %v1083, %v1083
        %v2121 = vmul.f32 %v1098, %v1098
        %v2122 = vmul.f32 %v1113, %v1113
        %v2123 = vmul.f32 %v1128, %v1128
        %v2124 = vmul.f32 %v1143, %v1143
        %v2125 = vmul.f32 %v1158, %v1158
        %v2126 = vmul.f32 %v1173, %v1173
        %v2127 = vmul.f32 %v1188, %v1188
        %v2128 = vmul.f32 %v1203, %v1203
        %v2129 = vmul.f32 %v1218, %v1218
        %v2130 = vmul.f32 %v1233, %v1233
        %v2131 = vmul.f32 %v1248, %v1248
        %v2132 = vmul.f32 %v1263, %v1263
        %v2133 = vmul.f32 %v1278, %v1278
        %v2134 = vmul.f32 %v1293, %v1293
        %v2135 = vmul.f32 %v1308, %v1308
        %v2136 = vmul.f32 %v1323, %v1323
        %v2137 = vmul.f32 %v1338, %v1338
        %v2138 = vmul.f32 %v1353, %v1353
        %v2139 = vmul.f32 %v1368, %v1368
        %v2140 = vmul.f32 %v1383, %v1383
        %v2141 = vmul.f32 %v1398, %v1398
        %v2142 = vmul.f32 %v1413, %v1413
        %v2143 = vmul.f32 %v1428, %v1428
        %v2144 = vmul.f32 %v1443, %v1443
        %v2145 = vmul.f32 %v1458, %v1458
        %v2146 = vmul.f32 %v1473, %v1473
        %v2147 = vmul.f32 %v1488, %v1488
        %v2148 = vmul.f32 %v1503, %v1503
        %v2149 = vmul.f32 %v1518, %v1518
        %v2150 = vmul.f32 %v1533, %v1533
        %v2151 = vmul.f32 %v1548, %v1548
        %v2152 = vmul.f32 %v1563, %v1563
        %v2153 = vmul.f32 %v1578, %v1578
        %v2154 = vmul.f32 %v1593, %v1593
        %v2155 = vmul.f32 %v1608, %v1608
        %v2156 = vmul.f32 %v1623, %v1623
        %v2157 = vmul.f32 %v1638, %v1638
        %v2158 = vmul.f32 %v1653, %v1653
        %v2159 = vmul.f32 %v1668, %v1668
        %v2160 = vmul.f32 %v1683, %v1683
        %v2161 = vmul.f32 %v1698, %v1698
        %v2162 = vmul.f32 %v1713, %v1713
        %v2163 = vmul.f32 %v1728, %v1728
        %v2164 = vmul.f32 %v1743, %v1743
        %v2165 = vmul.f32 %v1758, %v1758
        %v2166 = vmul.f32 %v1773, %v1773
        %v2167 = vmul.f32 %v1788, %v1788
        %v2168 = vmul.f32 %v1803, %v1803
        %v2169 = vmul.f32 %v1818, %v1818
        %v2170 = vmul.f32 %v1833, %v1833
        %v2171 = vmul.f32 %v1848, %v1848
        %v2172 = vmul.f32 %v1863, %v1863
        %v2173 = vmul.f32 %v1878, %v1878
        %v2174 = vmul.f32 %v1893, %v1893
        %v2175 = vmul.f32 %v1908, %v1908
        %v2176 = vmul.f32 %v1923, %v1923
        %v2177 = vmul.f32 %v1938, %v1938
        %v2178 = vmul.f32 %v1953, %v1953
        %v2179 = vmul.f32 %v1968, %v1968
        %v2180 = vmul.f32 %v1983, %v1983
        %v2181 = vadd.f32 %v2117, %v2118
        %v2182 = vadd.f32 %v2181, %v2119
        %v2183 = vadd.f32 %v2182, %v2120
        %v2184 = vadd.f32 %v2183, %v2121
        %v2185 = vadd.f32 %v2184, %v2122
        %v2186 = vadd.f32 %v2185, %v2123
        %v2187 = vadd.f32 %v2186, %v2124
        %v2188 = vadd.f32 %v2187, %v2125
        %v2189 = vadd.f32 %v2188, %v2126
        %v2190 = vadd.f32 %v2189, %v2127
        %v2191 = vadd.f32 %v2190, %v2128
        %v2192 = vadd.f32 %v2191, %v2129
        %v2193 = vadd.f32 %v2192, %v2130
        %v2194 = vadd.f32 %v2193, %v2131
        %v2195 = vadd.f32 %v2194, %v2132
        %v2196 = vadd.f32 %v2195, %v2133
        %v2197 = vadd.f32 %v2196, %v2134
        %v2198 = vadd.f32 %v2197, %v2135
        %v2199 = vadd.f32 %v2198, %v2136
        %v2200 = vadd.f32 %v2199, %v2137
        %v2201 = vadd.f32 %v2200, %v2138
        %v2202 = vadd.f32 %v2201, %v2139
        %v2203 = vadd.f32 %v2202, %v2140
        %v2204 = vadd.f32 %v2203, %v2141
        %v2205 = vadd.f32 %v2204, %v2142
        %v2206 = vadd.f32 %v2205, %v2143
        %v2207 = vadd.f32 %v2206, %v2144
        %v2208 = vadd.f32 %v2207, %v2145
        %v2209 = vadd.f32 %v2208, %v2146
        %v2210 = vadd.f32 %v2209, %v2147
        %v2211 = vadd.f32 %v2210, %v2148
        %v2212 = vadd.f32 %v2211, %v2149
        %v2213 = vadd.f32 %v2212, %v2150
        %v2214 = vadd.f32 %v2213, %v2151
        %v2215 = vadd.f32 %v2214, %v2152
        %v2216 = vadd.f32 %v2215, %v2153
        %v2217 = vadd.f32 %v2216, %v2154
        %v2218 = vadd.f32 %v2217, %v2155
        %v2219 = vadd.f32 %v2218, %v2156
        %v2220 = vadd.f32 %v2219, %v2157
        %v2221 = vadd.f32 %v2220, %v2158
        %v2222 = vadd.f32 %v2221, %v2159
        %v2223 = vadd.f32 %v2222, %v2160
        %v2224 = vadd.f32 %v2223, %v2161
        %v2225 = vadd.f32 %v2224, %v2162
        %v2226 = vadd.f32 %v2225, %v2163
        %v2227 = vadd.f32 %v2226, %v2164
        %v2228 = vadd.f32 %v2227, %v2165
        %v2229 = vadd.f32 %v2228, %v2166
        %v2230 = vadd.f32 %v2229, %v2167
        %v2231 = vadd.f32 %v2230, %v2168
        %v2232 = vadd.f32 %v2231, %v2169
        %v2233 = vadd.f32 %v2232, %v2170
        %v2234 = vadd.f32 %v2233, %v2171
        %v2235 = vadd.f32 %v2234, %v2172
        %v2236 = vadd.f32 %v2235, %v2173
        %v2237 = vadd.f32 %v2236, %v2174
        %v2238 = vadd.f32 %v2237, %v2175
        %v2239 = vadd.f32 %v2238, %v2176
        %v2240 = vadd.f32 %v2239, %v2177
        %v2241 = vadd.f32 %v2240, %v2178
        %v2242 = vadd.f32 %v2241, %v2179
        %v2243 = vadd.f32 %v2242, %v2180
        %v2244 = vrot.slane %v2243, 4
        %v2245 = vadd.f32 %v2243, %v2244
        %v2246 = vrot.slane %v2245, 2
        %v2247 = vadd.f32 %v2245, %v2246
        %v2248 = vrot.slane %v2247, 1
        %v2249 = vadd.f32 %v2247, %v2248
        %2250 = vst [vmem:[%s229] sm:$0xff] %v2116
        %2251 = vst [vmem:[%s236] sm:$0xff] %v2249
        %s2252 = smul.u32 64, %s23
        %p2253 = scmp.lt.s32.totalorder %s2252, 575
        %s2254 = scalar_select %p2253, %s2252, 575
        %s2255 = smul.addr %s2254, 8
        %s2256 = scalar_lea.vmem %s3, %s2255
        %s2257 = sand.u32 %s125, 1
        %s2258 = scalar_lea.sflag [#allocation3], %s2257
        %s2259 = sand.u32 %s125, 1
        %s2260 = smul.addr %s2259, 8
        %s2261 = scalar_lea.vmem [#allocation2], %s2260
        %s2262 = sand.u32 %s151, 1
        %s2263 = scalar_lea.sflag [#allocation5], %s2262
        %s2264 = sand.u32 %s151, 1
        %s2265 = smul.addr %s2264, 8
        %s2266 = scalar_lea.vmem [#allocation4], %s2265
        // Predicated region
        $region33: #{generator_forward.37} parent=31 // pred_check
          %p2267 = pneg %p109
        $region34: #{generator_forward.37} parent=31 // pred_check_branch
          %2269 = sbr.rel (%p2267) target = $region36
        $region35: #{generator_forward.37} parent=31 // pred_region
          %s2270 = smul.u32 64, %s23
        $region36: #{generator_forward.37} parent=31 // pred_fallthru
          _
        // Predicated region
        $region37: #{generator_forward.37} parent=31 // pred_check
          %p2271 = pneg %p135
        $region38: #{generator_forward.37} parent=31 // pred_check_branch
          %2273 = sbr.rel (%p2271) target = $region40
        $region39: #{generator_forward.37} parent=31 // pred_region
          %2275 = vsyncadd %s2258, 0
          %s2276 = smul.addr %s23, 8
          %s2277 = scalar_lea.hbm %s4, %s2276
          %s2279 = sshll.u32 %s2261, 4
          %s2280 = int_to_ptr.vmem [resolvable:$true] %s2279
          %s2281 = sshll.u32 %s2277, 4
          %s2282 = int_to_ptr.hbm [resolvable:$true] %s2281
          %2284 = dma.vmem_to_hbm [thread:$0]  %s2280, 128, %s2282, %s2258
        $region40: #{generator_forward.37} parent=31 // pred_fallthru
          _
        // Predicated region
        $region41: #{generator_forward.37} parent=31 // pred_check
          %p2285 = pneg %p161
        $region42: #{generator_forward.37} parent=31 // pred_check_branch
          %2287 = sbr.rel (%p2285) target = $region44
        $region43: #{generator_forward.37} parent=31 // pred_region
          %2289 = vsyncadd %s2263, 0
          %s2290 = smul.addr %s23, 8
          %s2291 = scalar_lea.hbm %s5, %s2290
          %s2293 = sshll.u32 %s2266, 4
          %s2294 = int_to_ptr.vmem [resolvable:$true] %s2293
          %s2295 = sshll.u32 %s2291, 4
          %s2296 = int_to_ptr.hbm [resolvable:$true] %s2295
          %2298 = dma.vmem_to_hbm [thread:$0]  %s2294, 128, %s2296, %s2263
        $region44: #{generator_forward.37} parent=31 // pred_fallthru
          _
      $region32: #{generator_forward.37} parent=5 // pred_fallthru
        _
      %p2299 = scmp.le.s32.totalorder 2, %s18
      // Predicated region
      $region45: #{generator_forward.37} parent=5 // pred_check
        %p2300 = pneg %p2299
      $region46: #{generator_forward.37} parent=5 // pred_check_branch
        %2302 = sbr.rel (%p2300) target = $region48
      $region47: #{generator_forward.37} parent=5 // pred_region
        %s2303 = ssub.s32 %s18, 2
        // Predicated region
        $region49: #{generator_forward.37} parent=47 // pred_check
          %p2304 = pneg %p115
        $region50: #{generator_forward.37} parent=47 // pred_check_branch
          %2306 = sbr.rel (%p2304) target = $region52
        $region51: #{generator_forward.37} parent=47 // pred_region
          %s2307 = smul.u32 64, %s24
          %p2308 = scmp.lt.s32.totalorder %s2307, 575
          %s2309 = scalar_select %p2308, %s2307, 575
          %s2310 = smul.addr %s2309, 8
          %s2311 = scalar_lea.vmem %s3, %s2310
        $region52: #{generator_forward.37} parent=47 // pred_fallthru
          _
        // Predicated region
        $region53: #{generator_forward.37} parent=47 // pred_check
          %p2312 = pneg %p141
        $region54: #{generator_forward.37} parent=47 // pred_check_branch
          %2314 = sbr.rel (%p2312) target = $region56
        $region55: #{generator_forward.37} parent=47 // pred_region
          %s2315 = sand.u32 %s126, 1
          %s2316 = scalar_lea.sflag [#allocation3], %s2315
          %s2317 = sand.u32 %s126, 1
          %s2318 = smul.addr %s2317, 8
          %s2319 = scalar_lea.vmem [#allocation2], %s2318
          %2321 = dma.done %s2316, 128
        $region56: #{generator_forward.37} parent=47 // pred_fallthru
          _
        // Predicated region
        $region57: #{generator_forward.37} parent=47 // pred_check
          %p2322 = pneg %p167
        $region58: #{generator_forward.37} parent=47 // pred_check_branch
          %2324 = sbr.rel (%p2322) target = $region60
        $region59: #{generator_forward.37} parent=47 // pred_region
          %s2325 = sand.u32 %s152, 1
          %s2326 = scalar_lea.sflag [#allocation5], %s2325
          %s2327 = sand.u32 %s152, 1
          %s2328 = smul.addr %s2327, 8
          %s2329 = scalar_lea.vmem [#allocation4], %s2328
          %2331 = dma.done %s2326, 128
        $region60: #{generator_forward.37} parent=47 // pred_fallthru
          _
      $region48: #{generator_forward.37} parent=5 // pred_fallthru
        _
    $region6: #{generator_forward.37} parent=1 // loop_footer
      %s22 = sadd.s32 1, %s18
    $region7: #{generator_forward.37} parent=1 // loop_footer_branch
      %17 = sbr.rel target = $region3
    $region8: #{generator_forward.37} parent=1 // loop_exit
      _
    %2332 = vsyncpa [#allocation3], 1
    %s2333 = scalar_lea.sflag [#allocation3], 1
    %2334 = vsyncpa %s2333, 1
    %2335 = vsyncpa [#allocation5], 1
    %s2336 = scalar_lea.sflag [#allocation5], 1
    %2337 = vsyncpa %s2336, 1

</llo_original>
